<compile_context>
chip_gen: v7x
topology: tpu7x:2x2x1
jax: 0.10.0
libtpu: 0.0.40
codegen_flags: <defaults>
</compile_context>

<pallas_src>
import numpy as np
import jax
import jax.numpy as jnp
from jax import lax
from jax.experimental import pallas as pl
from jax.experimental.pallas import tpu as pltpu

TASKS = ('S', 'D', 'I')                       # 'D' must be present ('D_src' head), 'I' exercises C/O heads
NUM_OUTPUT = {'S': 8, 'D': 1, 'C': 5, 'O': 3}
INPUT_CHANNELS = 64
INTERMEDIATE_CHANNELS = 128                   # != INPUT_CHANNELS -> downsample branch is exercised
BN_EPS = 1e-5
HEAD_PAD = 128                                # lane-dense width for the packed prediction heads


# --------------------------------------------------------------------------- #
# Fused Pallas kernel: bottleneck1 -> bottleneck2 -> packed 1x1 heads
# --------------------------------------------------------------------------- #
def _make_fused_task_kernel(has_downsample):
    def kernel(*refs):
        if has_downsample:
            (x_ref,
             a_w1, a_sb1, a_w2, a_sb2, a_w3, a_sb3, a_wd, a_sbd,
             b_w1, b_sb1, b_w2, b_sb2, b_w3, b_sb3,
             hw_ref, hb_ref,
             feat_ref, head_ref, pad_ref, patch_ref) = refs
        else:
            (x_ref,
             a_w1, a_sb1, a_w2, a_sb2, a_w3, a_sb3,
             b_w1, b_sb1, b_w2, b_sb2, b_w3, b_sb3,
             hw_ref, hb_ref,
             feat_ref, head_ref, pad_ref, patch_ref) = refs
            a_wd = a_sbd = None

        _, H, W, cin = x_ref.shape
        P = a_w1.shape[2]            # bottleneck planes (= intermediate_channels // 4)
        cmid = a_w3.shape[2]         # 4 * planes
        hpad = hw_ref.shape[2]
        f32, bf16 = jnp.float32, jnp.bfloat16

        # pad-scratch halo: the 3x3 windows read rows 0 / H+1 and the column bands
        # around the interior, but nothing ever writes them -> zero just the halo
        # (small aligned stores); the interior is fully overwritten by each conv.
        pad_ref[0:1, :, :] = jnp.zeros((1, W + 16, P), f32)
        pad_ref[H + 1:H + 2, :, :] = jnp.zeros((1, W + 16, P), f32)
        pad_ref[:, 0:8, :] = jnp.zeros((H + 2, 8, P), f32)
        pad_ref[:, 8 + W:16 + W, :] = jnp.zeros((H + 2, 8, P), f32)

        def scale_bias(h, sb_ref):
            # sb_ref: (1, 2, C) -> row 0 = folded BN scale, row 1 = folded BN bias
            return h * sb_ref[0, 0:1, :] + sb_ref[0, 1:2, :]

        def conv3x3(h, w2_ref):
            # h: (H*W, P) f32 -> (H*W, P) f32. 3x3 conv, stride 1, zero-pad 1,
            # computed as ONE im2col matmul with K = 9*P.
            pad_ref[1:H + 1, 8:8 + W, :] = h.reshape(H, W, P)
            for ky in range(3):
                for kx in range(3):
                    t = ky * 3 + kx
                    patch_ref[:, :, t * P:(t + 1) * P] = \
                        pad_ref[ky:ky + H, 7 + kx:7 + kx + W, :]
            patches = patch_ref[...].reshape(H * W, 9 * P).astype(bf16)
            return jnp.dot(patches, w2_ref[0], preferred_element_type=f32)

        def bottleneck(inp, w1, sb1, w2, sb2, w3, sb3, wd, sbd):
            # inp: (H*W, C_in) f32
            xb = inp.astype(bf16)
            h = jnp.dot(xb, w1[0], preferred_element_type=f32)
            h = jnp.maximum(scale_bias(h, sb1), 0.0)
            h2 = conv3x3(h, w2)
            h2 = jnp.maximum(scale_bias(h2, sb2), 0.0)
            h3 = jnp.dot(h2.astype(bf16), w3[0], preferred_element_type=f32)
            h3 = scale_bias(h3, sb3)
            if wd is None:
                res = inp
            else:
                res = scale_bias(jnp.dot(xb, wd[0], preferred_element_type=f32), sbd)
            return jnp.maximum(h3 + res, 0.0)

        x2d = x_ref[...].reshape(H * W, cin)
        f1 = bottleneck(x2d, a_w1, a_sb1, a_w2, a_sb2, a_w3, a_sb3, a_wd, a_sbd)
        f2 = bottleneck(f1, b_w1, b_sb1, b_w2, b_sb2, b_w3, b_sb3, None, None)

        feat_ref[...] = f2.reshape(1, 1, H, W, cmid)
        heads = jnp.dot(f2.astype(bf16), hw_ref[0],
                        preferred_element_type=f32) + hb_ref[0]
        head_ref[...] = heads.reshape(1, 1, H, W, hpad)

    return kernel


def fused_forward_pallas(x_nhwc, packed):
    """x_nhwc: (B, H, W, cin) f32 -> (features (T,B,H,W,cmid), heads (T,B,H,W,128))."""
    B, H, W, cin = x_nhwc.shape
    has_ds = packed['has_downsample']
    T = packed['head_w'].shape[0]
    P = packed['a_w1'].shape[2]
    cmid = packed['a_w3'].shape[2]
    hpad = packed['head_w'].shape[2]

    names = ['a_w1', 'a_sb1', 'a_w2', 'a_sb2', 'a_w3', 'a_sb3']
    if has_ds:
        names += ['a_wd', 'a_sbd']
    names += ['b_w1', 'b_sb1', 'b_w2', 'b_sb2', 'b_w3', 'b_sb3', 'head_w', 'head_b']
    w_args = [packed[n] for n in names]

    in_specs = [pl.BlockSpec((1, H, W, cin), lambda t, b: (b, 0, 0, 0))]
    in_specs += [pl.BlockSpec((1,) + tuple(a.shape[1:]), lambda t, b: (t, 0, 0))
                 for a in w_args]

    feat, head = pl.pallas_call(
        _make_fused_task_kernel(has_ds),
        out_shape=(jax.ShapeDtypeStruct((T, B, H, W, cmid), jnp.float32),
                   jax.ShapeDtypeStruct((T, B, H, W, hpad), jnp.float32)),
        grid=(T, B),
        in_specs=in_specs,
        out_specs=(pl.BlockSpec((1, 1, H, W, cmid), lambda t, b: (t, b, 0, 0, 0)),
                   pl.BlockSpec((1, 1, H, W, hpad), lambda t, b: (t, b, 0, 0, 0))),
        scratch_shapes=[pltpu.VMEM((H + 2, W + 16, P), jnp.float32),   # padded act
                        pltpu.VMEM((H, W, 9 * P), jnp.float32)],       # im2col patches
        compiler_params=pltpu.CompilerParams(
            dimension_semantics=("parallel", "parallel")),
    )(x_nhwc, *w_args)
    return feat, head


# --------------------------------------------------------------------------- #
# Deterministic parameter construction (BN folded into scale/bias, eval mode)
# --------------------------------------------------------------------------- #
def _bn_fold(key, c):
    k1, k2, k3, k4 = jax.random.split(key, 4)
    gamma = 1.0 + 0.1 * jax.random.normal(k1, (c,), jnp.float32)
    beta = 0.1 * jax.random.normal(k2, (c,), jnp.float32)
    mean = 0.1 * jax.random.normal(k3, (c,), jnp.float32)
    var = 1.0 + 0.1 * jax.random.uniform(k4, (c,), jnp.float32)
    scale = gamma / jnp.sqrt(var + BN_EPS)
    bias = beta - mean * scale
    return scale.reshape(1, c), bias.reshape(1, c)


def _conv_w(key, ci, co):
    return (jax.random.normal(key, (ci, co), jnp.float32) / np.sqrt(ci)).astype(jnp.float32)


def make_bottleneck_params(key, cin, planes, has_downsample):
    cout = 4 * planes
    ks = jax.random.split(key, 8)
    p = {'w1': _conv_w(ks[0], cin, planes)}
    p['s1'], p['b1'] = _bn_fold(ks[1], planes)
    # 3x3 weights stored as (9, P, P): entry k = kernel tap (ky, kx) as an (in, out) matrix
    p['w2'] = (jax.random.normal(ks[2], (9, planes, planes), jnp.float32)
               / np.sqrt(9 * planes)).astype(jnp.float32)
    p['s2'], p['b2'] = _bn_fold(ks[3], planes)
    p['w3'] = _conv_w(ks[4], planes, cout)
    p['s3'], p['b3'] = _bn_fold(ks[5], cout)
    if has_downsample:
        p['wd'] = _conv_w(ks[6], cin, cout)
        p['sd'], p['bd'] = _bn_fold(ks[7], cout)
    return p


def make_params(key, tasks, cin, cmid, num_output):
    planes = cmid // 4
    has_ds = (cin != cmid)
    params = {'layers': {}, 'conv_out': {}, 'has_downsample': has_ds}
    for task in tasks:
        key, k1, k2 = jax.random.split(key, 3)
        params['layers'][task] = {
            'b1': make_bottleneck_params(k1, cin, planes, has_ds),
            'b2': make_bottleneck_params(k2, cmid, planes, False),
        }
        out_names = ('C', 'O') if task == 'I' else (task,)
        for name in out_names:
            key, kw, kb = jax.random.split(key, 3)
            params['conv_out'][name] = (
                _conv_w(kw, cmid, num_output[name]),
                0.1 * jax.random.normal(kb, (1, num_output[name]), jnp.float32))
    key, kw, kb = jax.random.split(key, 3)
    params['conv_out']['D_src'] = (
        _conv_w(kw, cmid, num_output['D']),
        0.1 * jax.random.normal(kb, (1, num_output['D']), jnp.float32))
    return params


def pack_params_for_kernel(params, tasks):
    """Stack per-task weights along a leading task dim (bf16 for matmul weights),
    fold each task's 1x1 heads into one lane-dense (cmid, 128) matmul."""
    if 'D' not in tasks:
        raise ValueError("'D' must be in tasks (the D_src head reads features_D)")
    has_ds = params['has_downsample']
    b1_list = [params['layers'][t]['b1'] for t in tasks]
    b2_list = [params['layers'][t]['b2'] for t in tasks]

    def stack_w(plist, name):                          # matmul weights -> bf16
        return jnp.stack([p[name] for p in plist]).astype(jnp.bfloat16)

    def stack_w2(plist):                               # (9,P,P) -> (9P,P) im2col weight, bf16
        return jnp.stack([p['w2'].reshape(-1, p['w2'].shape[-1])
                          for p in plist]).astype(jnp.bfloat16)

    def stack_sb(plist, s, b):                         # folded BN scale/bias -> (T,2,C) f32
        return jnp.stack([jnp.concatenate([p[s], p[b]], axis=0) for p in plist])

    packed = {
        'a_w1': stack_w(b1_list, 'w1'), 'a_sb1': stack_sb(b1_list, 's1', 'b1'),
        'a_w2': stack_w2(b1_list),      'a_sb2': stack_sb(b1_list, 's2', 'b2'),
        'a_w3': stack_w(b1_list, 'w3'), 'a_sb3': stack_sb(b1_list, 's3', 'b3'),
        'b_w1': stack_w(b2_list, 'w1'), 'b_sb1': stack_sb(b2_list, 's1', 'b1'),
        'b_w2': stack_w2(b2_list),      'b_sb2': stack_sb(b2_list, 's2', 'b2'),
        'b_w3': stack_w(b2_list, 'w3'), 'b_sb3': stack_sb(b2_list, 's3', 'b3'),
        'has_downsample': has_ds,
    }
    if has_ds:
        packed['a_wd'] = stack_w(b1_list, 'wd')
        packed['a_sbd'] = stack_sb(b1_list, 'sd', 'bd')

    cmid = int(b1_list[0]['w3'].shape[1])
    hw = np.zeros((len(tasks), cmid, HEAD_PAD), np.float32)
    hb = np.zeros((len(tasks), 1, HEAD_PAD), np.float32)
    layout = {}                                        # head name -> (task_idx, col_off, n)
    for ti, task in enumerate(tasks):
        names = ['C', 'O'] if task == 'I' else [task]
        if task == 'D':
            names.append('D_src')
        off = 0
        for name in names:
            w, b = params['conv_out'][name]
            n = int(w.shape[1])
            hw[ti, :, off:off + n] = np.asarray(w)
            hb[ti, 0, off:off + n] = np.asarray(b).reshape(-1)
            layout[name] = (ti, off, n)
            off += n
    packed['head_w'] = jnp.asarray(hw).astype(jnp.bfloat16)
    packed['head_b'] = jnp.asarray(hb)
    packed['head_layout'] = layout
    return packed


# --------------------------------------------------------------------------- #
# Forward pass (mirrors InitialTaskPredictionModule.forward)
# --------------------------------------------------------------------------- #
def init_task_prediction_forward(x_nchw, params, tasks):
    x = jnp.transpose(x_nchw, (0, 2, 3, 1))            # NCHW -> NHWC
    packed = pack_params_for_kernel(params, tasks)
    feat, head = fused_forward_pallas(x, packed)       # (T,B,H,W,cmid), (T,B,H,W,128)
    out = {}
    for ti, task in enumerate(tasks):
        out['features_%s' % task] = feat[ti]
    for name, (ti, off, n) in packed['head_layout'].items():
        out[name] = head[ti, :, :, :, off:off + n]
    return {k: jnp.transpose(v, (0, 3, 1, 2)) for k, v in out.items()}   # back to NCHW


# --------------------------------------------------------------------------- #
# Pure-JAX reference (for correctness check)
# --------------------------------------------------------------------------- #
def _ref_conv1x1(h, w):
    return jnp.einsum('bhwc,cp->bhwp', h, w, precision=lax.Precision.HIGHEST)


def _ref_bottleneck(h, p, has_downsample):
    B, H, W, _ = h.shape
    P = p['w1'].shape[1]
    t = jnp.maximum(_ref_conv1x1(h, p['w1']) * p['s1'] + p['b1'], 0.0)
    tp = jnp.pad(t, ((0, 0), (1, 1), (1, 1), (0, 0)))
    acc = jnp.zeros((B, H, W, P), jnp.float32)
    for ky in range(3):
        for kx in range(3):
            acc = acc + _ref_conv1x1(tp[:, ky:ky + H, kx:kx + W, :], p['w2'][ky * 3 + kx])
    t2 = jnp.maximum(acc * p['s2'] + p['b2'], 0.0)
    t3 = _ref_conv1x1(t2, p['w3']) * p['s3'] + p['b3']
    res = (_ref_conv1x1(h, p['wd']) * p['sd'] + p['bd']) if has_downsample else h
    return jnp.maximum(t3 + res, 0.0)


def ref_forward(x_nchw, params, tasks):
    x = jnp.transpose(x_nchw, (0, 2, 3, 1))
    has_ds = params['has_downsample']
    out = {}
    for task in tasks:
        lp = params['layers'][task]
        f = _ref_bottleneck(x, lp['b1'], has_ds)
        f = _ref_bottleneck(f, lp['b2'], False)
        out['features_%s' % task] = f
        names = ('C', 'O') if task == 'I' else (task,)
        for n in names:
            w, b = params['conv_out'][n]
            out[n] = _ref_conv1x1(f, w) + b
    w, b = params['conv_out']['D_src']
    out['D_src'] = _ref_conv1x1(out['features_D'], w) + b
    return {k: jnp.transpose(v, (0, 3, 1, 2)) for k, v in out.items()}


# --------------------------------------------------------------------------- #
if __name__ == "__main__":
    key = jax.random.PRNGKey(0)
    kx, kp = jax.random.split(key)
    B, H, W = 2, 16, 16
    x = jax.random.normal(kx, (B, INPUT_CHANNELS, H, W), jnp.float32)   # NCHW (PyTorch convention)
    params = make_params(kp, TASKS, INPUT_CHANNELS, INTERMEDIATE_CHANNELS, NUM_OUTPUT)

    out = init_task_prediction_forward(x, params, TASKS)
    out = jax.tree_util.tree_map(jax.block_until_ready, out)

    ref = ref_forward(x, params, TASKS)
    # kernel matmuls run in bf16 with f32 accumulation -> slightly looser atol than pure-f32
    for k in sorted(ref.keys()):
        np.testing.assert_allclose(np.asarray(out[k]), np.asarray(ref[k]),
                                   rtol=2e-2, atol=5e-2)

    print("KERNEL_OK")
</pallas_src>

<mosaic_0001>
module attributes {stable_mosaic.version = 11 : i64} {
  func.func @kernel(%arg0: i32, %arg1: i32, %arg2: memref<1x16x16x64xf32, #tpu.memory_space<vmem>>, %arg3: memref<1x64x32xbf16, #tpu.memory_space<vmem>>, %arg4: memref<1x2x32xf32, #tpu.memory_space<vmem>>, %arg5: memref<1x288x32xbf16, #tpu.memory_space<vmem>>, %arg6: memref<1x2x32xf32, #tpu.memory_space<vmem>>, %arg7: memref<1x32x128xbf16, #tpu.memory_space<vmem>>, %arg8: memref<1x2x128xf32, #tpu.memory_space<vmem>>, %arg9: memref<1x64x128xbf16, #tpu.memory_space<vmem>>, %arg10: memref<1x2x128xf32, #tpu.memory_space<vmem>>, %arg11: memref<1x128x32xbf16, #tpu.memory_space<vmem>>, %arg12: memref<1x2x32xf32, #tpu.memory_space<vmem>>, %arg13: memref<1x288x32xbf16, #tpu.memory_space<vmem>>, %arg14: memref<1x2x32xf32, #tpu.memory_space<vmem>>, %arg15: memref<1x32x128xbf16, #tpu.memory_space<vmem>>, %arg16: memref<1x2x128xf32, #tpu.memory_space<vmem>>, %arg17: memref<1x128x128xbf16, #tpu.memory_space<vmem>>, %arg18: memref<1x1x128xf32, #tpu.memory_space<vmem>>, %arg19: memref<1x1x16x16x128xf32, #tpu.memory_space<vmem>>, %arg20: memref<1x1x16x16x128xf32, #tpu.memory_space<vmem>>, %arg21: memref<18x32x32xf32, #tpu.memory_space<vmem>>, %arg22: memref<16x16x288xf32, #tpu.memory_space<vmem>>) attributes {dimension_semantics = [#tpu.dimension_semantics<parallel>, #tpu.dimension_semantics<parallel>], iteration_bounds = array<i64: 3, 2>, scalar_prefetch = 0 : i64, scratch_operands = 2 : i64, tpu.core_type = #tpu.core_type<tc>, window_params = [{transform_indices = @transform_0, window_bounds = array<i64: 1, 16, 16, 64>}, {transform_indices = @transform_1, window_bounds = array<i64: 1, 64, 32>}, {transform_indices = @transform_2, window_bounds = array<i64: 1, 2, 32>}, {transform_indices = @transform_3, window_bounds = array<i64: 1, 288, 32>}, {transform_indices = @transform_4, window_bounds = array<i64: 1, 2, 32>}, {transform_indices = @transform_5, window_bounds = array<i64: 1, 32, 128>}, {transform_indices = @transform_6, window_bounds = array<i64: 1, 2, 128>}, {transform_indices = @transform_7, window_bounds = array<i64: 1, 64, 128>}, {transform_indices = @transform_8, window_bounds = array<i64: 1, 2, 128>}, {transform_indices = @transform_9, window_bounds = array<i64: 1, 128, 32>}, {transform_indices = @transform_10, window_bounds = array<i64: 1, 2, 32>}, {transform_indices = @transform_11, window_bounds = array<i64: 1, 288, 32>}, {transform_indices = @transform_12, window_bounds = array<i64: 1, 2, 32>}, {transform_indices = @transform_13, window_bounds = array<i64: 1, 32, 128>}, {transform_indices = @transform_14, window_bounds = array<i64: 1, 2, 128>}, {transform_indices = @transform_15, window_bounds = array<i64: 1, 128, 128>}, {transform_indices = @transform_16, window_bounds = array<i64: 1, 1, 128>}, {transform_indices = @transform_17, window_bounds = array<i64: 1, 1, 16, 16, 128>}, {transform_indices = @transform_18, window_bounds = array<i64: 1, 1, 16, 16, 128>}]} {
    %cst = arith.constant 0.000000e+00 : f32
    %0 = vector.broadcast %cst : f32 to vector<1x32x32xf32>
    %c0 = arith.constant 0 : index
    %c0_0 = arith.constant 0 : index
    %c0_1 = arith.constant 0 : index
    %1 = vector.load %arg21[%c0, %c0_0, %c0_1] : memref<18x32x32xf32, #tpu.memory_space<vmem>>, vector<1x32x32xf32>
    tpu.vector_store %arg21[%c0, %c0_0, %c0_1], %0 {strides = array<i32>} : memref<18x32x32xf32, #tpu.memory_space<vmem>>, vector<1x32x32xf32>,
    %cst_2 = arith.constant 0.000000e+00 : f32
    %2 = vector.broadcast %cst_2 : f32 to vector<1x32x32xf32>
    %c17 = arith.constant 17 : index
    %c0_3 = arith.constant 0 : index
    %c0_4 = arith.constant 0 : index
    %3 = vector.load %arg21[%c17, %c0_3, %c0_4] : memref<18x32x32xf32, #tpu.memory_space<vmem>>, vector<1x32x32xf32>
    tpu.vector_store %arg21[%c17, %c0_3, %c0_4], %2 {strides = array<i32>} : memref<18x32x32xf32, #tpu.memory_space<vmem>>, vector<1x32x32xf32>,
    %cst_5 = arith.constant 0.000000e+00 : f32
    %4 = vector.broadcast %cst_5 : f32 to vector<18x8x32xf32>
    %c0_6 = arith.constant 0 : index
    %c0_7 = arith.constant 0 : index
    %c0_8 = arith.constant 0 : index
    %5 = vector.load %arg21[%c0_6, %c0_7, %c0_8] : memref<18x32x32xf32, #tpu.memory_space<vmem>>, vector<18x8x32xf32>
    tpu.vector_store %arg21[%c0_6, %c0_7, %c0_8], %4 {strides = array<i32>} : memref<18x32x32xf32, #tpu.memory_space<vmem>>, vector<18x8x32xf32>,
    %cst_9 = arith.constant 0.000000e+00 : f32
    %6 = vector.broadcast %cst_9 : f32 to vector<18x8x32xf32>
    %c0_10 = arith.constant 0 : index
    %c24 = arith.constant 24 : index
    %c0_11 = arith.constant 0 : index
    %7 = vector.load %arg21[%c0_10, %c24, %c0_11] : memref<18x32x32xf32, #tpu.memory_space<vmem>>, vector<18x8x32xf32>
    tpu.vector_store %arg21[%c0_10, %c24, %c0_11], %6 {strides = array<i32>} : memref<18x32x32xf32, #tpu.memory_space<vmem>>, vector<18x8x32xf32>,
    %c0_12 = arith.constant 0 : index
    %c0_13 = arith.constant 0 : index
    %c0_14 = arith.constant 0 : index
    %c0_15 = arith.constant 0 : index
    %8 = vector.load %arg2[%c0_12, %c0_13, %c0_14, %c0_15] : memref<1x16x16x64xf32, #tpu.memory_space<vmem>>, vector<1x16x16x64xf32>
    %9 = vector.shape_cast %8 : vector<1x16x16x64xf32> to vector<256x64xf32>
    %10 = arith.truncf %9 : vector<256x64xf32> to vector<256x64xbf16>
    %c0_16 = arith.constant 0 : index
    %c0_17 = arith.constant 0 : index
    %c0_18 = arith.constant 0 : index
    %11 = vector.load %arg3[%c0_16, %c0_17, %c0_18] : memref<1x64x32xbf16, #tpu.memory_space<vmem>>, vector<1x64x32xbf16>
    %12 = vector.shape_cast %11 : vector<1x64x32xbf16> to vector<64x32xbf16>
    %cst_19 = arith.constant dense<0.000000e+00> : vector<256x32xf32>
    %13 = tpu.matmul %10, %12, %cst_19 {dimension_numbers = #tpu.dot_dimension_numbers<[1], [0], [0], [1], [0, 0, 1, 1], [], []>} : vector<256x64xbf16>, vector<64x32xbf16>, vector<256x32xf32> -> vector<256x32xf32>
    %c0_20 = arith.constant 0 : index
    %c0_21 = arith.constant 0 : index
    %c0_22 = arith.constant 0 : index
    %14 = vector.load %arg4[%c0_20, %c0_21, %c0_22] : memref<1x2x32xf32, #tpu.memory_space<vmem>>, vector<1x1x32xf32>
    %15 = vector.shape_cast %14 : vector<1x1x32xf32> to vector<1x32xf32>
    %16 = vector.broadcast %15 : vector<1x32xf32> to vector<256x32xf32>
    %17 = arith.mulf %13, %16 : vector<256x32xf32>
    %c0_23 = arith.constant 0 : index
    %c1 = arith.constant 1 : index
    %c0_24 = arith.constant 0 : index
    %18 = vector.load %arg4[%c0_23, %c1, %c0_24] : memref<1x2x32xf32, #tpu.memory_space<vmem>>, vector<1x1x32xf32>
    %19 = vector.shape_cast %18 : vector<1x1x32xf32> to vector<1x32xf32>
    %20 = vector.broadcast %19 : vector<1x32xf32> to vector<256x32xf32>
    %21 = arith.addf %17, %20 : vector<256x32xf32>
    %cst_25 = arith.constant 0.000000e+00 : f32
    %22 = vector.broadcast %cst_25 : f32 to vector<256x32xf32>
    %23 = arith.maximumf %21, %22 : vector<256x32xf32>
    %24 = vector.shape_cast %23 : vector<256x32xf32> to vector<16x16x32xf32>
    %c1_26 = arith.constant 1 : index
    %c8 = arith.constant 8 : index
    %c0_27 = arith.constant 0 : index
    %25 = vector.load %arg21[%c1_26, %c8, %c0_27] : memref<18x32x32xf32, #tpu.memory_space<vmem>>, vector<16x16x32xf32>
    tpu.vector_store %arg21[%c1_26, %c8, %c0_27], %24 {strides = array<i32>} : memref<18x32x32xf32, #tpu.memory_space<vmem>>, vector<16x16x32xf32>,
    %c0_28 = arith.constant 0 : index
    %c7 = arith.constant 7 : index
    %c0_29 = arith.constant 0 : index
    %26 = vector.load %arg21[%c0_28, %c7, %c0_29] : memref<18x32x32xf32, #tpu.memory_space<vmem>>, vector<16x16x32xf32>
    %c0_30 = arith.constant 0 : index
    %c0_31 = arith.constant 0 : index
    %c0_32 = arith.constant 0 : index
    %27 = vector.load %arg22[%c0_30, %c0_31, %c0_32] : memref<16x16x288xf32, #tpu.memory_space<vmem>>, vector<16x16x32xf32>
    tpu.vector_store %arg22[%c0_30, %c0_31, %c0_32], %26 {strides = array<i32>} : memref<16x16x288xf32, #tpu.memory_space<vmem>>, vector<16x16x32xf32>,
    %c0_33 = arith.constant 0 : index
    %c8_34 = arith.constant 8 : index
    %c0_35 = arith.constant 0 : index
    %28 = vector.load %arg21[%c0_33, %c8_34, %c0_35] : memref<18x32x32xf32, #tpu.memory_space<vmem>>, vector<16x16x32xf32>
    %c0_36 = arith.constant 0 : index
    %c0_37 = arith.constant 0 : index
    %c32 = arith.constant 32 : index
    %29 = vector.load %arg22[%c0_36, %c0_37, %c32] : memref<16x16x288xf32, #tpu.memory_space<vmem>>, vector<16x16x32xf32>
    tpu.vector_store %arg22[%c0_36, %c0_37, %c32], %28 {strides = array<i32>} : memref<16x16x288xf32, #tpu.memory_space<vmem>>, vector<16x16x32xf32>,
    %c0_38 = arith.constant 0 : index
    %c9 = arith.constant 9 : index
    %c0_39 = arith.constant 0 : index
    %30 = vector.load %arg21[%c0_38, %c9, %c0_39] : memref<18x32x32xf32, #tpu.memory_space<vmem>>, vector<16x16x32xf32>
    %c0_40 = arith.constant 0 : index
    %c0_41 = arith.constant 0 : index
    %c64 = arith.constant 64 : index
    %31 = vector.load %arg22[%c0_40, %c0_41, %c64] : memref<16x16x288xf32, #tpu.memory_space<vmem>>, vector<16x16x32xf32>
    tpu.vector_store %arg22[%c0_40, %c0_41, %c64], %30 {strides = array<i32>} : memref<16x16x288xf32, #tpu.memory_space<vmem>>, vector<16x16x32xf32>,
    %c1_42 = arith.constant 1 : index
    %c7_43 = arith.constant 7 : index
    %c0_44 = arith.constant 0 : index
    %32 = vector.load %arg21[%c1_42, %c7_43, %c0_44] : memref<18x32x32xf32, #tpu.memory_space<vmem>>, vector<16x16x32xf32>
    %c0_45 = arith.constant 0 : index
    %c0_46 = arith.constant 0 : index
    %c96 = arith.constant 96 : index
    %33 = vector.load %arg22[%c0_45, %c0_46, %c96] : memref<16x16x288xf32, #tpu.memory_space<vmem>>, vector<16x16x32xf32>
    tpu.vector_store %arg22[%c0_45, %c0_46, %c96], %32 {strides = array<i32>} : memref<16x16x288xf32, #tpu.memory_space<vmem>>, vector<16x16x32xf32>,
    %c1_47 = arith.constant 1 : index
    %c8_48 = arith.constant 8 : index
    %c0_49 = arith.constant 0 : index
    %34 = vector.load %arg21[%c1_47, %c8_48, %c0_49] : memref<18x32x32xf32, #tpu.memory_space<vmem>>, vector<16x16x32xf32>
    %c0_50 = arith.constant 0 : index
    %c0_51 = arith.constant 0 : index
    %c128 = arith.constant 128 : index
    %35 = vector.load %arg22[%c0_50, %c0_51, %c128] : memref<16x16x288xf32, #tpu.memory_space<vmem>>, vector<16x16x32xf32>
    tpu.vector_store %arg22[%c0_50, %c0_51, %c128], %34 {strides = array<i32>} : memref<16x16x288xf32, #tpu.memory_space<vmem>>, vector<16x16x32xf32>,
    %c1_52 = arith.constant 1 : index
    %c9_53 = arith.constant 9 : index
    %c0_54 = arith.constant 0 : index
    %36 = vector.load %arg21[%c1_52, %c9_53, %c0_54] : memref<18x32x32xf32, #tpu.memory_space<vmem>>, vector<16x16x32xf32>
    %c0_55 = arith.constant 0 : index
    %c0_56 = arith.constant 0 : index
    %c160 = arith.constant 160 : index
    %37 = vector.load %arg22[%c0_55, %c0_56, %c160] : memref<16x16x288xf32, #tpu.memory_space<vmem>>, vector<16x16x32xf32>
    tpu.vector_store %arg22[%c0_55, %c0_56, %c160], %36 {strides = array<i32>} : memref<16x16x288xf32, #tpu.memory_space<vmem>>, vector<16x16x32xf32>,
    %c2 = arith.constant 2 : index
    %c7_57 = arith.constant 7 : index
    %c0_58 = arith.constant 0 : index
    %38 = vector.load %arg21[%c2, %c7_57, %c0_58] : memref<18x32x32xf32, #tpu.memory_space<vmem>>, vector<16x16x32xf32>
    %c0_59 = arith.constant 0 : index
    %c0_60 = arith.constant 0 : index
    %c192 = arith.constant 192 : index
    %39 = vector.load %arg22[%c0_59, %c0_60, %c192] : memref<16x16x288xf32, #tpu.memory_space<vmem>>, vector<16x16x32xf32>
    tpu.vector_store %arg22[%c0_59, %c0_60, %c192], %38 {strides = array<i32>} : memref<16x16x288xf32, #tpu.memory_space<vmem>>, vector<16x16x32xf32>,
    %c2_61 = arith.constant 2 : index
    %c8_62 = arith.constant 8 : index
    %c0_63 = arith.constant 0 : index
    %40 = vector.load %arg21[%c2_61, %c8_62, %c0_63] : memref<18x32x32xf32, #tpu.memory_space<vmem>>, vector<16x16x32xf32>
    %c0_64 = arith.constant 0 : index
    %c0_65 = arith.constant 0 : index
    %c224 = arith.constant 224 : index
    %41 = vector.load %arg22[%c0_64, %c0_65, %c224] : memref<16x16x288xf32, #tpu.memory_space<vmem>>, vector<16x16x32xf32>
    tpu.vector_store %arg22[%c0_64, %c0_65, %c224], %40 {strides = array<i32>} : memref<16x16x288xf32, #tpu.memory_space<vmem>>, vector<16x16x32xf32>,
    %c2_66 = arith.constant 2 : index
    %c9_67 = arith.constant 9 : index
    %c0_68 = arith.constant 0 : index
    %42 = vector.load %arg21[%c2_66, %c9_67, %c0_68] : memref<18x32x32xf32, #tpu.memory_space<vmem>>, vector<16x16x32xf32>
    %c0_69 = arith.constant 0 : index
    %c0_70 = arith.constant 0 : index
    %c256 = arith.constant 256 : index
    %43 = vector.load %arg22[%c0_69, %c0_70, %c256] : memref<16x16x288xf32, #tpu.memory_space<vmem>>, vector<16x16x32xf32>
    tpu.vector_store %arg22[%c0_69, %c0_70, %c256], %42 {strides = array<i32>} : memref<16x16x288xf32, #tpu.memory_space<vmem>>, vector<16x16x32xf32>,
    %c0_71 = arith.constant 0 : index
    %c0_72 = arith.constant 0 : index
    %c0_73 = arith.constant 0 : index
    %44 = vector.load %arg22[%c0_71, %c0_72, %c0_73] : memref<16x16x288xf32, #tpu.memory_space<vmem>>, vector<16x16x288xf32>
    %45 = vector.shape_cast %44 : vector<16x16x288xf32> to vector<256x288xf32>
    %46 = arith.truncf %45 : vector<256x288xf32> to vector<256x288xbf16>
    %c0_74 = arith.constant 0 : index
    %c0_75 = arith.constant 0 : index
    %c0_76 = arith.constant 0 : index
    %47 = vector.load %arg5[%c0_74, %c0_75, %c0_76] : memref<1x288x32xbf16, #tpu.memory_space<vmem>>, vector<1x288x32xbf16>
    %48 = vector.shape_cast %47 : vector<1x288x32xbf16> to vector<288x32xbf16>
    %cst_77 = arith.constant dense<0.000000e+00> : vector<256x32xf32>
    %49 = tpu.matmul %46, %48, %cst_77 {dimension_numbers = #tpu.dot_dimension_numbers<[1], [0], [0], [1], [0, 0, 1, 1], [], []>} : vector<256x288xbf16>, vector<288x32xbf16>, vector<256x32xf32> -> vector<256x32xf32>
    %c0_78 = arith.constant 0 : index
    %c0_79 = arith.constant 0 : index
    %c0_80 = arith.constant 0 : index
    %50 = vector.load %arg6[%c0_78, %c0_79, %c0_80] : memref<1x2x32xf32, #tpu.memory_space<vmem>>, vector<1x1x32xf32>
    %51 = vector.shape_cast %50 : vector<1x1x32xf32> to vector<1x32xf32>
    %52 = vector.broadcast %51 : vector<1x32xf32> to vector<256x32xf32>
    %53 = arith.mulf %49, %52 : vector<256x32xf32>
    %c0_81 = arith.constant 0 : index
    %c1_82 = arith.constant 1 : index
    %c0_83 = arith.constant 0 : index
    %54 = vector.load %arg6[%c0_81, %c1_82, %c0_83] : memref<1x2x32xf32, #tpu.memory_space<vmem>>, vector<1x1x32xf32>
    %55 = vector.shape_cast %54 : vector<1x1x32xf32> to vector<1x32xf32>
    %56 = vector.broadcast %55 : vector<1x32xf32> to vector<256x32xf32>
    %57 = arith.addf %53, %56 : vector<256x32xf32>
    %cst_84 = arith.constant 0.000000e+00 : f32
    %58 = vector.broadcast %cst_84 : f32 to vector<256x32xf32>
    %59 = arith.maximumf %57, %58 : vector<256x32xf32>
    %60 = arith.truncf %59 : vector<256x32xf32> to vector<256x32xbf16>
    %c0_85 = arith.constant 0 : index
    %c0_86 = arith.constant 0 : index
    %c0_87 = arith.constant 0 : index
    %61 = vector.load %arg7[%c0_85, %c0_86, %c0_87] : memref<1x32x128xbf16, #tpu.memory_space<vmem>>, vector<1x32x128xbf16>
    %62 = vector.shape_cast %61 : vector<1x32x128xbf16> to vector<32x128xbf16>
    %cst_88 = arith.constant dense<0.000000e+00> : vector<256x128xf32>
    %63 = tpu.matmul %60, %62, %cst_88 {dimension_numbers = #tpu.dot_dimension_numbers<[1], [0], [0], [1], [0, 0, 1, 1], [], []>} : vector<256x32xbf16>, vector<32x128xbf16>, vector<256x128xf32> -> vector<256x128xf32>
    %c0_89 = arith.constant 0 : index
    %c0_90 = arith.constant 0 : index
    %c0_91 = arith.constant 0 : index
    %64 = vector.load %arg8[%c0_89, %c0_90, %c0_91] : memref<1x2x128xf32, #tpu.memory_space<vmem>>, vector<1x1x128xf32>
    %65 = vector.shape_cast %64 : vector<1x1x128xf32> to vector<1x128xf32>
    %66 = vector.broadcast %65 : vector<1x128xf32> to vector<256x128xf32>
    %67 = arith.mulf %63, %66 : vector<256x128xf32>
    %c0_92 = arith.constant 0 : index
    %c1_93 = arith.constant 1 : index
    %c0_94 = arith.constant 0 : index
    %68 = vector.load %arg8[%c0_92, %c1_93, %c0_94] : memref<1x2x128xf32, #tpu.memory_space<vmem>>, vector<1x1x128xf32>
    %69 = vector.shape_cast %68 : vector<1x1x128xf32> to vector<1x128xf32>
    %70 = vector.broadcast %69 : vector<1x128xf32> to vector<256x128xf32>
    %71 = arith.addf %67, %70 : vector<256x128xf32>
    %c0_95 = arith.constant 0 : index
    %c0_96 = arith.constant 0 : index
    %c0_97 = arith.constant 0 : index
    %72 = vector.load %arg9[%c0_95, %c0_96, %c0_97] : memref<1x64x128xbf16, #tpu.memory_space<vmem>>, vector<1x64x128xbf16>
    %73 = vector.shape_cast %72 : vector<1x64x128xbf16> to vector<64x128xbf16>
    %cst_98 = arith.constant dense<0.000000e+00> : vector<256x128xf32>
    %74 = tpu.matmul %10, %73, %cst_98 {dimension_numbers = #tpu.dot_dimension_numbers<[1], [0], [0], [1], [0, 0, 1, 1], [], []>} : vector<256x64xbf16>, vector<64x128xbf16>, vector<256x128xf32> -> vector<256x128xf32>
    %c0_99 = arith.constant 0 : index
    %c0_100 = arith.constant 0 : index
    %c0_101 = arith.constant 0 : index
    %75 = vector.load %arg10[%c0_99, %c0_100, %c0_101] : memref<1x2x128xf32, #tpu.memory_space<vmem>>, vector<1x1x128xf32>
    %76 = vector.shape_cast %75 : vector<1x1x128xf32> to vector<1x128xf32>
    %77 = vector.broadcast %76 : vector<1x128xf32> to vector<256x128xf32>
    %78 = arith.mulf %74, %77 : vector<256x128xf32>
    %c0_102 = arith.constant 0 : index
    %c1_103 = arith.constant 1 : index
    %c0_104 = arith.constant 0 : index
    %79 = vector.load %arg10[%c0_102, %c1_103, %c0_104] : memref<1x2x128xf32, #tpu.memory_space<vmem>>, vector<1x1x128xf32>
    %80 = vector.shape_cast %79 : vector<1x1x128xf32> to vector<1x128xf32>
    %81 = vector.broadcast %80 : vector<1x128xf32> to vector<256x128xf32>
    %82 = arith.addf %78, %81 : vector<256x128xf32>
    %83 = arith.addf %71, %82 : vector<256x128xf32>
    %cst_105 = arith.constant 0.000000e+00 : f32
    %84 = vector.broadcast %cst_105 : f32 to vector<256x128xf32>
    %85 = arith.maximumf %83, %84 : vector<256x128xf32>
    %86 = arith.truncf %85 : vector<256x128xf32> to vector<256x128xbf16>
    %c0_106 = arith.constant 0 : index
    %c0_107 = arith.constant 0 : index
    %c0_108 = arith.constant 0 : index
    %87 = vector.load %arg11[%c0_106, %c0_107, %c0_108] : memref<1x128x32xbf16, #tpu.memory_space<vmem>>, vector<1x128x32xbf16>
    %88 = vector.shape_cast %87 : vector<1x128x32xbf16> to vector<128x32xbf16>
    %cst_109 = arith.constant dense<0.000000e+00> : vector<256x32xf32>
    %89 = tpu.matmul %86, %88, %cst_109 {dimension_numbers = #tpu.dot_dimension_numbers<[1], [0], [0], [1], [0, 0, 1, 1], [], []>} : vector<256x128xbf16>, vector<128x32xbf16>, vector<256x32xf32> -> vector<256x32xf32>
    %c0_110 = arith.constant 0 : index
    %c0_111 = arith.constant 0 : index
    %c0_112 = arith.constant 0 : index
    %90 = vector.load %arg12[%c0_110, %c0_111, %c0_112] : memref<1x2x32xf32, #tpu.memory_space<vmem>>, vector<1x1x32xf32>
    %91 = vector.shape_cast %90 : vector<1x1x32xf32> to vector<1x32xf32>
    %92 = vector.broadcast %91 : vector<1x32xf32> to vector<256x32xf32>
    %93 = arith.mulf %89, %92 : vector<256x32xf32>
    %c0_113 = arith.constant 0 : index
    %c1_114 = arith.constant 1 : index
    %c0_115 = arith.constant 0 : index
    %94 = vector.load %arg12[%c0_113, %c1_114, %c0_115] : memref<1x2x32xf32, #tpu.memory_space<vmem>>, vector<1x1x32xf32>
    %95 = vector.shape_cast %94 : vector<1x1x32xf32> to vector<1x32xf32>
    %96 = vector.broadcast %95 : vector<1x32xf32> to vector<256x32xf32>
    %97 = arith.addf %93, %96 : vector<256x32xf32>
    %cst_116 = arith.constant 0.000000e+00 : f32
    %98 = vector.broadcast %cst_116 : f32 to vector<256x32xf32>
    %99 = arith.maximumf %97, %98 : vector<256x32xf32>
    %100 = vector.shape_cast %99 : vector<256x32xf32> to vector<16x16x32xf32>
    %c1_117 = arith.constant 1 : index
    %c8_118 = arith.constant 8 : index
    %c0_119 = arith.constant 0 : index
    %101 = vector.load %arg21[%c1_117, %c8_118, %c0_119] : memref<18x32x32xf32, #tpu.memory_space<vmem>>, vector<16x16x32xf32>
    tpu.vector_store %arg21[%c1_117, %c8_118, %c0_119], %100 {strides = array<i32>} : memref<18x32x32xf32, #tpu.memory_space<vmem>>, vector<16x16x32xf32>,
    %c0_120 = arith.constant 0 : index
    %c7_121 = arith.constant 7 : index
    %c0_122 = arith.constant 0 : index
    %102 = vector.load %arg21[%c0_120, %c7_121, %c0_122] : memref<18x32x32xf32, #tpu.memory_space<vmem>>, vector<16x16x32xf32>
    %c0_123 = arith.constant 0 : index
    %c0_124 = arith.constant 0 : index
    %c0_125 = arith.constant 0 : index
    %103 = vector.load %arg22[%c0_123, %c0_124, %c0_125] : memref<16x16x288xf32, #tpu.memory_space<vmem>>, vector<16x16x32xf32>
    tpu.vector_store %arg22[%c0_123, %c0_124, %c0_125], %102 {strides = array<i32>} : memref<16x16x288xf32, #tpu.memory_space<vmem>>, vector<16x16x32xf32>,
    %c0_126 = arith.constant 0 : index
    %c8_127 = arith.constant 8 : index
    %c0_128 = arith.constant 0 : index
    %104 = vector.load %arg21[%c0_126, %c8_127, %c0_128] : memref<18x32x32xf32, #tpu.memory_space<vmem>>, vector<16x16x32xf32>
    %c0_129 = arith.constant 0 : index
    %c0_130 = arith.constant 0 : index
    %c32_131 = arith.constant 32 : index
    %105 = vector.load %arg22[%c0_129, %c0_130, %c32_131] : memref<16x16x288xf32, #tpu.memory_space<vmem>>, vector<16x16x32xf32>
    tpu.vector_store %arg22[%c0_129, %c0_130, %c32_131], %104 {strides = array<i32>} : memref<16x16x288xf32, #tpu.memory_space<vmem>>, vector<16x16x32xf32>,
    %c0_132 = arith.constant 0 : index
    %c9_133 = arith.constant 9 : index
    %c0_134 = arith.constant 0 : index
    %106 = vector.load %arg21[%c0_132, %c9_133, %c0_134] : memref<18x32x32xf32, #tpu.memory_space<vmem>>, vector<16x16x32xf32>
    %c0_135 = arith.constant 0 : index
    %c0_136 = arith.constant 0 : index
    %c64_137 = arith.constant 64 : index
    %107 = vector.load %arg22[%c0_135, %c0_136, %c64_137] : memref<16x16x288xf32, #tpu.memory_space<vmem>>, vector<16x16x32xf32>
    tpu.vector_store %arg22[%c0_135, %c0_136, %c64_137], %106 {strides = array<i32>} : memref<16x16x288xf32, #tpu.memory_space<vmem>>, vector<16x16x32xf32>,
    %c1_138 = arith.constant 1 : index
    %c7_139 = arith.constant 7 : index
    %c0_140 = arith.constant 0 : index
    %108 = vector.load %arg21[%c1_138, %c7_139, %c0_140] : memref<18x32x32xf32, #tpu.memory_space<vmem>>, vector<16x16x32xf32>
    %c0_141 = arith.constant 0 : index
    %c0_142 = arith.constant 0 : index
    %c96_143 = arith.constant 96 : index
    %109 = vector.load %arg22[%c0_141, %c0_142, %c96_143] : memref<16x16x288xf32, #tpu.memory_space<vmem>>, vector<16x16x32xf32>
    tpu.vector_store %arg22[%c0_141, %c0_142, %c96_143], %108 {strides = array<i32>} : memref<16x16x288xf32, #tpu.memory_space<vmem>>, vector<16x16x32xf32>,
    %c1_144 = arith.constant 1 : index
    %c8_145 = arith.constant 8 : index
    %c0_146 = arith.constant 0 : index
    %110 = vector.load %arg21[%c1_144, %c8_145, %c0_146] : memref<18x32x32xf32, #tpu.memory_space<vmem>>, vector<16x16x32xf32>
    %c0_147 = arith.constant 0 : index
    %c0_148 = arith.constant 0 : index
    %c128_149 = arith.constant 128 : index
    %111 = vector.load %arg22[%c0_147, %c0_148, %c128_149] : memref<16x16x288xf32, #tpu.memory_space<vmem>>, vector<16x16x32xf32>
    tpu.vector_store %arg22[%c0_147, %c0_148, %c128_149], %110 {strides = array<i32>} : memref<16x16x288xf32, #tpu.memory_space<vmem>>, vector<16x16x32xf32>,
    %c1_150 = arith.constant 1 : index
    %c9_151 = arith.constant 9 : index
    %c0_152 = arith.constant 0 : index
    %112 = vector.load %arg21[%c1_150, %c9_151, %c0_152] : memref<18x32x32xf32, #tpu.memory_space<vmem>>, vector<16x16x32xf32>
    %c0_153 = arith.constant 0 : index
    %c0_154 = arith.constant 0 : index
    %c160_155 = arith.constant 160 : index
    %113 = vector.load %arg22[%c0_153, %c0_154, %c160_155] : memref<16x16x288xf32, #tpu.memory_space<vmem>>, vector<16x16x32xf32>
    tpu.vector_store %arg22[%c0_153, %c0_154, %c160_155], %112 {strides = array<i32>} : memref<16x16x288xf32, #tpu.memory_space<vmem>>, vector<16x16x32xf32>,
    %c2_156 = arith.constant 2 : index
    %c7_157 = arith.constant 7 : index
    %c0_158 = arith.constant 0 : index
    %114 = vector.load %arg21[%c2_156, %c7_157, %c0_158] : memref<18x32x32xf32, #tpu.memory_space<vmem>>, vector<16x16x32xf32>
    %c0_159 = arith.constant 0 : index
    %c0_160 = arith.constant 0 : index
    %c192_161 = arith.constant 192 : index
    %115 = vector.load %arg22[%c0_159, %c0_160, %c192_161] : memref<16x16x288xf32, #tpu.memory_space<vmem>>, vector<16x16x32xf32>
    tpu.vector_store %arg22[%c0_159, %c0_160, %c192_161], %114 {strides = array<i32>} : memref<16x16x288xf32, #tpu.memory_space<vmem>>, vector<16x16x32xf32>,
    %c2_162 = arith.constant 2 : index
    %c8_163 = arith.constant 8 : index
    %c0_164 = arith.constant 0 : index
    %116 = vector.load %arg21[%c2_162, %c8_163, %c0_164] : memref<18x32x32xf32, #tpu.memory_space<vmem>>, vector<16x16x32xf32>
    %c0_165 = arith.constant 0 : index
    %c0_166 = arith.constant 0 : index
    %c224_167 = arith.constant 224 : index
    %117 = vector.load %arg22[%c0_165, %c0_166, %c224_167] : memref<16x16x288xf32, #tpu.memory_space<vmem>>, vector<16x16x32xf32>
    tpu.vector_store %arg22[%c0_165, %c0_166, %c224_167], %116 {strides = array<i32>} : memref<16x16x288xf32, #tpu.memory_space<vmem>>, vector<16x16x32xf32>,
    %c2_168 = arith.constant 2 : index
    %c9_169 = arith.constant 9 : index
    %c0_170 = arith.constant 0 : index
    %118 = vector.load %arg21[%c2_168, %c9_169, %c0_170] : memref<18x32x32xf32, #tpu.memory_space<vmem>>, vector<16x16x32xf32>
    %c0_171 = arith.constant 0 : index
    %c0_172 = arith.constant 0 : index
    %c256_173 = arith.constant 256 : index
    %119 = vector.load %arg22[%c0_171, %c0_172, %c256_173] : memref<16x16x288xf32, #tpu.memory_space<vmem>>, vector<16x16x32xf32>
    tpu.vector_store %arg22[%c0_171, %c0_172, %c256_173], %118 {strides = array<i32>} : memref<16x16x288xf32, #tpu.memory_space<vmem>>, vector<16x16x32xf32>,
    %c0_174 = arith.constant 0 : index
    %c0_175 = arith.constant 0 : index
    %c0_176 = arith.constant 0 : index
    %120 = vector.load %arg22[%c0_174, %c0_175, %c0_176] : memref<16x16x288xf32, #tpu.memory_space<vmem>>, vector<16x16x288xf32>
    %121 = vector.shape_cast %120 : vector<16x16x288xf32> to vector<256x288xf32>
    %122 = arith.truncf %121 : vector<256x288xf32> to vector<256x288xbf16>
    %c0_177 = arith.constant 0 : index
    %c0_178 = arith.constant 0 : index
    %c0_179 = arith.constant 0 : index
    %123 = vector.load %arg13[%c0_177, %c0_178, %c0_179] : memref<1x288x32xbf16, #tpu.memory_space<vmem>>, vector<1x288x32xbf16>
    %124 = vector.shape_cast %123 : vector<1x288x32xbf16> to vector<288x32xbf16>
    %cst_180 = arith.constant dense<0.000000e+00> : vector<256x32xf32>
    %125 = tpu.matmul %122, %124, %cst_180 {dimension_numbers = #tpu.dot_dimension_numbers<[1], [0], [0], [1], [0, 0, 1, 1], [], []>} : vector<256x288xbf16>, vector<288x32xbf16>, vector<256x32xf32> -> vector<256x32xf32>
    %c0_181 = arith.constant 0 : index
    %c0_182 = arith.constant 0 : index
    %c0_183 = arith.constant 0 : index
    %126 = vector.load %arg14[%c0_181, %c0_182, %c0_183] : memref<1x2x32xf32, #tpu.memory_space<vmem>>, vector<1x1x32xf32>
    %127 = vector.shape_cast %126 : vector<1x1x32xf32> to vector<1x32xf32>
    %128 = vector.broadcast %127 : vector<1x32xf32> to vector<256x32xf32>
    %129 = arith.mulf %125, %128 : vector<256x32xf32>
    %c0_184 = arith.constant 0 : index
    %c1_185 = arith.constant 1 : index
    %c0_186 = arith.constant 0 : index
    %130 = vector.load %arg14[%c0_184, %c1_185, %c0_186] : memref<1x2x32xf32, #tpu.memory_space<vmem>>, vector<1x1x32xf32>
    %131 = vector.shape_cast %130 : vector<1x1x32xf32> to vector<1x32xf32>
    %132 = vector.broadcast %131 : vector<1x32xf32> to vector<256x32xf32>
    %133 = arith.addf %129, %132 : vector<256x32xf32>
    %cst_187 = arith.constant 0.000000e+00 : f32
    %134 = vector.broadcast %cst_187 : f32 to vector<256x32xf32>
    %135 = arith.maximumf %133, %134 : vector<256x32xf32>
    %136 = arith.truncf %135 : vector<256x32xf32> to vector<256x32xbf16>
    %c0_188 = arith.constant 0 : index
    %c0_189 = arith.constant 0 : index
    %c0_190 = arith.constant 0 : index
    %137 = vector.load %arg15[%c0_188, %c0_189, %c0_190] : memref<1x32x128xbf16, #tpu.memory_space<vmem>>, vector<1x32x128xbf16>
    %138 = vector.shape_cast %137 : vector<1x32x128xbf16> to vector<32x128xbf16>
    %cst_191 = arith.constant dense<0.000000e+00> : vector<256x128xf32>
    %139 = tpu.matmul %136, %138, %cst_191 {dimension_numbers = #tpu.dot_dimension_numbers<[1], [0], [0], [1], [0, 0, 1, 1], [], []>} : vector<256x32xbf16>, vector<32x128xbf16>, vector<256x128xf32> -> vector<256x128xf32>
    %c0_192 = arith.constant 0 : index
    %c0_193 = arith.constant 0 : index
    %c0_194 = arith.constant 0 : index
    %140 = vector.load %arg16[%c0_192, %c0_193, %c0_194] : memref<1x2x128xf32, #tpu.memory_space<vmem>>, vector<1x1x128xf32>
    %141 = vector.shape_cast %140 : vector<1x1x128xf32> to vector<1x128xf32>
    %142 = vector.broadcast %141 : vector<1x128xf32> to vector<256x128xf32>
    %143 = arith.mulf %139, %142 : vector<256x128xf32>
    %c0_195 = arith.constant 0 : index
    %c1_196 = arith.constant 1 : index
    %c0_197 = arith.constant 0 : index
    %144 = vector.load %arg16[%c0_195, %c1_196, %c0_197] : memref<1x2x128xf32, #tpu.memory_space<vmem>>, vector<1x1x128xf32>
    %145 = vector.shape_cast %144 : vector<1x1x128xf32> to vector<1x128xf32>
    %146 = vector.broadcast %145 : vector<1x128xf32> to vector<256x128xf32>
    %147 = arith.addf %143, %146 : vector<256x128xf32>
    %148 = arith.addf %147, %85 : vector<256x128xf32>
    %cst_198 = arith.constant 0.000000e+00 : f32
    %149 = vector.broadcast %cst_198 : f32 to vector<256x128xf32>
    %150 = arith.maximumf %148, %149 : vector<256x128xf32>
    %151 = vector.shape_cast %150 : vector<256x128xf32> to vector<1x1x16x16x128xf32>
    %c0_199 = arith.constant 0 : index
    %c0_200 = arith.constant 0 : index
    %c0_201 = arith.constant 0 : index
    %c0_202 = arith.constant 0 : index
    %c0_203 = arith.constant 0 : index
    %152 = vector.load %arg19[%c0_199, %c0_200, %c0_201, %c0_202, %c0_203] : memref<1x1x16x16x128xf32, #tpu.memory_space<vmem>>, vector<1x1x16x16x128xf32>
    tpu.vector_store %arg19[%c0_199, %c0_200, %c0_201, %c0_202, %c0_203], %151 {strides = array<i32>} : memref<1x1x16x16x128xf32, #tpu.memory_space<vmem>>, vector<1x1x16x16x128xf32>,
    %153 = arith.truncf %150 : vector<256x128xf32> to vector<256x128xbf16>
    %c0_204 = arith.constant 0 : index
    %c0_205 = arith.constant 0 : index
    %c0_206 = arith.constant 0 : index
    %154 = vector.load %arg17[%c0_204, %c0_205, %c0_206] : memref<1x128x128xbf16, #tpu.memory_space<vmem>>, vector<1x128x128xbf16>
    %155 = vector.shape_cast %154 : vector<1x128x128xbf16> to vector<128x128xbf16>
    %cst_207 = arith.constant dense<0.000000e+00> : vector<256x128xf32>
    %156 = tpu.matmul %153, %155, %cst_207 {dimension_numbers = #tpu.dot_dimension_numbers<[1], [0], [0], [1], [0, 0, 1, 1], [], []>} : vector<256x128xbf16>, vector<128x128xbf16>, vector<256x128xf32> -> vector<256x128xf32>
    %c0_208 = arith.constant 0 : index
    %c0_209 = arith.constant 0 : index
    %c0_210 = arith.constant 0 : index
    %157 = vector.load %arg18[%c0_208, %c0_209, %c0_210] : memref<1x1x128xf32, #tpu.memory_space<vmem>>, vector<1x1x128xf32>
    %158 = vector.shape_cast %157 : vector<1x1x128xf32> to vector<1x128xf32>
    %159 = vector.broadcast %158 : vector<1x128xf32> to vector<256x128xf32>
    %160 = arith.addf %156, %159 : vector<256x128xf32>
    %161 = vector.shape_cast %160 : vector<256x128xf32> to vector<1x1x16x16x128xf32>
    %c0_211 = arith.constant 0 : index
    %c0_212 = arith.constant 0 : index
    %c0_213 = arith.constant 0 : index
    %c0_214 = arith.constant 0 : index
    %c0_215 = arith.constant 0 : index
    %162 = vector.load %arg20[%c0_211, %c0_212, %c0_213, %c0_214, %c0_215] : memref<1x1x16x16x128xf32, #tpu.memory_space<vmem>>, vector<1x1x16x16x128xf32>
    tpu.vector_store %arg20[%c0_211, %c0_212, %c0_213, %c0_214, %c0_215], %161 {strides = array<i32>} : memref<1x1x16x16x128xf32, #tpu.memory_space<vmem>>, vector<1x1x16x16x128xf32>,
    return
  }
  func.func @transform_0(%arg0: i32, %arg1: i32) -> (i32, i32, i32, i32) {
    %c0_i32 = arith.constant 0 : i32
    %c0_i32_0 = arith.constant 0 : i32
    %c0_i32_1 = arith.constant 0 : i32
    %c0_i32_2 = arith.constant 0 : i32
    return %arg1, %c0_i32, %c0_i32_0, %c0_i32_1 : i32, i32, i32, i32
  }
  func.func @transform_1(%arg0: i32, %arg1: i32) -> (i32, i32, i32) {
    %c0_i32 = arith.constant 0 : i32
    %c0_i32_0 = arith.constant 0 : i32
    %c0_i32_1 = arith.constant 0 : i32
    return %arg0, %c0_i32, %c0_i32_0 : i32, i32, i32
  }
  func.func @transform_2(%arg0: i32, %arg1: i32) -> (i32, i32, i32) {
    %c0_i32 = arith.constant 0 : i32
    %c0_i32_0 = arith.constant 0 : i32
    %c0_i32_1 = arith.constant 0 : i32
    return %arg0, %c0_i32, %c0_i32_0 : i32, i32, i32
  }
  func.func @transform_3(%arg0: i32, %arg1: i32) -> (i32, i32, i32) {
    %c0_i32 = arith.constant 0 : i32
    %c0_i32_0 = arith.constant 0 : i32
    %c0_i32_1 = arith.constant 0 : i32
    return %arg0, %c0_i32, %c0_i32_0 : i32, i32, i32
  }
  func.func @transform_4(%arg0: i32, %arg1: i32) -> (i32, i32, i32) {
    %c0_i32 = arith.constant 0 : i32
    %c0_i32_0 = arith.constant 0 : i32
    %c0_i32_1 = arith.constant 0 : i32
    return %arg0, %c0_i32, %c0_i32_0 : i32, i32, i32
  }
  func.func @transform_5(%arg0: i32, %arg1: i32) -> (i32, i32, i32) {
    %c0_i32 = arith.constant 0 : i32
    %c0_i32_0 = arith.constant 0 : i32
    %c0_i32_1 = arith.constant 0 : i32
    return %arg0, %c0_i32, %c0_i32_0 : i32, i32, i32
  }
  func.func @transform_6(%arg0: i32, %arg1: i32) -> (i32, i32, i32) {
    %c0_i32 = arith.constant 0 : i32
    %c0_i32_0 = arith.constant 0 : i32
    %c0_i32_1 = arith.constant 0 : i32
    return %arg0, %c0_i32, %c0_i32_0 : i32, i32, i32
  }
  func.func @transform_7(%arg0: i32, %arg1: i32) -> (i32, i32, i32) {
    %c0_i32 = arith.constant 0 : i32
    %c0_i32_0 = arith.constant 0 : i32
    %c0_i32_1 = arith.constant 0 : i32
    return %arg0, %c0_i32, %c0_i32_0 : i32, i32, i32
  }
  func.func @transform_8(%arg0: i32, %arg1: i32) -> (i32, i32, i32) {
    %c0_i32 = arith.constant 0 : i32
    %c0_i32_0 = arith.constant 0 : i32
    %c0_i32_1 = arith.constant 0 : i32
    return %arg0, %c0_i32, %c0_i32_0 : i32, i32, i32
  }
  func.func @transform_9(%arg0: i32, %arg1: i32) -> (i32, i32, i32) {
    %c0_i32 = arith.constant 0 : i32
    %c0_i32_0 = arith.constant 0 : i32
    %c0_i32_1 = arith.constant 0 : i32
    return %arg0, %c0_i32, %c0_i32_0 : i32, i32, i32
  }
  func.func @transform_10(%arg0: i32, %arg1: i32) -> (i32, i32, i32) {
    %c0_i32 = arith.constant 0 : i32
    %c0_i32_0 = arith.constant 0 : i32
    %c0_i32_1 = arith.constant 0 : i32
    return %arg0, %c0_i32, %c0_i32_0 : i32, i32, i32
  }
  func.func @transform_11(%arg0: i32, %arg1: i32) -> (i32, i32, i32) {
    %c0_i32 = arith.constant 0 : i32
    %c0_i32_0 = arith.constant 0 : i32
    %c0_i32_1 = arith.constant 0 : i32
    return %arg0, %c0_i32, %c0_i32_0 : i32, i32, i32
  }
  func.func @transform_12(%arg0: i32, %arg1: i32) -> (i32, i32, i32) {
    %c0_i32 = arith.constant 0 : i32
    %c0_i32_0 = arith.constant 0 : i32
    %c0_i32_1 = arith.constant 0 : i32
    return %arg0, %c0_i32, %c0_i32_0 : i32, i32, i32
  }
  func.func @transform_13(%arg0: i32, %arg1: i32) -> (i32, i32, i32) {
    %c0_i32 = arith.constant 0 : i32
    %c0_i32_0 = arith.constant 0 : i32
    %c0_i32_1 = arith.constant 0 : i32
    return %arg0, %c0_i32, %c0_i32_0 : i32, i32, i32
  }
  func.func @transform_14(%arg0: i32, %arg1: i32) -> (i32, i32, i32) {
    %c0_i32 = arith.constant 0 : i32
    %c0_i32_0 = arith.constant 0 : i32
    %c0_i32_1 = arith.constant 0 : i32
    return %arg0, %c0_i32, %c0_i32_0 : i32, i32, i32
  }
  func.func @transform_15(%arg0: i32, %arg1: i32) -> (i32, i32, i32) {
    %c0_i32 = arith.constant 0 : i32
    %c0_i32_0 = arith.constant 0 : i32
    %c0_i32_1 = arith.constant 0 : i32
    return %arg0, %c0_i32, %c0_i32_0 : i32, i32, i32
  }
  func.func @transform_16(%arg0: i32, %arg1: i32) -> (i32, i32, i32) {
    %c0_i32 = arith.constant 0 : i32
    %c0_i32_0 = arith.constant 0 : i32
    %c0_i32_1 = arith.constant 0 : i32
    return %arg0, %c0_i32, %c0_i32_0 : i32, i32, i32
  }
  func.func @transform_17(%arg0: i32, %arg1: i32) -> (i32, i32, i32, i32, i32) {
    %c0_i32 = arith.constant 0 : i32
    %c0_i32_0 = arith.constant 0 : i32
    %c0_i32_1 = arith.constant 0 : i32
    %c0_i32_2 = arith.constant 0 : i32
    return %arg0, %arg1, %c0_i32, %c0_i32_0, %c0_i32_1 : i32, i32, i32, i32, i32
  }
  func.func @transform_18(%arg0: i32, %arg1: i32) -> (i32, i32, i32, i32, i32) {
    %c0_i32 = arith.constant 0 : i32
    %c0_i32_0 = arith.constant 0 : i32
    %c0_i32_1 = arith.constant 0 : i32
    %c0_i32_2 = arith.constant 0 : i32
    return %arg0, %arg1, %c0_i32, %c0_i32_0, %c0_i32_1 : i32, i32, i32, i32, i32
  }
}

</mosaic_0001>

<llo_original>
// kernel: tpu_custom_call.1
$region0: #{tpu_custom_call.1}
  #allocation0 [shape = 'u32[]', space=smem, size = 0x4, offset = 0x4, fixed_abs, tag = 'smem constant byte address 0x4 - core index']
  #allocation1 [shape = 'u32[144,128]{1,0:T(1,128)}', space=vmem, size = 0x12000, scoped, tag = 'internal scratch']
  #allocation2 [shape = 'f32[18,32,32]{2,1,0:T(8,128)}', space=vmem, size = 0x48000, scoped, tag = 'scratch operand']
  #allocation3 [shape = 'f32[16,16,288]{2,1,0:T(8,128)}', space=vmem, size = 0x60000, scoped, tag = 'scratch operand']
  %s0 = inlined_call_operand.vmem [shape: f32[2,16,16,64], index: 0, kind: input, shape index: {}]
  %s1 = inlined_call_operand.vmem [shape: bf16[3,64,32], index: 1, kind: input, shape index: {}]
  %s2 = inlined_call_operand.vmem [shape: f32[3,2,32], index: 2, kind: input, shape index: {}]
  %s3 = inlined_call_operand.vmem [shape: bf16[3,288,32], index: 3, kind: input, shape index: {}]
  %s4 = inlined_call_operand.vmem [shape: f32[3,2,32], index: 4, kind: input, shape index: {}]
  %s5 = inlined_call_operand.vmem [shape: bf16[3,32,128], index: 5, kind: input, shape index: {}]
  %s6 = inlined_call_operand.vmem [shape: f32[3,2,128], index: 6, kind: input, shape index: {}]
  %s7 = inlined_call_operand.vmem [shape: bf16[3,64,128], index: 7, kind: input, shape index: {}]
  %s8 = inlined_call_operand.vmem [shape: f32[3,2,128], index: 8, kind: input, shape index: {}]
  %s9 = inlined_call_operand.vmem [shape: bf16[3,128,32], index: 9, kind: input, shape index: {}]
  %s10 = inlined_call_operand.vmem [shape: f32[3,2,32], index: 10, kind: input, shape index: {}]
  %s11 = inlined_call_operand.vmem [shape: bf16[3,288,32], index: 11, kind: input, shape index: {}]
  %s12 = inlined_call_operand.vmem [shape: f32[3,2,32], index: 12, kind: input, shape index: {}]
  %s13 = inlined_call_operand.vmem [shape: bf16[3,32,128], index: 13, kind: input, shape index: {}]
  %s14 = inlined_call_operand.vmem [shape: f32[3,2,128], index: 14, kind: input, shape index: {}]
  %s15 = inlined_call_operand.vmem [shape: bf16[3,128,128], index: 15, kind: input, shape index: {}]
  %s16 = inlined_call_operand.vmem [shape: f32[3,1,128], index: 16, kind: input, shape index: {}]
  %s17 = inlined_call_operand.hbm [shape: f32[3,2,16,16,128], index: 17, kind: output, shape index: {0}]
  %s18 = inlined_call_operand.hbm [shape: f32[3,2,16,16,128], index: 18, kind: output, shape index: {1}]
  %19 = xla_tuple %s17, %s18
  %s20 = sld [smem:[#allocation0]]
  $region109: #{tpu_custom_call.1} parent=0
    _
  %s22 = ssub.s32 1, %s20
  %s23 = scalar_select 0, %s22, %s20
  $region1: #{tpu_custom_call.1} parent=0
    #allocation4 [shape = 'u8[262144]{0}', space=vmem, size = 0x40000, scoped, tag = 'output window, operand 0']
    #allocation5 [shape = 's32[2]{0}', space=sflag, size = 0x8, scoped, tag = 'scoped memory for tpu_custom_call.1']
    #allocation6 [shape = 'u8[262144]{0}', space=vmem, size = 0x40000, scoped, tag = 'output window, operand 1']
    #allocation7 [shape = 's32[2]{0}', space=sflag, size = 0x8, scoped, tag = 'scoped memory for tpu_custom_call.1']
    %24 = vsyncpa [#allocation5], 0
    %s25 = scalar_lea.sflag [#allocation5], 1
    %26 = vsyncpa %s25, 0
    %27 = vsyncpa [#allocation7], 0
    %s28 = scalar_lea.sflag [#allocation7], 1
    %29 = vsyncpa %s28, 0
    loop: start=0, step=1, limit=8
    $region2: #{tpu_custom_call.1} parent=1 // loop_pre_header
      _
    $region3: #{tpu_custom_call.1} parent=1 // loop_header
      %s31 = sphi 0, %s35
      %p32 = scmp.ge.s32.totalorder %s31, 8
      %s38 = sphi 0, %s50
      %s39 = sphi 0, %s46
      %s40 = sphi 0, %s38
      %s41 = sphi 0, %s39
      %s42 = sphi 0, %s40
      %s43 = sphi 0, %s41
      %s53 = sphi 0, %s55
      %s56 = sphi 0, %s53
      %s57 = sphi 0, %s56
      %s73 = sphi 0, %s57
      %s79 = sphi 0, %s81
      %s82 = sphi 0, %s79
      %s83 = sphi 0, %s82
      %s99 = sphi 0, %s83
      %s105 = sphi 0, %s107
      %s108 = sphi 0, %s105
      %s109 = sphi 0, %s108
      %s125 = sphi 0, %s109
      %s131 = sphi 0, %s133
      %s134 = sphi 0, %s131
      %s135 = sphi 0, %s134
      %s151 = sphi 0, %s135
      %s157 = sphi 0, %s159
      %s160 = sphi 0, %s157
      %s161 = sphi 0, %s160
      %s177 = sphi 0, %s161
      %s183 = sphi 0, %s185
      %s186 = sphi 0, %s183
      %s187 = sphi 0, %s186
      %s203 = sphi 0, %s187
      %s209 = sphi 0, %s211
      %s212 = sphi 0, %s209
      %s213 = sphi 0, %s212
      %s229 = sphi 0, %s213
      %s235 = sphi 0, %s237
      %s238 = sphi 0, %s235
      %s239 = sphi 0, %s238
      %s255 = sphi 0, %s239
      %s261 = sphi 0, %s263
      %s264 = sphi 0, %s261
      %s265 = sphi 0, %s264
      %s281 = sphi 0, %s265
      %s287 = sphi 0, %s289
      %s290 = sphi 0, %s287
      %s291 = sphi 0, %s290
      %s307 = sphi 0, %s291
      %s313 = sphi 0, %s315
      %s316 = sphi 0, %s313
      %s317 = sphi 0, %s316
      %s333 = sphi 0, %s317
      %s339 = sphi 0, %s341
      %s342 = sphi 0, %s339
      %s343 = sphi 0, %s342
      %s359 = sphi 0, %s343
      %s365 = sphi 0, %s367
      %s368 = sphi 0, %s365
      %s369 = sphi 0, %s368
      %s385 = sphi 0, %s369
      %s391 = sphi 0, %s393
      %s394 = sphi 0, %s391
      %s395 = sphi 0, %s394
      %s411 = sphi 0, %s395
      %s417 = sphi 0, %s419
      %s420 = sphi 0, %s417
      %s421 = sphi 0, %s420
      %s437 = sphi 0, %s421
      %s443 = sphi 0, %s445
      %s446 = sphi 0, %s443
      %s447 = sphi 0, %s446
      %s463 = sphi 0, %s447
      %s469 = sphi 0, %s471
      %s472 = sphi 0, %s469
      %s473 = sphi 0, %s472
      %s489 = sphi 0, %s473
      %s497 = sphi 0, %s499
      %s500 = sphi 0, %s497
      %s501 = sphi 0, %s500
      %s517 = sphi 0, %s501
      %s525 = sphi 0, %s527
      %s528 = sphi 0, %s525
      %s529 = sphi 0, %s528
      %s545 = sphi 0, %s529
    $region4: #{tpu_custom_call.1} parent=1 // loop_header_branch
      %34 = sbr.rel (%p32) target = $region8
    $region5: #{tpu_custom_call.1} parent=1 // loop_body
      %s36 = ssub.s32 %s31, 1
      %s37 = ssub.s32 %s31, 2
      %s44 = sadd.s32 1, %s39
      %p45 = scmp.ge.s32.totalorder %s44, 2
      %s46 = scalar_select %p45, 0, %s44
      %s47 = sadd.s32 1, %s38
      %s48 = scalar_select %p45, %s47, %s38
      %p49 = scmp.ge.s32.totalorder %s48, 3
      %s50 = scalar_select %p49, 0, %s48
      %s51 = ssub.s32 %s39, %s46
      %p52 = scmp.eq.s32.totalorder %s51, 0
      %s54 = sadd.s32 %s53, 1
      %s55 = scalar_select %p52, %s53, %s54
      %p58 = pneg %p52
      %p59 = scmp.eq.s32.totalorder %s31, 5
      %p60 = por %p58, %p59
      %p61 = scmp.ne.s32.totalorder %s53, %s56
      %p62 = scmp.eq.s32.totalorder %s31, 0
      %p63 = por %p61, %p62
      %p64 = scmp.ne.s32.totalorder %s53, %s56
      %p65 = scmp.eq.s32.totalorder %s36, 5
      %p66 = por %p64, %p65
      %p67 = scmp.ne.s32.totalorder %s56, %s57
      %p68 = scmp.eq.s32.totalorder %s36, 0
      %p69 = por %p67, %p68
      %p70 = scmp.ne.s32.totalorder %s56, %s57
      %p71 = scmp.eq.s32.totalorder %s37, 5
      %p72 = por %p70, %p71
      %p74 = scmp.ne.s32.totalorder %s57, %s73
      %p75 = scmp.eq.s32.totalorder %s37, 0
      %p76 = por %p74, %p75
      %s77 = ssub.s32 %s38, %s50
      %p78 = scmp.eq.s32.totalorder %s77, 0
      %s80 = sadd.s32 %s79, 1
      %s81 = scalar_select %p78, %s79, %s80
      %p84 = pneg %p78
      %p85 = scmp.eq.s32.totalorder %s31, 5
      %p86 = por %p84, %p85
      %p87 = scmp.ne.s32.totalorder %s79, %s82
      %p88 = scmp.eq.s32.totalorder %s31, 0
      %p89 = por %p87, %p88
      %p90 = scmp.ne.s32.totalorder %s79, %s82
      %p91 = scmp.eq.s32.totalorder %s36, 5
      %p92 = por %p90, %p91
      %p93 = scmp.ne.s32.totalorder %s82, %s83
      %p94 = scmp.eq.s32.totalorder %s36, 0
      %p95 = por %p93, %p94
      %p96 = scmp.ne.s32.totalorder %s82, %s83
      %p97 = scmp.eq.s32.totalorder %s37, 5
      %p98 = por %p96, %p97
      %p100 = scmp.ne.s32.totalorder %s83, %s99
      %p101 = scmp.eq.s32.totalorder %s37, 0
      %p102 = por %p100, %p101
      %s103 = ssub.s32 %s38, %s50
      %p104 = scmp.eq.s32.totalorder %s103, 0
      %s106 = sadd.s32 %s105, 1
      %s107 = scalar_select %p104, %s105, %s106
      %p110 = pneg %p104
      %p111 = scmp.eq.s32.totalorder %s31, 5
      %p112 = por %p110, %p111
      %p113 = scmp.ne.s32.totalorder %s105, %s108
      %p114 = scmp.eq.s32.totalorder %s31, 0
      %p115 = por %p113, %p114
      %p116 = scmp.ne.s32.totalorder %s105, %s108
      %p117 = scmp.eq.s32.totalorder %s36, 5
      %p118 = por %p116, %p117
      %p119 = scmp.ne.s32.totalorder %s108, %s109
      %p120 = scmp.eq.s32.totalorder %s36, 0
      %p121 = por %p119, %p120
      %p122 = scmp.ne.s32.totalorder %s108, %s109
      %p123 = scmp.eq.s32.totalorder %s37, 5
      %p124 = por %p122, %p123
      %p126 = scmp.ne.s32.totalorder %s109, %s125
      %p127 = scmp.eq.s32.totalorder %s37, 0
      %p128 = por %p126, %p127
      %s129 = ssub.s32 %s38, %s50
      %p130 = scmp.eq.s32.totalorder %s129, 0
      %s132 = sadd.s32 %s131, 1
      %s133 = scalar_select %p130, %s131, %s132
      %p136 = pneg %p130
      %p137 = scmp.eq.s32.totalorder %s31, 5
      %p138 = por %p136, %p137
      %p139 = scmp.ne.s32.totalorder %s131, %s134
      %p140 = scmp.eq.s32.totalorder %s31, 0
      %p141 = por %p139, %p140
      %p142 = scmp.ne.s32.totalorder %s131, %s134
      %p143 = scmp.eq.s32.totalorder %s36, 5
      %p144 = por %p142, %p143
      %p145 = scmp.ne.s32.totalorder %s134, %s135
      %p146 = scmp.eq.s32.totalorder %s36, 0
      %p147 = por %p145, %p146
      %p148 = scmp.ne.s32.totalorder %s134, %s135
      %p149 = scmp.eq.s32.totalorder %s37, 5
      %p150 = por %p148, %p149
      %p152 = scmp.ne.s32.totalorder %s135, %s151
      %p153 = scmp.eq.s32.totalorder %s37, 0
      %p154 = por %p152, %p153
      %s155 = ssub.s32 %s38, %s50
      %p156 = scmp.eq.s32.totalorder %s155, 0
      %s158 = sadd.s32 %s157, 1
      %s159 = scalar_select %p156, %s157, %s158
      %p162 = pneg %p156
      %p163 = scmp.eq.s32.totalorder %s31, 5
      %p164 = por %p162, %p163
      %p165 = scmp.ne.s32.totalorder %s157, %s160
      %p166 = scmp.eq.s32.totalorder %s31, 0
      %p167 = por %p165, %p166
      %p168 = scmp.ne.s32.totalorder %s157, %s160
      %p169 = scmp.eq.s32.totalorder %s36, 5
      %p170 = por %p168, %p169
      %p171 = scmp.ne.s32.totalorder %s160, %s161
      %p172 = scmp.eq.s32.totalorder %s36, 0
      %p173 = por %p171, %p172
      %p174 = scmp.ne.s32.totalorder %s160, %s161
      %p175 = scmp.eq.s32.totalorder %s37, 5
      %p176 = por %p174, %p175
      %p178 = scmp.ne.s32.totalorder %s161, %s177
      %p179 = scmp.eq.s32.totalorder %s37, 0
      %p180 = por %p178, %p179
      %s181 = ssub.s32 %s38, %s50
      %p182 = scmp.eq.s32.totalorder %s181, 0
      %s184 = sadd.s32 %s183, 1
      %s185 = scalar_select %p182, %s183, %s184
      %p188 = pneg %p182
      %p189 = scmp.eq.s32.totalorder %s31, 5
      %p190 = por %p188, %p189
      %p191 = scmp.ne.s32.totalorder %s183, %s186
      %p192 = scmp.eq.s32.totalorder %s31, 0
      %p193 = por %p191, %p192
      %p194 = scmp.ne.s32.totalorder %s183, %s186
      %p195 = scmp.eq.s32.totalorder %s36, 5
      %p196 = por %p194, %p195
      %p197 = scmp.ne.s32.totalorder %s186, %s187
      %p198 = scmp.eq.s32.totalorder %s36, 0
      %p199 = por %p197, %p198
      %p200 = scmp.ne.s32.totalorder %s186, %s187
      %p201 = scmp.eq.s32.totalorder %s37, 5
      %p202 = por %p200, %p201
      %p204 = scmp.ne.s32.totalorder %s187, %s203
      %p205 = scmp.eq.s32.totalorder %s37, 0
      %p206 = por %p204, %p205
      %s207 = ssub.s32 %s38, %s50
      %p208 = scmp.eq.s32.totalorder %s207, 0
      %s210 = sadd.s32 %s209, 1
      %s211 = scalar_select %p208, %s209, %s210
      %p214 = pneg %p208
      %p215 = scmp.eq.s32.totalorder %s31, 5
      %p216 = por %p214, %p215
      %p217 = scmp.ne.s32.totalorder %s209, %s212
      %p218 = scmp.eq.s32.totalorder %s31, 0
      %p219 = por %p217, %p218
      %p220 = scmp.ne.s32.totalorder %s209, %s212
      %p221 = scmp.eq.s32.totalorder %s36, 5
      %p222 = por %p220, %p221
      %p223 = scmp.ne.s32.totalorder %s212, %s213
      %p224 = scmp.eq.s32.totalorder %s36, 0
      %p225 = por %p223, %p224
      %p226 = scmp.ne.s32.totalorder %s212, %s213
      %p227 = scmp.eq.s32.totalorder %s37, 5
      %p228 = por %p226, %p227
      %p230 = scmp.ne.s32.totalorder %s213, %s229
      %p231 = scmp.eq.s32.totalorder %s37, 0
      %p232 = por %p230, %p231
      %s233 = ssub.s32 %s38, %s50
      %p234 = scmp.eq.s32.totalorder %s233, 0
      %s236 = sadd.s32 %s235, 1
      %s237 = scalar_select %p234, %s235, %s236
      %p240 = pneg %p234
      %p241 = scmp.eq.s32.totalorder %s31, 5
      %p242 = por %p240, %p241
      %p243 = scmp.ne.s32.totalorder %s235, %s238
      %p244 = scmp.eq.s32.totalorder %s31, 0
      %p245 = por %p243, %p244
      %p246 = scmp.ne.s32.totalorder %s235, %s238
      %p247 = scmp.eq.s32.totalorder %s36, 5
      %p248 = por %p246, %p247
      %p249 = scmp.ne.s32.totalorder %s238, %s239
      %p250 = scmp.eq.s32.totalorder %s36, 0
      %p251 = por %p249, %p250
      %p252 = scmp.ne.s32.totalorder %s238, %s239
      %p253 = scmp.eq.s32.totalorder %s37, 5
      %p254 = por %p252, %p253
      %p256 = scmp.ne.s32.totalorder %s239, %s255
      %p257 = scmp.eq.s32.totalorder %s37, 0
      %p258 = por %p256, %p257
      %s259 = ssub.s32 %s38, %s50
      %p260 = scmp.eq.s32.totalorder %s259, 0
      %s262 = sadd.s32 %s261, 1
      %s263 = scalar_select %p260, %s261, %s262
      %p266 = pneg %p260
      %p267 = scmp.eq.s32.totalorder %s31, 5
      %p268 = por %p266, %p267
      %p269 = scmp.ne.s32.totalorder %s261, %s264
      %p270 = scmp.eq.s32.totalorder %s31, 0
      %p271 = por %p269, %p270
      %p272 = scmp.ne.s32.totalorder %s261, %s264
      %p273 = scmp.eq.s32.totalorder %s36, 5
      %p274 = por %p272, %p273
      %p275 = scmp.ne.s32.totalorder %s264, %s265
      %p276 = scmp.eq.s32.totalorder %s36, 0
      %p277 = por %p275, %p276
      %p278 = scmp.ne.s32.totalorder %s264, %s265
      %p279 = scmp.eq.s32.totalorder %s37, 5
      %p280 = por %p278, %p279
      %p282 = scmp.ne.s32.totalorder %s265, %s281
      %p283 = scmp.eq.s32.totalorder %s37, 0
      %p284 = por %p282, %p283
      %s285 = ssub.s32 %s38, %s50
      %p286 = scmp.eq.s32.totalorder %s285, 0
      %s288 = sadd.s32 %s287, 1
      %s289 = scalar_select %p286, %s287, %s288
      %p292 = pneg %p286
      %p293 = scmp.eq.s32.totalorder %s31, 5
      %p294 = por %p292, %p293
      %p295 = scmp.ne.s32.totalorder %s287, %s290
      %p296 = scmp.eq.s32.totalorder %s31, 0
      %p297 = por %p295, %p296
      %p298 = scmp.ne.s32.totalorder %s287, %s290
      %p299 = scmp.eq.s32.totalorder %s36, 5
      %p300 = por %p298, %p299
      %p301 = scmp.ne.s32.totalorder %s290, %s291
      %p302 = scmp.eq.s32.totalorder %s36, 0
      %p303 = por %p301, %p302
      %p304 = scmp.ne.s32.totalorder %s290, %s291
      %p305 = scmp.eq.s32.totalorder %s37, 5
      %p306 = por %p304, %p305
      %p308 = scmp.ne.s32.totalorder %s291, %s307
      %p309 = scmp.eq.s32.totalorder %s37, 0
      %p310 = por %p308, %p309
      %s311 = ssub.s32 %s38, %s50
      %p312 = scmp.eq.s32.totalorder %s311, 0
      %s314 = sadd.s32 %s313, 1
      %s315 = scalar_select %p312, %s313, %s314
      %p318 = pneg %p312
      %p319 = scmp.eq.s32.totalorder %s31, 5
      %p320 = por %p318, %p319
      %p321 = scmp.ne.s32.totalorder %s313, %s316
      %p322 = scmp.eq.s32.totalorder %s31, 0
      %p323 = por %p321, %p322
      %p324 = scmp.ne.s32.totalorder %s313, %s316
      %p325 = scmp.eq.s32.totalorder %s36, 5
      %p326 = por %p324, %p325
      %p327 = scmp.ne.s32.totalorder %s316, %s317
      %p328 = scmp.eq.s32.totalorder %s36, 0
      %p329 = por %p327, %p328
      %p330 = scmp.ne.s32.totalorder %s316, %s317
      %p331 = scmp.eq.s32.totalorder %s37, 5
      %p332 = por %p330, %p331
      %p334 = scmp.ne.s32.totalorder %s317, %s333
      %p335 = scmp.eq.s32.totalorder %s37, 0
      %p336 = por %p334, %p335
      %s337 = ssub.s32 %s38, %s50
      %p338 = scmp.eq.s32.totalorder %s337, 0
      %s340 = sadd.s32 %s339, 1
      %s341 = scalar_select %p338, %s339, %s340
      %p344 = pneg %p338
      %p345 = scmp.eq.s32.totalorder %s31, 5
      %p346 = por %p344, %p345
      %p347 = scmp.ne.s32.totalorder %s339, %s342
      %p348 = scmp.eq.s32.totalorder %s31, 0
      %p349 = por %p347, %p348
      %p350 = scmp.ne.s32.totalorder %s339, %s342
      %p351 = scmp.eq.s32.totalorder %s36, 5
      %p352 = por %p350, %p351
      %p353 = scmp.ne.s32.totalorder %s342, %s343
      %p354 = scmp.eq.s32.totalorder %s36, 0
      %p355 = por %p353, %p354
      %p356 = scmp.ne.s32.totalorder %s342, %s343
      %p357 = scmp.eq.s32.totalorder %s37, 5
      %p358 = por %p356, %p357
      %p360 = scmp.ne.s32.totalorder %s343, %s359
      %p361 = scmp.eq.s32.totalorder %s37, 0
      %p362 = por %p360, %p361
      %s363 = ssub.s32 %s38, %s50
      %p364 = scmp.eq.s32.totalorder %s363, 0
      %s366 = sadd.s32 %s365, 1
      %s367 = scalar_select %p364, %s365, %s366
      %p370 = pneg %p364
      %p371 = scmp.eq.s32.totalorder %s31, 5
      %p372 = por %p370, %p371
      %p373 = scmp.ne.s32.totalorder %s365, %s368
      %p374 = scmp.eq.s32.totalorder %s31, 0
      %p375 = por %p373, %p374
      %p376 = scmp.ne.s32.totalorder %s365, %s368
      %p377 = scmp.eq.s32.totalorder %s36, 5
      %p378 = por %p376, %p377
      %p379 = scmp.ne.s32.totalorder %s368, %s369
      %p380 = scmp.eq.s32.totalorder %s36, 0
      %p381 = por %p379, %p380
      %p382 = scmp.ne.s32.totalorder %s368, %s369
      %p383 = scmp.eq.s32.totalorder %s37, 5
      %p384 = por %p382, %p383
      %p386 = scmp.ne.s32.totalorder %s369, %s385
      %p387 = scmp.eq.s32.totalorder %s37, 0
      %p388 = por %p386, %p387
      %s389 = ssub.s32 %s38, %s50
      %p390 = scmp.eq.s32.totalorder %s389, 0
      %s392 = sadd.s32 %s391, 1
      %s393 = scalar_select %p390, %s391, %s392
      %p396 = pneg %p390
      %p397 = scmp.eq.s32.totalorder %s31, 5
      %p398 = por %p396, %p397
      %p399 = scmp.ne.s32.totalorder %s391, %s394
      %p400 = scmp.eq.s32.totalorder %s31, 0
      %p401 = por %p399, %p400
      %p402 = scmp.ne.s32.totalorder %s391, %s394
      %p403 = scmp.eq.s32.totalorder %s36, 5
      %p404 = por %p402, %p403
      %p405 = scmp.ne.s32.totalorder %s394, %s395
      %p406 = scmp.eq.s32.totalorder %s36, 0
      %p407 = por %p405, %p406
      %p408 = scmp.ne.s32.totalorder %s394, %s395
      %p409 = scmp.eq.s32.totalorder %s37, 5
      %p410 = por %p408, %p409
      %p412 = scmp.ne.s32.totalorder %s395, %s411
      %p413 = scmp.eq.s32.totalorder %s37, 0
      %p414 = por %p412, %p413
      %s415 = ssub.s32 %s38, %s50
      %p416 = scmp.eq.s32.totalorder %s415, 0
      %s418 = sadd.s32 %s417, 1
      %s419 = scalar_select %p416, %s417, %s418
      %p422 = pneg %p416
      %p423 = scmp.eq.s32.totalorder %s31, 5
      %p424 = por %p422, %p423
      %p425 = scmp.ne.s32.totalorder %s417, %s420
      %p426 = scmp.eq.s32.totalorder %s31, 0
      %p427 = por %p425, %p426
      %p428 = scmp.ne.s32.totalorder %s417, %s420
      %p429 = scmp.eq.s32.totalorder %s36, 5
      %p430 = por %p428, %p429
      %p431 = scmp.ne.s32.totalorder %s420, %s421
      %p432 = scmp.eq.s32.totalorder %s36, 0
      %p433 = por %p431, %p432
      %p434 = scmp.ne.s32.totalorder %s420, %s421
      %p435 = scmp.eq.s32.totalorder %s37, 5
      %p436 = por %p434, %p435
      %p438 = scmp.ne.s32.totalorder %s421, %s437
      %p439 = scmp.eq.s32.totalorder %s37, 0
      %p440 = por %p438, %p439
      %s441 = ssub.s32 %s38, %s50
      %p442 = scmp.eq.s32.totalorder %s441, 0
      %s444 = sadd.s32 %s443, 1
      %s445 = scalar_select %p442, %s443, %s444
      %p448 = pneg %p442
      %p449 = scmp.eq.s32.totalorder %s31, 5
      %p450 = por %p448, %p449
      %p451 = scmp.ne.s32.totalorder %s443, %s446
      %p452 = scmp.eq.s32.totalorder %s31, 0
      %p453 = por %p451, %p452
      %p454 = scmp.ne.s32.totalorder %s443, %s446
      %p455 = scmp.eq.s32.totalorder %s36, 5
      %p456 = por %p454, %p455
      %p457 = scmp.ne.s32.totalorder %s446, %s447
      %p458 = scmp.eq.s32.totalorder %s36, 0
      %p459 = por %p457, %p458
      %p460 = scmp.ne.s32.totalorder %s446, %s447
      %p461 = scmp.eq.s32.totalorder %s37, 5
      %p462 = por %p460, %p461
      %p464 = scmp.ne.s32.totalorder %s447, %s463
      %p465 = scmp.eq.s32.totalorder %s37, 0
      %p466 = por %p464, %p465
      %s467 = ssub.s32 %s38, %s50
      %p468 = scmp.eq.s32.totalorder %s467, 0
      %s470 = sadd.s32 %s469, 1
      %s471 = scalar_select %p468, %s469, %s470
      %p474 = pneg %p468
      %p475 = scmp.eq.s32.totalorder %s31, 5
      %p476 = por %p474, %p475
      %p477 = scmp.ne.s32.totalorder %s469, %s472
      %p478 = scmp.eq.s32.totalorder %s31, 0
      %p479 = por %p477, %p478
      %p480 = scmp.ne.s32.totalorder %s469, %s472
      %p481 = scmp.eq.s32.totalorder %s36, 5
      %p482 = por %p480, %p481
      %p483 = scmp.ne.s32.totalorder %s472, %s473
      %p484 = scmp.eq.s32.totalorder %s36, 0
      %p485 = por %p483, %p484
      %p486 = scmp.ne.s32.totalorder %s472, %s473
      %p487 = scmp.eq.s32.totalorder %s37, 5
      %p488 = por %p486, %p487
      %p490 = scmp.ne.s32.totalorder %s473, %s489
      %p491 = scmp.eq.s32.totalorder %s37, 0
      %p492 = por %p490, %p491
      %s493 = ssub.s32 %s38, %s50
      %s494 = ssub.s32 %s39, %s46
      %s495 = sor.u32 %s493, %s494
      %p496 = scmp.eq.s32.totalorder %s495, 0
      %s498 = sadd.s32 %s497, 1
      %s499 = scalar_select %p496, %s497, %s498
      %p502 = pneg %p496
      %p503 = scmp.eq.s32.totalorder %s31, 5
      %p504 = por %p502, %p503
      %p505 = scmp.ne.s32.totalorder %s497, %s500
      %p506 = scmp.eq.s32.totalorder %s31, 0
      %p507 = por %p505, %p506
      %p508 = scmp.ne.s32.totalorder %s497, %s500
      %p509 = scmp.eq.s32.totalorder %s36, 5
      %p510 = por %p508, %p509
      %p511 = scmp.ne.s32.totalorder %s500, %s501
      %p512 = scmp.eq.s32.totalorder %s36, 0
      %p513 = por %p511, %p512
      %p514 = scmp.ne.s32.totalorder %s500, %s501
      %p515 = scmp.eq.s32.totalorder %s37, 5
      %p516 = por %p514, %p515
      %p518 = scmp.ne.s32.totalorder %s501, %s517
      %p519 = scmp.eq.s32.totalorder %s37, 0
      %p520 = por %p518, %p519
      %s521 = ssub.s32 %s38, %s50
      %s522 = ssub.s32 %s39, %s46
      %s523 = sor.u32 %s521, %s522
      %p524 = scmp.eq.s32.totalorder %s523, 0
      %s526 = sadd.s32 %s525, 1
      %s527 = scalar_select %p524, %s525, %s526
      %p530 = pneg %p524
      %p531 = scmp.eq.s32.totalorder %s31, 5
      %p532 = por %p530, %p531
      %p533 = scmp.ne.s32.totalorder %s525, %s528
      %p534 = scmp.eq.s32.totalorder %s31, 0
      %p535 = por %p533, %p534
      %p536 = scmp.ne.s32.totalorder %s525, %s528
      %p537 = scmp.eq.s32.totalorder %s36, 5
      %p538 = por %p536, %p537
      %p539 = scmp.ne.s32.totalorder %s528, %s529
      %p540 = scmp.eq.s32.totalorder %s36, 0
      %p541 = por %p539, %p540
      %p542 = scmp.ne.s32.totalorder %s528, %s529
      %p543 = scmp.eq.s32.totalorder %s37, 5
      %p544 = por %p542, %p543
      %p546 = scmp.ne.s32.totalorder %s529, %s545
      %p547 = scmp.eq.s32.totalorder %s37, 0
      %p548 = por %p546, %p547
      %p549 = scmp.le.s32.totalorder 1, %s31
      %p550 = scmp.lt.s32.totalorder %s31, 7
      %p551 = pnand %p549, %p550
      %p552 = pneg %p551
      // Predicated region
      $region9: #{tpu_custom_call.1} parent=5 // pred_check
        _
      $region10: #{tpu_custom_call.1} parent=5 // pred_check_branch
        %554 = sbr.rel (%p551) target = $region12
      $region11: #{tpu_custom_call.1} parent=5 // pred_region
        %s555 = ssub.s32 %s31, 1
      $region12: #{tpu_custom_call.1} parent=5 // pred_fallthru
        _
      %p556 = scmp.lt.s32.totalorder %s31, 6
      // Predicated region
      $region13: #{tpu_custom_call.1} parent=5 // pred_check
        %p557 = pneg %p556
      $region14: #{tpu_custom_call.1} parent=5 // pred_check_branch
        %559 = sbr.rel (%p557) target = $region16
      $region15: #{tpu_custom_call.1} parent=5 // pred_region
        // Predicated region
        $region17: #{tpu_custom_call.1} parent=15 // pred_check
          %p560 = pneg %p63
        $region18: #{tpu_custom_call.1} parent=15 // pred_check_branch
          %562 = sbr.rel (%p560) target = $region20
        $region19: #{tpu_custom_call.1} parent=15 // pred_region
          %p563 = scmp.lt.s32.totalorder %s39, 1
          %s564 = scalar_select %p563, %s39, 1
          %s565 = smul.addr %s564, 32
          %s566 = smul.addr %s565, 8
          %s567 = scalar_lea.vmem %s0, %s566
        $region20: #{tpu_custom_call.1} parent=15 // pred_fallthru
          _
        // Predicated region
        $region21: #{tpu_custom_call.1} parent=15 // pred_check
          %p568 = pneg %p89
        $region22: #{tpu_custom_call.1} parent=15 // pred_check_branch
          %570 = sbr.rel (%p568) target = $region24
        $region23: #{tpu_custom_call.1} parent=15 // pred_region
          %p571 = scmp.lt.s32.totalorder %s38, 2
          %s572 = scalar_select %p571, %s38, 2
          %s573 = smul.addr %s572, 8
          %s574 = smul.addr %s573, 4
          %s575 = scalar_lea.vmem %s1, %s574
        $region24: #{tpu_custom_call.1} parent=15 // pred_fallthru
          _
        // Predicated region
        $region25: #{tpu_custom_call.1} parent=15 // pred_check
          %p576 = pneg %p115
        $region26: #{tpu_custom_call.1} parent=15 // pred_check_branch
          %578 = sbr.rel (%p576) target = $region28
        $region27: #{tpu_custom_call.1} parent=15 // pred_region
          %p579 = scmp.lt.s32.totalorder %s38, 2
          %s580 = scalar_select %p579, %s38, 2
          %s581 = smul.addr %s580, 2
          %s582 = scalar_lea.vmem %s2, %s581
        $region28: #{tpu_custom_call.1} parent=15 // pred_fallthru
          _
        // Predicated region
        $region29: #{tpu_custom_call.1} parent=15 // pred_check
          %p583 = pneg %p141
        $region30: #{tpu_custom_call.1} parent=15 // pred_check_branch
          %585 = sbr.rel (%p583) target = $region32
        $region31: #{tpu_custom_call.1} parent=15 // pred_region
          %p586 = scmp.lt.s32.totalorder %s38, 2
          %s587 = scalar_select %p586, %s38, 2
          %s588 = smul.addr %s587, 36
          %s589 = smul.addr %s588, 4
          %s590 = scalar_lea.vmem %s3, %s589
        $region32: #{tpu_custom_call.1} parent=15 // pred_fallthru
          _
        // Predicated region
        $region33: #{tpu_custom_call.1} parent=15 // pred_check
          %p591 = pneg %p167
        $region34: #{tpu_custom_call.1} parent=15 // pred_check_branch
          %593 = sbr.rel (%p591) target = $region36
        $region35: #{tpu_custom_call.1} parent=15 // pred_region
          %p594 = scmp.lt.s32.totalorder %s38, 2
          %s595 = scalar_select %p594, %s38, 2
          %s596 = smul.addr %s595, 2
          %s597 = scalar_lea.vmem %s4, %s596
        $region36: #{tpu_custom_call.1} parent=15 // pred_fallthru
          _
        // Predicated region
        $region37: #{tpu_custom_call.1} parent=15 // pred_check
          %p598 = pneg %p193
        $region38: #{tpu_custom_call.1} parent=15 // pred_check_branch
          %600 = sbr.rel (%p598) target = $region40
        $region39: #{tpu_custom_call.1} parent=15 // pred_region
          %p601 = scmp.lt.s32.totalorder %s38, 2
          %s602 = scalar_select %p601, %s38, 2
          %s603 = smul.addr %s602, 4
          %s604 = smul.addr %s603, 4
          %s605 = scalar_lea.vmem %s5, %s604
        $region40: #{tpu_custom_call.1} parent=15 // pred_fallthru
          _
        // Predicated region
        $region41: #{tpu_custom_call.1} parent=15 // pred_check
          %p606 = pneg %p219
        $region42: #{tpu_custom_call.1} parent=15 // pred_check_branch
          %608 = sbr.rel (%p606) target = $region44
        $region43: #{tpu_custom_call.1} parent=15 // pred_region
          %p609 = scmp.lt.s32.totalorder %s38, 2
          %s610 = scalar_select %p609, %s38, 2
          %s611 = smul.addr %s610, 2
          %s612 = scalar_lea.vmem %s6, %s611
        $region44: #{tpu_custom_call.1} parent=15 // pred_fallthru
          _
        // Predicated region
        $region45: #{tpu_custom_call.1} parent=15 // pred_check
          %p613 = pneg %p245
        $region46: #{tpu_custom_call.1} parent=15 // pred_check_branch
          %615 = sbr.rel (%p613) target = $region48
        $region47: #{tpu_custom_call.1} parent=15 // pred_region
          %p616 = scmp.lt.s32.totalorder %s38, 2
          %s617 = scalar_select %p616, %s38, 2
          %s618 = smul.addr %s617, 8
          %s619 = smul.addr %s618, 4
          %s620 = scalar_lea.vmem %s7, %s619
        $region48: #{tpu_custom_call.1} parent=15 // pred_fallthru
          _
        // Predicated region
        $region49: #{tpu_custom_call.1} parent=15 // pred_check
          %p621 = pneg %p271
        $region50: #{tpu_custom_call.1} parent=15 // pred_check_branch
          %623 = sbr.rel (%p621) target = $region52
        $region51: #{tpu_custom_call.1} parent=15 // pred_region
          %p624 = scmp.lt.s32.totalorder %s38, 2
          %s625 = scalar_select %p624, %s38, 2
          %s626 = smul.addr %s625, 2
          %s627 = scalar_lea.vmem %s8, %s626
        $region52: #{tpu_custom_call.1} parent=15 // pred_fallthru
          _
        // Predicated region
        $region53: #{tpu_custom_call.1} parent=15 // pred_check
          %p628 = pneg %p297
        $region54: #{tpu_custom_call.1} parent=15 // pred_check_branch
          %630 = sbr.rel (%p628) target = $region56
        $region55: #{tpu_custom_call.1} parent=15 // pred_region
          %p631 = scmp.lt.s32.totalorder %s38, 2
          %s632 = scalar_select %p631, %s38, 2
          %s633 = smul.addr %s632, 16
          %s634 = smul.addr %s633, 4
          %s635 = scalar_lea.vmem %s9, %s634
        $region56: #{tpu_custom_call.1} parent=15 // pred_fallthru
          _
        // Predicated region
        $region57: #{tpu_custom_call.1} parent=15 // pred_check
          %p636 = pneg %p323
        $region58: #{tpu_custom_call.1} parent=15 // pred_check_branch
          %638 = sbr.rel (%p636) target = $region60
        $region59: #{tpu_custom_call.1} parent=15 // pred_region
          %p639 = scmp.lt.s32.totalorder %s38, 2
          %s640 = scalar_select %p639, %s38, 2
          %s641 = smul.addr %s640, 2
          %s642 = scalar_lea.vmem %s10, %s641
        $region60: #{tpu_custom_call.1} parent=15 // pred_fallthru
          _
        // Predicated region
        $region61: #{tpu_custom_call.1} parent=15 // pred_check
          %p643 = pneg %p349
        $region62: #{tpu_custom_call.1} parent=15 // pred_check_branch
          %645 = sbr.rel (%p643) target = $region64
        $region63: #{tpu_custom_call.1} parent=15 // pred_region
          %p646 = scmp.lt.s32.totalorder %s38, 2
          %s647 = scalar_select %p646, %s38, 2
          %s648 = smul.addr %s647, 36
          %s649 = smul.addr %s648, 4
          %s650 = scalar_lea.vmem %s11, %s649
        $region64: #{tpu_custom_call.1} parent=15 // pred_fallthru
          _
        // Predicated region
        $region65: #{tpu_custom_call.1} parent=15 // pred_check
          %p651 = pneg %p375
        $region66: #{tpu_custom_call.1} parent=15 // pred_check_branch
          %653 = sbr.rel (%p651) target = $region68
        $region67: #{tpu_custom_call.1} parent=15 // pred_region
          %p654 = scmp.lt.s32.totalorder %s38, 2
          %s655 = scalar_select %p654, %s38, 2
          %s656 = smul.addr %s655, 2
          %s657 = scalar_lea.vmem %s12, %s656
        $region68: #{tpu_custom_call.1} parent=15 // pred_fallthru
          _
        // Predicated region
        $region69: #{tpu_custom_call.1} parent=15 // pred_check
          %p658 = pneg %p401
        $region70: #{tpu_custom_call.1} parent=15 // pred_check_branch
          %660 = sbr.rel (%p658) target = $region72
        $region71: #{tpu_custom_call.1} parent=15 // pred_region
          %p661 = scmp.lt.s32.totalorder %s38, 2
          %s662 = scalar_select %p661, %s38, 2
          %s663 = smul.addr %s662, 4
          %s664 = smul.addr %s663, 4
          %s665 = scalar_lea.vmem %s13, %s664
        $region72: #{tpu_custom_call.1} parent=15 // pred_fallthru
          _
        // Predicated region
        $region73: #{tpu_custom_call.1} parent=15 // pred_check
          %p666 = pneg %p427
        $region74: #{tpu_custom_call.1} parent=15 // pred_check_branch
          %668 = sbr.rel (%p666) target = $region76
        $region75: #{tpu_custom_call.1} parent=15 // pred_region
          %p669 = scmp.lt.s32.totalorder %s38, 2
          %s670 = scalar_select %p669, %s38, 2
          %s671 = smul.addr %s670, 2
          %s672 = scalar_lea.vmem %s14, %s671
        $region76: #{tpu_custom_call.1} parent=15 // pred_fallthru
          _
        // Predicated region
        $region77: #{tpu_custom_call.1} parent=15 // pred_check
          %p673 = pneg %p453
        $region78: #{tpu_custom_call.1} parent=15 // pred_check_branch
          %675 = sbr.rel (%p673) target = $region80
        $region79: #{tpu_custom_call.1} parent=15 // pred_region
          %p676 = scmp.lt.s32.totalorder %s38, 2
          %s677 = scalar_select %p676, %s38, 2
          %s678 = smul.addr %s677, 16
          %s679 = smul.addr %s678, 4
          %s680 = scalar_lea.vmem %s15, %s679
        $region80: #{tpu_custom_call.1} parent=15 // pred_fallthru
          _
        // Predicated region
        $region81: #{tpu_custom_call.1} parent=15 // pred_check
          %p681 = pneg %p479
        $region82: #{tpu_custom_call.1} parent=15 // pred_check_branch
          %683 = sbr.rel (%p681) target = $region84
        $region83: #{tpu_custom_call.1} parent=15 // pred_region
          %p684 = scmp.lt.s32.totalorder %s38, 2
          %s685 = scalar_select %p684, %s38, 2
          %s686 = scalar_lea.vmem %s16, %s685
        $region84: #{tpu_custom_call.1} parent=15 // pred_fallthru
          _
      $region16: #{tpu_custom_call.1} parent=5 // pred_fallthru
        _
      %p687 = scmp.le.s32.totalorder 1, %s31
      %p688 = scmp.lt.s32.totalorder %s31, 7
      %p689 = pnand %p687, %p688
      %p690 = pneg %p689
      // Predicated region
      $region85: #{tpu_custom_call.1} parent=5 // pred_check
        _
      $region86: #{tpu_custom_call.1} parent=5 // pred_check_branch
        %692 = sbr.rel (%p689) target = $region88
      $region87: #{tpu_custom_call.1} parent=5 // pred_region
        %s693 = ssub.s32 %s31, 1
        %p694 = scmp.lt.s32.totalorder %s41, 1
        %s695 = scalar_select %p694, %s41, 1
        %s696 = smul.addr %s695, 32
        %s697 = smul.addr %s696, 8
        %s698 = scalar_lea.vmem %s0, %s697
        %p699 = pneg %p69
        %p700 = pneg %p66
        %p701 = scmp.lt.s32.totalorder %s40, 2
        %s702 = scalar_select %p701, %s40, 2
        %s703 = smul.addr %s702, 8
        %s704 = smul.addr %s703, 4
        %s705 = scalar_lea.vmem %s1, %s704
        %p706 = pneg %p95
        %p707 = pneg %p92
        %p708 = scmp.lt.s32.totalorder %s40, 2
        %s709 = scalar_select %p708, %s40, 2
        %s710 = smul.addr %s709, 2
        %s711 = scalar_lea.vmem %s2, %s710
        %p712 = pneg %p121
        %p713 = pneg %p118
        %p714 = scmp.lt.s32.totalorder %s40, 2
        %s715 = scalar_select %p714, %s40, 2
        %s716 = smul.addr %s715, 36
        %s717 = smul.addr %s716, 4
        %s718 = scalar_lea.vmem %s3, %s717
        %p719 = pneg %p147
        %p720 = pneg %p144
        %p721 = scmp.lt.s32.totalorder %s40, 2
        %s722 = scalar_select %p721, %s40, 2
        %s723 = smul.addr %s722, 2
        %s724 = scalar_lea.vmem %s4, %s723
        %p725 = pneg %p173
        %p726 = pneg %p170
        %p727 = scmp.lt.s32.totalorder %s40, 2
        %s728 = scalar_select %p727, %s40, 2
        %s729 = smul.addr %s728, 4
        %s730 = smul.addr %s729, 4
        %s731 = scalar_lea.vmem %s5, %s730
        %p732 = pneg %p199
        %p733 = pneg %p196
        %p734 = scmp.lt.s32.totalorder %s40, 2
        %s735 = scalar_select %p734, %s40, 2
        %s736 = smul.addr %s735, 2
        %s737 = scalar_lea.vmem %s6, %s736
        %p738 = pneg %p225
        %p739 = pneg %p222
        %p740 = scmp.lt.s32.totalorder %s40, 2
        %s741 = scalar_select %p740, %s40, 2
        %s742 = smul.addr %s741, 8
        %s743 = smul.addr %s742, 4
        %s744 = scalar_lea.vmem %s7, %s743
        %p745 = pneg %p251
        %p746 = pneg %p248
        %p747 = scmp.lt.s32.totalorder %s40, 2
        %s748 = scalar_select %p747, %s40, 2
        %s749 = smul.addr %s748, 2
        %s750 = scalar_lea.vmem %s8, %s749
        %p751 = pneg %p277
        %p752 = pneg %p274
        %p753 = scmp.lt.s32.totalorder %s40, 2
        %s754 = scalar_select %p753, %s40, 2
        %s755 = smul.addr %s754, 16
        %s756 = smul.addr %s755, 4
        %s757 = scalar_lea.vmem %s9, %s756
        %p758 = pneg %p303
        %p759 = pneg %p300
        %p760 = scmp.lt.s32.totalorder %s40, 2
        %s761 = scalar_select %p760, %s40, 2
        %s762 = smul.addr %s761, 2
        %s763 = scalar_lea.vmem %s10, %s762
        %p764 = pneg %p329
        %p765 = pneg %p326
        %p766 = scmp.lt.s32.totalorder %s40, 2
        %s767 = scalar_select %p766, %s40, 2
        %s768 = smul.addr %s767, 36
        %s769 = smul.addr %s768, 4
        %s770 = scalar_lea.vmem %s11, %s769
        %p771 = pneg %p355
        %p772 = pneg %p352
        %p773 = scmp.lt.s32.totalorder %s40, 2
        %s774 = scalar_select %p773, %s40, 2
        %s775 = smul.addr %s774, 2
        %s776 = scalar_lea.vmem %s12, %s775
        %p777 = pneg %p381
        %p778 = pneg %p378
        %p779 = scmp.lt.s32.totalorder %s40, 2
        %s780 = scalar_select %p779, %s40, 2
        %s781 = smul.addr %s780, 4
        %s782 = smul.addr %s781, 4
        %s783 = scalar_lea.vmem %s13, %s782
        %p784 = pneg %p407
        %p785 = pneg %p404
        %p786 = scmp.lt.s32.totalorder %s40, 2
        %s787 = scalar_select %p786, %s40, 2
        %s788 = smul.addr %s787, 2
        %s789 = scalar_lea.vmem %s14, %s788
        %p790 = pneg %p433
        %p791 = pneg %p430
        %p792 = scmp.lt.s32.totalorder %s40, 2
        %s793 = scalar_select %p792, %s40, 2
        %s794 = smul.addr %s793, 16
        %s795 = smul.addr %s794, 4
        %s796 = scalar_lea.vmem %s15, %s795
        %p797 = pneg %p459
        %p798 = pneg %p456
        %p799 = scmp.lt.s32.totalorder %s40, 2
        %s800 = scalar_select %p799, %s40, 2
        %s801 = scalar_lea.vmem %s16, %s800
        %p802 = pneg %p485
        %p803 = pneg %p482
        %p804 = pneg %p513
        %p805 = pneg %p510
        %s806 = sand.u32 %s500, 1
        %s807 = scalar_lea.sflag [#allocation5], %s806
        %s808 = sand.u32 %s500, 1
        %s809 = smul.addr %s808, 256
        %s810 = scalar_lea.vmem [#allocation4], %s809
        %p811 = pneg %p541
        %p812 = pneg %p538
        %s813 = sand.u32 %s528, 1
        %s814 = scalar_lea.sflag [#allocation7], %s813
        %s815 = sand.u32 %s528, 1
        %s816 = smul.addr %s815, 256
        %s817 = scalar_lea.vmem [#allocation6], %s816
        %p818 = scmp.lt.s32.totalorder %s41, 1
        %s819 = scalar_select %p818, %s41, 1
        %s820 = smul.addr %s819, 32
        %s821 = smul.addr %s820, 8
        %s822 = scalar_lea.vmem %s0, %s821
        %p823 = scmp.lt.s32.totalorder %s40, 2
        %s824 = scalar_select %p823, %s40, 2
        %s825 = smul.addr %s824, 8
        %s826 = smul.addr %s825, 4
        %s827 = scalar_lea.vmem %s1, %s826
        %p828 = scmp.lt.s32.totalorder %s40, 2
        %s829 = scalar_select %p828, %s40, 2
        %s830 = smul.addr %s829, 2
        %s831 = scalar_lea.vmem %s2, %s830
        %p832 = scmp.lt.s32.totalorder %s40, 2
        %s833 = scalar_select %p832, %s40, 2
        %s834 = smul.addr %s833, 36
        %s835 = smul.addr %s834, 4
        %s836 = scalar_lea.vmem %s3, %s835
        %p837 = scmp.lt.s32.totalorder %s40, 2
        %s838 = scalar_select %p837, %s40, 2
        %s839 = smul.addr %s838, 2
        %s840 = scalar_lea.vmem %s4, %s839
        %p841 = scmp.lt.s32.totalorder %s40, 2
        %s842 = scalar_select %p841, %s40, 2
        %s843 = smul.addr %s842, 4
        %s844 = smul.addr %s843, 4
        %s845 = scalar_lea.vmem %s5, %s844
        %p846 = scmp.lt.s32.totalorder %s40, 2
        %s847 = scalar_select %p846, %s40, 2
        %s848 = smul.addr %s847, 2
        %s849 = scalar_lea.vmem %s6, %s848
        %p850 = scmp.lt.s32.totalorder %s40, 2
        %s851 = scalar_select %p850, %s40, 2
        %s852 = smul.addr %s851, 8
        %s853 = smul.addr %s852, 4
        %s854 = scalar_lea.vmem %s7, %s853
        %p855 = scmp.lt.s32.totalorder %s40, 2
        %s856 = scalar_select %p855, %s40, 2
        %s857 = smul.addr %s856, 2
        %s858 = scalar_lea.vmem %s8, %s857
        %p859 = scmp.lt.s32.totalorder %s40, 2
        %s860 = scalar_select %p859, %s40, 2
        %s861 = smul.addr %s860, 16
        %s862 = smul.addr %s861, 4
        %s863 = scalar_lea.vmem %s9, %s862
        %p864 = scmp.lt.s32.totalorder %s40, 2
        %s865 = scalar_select %p864, %s40, 2
        %s866 = smul.addr %s865, 2
        %s867 = scalar_lea.vmem %s10, %s866
        %p868 = scmp.lt.s32.totalorder %s40, 2
        %s869 = scalar_select %p868, %s40, 2
        %s870 = smul.addr %s869, 36
        %s871 = smul.addr %s870, 4
        %s872 = scalar_lea.vmem %s11, %s871
        %p873 = scmp.lt.s32.totalorder %s40, 2
        %s874 = scalar_select %p873, %s40, 2
        %s875 = smul.addr %s874, 2
        %s876 = scalar_lea.vmem %s12, %s875
        %p877 = scmp.lt.s32.totalorder %s40, 2
        %s878 = scalar_select %p877, %s40, 2
        %s879 = smul.addr %s878, 4
        %s880 = smul.addr %s879, 4
        %s881 = scalar_lea.vmem %s13, %s880
        %p882 = scmp.lt.s32.totalorder %s40, 2
        %s883 = scalar_select %p882, %s40, 2
        %s884 = smul.addr %s883, 2
        %s885 = scalar_lea.vmem %s14, %s884
        %p886 = scmp.lt.s32.totalorder %s40, 2
        %s887 = scalar_select %p886, %s40, 2
        %s888 = smul.addr %s887, 16
        %s889 = smul.addr %s888, 4
        %s890 = scalar_lea.vmem %s15, %s889
        %p891 = scmp.lt.s32.totalorder %s40, 2
        %s892 = scalar_select %p891, %s40, 2
        %s893 = scalar_lea.vmem %s16, %s892
        %vm895 = vcmask 261120
        %896 = vst.msk [vmem:[#allocation2] sm:$0xff] %vm895, 0.0
        %897 = vst.msk [vmem:[#allocation2 + $0x8] sm:$0xff] %vm895, 0.0
        %898 = vst.msk [vmem:[#allocation2 + $0x10] sm:$0xff] %vm895, 0.0
        %899 = vst.msk [vmem:[#allocation2 + $0x18] sm:$0xff] %vm895, 0.0
        %s900 = scalar_lea.vmem [#allocation2], 544
        %901 = vst.msk [vmem:[%s900] sm:$0xff] %vm895, 0.0
        %902 = vst.msk [vmem:[%s900 + $0x8] sm:$0xff] %vm895, 0.0
        %903 = vst.msk [vmem:[%s900 + $0x10] sm:$0xff] %vm895, 0.0
        %904 = vst.msk [vmem:[%s900 + $0x18] sm:$0xff] %vm895, 0.0
        %905 = vst.msk [vmem:[#allocation2] sm:$0xff] %vm895, 0.0
        %906 = vst.msk [vmem:[#allocation2 + $0x20] sm:$0xff] %vm895, 0.0
        %907 = vst.msk [vmem:[#allocation2 + $0x40] sm:$0xff] %vm895, 0.0
        %908 = vst.msk [vmem:[#allocation2 + $0x60] sm:$0xff] %vm895, 0.0
        %909 = vst.msk [vmem:[#allocation2 + $0x80] sm:$0xff] %vm895, 0.0
        %910 = vst.msk [vmem:[#allocation2 + $0xa0] sm:$0xff] %vm895, 0.0
        %911 = vst.msk [vmem:[#allocation2 + $0xc0] sm:$0xff] %vm895, 0.0
        %912 = vst.msk [vmem:[#allocation2 + $0xe0] sm:$0xff] %vm895, 0.0
        %913 = vst.msk [vmem:[#allocation2 + $0x100] sm:$0xff] %vm895, 0.0
        %914 = vst.msk [vmem:[#allocation2 + $0x120] sm:$0xff] %vm895, 0.0
        %915 = vst.msk [vmem:[#allocation2 + $0x140] sm:$0xff] %vm895, 0.0
        %916 = vst.msk [vmem:[#allocation2 + $0x160] sm:$0xff] %vm895, 0.0
        %917 = vst.msk [vmem:[#allocation2 + $0x180] sm:$0xff] %vm895, 0.0
        %918 = vst.msk [vmem:[#allocation2 + $0x1a0] sm:$0xff] %vm895, 0.0
        %919 = vst.msk [vmem:[#allocation2 + $0x1c0] sm:$0xff] %vm895, 0.0
        %920 = vst.msk [vmem:[#allocation2 + $0x1e0] sm:$0xff] %vm895, 0.0
        %921 = vst.msk [vmem:[#allocation2 + $0x200] sm:$0xff] %vm895, 0.0
        %922 = vst.msk [vmem:[#allocation2 + $0x220] sm:$0xff] %vm895, 0.0
        %923 = vst.msk [vmem:[#allocation2 + $0x18] sm:$0xff] %vm895, 0.0
        %924 = vst.msk [vmem:[#allocation2 + $0x38] sm:$0xff] %vm895, 0.0
        %925 = vst.msk [vmem:[#allocation2 + $0x58] sm:$0xff] %vm895, 0.0
        %926 = vst.msk [vmem:[#allocation2 + $0x78] sm:$0xff] %vm895, 0.0
        %927 = vst.msk [vmem:[#allocation2 + $0x98] sm:$0xff] %vm895, 0.0
        %928 = vst.msk [vmem:[#allocation2 + $0xb8] sm:$0xff] %vm895, 0.0
        %929 = vst.msk [vmem:[#allocation2 + $0xd8] sm:$0xff] %vm895, 0.0
        %930 = vst.msk [vmem:[#allocation2 + $0xf8] sm:$0xff] %vm895, 0.0
        %931 = vst.msk [vmem:[#allocation2 + $0x118] sm:$0xff] %vm895, 0.0
        %932 = vst.msk [vmem:[#allocation2 + $0x138] sm:$0xff] %vm895, 0.0
        %933 = vst.msk [vmem:[#allocation2 + $0x158] sm:$0xff] %vm895, 0.0
        %934 = vst.msk [vmem:[#allocation2 + $0x178] sm:$0xff] %vm895, 0.0
        %935 = vst.msk [vmem:[#allocation2 + $0x198] sm:$0xff] %vm895, 0.0
        %936 = vst.msk [vmem:[#allocation2 + $0x1b8] sm:$0xff] %vm895, 0.0
        %937 = vst.msk [vmem:[#allocation2 + $0x1d8] sm:$0xff] %vm895, 0.0
        %938 = vst.msk [vmem:[#allocation2 + $0x1f8] sm:$0xff] %vm895, 0.0
        %939 = vst.msk [vmem:[#allocation2 + $0x218] sm:$0xff] %vm895, 0.0
        %940 = vst.msk [vmem:[#allocation2 + $0x238] sm:$0xff] %vm895, 0.0
        %v941 = vld [vmem:[%s822] sm:$0xff]
        %v942 = vld [vmem:[%s822 + $0x8] sm:$0xff]
        %v943 = vld [vmem:[%s822 + $0x10] sm:$0xff]
        %v944 = vld [vmem:[%s822 + $0x18] sm:$0xff]
        %v945 = vld [vmem:[%s822 + $0x20] sm:$0xff]
        %v946 = vld [vmem:[%s822 + $0x28] sm:$0xff]
        %v947 = vld [vmem:[%s822 + $0x30] sm:$0xff]
        %v948 = vld [vmem:[%s822 + $0x38] sm:$0xff]
        %v949 = vld [vmem:[%s822 + $0x40] sm:$0xff]
        %v950 = vld [vmem:[%s822 + $0x48] sm:$0xff]
        %v951 = vld [vmem:[%s822 + $0x50] sm:$0xff]
        %v952 = vld [vmem:[%s822 + $0x58] sm:$0xff]
        %v953 = vld [vmem:[%s822 + $0x60] sm:$0xff]
        %v954 = vld [vmem:[%s822 + $0x68] sm:$0xff]
        %v955 = vld [vmem:[%s822 + $0x70] sm:$0xff]
        %v956 = vld [vmem:[%s822 + $0x78] sm:$0xff]
        %v957 = vld [vmem:[%s822 + $0x80] sm:$0xff]
        %v958 = vld [vmem:[%s822 + $0x88] sm:$0xff]
        %v959 = vld [vmem:[%s822 + $0x90] sm:$0xff]
        %v960 = vld [vmem:[%s822 + $0x98] sm:$0xff]
        %v961 = vld [vmem:[%s822 + $0xa0] sm:$0xff]
        %v962 = vld [vmem:[%s822 + $0xa8] sm:$0xff]
        %v963 = vld [vmem:[%s822 + $0xb0] sm:$0xff]
        %v964 = vld [vmem:[%s822 + $0xb8] sm:$0xff]
        %v965 = vld [vmem:[%s822 + $0xc0] sm:$0xff]
        %v966 = vld [vmem:[%s822 + $0xc8] sm:$0xff]
        %v967 = vld [vmem:[%s822 + $0xd0] sm:$0xff]
        %v968 = vld [vmem:[%s822 + $0xd8] sm:$0xff]
        %v969 = vld [vmem:[%s822 + $0xe0] sm:$0xff]
        %v970 = vld [vmem:[%s822 + $0xe8] sm:$0xff]
        %v971 = vld [vmem:[%s822 + $0xf0] sm:$0xff]
        %v972 = vld [vmem:[%s822 + $0xf8] sm:$0xff]
        %v973 = vpack.c.bf16 %v942, %v941
        %v974 = vpack.c.bf16 %v944, %v943
        %v975 = vpack.c.bf16 %v946, %v945
        %v976 = vpack.c.bf16 %v948, %v947
        %v977 = vpack.c.bf16 %v950, %v949
        %v978 = vpack.c.bf16 %v952, %v951
        %v979 = vpack.c.bf16 %v954, %v953
        %v980 = vpack.c.bf16 %v956, %v955
        %v981 = vpack.c.bf16 %v958, %v957
        %v982 = vpack.c.bf16 %v960, %v959
        %v983 = vpack.c.bf16 %v962, %v961
        %v984 = vpack.c.bf16 %v964, %v963
        %v985 = vpack.c.bf16 %v966, %v965
        %v986 = vpack.c.bf16 %v968, %v967
        %v987 = vpack.c.bf16 %v970, %v969
        %v988 = vpack.c.bf16 %v972, %v971
        %v989 = vld [vmem:[%s827] sm:$0xf]
        %v990 = vld [vmem:[%s827 + $0x4] sm:$0xf]
        %v991 = vld [vmem:[%s827 + $0x8] sm:$0xf]
        %v992 = vld [vmem:[%s827 + $0xc] sm:$0xf]
        %v993 = vld [vmem:[%s827 + $0x10] sm:$0xf]
        %v994 = vld [vmem:[%s827 + $0x14] sm:$0xf]
        %v995 = vld [vmem:[%s827 + $0x18] sm:$0xf]
        %v996 = vld [vmem:[%s827 + $0x1c] sm:$0xf]
        %v1005 = vunpack.c.l.b16 %v989
        %v1006 = vunpack.c.l.b16 %v990
        %v1007 = vunpack.c.l.b16 %v991
        %v1008 = vunpack.c.l.b16 %v992
        %v1009 = vunpack.c.l.b16 %v993
        %v1010 = vunpack.c.l.b16 %v994
        %v1011 = vunpack.c.l.b16 %v995
        %v1012 = vunpack.c.l.b16 %v996
        %v1013 = vpack.c.b16 %v1006, %v1005
        %v1014 = vpack.c.b16 %v1008, %v1007
        %v1015 = vpack.c.b16 %v1010, %v1009
        %v1016 = vpack.c.b16 %v1012, %v1011
        %vm1021 = vcmask 523264
        %v1023 = vsel %vm1021, %v973, 0
        %v1026 = vsel %vm1021, %v974, 0
        %v1029 = vsel %vm1021, %v975, 0
        %v1032 = vsel %vm1021, %v976, 0
        %v1035 = vsel %vm1021, %v977, 0
        %v1038 = vsel %vm1021, %v978, 0
        %v1041 = vsel %vm1021, %v979, 0
        %v1044 = vsel %vm1021, %v980, 0
        %v1047 = vsel %vm1021, %v981, 0
        %v1050 = vsel %vm1021, %v982, 0
        %v1053 = vsel %vm1021, %v983, 0
        %v1056 = vsel %vm1021, %v984, 0
        %v1059 = vsel %vm1021, %v985, 0
        %v1062 = vsel %vm1021, %v986, 0
        %v1065 = vsel %vm1021, %v987, 0
        %v1068 = vsel %vm1021, %v988, 0
        %1070 = vmatprep.subr.bf16.mxu0 0
        %1071 = vmatpush1.bf16.msra.mxu0 %v1013
        %1072 = vmatprep.subr.bf16.mxu0 0
        %1073 = vmatpush1.bf16.msra.mxu0 %v1014
        %1074 = vmatprep.subr.bf16.mxu0 0
        %1075 = vmatpush1.bf16.msra.mxu0 %v1015
        %1076 = vmatprep.subr.bf16.mxu0 0
        %1077 = vmatpush1.bf16.msra.mxu0 %v1016
        %1078 = vmatprep.subr.bf16.mxu0 0
        %1079 = vmatpush1.bf16.msra.mxu0 0
        %1080 = vmatprep.subr.bf16.mxu0 0
        %1081 = vmatpush1.bf16.msra.mxu0 0
        %1082 = vmatprep.subr.bf16.mxu0 0
        %1083 = vmatpush1.bf16.msra.mxu0 0
        %1084 = vmatprep.subr.bf16.mxu0 0
        %1085 = vmatpush1.bf16.msra.mxu0 0
        %1086 = vmatprep.subr.bf16.mxu0 0
        %1087 = vmatpush1.bf16.msra.mxu0 0
        %1088 = vmatprep.subr.bf16.mxu0 0
        %1089 = vmatpush1.bf16.msra.mxu0 0
        %1090 = vmatprep.subr.bf16.mxu0 0
        %1091 = vmatpush1.bf16.msra.mxu0 0
        %1092 = vmatprep.subr.bf16.mxu0 0
        %1093 = vmatpush1.bf16.msra.mxu0 0
        %1094 = vmatprep.subr.bf16.mxu0 0
        %1095 = vmatpush1.bf16.msra.mxu0 0
        %1096 = vmatprep.subr.bf16.mxu0 0
        %1097 = vmatpush1.bf16.msra.mxu0 0
        %1098 = vmatprep.subr.bf16.mxu0 0
        %1099 = vmatpush1.bf16.msra.mxu0 0
        %1100 = vmatprep.subr.bf16.mxu0 0
        %1101 = vmatpush1.bf16.msra.mxu0 0
        %1102 = vmatprep.mubr.bf16.mxu0 0
        %1103 = vmatmul.mubr.bf16.gmra.mrb[0].mxu0 %v1023
        %v1104 = vpop.f32.mrb[0].mxu0
        %v1105 = vadd.f32 0.0, %v1104
        %v1106 = vpop.f32.mrb[0].mxu0
        %v1107 = vpop.f32.mrb[0].mxu0
        %v1108 = vadd.f32 0.0, %v1107
        %v1109 = vpop.f32.mrb[0].mxu0
        %1110 = vmatprep.mubr.bf16.mxu0 0
        %1111 = vmatmul.mubr.bf16.gmra.mrb[0].mxu0 %v1026
        %v1112 = vpop.f32.mrb[0].mxu0
        %v1113 = vadd.f32 0.0, %v1112
        %v1114 = vpop.f32.mrb[0].mxu0
        %v1115 = vpop.f32.mrb[0].mxu0
        %v1116 = vadd.f32 0.0, %v1115
        %v1117 = vpop.f32.mrb[0].mxu0
        %1118 = vmatprep.mubr.bf16.mxu0 0
        %1119 = vmatmul.mubr.bf16.gmra.mrb[0].mxu0 %v1029
        %v1120 = vpop.f32.mrb[0].mxu0
        %v1121 = vadd.f32 0.0, %v1120
        %v1122 = vpop.f32.mrb[0].mxu0
        %v1123 = vpop.f32.mrb[0].mxu0
        %v1124 = vadd.f32 0.0, %v1123
        %v1125 = vpop.f32.mrb[0].mxu0
        %1126 = vmatprep.mubr.bf16.mxu0 0
        %1127 = vmatmul.mubr.bf16.gmra.mrb[0].mxu0 %v1032
        %v1128 = vpop.f32.mrb[0].mxu0
        %v1129 = vadd.f32 0.0, %v1128
        %v1130 = vpop.f32.mrb[0].mxu0
        %v1131 = vpop.f32.mrb[0].mxu0
        %v1132 = vadd.f32 0.0, %v1131
        %v1133 = vpop.f32.mrb[0].mxu0
        %1134 = vmatprep.mubr.bf16.mxu0 0
        %1135 = vmatmul.mubr.bf16.gmra.mrb[0].mxu0 %v1035
        %v1136 = vpop.f32.mrb[0].mxu0
        %v1137 = vadd.f32 0.0, %v1136
        %v1138 = vpop.f32.mrb[0].mxu0
        %v1139 = vpop.f32.mrb[0].mxu0
        %v1140 = vadd.f32 0.0, %v1139
        %v1141 = vpop.f32.mrb[0].mxu0
        %1142 = vmatprep.mubr.bf16.mxu0 0
        %1143 = vmatmul.mubr.bf16.gmra.mrb[0].mxu0 %v1038
        %v1144 = vpop.f32.mrb[0].mxu0
        %v1145 = vadd.f32 0.0, %v1144
        %v1146 = vpop.f32.mrb[0].mxu0
        %v1147 = vpop.f32.mrb[0].mxu0
        %v1148 = vadd.f32 0.0, %v1147
        %v1149 = vpop.f32.mrb[0].mxu0
        %1150 = vmatprep.mubr.bf16.mxu0 0
        %1151 = vmatmul.mubr.bf16.gmra.mrb[0].mxu0 %v1041
        %v1152 = vpop.f32.mrb[0].mxu0
        %v1153 = vadd.f32 0.0, %v1152
        %v1154 = vpop.f32.mrb[0].mxu0
        %v1155 = vpop.f32.mrb[0].mxu0
        %v1156 = vadd.f32 0.0, %v1155
        %v1157 = vpop.f32.mrb[0].mxu0
        %1158 = vmatprep.mubr.bf16.mxu0 0
        %1159 = vmatmul.mubr.bf16.gmra.mrb[0].mxu0 %v1044
        %v1160 = vpop.f32.mrb[0].mxu0
        %v1161 = vadd.f32 0.0, %v1160
        %v1162 = vpop.f32.mrb[0].mxu0
        %v1163 = vpop.f32.mrb[0].mxu0
        %v1164 = vadd.f32 0.0, %v1163
        %v1165 = vpop.f32.mrb[0].mxu0
        %1166 = vmatprep.mubr.bf16.mxu0 0
        %1167 = vmatmul.mubr.bf16.gmra.mrb[0].mxu0 %v1047
        %v1168 = vpop.f32.mrb[0].mxu0
        %v1169 = vadd.f32 0.0, %v1168
        %v1170 = vpop.f32.mrb[0].mxu0
        %v1171 = vpop.f32.mrb[0].mxu0
        %v1172 = vadd.f32 0.0, %v1171
        %v1173 = vpop.f32.mrb[0].mxu0
        %1174 = vmatprep.mubr.bf16.mxu0 0
        %1175 = vmatmul.mubr.bf16.gmra.mrb[0].mxu0 %v1050
        %v1176 = vpop.f32.mrb[0].mxu0
        %v1177 = vadd.f32 0.0, %v1176
        %v1178 = vpop.f32.mrb[0].mxu0
        %v1179 = vpop.f32.mrb[0].mxu0
        %v1180 = vadd.f32 0.0, %v1179
        %v1181 = vpop.f32.mrb[0].mxu0
        %1182 = vmatprep.mubr.bf16.mxu0 0
        %1183 = vmatmul.mubr.bf16.gmra.mrb[0].mxu0 %v1053
        %v1184 = vpop.f32.mrb[0].mxu0
        %v1185 = vadd.f32 0.0, %v1184
        %v1186 = vpop.f32.mrb[0].mxu0
        %v1187 = vpop.f32.mrb[0].mxu0
        %v1188 = vadd.f32 0.0, %v1187
        %v1189 = vpop.f32.mrb[0].mxu0
        %1190 = vmatprep.mubr.bf16.mxu0 0
        %1191 = vmatmul.mubr.bf16.gmra.mrb[0].mxu0 %v1056
        %v1192 = vpop.f32.mrb[0].mxu0
        %v1193 = vadd.f32 0.0, %v1192
        %v1194 = vpop.f32.mrb[0].mxu0
        %v1195 = vpop.f32.mrb[0].mxu0
        %v1196 = vadd.f32 0.0, %v1195
        %v1197 = vpop.f32.mrb[0].mxu0
        %1198 = vmatprep.mubr.bf16.mxu0 0
        %1199 = vmatmul.mubr.bf16.gmra.mrb[0].mxu0 %v1059
        %v1200 = vpop.f32.mrb[0].mxu0
        %v1201 = vadd.f32 0.0, %v1200
        %v1202 = vpop.f32.mrb[0].mxu0
        %v1203 = vpop.f32.mrb[0].mxu0
        %v1204 = vadd.f32 0.0, %v1203
        %v1205 = vpop.f32.mrb[0].mxu0
        %1206 = vmatprep.mubr.bf16.mxu0 0
        %1207 = vmatmul.mubr.bf16.gmra.mrb[0].mxu0 %v1062
        %v1208 = vpop.f32.mrb[0].mxu0
        %v1209 = vadd.f32 0.0, %v1208
        %v1210 = vpop.f32.mrb[0].mxu0
        %v1211 = vpop.f32.mrb[0].mxu0
        %v1212 = vadd.f32 0.0, %v1211
        %v1213 = vpop.f32.mrb[0].mxu0
        %1214 = vmatprep.mubr.bf16.mxu0 0
        %1215 = vmatmul.mubr.bf16.gmra.mrb[0].mxu0 %v1065
        %v1216 = vpop.f32.mrb[0].mxu0
        %v1217 = vadd.f32 0.0, %v1216
        %v1218 = vpop.f32.mrb[0].mxu0
        %v1219 = vpop.f32.mrb[0].mxu0
        %v1220 = vadd.f32 0.0, %v1219
        %v1221 = vpop.f32.mrb[0].mxu0
        %1222 = vmatprep.mubr.bf16.mxu0 0
        %1223 = vmatmul.mubr.bf16.gmra.mrb[0].mxu0 %v1068
        %v1224 = vpop.f32.mrb[0].mxu0
        %v1225 = vadd.f32 0.0, %v1224
        %v1226 = vpop.f32.mrb[0].mxu0
        %v1227 = vpop.f32.mrb[0].mxu0
        %v1228 = vadd.f32 0.0, %v1227
        %v1229 = vpop.f32.mrb[0].mxu0
        %1230 = vdwg.mxu0
        %v1231 = vld [vmem:[%s831] sm:$0x1]
        %v1232 = vlaneseq
        %v1233 = vshrl.u32 %v1232, 7
        %v1234 = vsub.s32 0, %v1233
        %v1235 = vrot.slane %v1231, %v1234
        %v1236 = vmul.f32 %v1105, %v1235
        %v1237 = vmul.f32 %v1108, %v1235
        %v1238 = vmul.f32 %v1113, %v1235
        %v1239 = vmul.f32 %v1116, %v1235
        %v1240 = vmul.f32 %v1121, %v1235
        %v1241 = vmul.f32 %v1124, %v1235
        %v1242 = vmul.f32 %v1129, %v1235
        %v1243 = vmul.f32 %v1132, %v1235
        %v1244 = vmul.f32 %v1137, %v1235
        %v1245 = vmul.f32 %v1140, %v1235
        %v1246 = vmul.f32 %v1145, %v1235
        %v1247 = vmul.f32 %v1148, %v1235
        %v1248 = vmul.f32 %v1153, %v1235
        %v1249 = vmul.f32 %v1156, %v1235
        %v1250 = vmul.f32 %v1161, %v1235
        %v1251 = vmul.f32 %v1164, %v1235
        %v1252 = vmul.f32 %v1169, %v1235
        %v1253 = vmul.f32 %v1172, %v1235
        %v1254 = vmul.f32 %v1177, %v1235
        %v1255 = vmul.f32 %v1180, %v1235
        %v1256 = vmul.f32 %v1185, %v1235
        %v1257 = vmul.f32 %v1188, %v1235
        %v1258 = vmul.f32 %v1193, %v1235
        %v1259 = vmul.f32 %v1196, %v1235
        %v1260 = vmul.f32 %v1201, %v1235
        %v1261 = vmul.f32 %v1204, %v1235
        %v1262 = vmul.f32 %v1209, %v1235
        %v1263 = vmul.f32 %v1212, %v1235
        %v1264 = vmul.f32 %v1217, %v1235
        %v1265 = vmul.f32 %v1220, %v1235
        %v1266 = vmul.f32 %v1225, %v1235
        %v1267 = vmul.f32 %v1228, %v1235
        %v1268 = vld [vmem:[%s831 + $0x1] sm:$0x1]
        %v1269 = vlaneseq
        %v1270 = vshrl.u32 %v1269, 7
        %v1271 = vsub.s32 0, %v1270
        %v1272 = vrot.slane %v1268, %v1271
        %v1273 = vadd.f32 %v1236, %v1272
        %v1274 = vadd.f32 %v1237, %v1272
        %v1275 = vadd.f32 %v1238, %v1272
        %v1276 = vadd.f32 %v1239, %v1272
        %v1277 = vadd.f32 %v1240, %v1272
        %v1278 = vadd.f32 %v1241, %v1272
        %v1279 = vadd.f32 %v1242, %v1272
        %v1280 = vadd.f32 %v1243, %v1272
        %v1281 = vadd.f32 %v1244, %v1272
        %v1282 = vadd.f32 %v1245, %v1272
        %v1283 = vadd.f32 %v1246, %v1272
        %v1284 = vadd.f32 %v1247, %v1272
        %v1285 = vadd.f32 %v1248, %v1272
        %v1286 = vadd.f32 %v1249, %v1272
        %v1287 = vadd.f32 %v1250, %v1272
        %v1288 = vadd.f32 %v1251, %v1272
        %v1289 = vadd.f32 %v1252, %v1272
        %v1290 = vadd.f32 %v1253, %v1272
        %v1291 = vadd.f32 %v1254, %v1272
        %v1292 = vadd.f32 %v1255, %v1272
        %v1293 = vadd.f32 %v1256, %v1272
        %v1294 = vadd.f32 %v1257, %v1272
        %v1295 = vadd.f32 %v1258, %v1272
        %v1296 = vadd.f32 %v1259, %v1272
        %v1297 = vadd.f32 %v1260, %v1272
        %v1298 = vadd.f32 %v1261, %v1272
        %v1299 = vadd.f32 %v1262, %v1272
        %v1300 = vadd.f32 %v1263, %v1272
        %v1301 = vadd.f32 %v1264, %v1272
        %v1302 = vadd.f32 %v1265, %v1272
        %v1303 = vadd.f32 %v1266, %v1272
        %v1304 = vadd.f32 %v1267, %v1272
        %v1305 = vmax.f32 %v1273, 0.0
        %v1306 = vmax.f32 %v1274, 0.0
        %v1307 = vmax.f32 %v1275, 0.0
        %v1308 = vmax.f32 %v1276, 0.0
        %v1309 = vmax.f32 %v1277, 0.0
        %v1310 = vmax.f32 %v1278, 0.0
        %v1311 = vmax.f32 %v1279, 0.0
        %v1312 = vmax.f32 %v1280, 0.0
        %v1313 = vmax.f32 %v1281, 0.0
        %v1314 = vmax.f32 %v1282, 0.0
        %v1315 = vmax.f32 %v1283, 0.0
        %v1316 = vmax.f32 %v1284, 0.0
        %v1317 = vmax.f32 %v1285, 0.0
        %v1318 = vmax.f32 %v1286, 0.0
        %v1319 = vmax.f32 %v1287, 0.0
        %v1320 = vmax.f32 %v1288, 0.0
        %v1321 = vmax.f32 %v1289, 0.0
        %v1322 = vmax.f32 %v1290, 0.0
        %v1323 = vmax.f32 %v1291, 0.0
        %v1324 = vmax.f32 %v1292, 0.0
        %v1325 = vmax.f32 %v1293, 0.0
        %v1326 = vmax.f32 %v1294, 0.0
        %v1327 = vmax.f32 %v1295, 0.0
        %v1328 = vmax.f32 %v1296, 0.0
        %v1329 = vmax.f32 %v1297, 0.0
        %v1330 = vmax.f32 %v1298, 0.0
        %v1331 = vmax.f32 %v1299, 0.0
        %v1332 = vmax.f32 %v1300, 0.0
        %v1333 = vmax.f32 %v1301, 0.0
        %v1334 = vmax.f32 %v1302, 0.0
        %v1335 = vmax.f32 %v1303, 0.0
        %v1336 = vmax.f32 %v1304, 0.0
        %s1337 = scalar_lea.vmem [#allocation2], 32
        %1338 = vst.msk [vmem:[%s1337 + $0x8] sm:$0xff] %vm895, %v1305
        %1339 = vst.msk [vmem:[%s1337 + $0x10] sm:$0xff] %vm895, %v1306
        %1340 = vst.msk [vmem:[%s1337 + $0x28] sm:$0xff] %vm895, %v1307
        %1341 = vst.msk [vmem:[%s1337 + $0x30] sm:$0xff] %vm895, %v1308
        %1342 = vst.msk [vmem:[%s1337 + $0x48] sm:$0xff] %vm895, %v1309
        %1343 = vst.msk [vmem:[%s1337 + $0x50] sm:$0xff] %vm895, %v1310
        %1344 = vst.msk [vmem:[%s1337 + $0x68] sm:$0xff] %vm895, %v1311
        %1345 = vst.msk [vmem:[%s1337 + $0x70] sm:$0xff] %vm895, %v1312
        %1346 = vst.msk [vmem:[%s1337 + $0x88] sm:$0xff] %vm895, %v1313
        %1347 = vst.msk [vmem:[%s1337 + $0x90] sm:$0xff] %vm895, %v1314
        %1348 = vst.msk [vmem:[%s1337 + $0xa8] sm:$0xff] %vm895, %v1315
        %1349 = vst.msk [vmem:[%s1337 + $0xb0] sm:$0xff] %vm895, %v1316
        %1350 = vst.msk [vmem:[%s1337 + $0xc8] sm:$0xff] %vm895, %v1317
        %1351 = vst.msk [vmem:[%s1337 + $0xd0] sm:$0xff] %vm895, %v1318
        %1352 = vst.msk [vmem:[%s1337 + $0xe8] sm:$0xff] %vm895, %v1319
        %1353 = vst.msk [vmem:[%s1337 + $0xf0] sm:$0xff] %vm895, %v1320
        %1354 = vst.msk [vmem:[%s1337 + $0x108] sm:$0xff] %vm895, %v1321
        %1355 = vst.msk [vmem:[%s1337 + $0x110] sm:$0xff] %vm895, %v1322
        %1356 = vst.msk [vmem:[%s1337 + $0x128] sm:$0xff] %vm895, %v1323
        %1357 = vst.msk [vmem:[%s1337 + $0x130] sm:$0xff] %vm895, %v1324
        %1358 = vst.msk [vmem:[%s1337 + $0x148] sm:$0xff] %vm895, %v1325
        %1359 = vst.msk [vmem:[%s1337 + $0x150] sm:$0xff] %vm895, %v1326
        %1360 = vst.msk [vmem:[%s1337 + $0x168] sm:$0xff] %vm895, %v1327
        %1361 = vst.msk [vmem:[%s1337 + $0x170] sm:$0xff] %vm895, %v1328
        %1362 = vst.msk [vmem:[%s1337 + $0x188] sm:$0xff] %vm895, %v1329
        %1363 = vst.msk [vmem:[%s1337 + $0x190] sm:$0xff] %vm895, %v1330
        %1364 = vst.msk [vmem:[%s1337 + $0x1a8] sm:$0xff] %vm895, %v1331
        %1365 = vst.msk [vmem:[%s1337 + $0x1b0] sm:$0xff] %vm895, %v1332
        %1366 = vst.msk [vmem:[%s1337 + $0x1c8] sm:$0xff] %vm895, %v1333
        %1367 = vst.msk [vmem:[%s1337 + $0x1d0] sm:$0xff] %vm895, %v1334
        %1368 = vst.msk [vmem:[%s1337 + $0x1e8] sm:$0xff] %vm895, %v1335
        %1369 = vst.msk [vmem:[%s1337 + $0x1f0] sm:$0xff] %vm895, %v1336
        %v1370 = vld [vmem:[#allocation2 + $0x7] sm:$0xff]
        %v1371 = vld [vmem:[#allocation2 + $0xf] sm:$0xff]
        %v1372 = vld [vmem:[#allocation2 + $0x27] sm:$0xff]
        %v1373 = vld [vmem:[#allocation2 + $0x2f] sm:$0xff]
        %v1374 = vld [vmem:[#allocation2 + $0x47] sm:$0xff]
        %v1375 = vld [vmem:[#allocation2 + $0x4f] sm:$0xff]
        %v1376 = vld [vmem:[#allocation2 + $0x67] sm:$0xff]
        %v1377 = vld [vmem:[#allocation2 + $0x6f] sm:$0xff]
        %v1378 = vld [vmem:[#allocation2 + $0x87] sm:$0xff]
        %v1379 = vld [vmem:[#allocation2 + $0x8f] sm:$0xff]
        %v1380 = vld [vmem:[#allocation2 + $0xa7] sm:$0xff]
        %v1381 = vld [vmem:[#allocation2 + $0xaf] sm:$0xff]
        %v1382 = vld [vmem:[#allocation2 + $0xc7] sm:$0xff]
        %v1383 = vld [vmem:[#allocation2 + $0xcf] sm:$0xff]
        %v1384 = vld [vmem:[#allocation2 + $0xe7] sm:$0xff]
        %v1385 = vld [vmem:[#allocation2 + $0xef] sm:$0xff]
        %v1386 = vld [vmem:[#allocation2 + $0x107] sm:$0xff]
        %v1387 = vld [vmem:[#allocation2 + $0x10f] sm:$0xff]
        %v1388 = vld [vmem:[#allocation2 + $0x127] sm:$0xff]
        %v1389 = vld [vmem:[#allocation2 + $0x12f] sm:$0xff]
        %v1390 = vld [vmem:[#allocation2 + $0x147] sm:$0xff]
        %v1391 = vld [vmem:[#allocation2 + $0x14f] sm:$0xff]
        %v1392 = vld [vmem:[#allocation2 + $0x167] sm:$0xff]
        %v1393 = vld [vmem:[#allocation2 + $0x16f] sm:$0xff]
        %v1394 = vld [vmem:[#allocation2 + $0x187] sm:$0xff]
        %v1395 = vld [vmem:[#allocation2 + $0x18f] sm:$0xff]
        %v1396 = vld [vmem:[#allocation2 + $0x1a7] sm:$0xff]
        %v1397 = vld [vmem:[#allocation2 + $0x1af] sm:$0xff]
        %v1398 = vld [vmem:[#allocation2 + $0x1c7] sm:$0xff]
        %v1399 = vld [vmem:[#allocation2 + $0x1cf] sm:$0xff]
        %v1400 = vld [vmem:[#allocation2 + $0x1e7] sm:$0xff]
        %v1401 = vld [vmem:[#allocation2 + $0x1ef] sm:$0xff]
        %1402 = vst.msk [vmem:[#allocation3] sm:$0xff] %vm895, %v1370
        %1403 = vst.msk [vmem:[#allocation3 + $0x18] sm:$0xff] %vm895, %v1371
        %1404 = vst.msk [vmem:[#allocation3 + $0x30] sm:$0xff] %vm895, %v1372
        %1405 = vst.msk [vmem:[#allocation3 + $0x48] sm:$0xff] %vm895, %v1373
        %1406 = vst.msk [vmem:[#allocation3 + $0x60] sm:$0xff] %vm895, %v1374
        %1407 = vst.msk [vmem:[#allocation3 + $0x78] sm:$0xff] %vm895, %v1375
        %1408 = vst.msk [vmem:[#allocation3 + $0x90] sm:$0xff] %vm895, %v1376
        %1409 = vst.msk [vmem:[#allocation3 + $0xa8] sm:$0xff] %vm895, %v1377
        %1410 = vst.msk [vmem:[#allocation3 + $0xc0] sm:$0xff] %vm895, %v1378
        %1411 = vst.msk [vmem:[#allocation3 + $0xd8] sm:$0xff] %vm895, %v1379
        %1412 = vst.msk [vmem:[#allocation3 + $0xf0] sm:$0xff] %vm895, %v1380
        %1413 = vst.msk [vmem:[#allocation3 + $0x108] sm:$0xff] %vm895, %v1381
        %1414 = vst.msk [vmem:[#allocation3 + $0x120] sm:$0xff] %vm895, %v1382
        %1415 = vst.msk [vmem:[#allocation3 + $0x138] sm:$0xff] %vm895, %v1383
        %1416 = vst.msk [vmem:[#allocation3 + $0x150] sm:$0xff] %vm895, %v1384
        %1417 = vst.msk [vmem:[#allocation3 + $0x168] sm:$0xff] %vm895, %v1385
        %1418 = vst.msk [vmem:[#allocation3 + $0x180] sm:$0xff] %vm895, %v1386
        %1419 = vst.msk [vmem:[#allocation3 + $0x198] sm:$0xff] %vm895, %v1387
        %1420 = vst.msk [vmem:[#allocation3 + $0x1b0] sm:$0xff] %vm895, %v1388
        %1421 = vst.msk [vmem:[#allocation3 + $0x1c8] sm:$0xff] %vm895, %v1389
        %1422 = vst.msk [vmem:[#allocation3 + $0x1e0] sm:$0xff] %vm895, %v1390
        %1423 = vst.msk [vmem:[#allocation3 + $0x1f8] sm:$0xff] %vm895, %v1391
        %1424 = vst.msk [vmem:[#allocation3 + $0x210] sm:$0xff] %vm895, %v1392
        %1425 = vst.msk [vmem:[#allocation3 + $0x228] sm:$0xff] %vm895, %v1393
        %1426 = vst.msk [vmem:[#allocation3 + $0x240] sm:$0xff] %vm895, %v1394
        %1427 = vst.msk [vmem:[#allocation3 + $0x258] sm:$0xff] %vm895, %v1395
        %1428 = vst.msk [vmem:[#allocation3 + $0x270] sm:$0xff] %vm895, %v1396
        %1429 = vst.msk [vmem:[#allocation3 + $0x288] sm:$0xff] %vm895, %v1397
        %1430 = vst.msk [vmem:[#allocation3 + $0x2a0] sm:$0xff] %vm895, %v1398
        %1431 = vst.msk [vmem:[#allocation3 + $0x2b8] sm:$0xff] %vm895, %v1399
        %1432 = vst.msk [vmem:[#allocation3 + $0x2d0] sm:$0xff] %vm895, %v1400
        %1433 = vst.msk [vmem:[#allocation3 + $0x2e8] sm:$0xff] %vm895, %v1401
        %v1434 = vld [vmem:[#allocation2 + $0x8] sm:$0xff]
        %v1435 = vld [vmem:[#allocation2 + $0x10] sm:$0xff]
        %v1436 = vld [vmem:[#allocation2 + $0x28] sm:$0xff]
        %v1437 = vld [vmem:[#allocation2 + $0x30] sm:$0xff]
        %v1438 = vld [vmem:[#allocation2 + $0x48] sm:$0xff]
        %v1439 = vld [vmem:[#allocation2 + $0x50] sm:$0xff]
        %v1440 = vld [vmem:[#allocation2 + $0x68] sm:$0xff]
        %v1441 = vld [vmem:[#allocation2 + $0x70] sm:$0xff]
        %v1442 = vld [vmem:[#allocation2 + $0x88] sm:$0xff]
        %v1443 = vld [vmem:[#allocation2 + $0x90] sm:$0xff]
        %v1444 = vld [vmem:[#allocation2 + $0xa8] sm:$0xff]
        %v1445 = vld [vmem:[#allocation2 + $0xb0] sm:$0xff]
        %v1446 = vld [vmem:[#allocation2 + $0xc8] sm:$0xff]
        %v1447 = vld [vmem:[#allocation2 + $0xd0] sm:$0xff]
        %v1448 = vld [vmem:[#allocation2 + $0xe8] sm:$0xff]
        %v1449 = vld [vmem:[#allocation2 + $0xf0] sm:$0xff]
        %v1450 = vld [vmem:[#allocation2 + $0x108] sm:$0xff]
        %v1451 = vld [vmem:[#allocation2 + $0x110] sm:$0xff]
        %v1452 = vld [vmem:[#allocation2 + $0x128] sm:$0xff]
        %v1453 = vld [vmem:[#allocation2 + $0x130] sm:$0xff]
        %v1454 = vld [vmem:[#allocation2 + $0x148] sm:$0xff]
        %v1455 = vld [vmem:[#allocation2 + $0x150] sm:$0xff]
        %v1456 = vld [vmem:[#allocation2 + $0x168] sm:$0xff]
        %v1457 = vld [vmem:[#allocation2 + $0x170] sm:$0xff]
        %v1458 = vld [vmem:[#allocation2 + $0x188] sm:$0xff]
        %v1459 = vld [vmem:[#allocation2 + $0x190] sm:$0xff]
        %v1460 = vld [vmem:[#allocation2 + $0x1a8] sm:$0xff]
        %v1461 = vld [vmem:[#allocation2 + $0x1b0] sm:$0xff]
        %v1462 = vld [vmem:[#allocation2 + $0x1c8] sm:$0xff]
        %v1463 = vld [vmem:[#allocation2 + $0x1d0] sm:$0xff]
        %v1464 = vld [vmem:[#allocation2 + $0x1e8] sm:$0xff]
        %v1465 = vld [vmem:[#allocation2 + $0x1f0] sm:$0xff]
        %1498 = vrot.lane.b32.xlu0 %v1434, 32
        %v1499 = vpop.permute.xlu0 %1498
        %1500 = vrot.lane.b32.xlu0 %v1435, 32
        %v1501 = vpop.permute.xlu0 %1500
        %1502 = vrot.lane.b32.xlu0 %v1436, 32
        %v1503 = vpop.permute.xlu0 %1502
        %1504 = vrot.lane.b32.xlu0 %v1437, 32
        %v1505 = vpop.permute.xlu0 %1504
        %1506 = vrot.lane.b32.xlu0 %v1438, 32
        %v1507 = vpop.permute.xlu0 %1506
        %1508 = vrot.lane.b32.xlu0 %v1439, 32
        %v1509 = vpop.permute.xlu0 %1508
        %1510 = vrot.lane.b32.xlu0 %v1440, 32
        %v1511 = vpop.permute.xlu0 %1510
        %1512 = vrot.lane.b32.xlu0 %v1441, 32
        %v1513 = vpop.permute.xlu0 %1512
        %1514 = vrot.lane.b32.xlu0 %v1442, 32
        %v1515 = vpop.permute.xlu0 %1514
        %1516 = vrot.lane.b32.xlu0 %v1443, 32
        %v1517 = vpop.permute.xlu0 %1516
        %1518 = vrot.lane.b32.xlu0 %v1444, 32
        %v1519 = vpop.permute.xlu0 %1518
        %1520 = vrot.lane.b32.xlu0 %v1445, 32
        %v1521 = vpop.permute.xlu0 %1520
        %1522 = vrot.lane.b32.xlu0 %v1446, 32
        %v1523 = vpop.permute.xlu0 %1522
        %1524 = vrot.lane.b32.xlu0 %v1447, 32
        %v1525 = vpop.permute.xlu0 %1524
        %1526 = vrot.lane.b32.xlu0 %v1448, 32
        %v1527 = vpop.permute.xlu0 %1526
        %1528 = vrot.lane.b32.xlu0 %v1449, 32
        %v1529 = vpop.permute.xlu0 %1528
        %1530 = vrot.lane.b32.xlu0 %v1450, 32
        %v1531 = vpop.permute.xlu0 %1530
        %1532 = vrot.lane.b32.xlu0 %v1451, 32
        %v1533 = vpop.permute.xlu0 %1532
        %1534 = vrot.lane.b32.xlu0 %v1452, 32
        %v1535 = vpop.permute.xlu0 %1534
        %1536 = vrot.lane.b32.xlu0 %v1453, 32
        %v1537 = vpop.permute.xlu0 %1536
        %1538 = vrot.lane.b32.xlu0 %v1454, 32
        %v1539 = vpop.permute.xlu0 %1538
        %1540 = vrot.lane.b32.xlu0 %v1455, 32
        %v1541 = vpop.permute.xlu0 %1540
        %1542 = vrot.lane.b32.xlu0 %v1456, 32
        %v1543 = vpop.permute.xlu0 %1542
        %1544 = vrot.lane.b32.xlu0 %v1457, 32
        %v1545 = vpop.permute.xlu0 %1544
        %1546 = vrot.lane.b32.xlu0 %v1458, 32
        %v1547 = vpop.permute.xlu0 %1546
        %1548 = vrot.lane.b32.xlu0 %v1459, 32
        %v1549 = vpop.permute.xlu0 %1548
        %1550 = vrot.lane.b32.xlu0 %v1460, 32
        %v1551 = vpop.permute.xlu0 %1550
        %1552 = vrot.lane.b32.xlu0 %v1461, 32
        %v1553 = vpop.permute.xlu0 %1552
        %1554 = vrot.lane.b32.xlu0 %v1462, 32
        %v1555 = vpop.permute.xlu0 %1554
        %1556 = vrot.lane.b32.xlu0 %v1463, 32
        %v1557 = vpop.permute.xlu0 %1556
        %1558 = vrot.lane.b32.xlu0 %v1464, 32
        %v1559 = vpop.permute.xlu0 %1558
        %1560 = vrot.lane.b32.xlu0 %v1465, 32
        %v1561 = vpop.permute.xlu0 %1560
        %vm1594 = vcmask 523520
        %1595 = vst.msk [vmem:[#allocation3] sm:$0xff] %vm1594, %v1499
        %1596 = vst.msk [vmem:[#allocation3 + $0x18] sm:$0xff] %vm1594, %v1501
        %1597 = vst.msk [vmem:[#allocation3 + $0x30] sm:$0xff] %vm1594, %v1503
        %1598 = vst.msk [vmem:[#allocation3 + $0x48] sm:$0xff] %vm1594, %v1505
        %1599 = vst.msk [vmem:[#allocation3 + $0x60] sm:$0xff] %vm1594, %v1507
        %1600 = vst.msk [vmem:[#allocation3 + $0x78] sm:$0xff] %vm1594, %v1509
        %1601 = vst.msk [vmem:[#allocation3 + $0x90] sm:$0xff] %vm1594, %v1511
        %1602 = vst.msk [vmem:[#allocation3 + $0xa8] sm:$0xff] %vm1594, %v1513
        %1603 = vst.msk [vmem:[#allocation3 + $0xc0] sm:$0xff] %vm1594, %v1515
        %1604 = vst.msk [vmem:[#allocation3 + $0xd8] sm:$0xff] %vm1594, %v1517
        %1605 = vst.msk [vmem:[#allocation3 + $0xf0] sm:$0xff] %vm1594, %v1519
        %1606 = vst.msk [vmem:[#allocation3 + $0x108] sm:$0xff] %vm1594, %v1521
        %1607 = vst.msk [vmem:[#allocation3 + $0x120] sm:$0xff] %vm1594, %v1523
        %1608 = vst.msk [vmem:[#allocation3 + $0x138] sm:$0xff] %vm1594, %v1525
        %1609 = vst.msk [vmem:[#allocation3 + $0x150] sm:$0xff] %vm1594, %v1527
        %1610 = vst.msk [vmem:[#allocation3 + $0x168] sm:$0xff] %vm1594, %v1529
        %1611 = vst.msk [vmem:[#allocation3 + $0x180] sm:$0xff] %vm1594, %v1531
        %1612 = vst.msk [vmem:[#allocation3 + $0x198] sm:$0xff] %vm1594, %v1533
        %1613 = vst.msk [vmem:[#allocation3 + $0x1b0] sm:$0xff] %vm1594, %v1535
        %1614 = vst.msk [vmem:[#allocation3 + $0x1c8] sm:$0xff] %vm1594, %v1537
        %1615 = vst.msk [vmem:[#allocation3 + $0x1e0] sm:$0xff] %vm1594, %v1539
        %1616 = vst.msk [vmem:[#allocation3 + $0x1f8] sm:$0xff] %vm1594, %v1541
        %1617 = vst.msk [vmem:[#allocation3 + $0x210] sm:$0xff] %vm1594, %v1543
        %1618 = vst.msk [vmem:[#allocation3 + $0x228] sm:$0xff] %vm1594, %v1545
        %1619 = vst.msk [vmem:[#allocation3 + $0x240] sm:$0xff] %vm1594, %v1547
        %1620 = vst.msk [vmem:[#allocation3 + $0x258] sm:$0xff] %vm1594, %v1549
        %1621 = vst.msk [vmem:[#allocation3 + $0x270] sm:$0xff] %vm1594, %v1551
        %1622 = vst.msk [vmem:[#allocation3 + $0x288] sm:$0xff] %vm1594, %v1553
        %1623 = vst.msk [vmem:[#allocation3 + $0x2a0] sm:$0xff] %vm1594, %v1555
        %1624 = vst.msk [vmem:[#allocation3 + $0x2b8] sm:$0xff] %vm1594, %v1557
        %1625 = vst.msk [vmem:[#allocation3 + $0x2d0] sm:$0xff] %vm1594, %v1559
        %1626 = vst.msk [vmem:[#allocation3 + $0x2e8] sm:$0xff] %vm1594, %v1561
        %v1627 = vld [vmem:[#allocation2 + $0x9] sm:$0xff]
        %v1628 = vld [vmem:[#allocation2 + $0x11] sm:$0xff]
        %v1629 = vld [vmem:[#allocation2 + $0x29] sm:$0xff]
        %v1630 = vld [vmem:[#allocation2 + $0x31] sm:$0xff]
        %v1631 = vld [vmem:[#allocation2 + $0x49] sm:$0xff]
        %v1632 = vld [vmem:[#allocation2 + $0x51] sm:$0xff]
        %v1633 = vld [vmem:[#allocation2 + $0x69] sm:$0xff]
        %v1634 = vld [vmem:[#allocation2 + $0x71] sm:$0xff]
        %v1635 = vld [vmem:[#allocation2 + $0x89] sm:$0xff]
        %v1636 = vld [vmem:[#allocation2 + $0x91] sm:$0xff]
        %v1637 = vld [vmem:[#allocation2 + $0xa9] sm:$0xff]
        %v1638 = vld [vmem:[#allocation2 + $0xb1] sm:$0xff]
        %v1639 = vld [vmem:[#allocation2 + $0xc9] sm:$0xff]
        %v1640 = vld [vmem:[#allocation2 + $0xd1] sm:$0xff]
        %v1641 = vld [vmem:[#allocation2 + $0xe9] sm:$0xff]
        %v1642 = vld [vmem:[#allocation2 + $0xf1] sm:$0xff]
        %v1643 = vld [vmem:[#allocation2 + $0x109] sm:$0xff]
        %v1644 = vld [vmem:[#allocation2 + $0x111] sm:$0xff]
        %v1645 = vld [vmem:[#allocation2 + $0x129] sm:$0xff]
        %v1646 = vld [vmem:[#allocation2 + $0x131] sm:$0xff]
        %v1647 = vld [vmem:[#allocation2 + $0x149] sm:$0xff]
        %v1648 = vld [vmem:[#allocation2 + $0x151] sm:$0xff]
        %v1649 = vld [vmem:[#allocation2 + $0x169] sm:$0xff]
        %v1650 = vld [vmem:[#allocation2 + $0x171] sm:$0xff]
        %v1651 = vld [vmem:[#allocation2 + $0x189] sm:$0xff]
        %v1652 = vld [vmem:[#allocation2 + $0x191] sm:$0xff]
        %v1653 = vld [vmem:[#allocation2 + $0x1a9] sm:$0xff]
        %v1654 = vld [vmem:[#allocation2 + $0x1b1] sm:$0xff]
        %v1655 = vld [vmem:[#allocation2 + $0x1c9] sm:$0xff]
        %v1656 = vld [vmem:[#allocation2 + $0x1d1] sm:$0xff]
        %v1657 = vld [vmem:[#allocation2 + $0x1e9] sm:$0xff]
        %v1658 = vld [vmem:[#allocation2 + $0x1f1] sm:$0xff]
        %1691 = vrot.lane.b32.xlu0 %v1627, 64
        %v1692 = vpop.permute.xlu0 %1691
        %1693 = vrot.lane.b32.xlu0 %v1628, 64
        %v1694 = vpop.permute.xlu0 %1693
        %1695 = vrot.lane.b32.xlu0 %v1629, 64
        %v1696 = vpop.permute.xlu0 %1695
        %1697 = vrot.lane.b32.xlu0 %v1630, 64
        %v1698 = vpop.permute.xlu0 %1697
        %1699 = vrot.lane.b32.xlu0 %v1631, 64
        %v1700 = vpop.permute.xlu0 %1699
        %1701 = vrot.lane.b32.xlu0 %v1632, 64
        %v1702 = vpop.permute.xlu0 %1701
        %1703 = vrot.lane.b32.xlu0 %v1633, 64
        %v1704 = vpop.permute.xlu0 %1703
        %1705 = vrot.lane.b32.xlu0 %v1634, 64
        %v1706 = vpop.permute.xlu0 %1705
        %1707 = vrot.lane.b32.xlu0 %v1635, 64
        %v1708 = vpop.permute.xlu0 %1707
        %1709 = vrot.lane.b32.xlu0 %v1636, 64
        %v1710 = vpop.permute.xlu0 %1709
        %1711 = vrot.lane.b32.xlu0 %v1637, 64
        %v1712 = vpop.permute.xlu0 %1711
        %1713 = vrot.lane.b32.xlu0 %v1638, 64
        %v1714 = vpop.permute.xlu0 %1713
        %1715 = vrot.lane.b32.xlu0 %v1639, 64
        %v1716 = vpop.permute.xlu0 %1715
        %1717 = vrot.lane.b32.xlu0 %v1640, 64
        %v1718 = vpop.permute.xlu0 %1717
        %1719 = vrot.lane.b32.xlu0 %v1641, 64
        %v1720 = vpop.permute.xlu0 %1719
        %1721 = vrot.lane.b32.xlu0 %v1642, 64
        %v1722 = vpop.permute.xlu0 %1721
        %1723 = vrot.lane.b32.xlu0 %v1643, 64
        %v1724 = vpop.permute.xlu0 %1723
        %1725 = vrot.lane.b32.xlu0 %v1644, 64
        %v1726 = vpop.permute.xlu0 %1725
        %1727 = vrot.lane.b32.xlu0 %v1645, 64
        %v1728 = vpop.permute.xlu0 %1727
        %1729 = vrot.lane.b32.xlu0 %v1646, 64
        %v1730 = vpop.permute.xlu0 %1729
        %1731 = vrot.lane.b32.xlu0 %v1647, 64
        %v1732 = vpop.permute.xlu0 %1731
        %1733 = vrot.lane.b32.xlu0 %v1648, 64
        %v1734 = vpop.permute.xlu0 %1733
        %1735 = vrot.lane.b32.xlu0 %v1649, 64
        %v1736 = vpop.permute.xlu0 %1735
        %1737 = vrot.lane.b32.xlu0 %v1650, 64
        %v1738 = vpop.permute.xlu0 %1737
        %1739 = vrot.lane.b32.xlu0 %v1651, 64
        %v1740 = vpop.permute.xlu0 %1739
        %1741 = vrot.lane.b32.xlu0 %v1652, 64
        %v1742 = vpop.permute.xlu0 %1741
        %1743 = vrot.lane.b32.xlu0 %v1653, 64
        %v1744 = vpop.permute.xlu0 %1743
        %1745 = vrot.lane.b32.xlu0 %v1654, 64
        %v1746 = vpop.permute.xlu0 %1745
        %1747 = vrot.lane.b32.xlu0 %v1655, 64
        %v1748 = vpop.permute.xlu0 %1747
        %1749 = vrot.lane.b32.xlu0 %v1656, 64
        %v1750 = vpop.permute.xlu0 %1749
        %1751 = vrot.lane.b32.xlu0 %v1657, 64
        %v1752 = vpop.permute.xlu0 %1751
        %1753 = vrot.lane.b32.xlu0 %v1658, 64
        %v1754 = vpop.permute.xlu0 %1753
        %vm1787 = vcmask 785920
        %1788 = vst.msk [vmem:[#allocation3] sm:$0xff] %vm1787, %v1692
        %1789 = vst.msk [vmem:[#allocation3 + $0x18] sm:$0xff] %vm1787, %v1694
        %1790 = vst.msk [vmem:[#allocation3 + $0x30] sm:$0xff] %vm1787, %v1696
        %1791 = vst.msk [vmem:[#allocation3 + $0x48] sm:$0xff] %vm1787, %v1698
        %1792 = vst.msk [vmem:[#allocation3 + $0x60] sm:$0xff] %vm1787, %v1700
        %1793 = vst.msk [vmem:[#allocation3 + $0x78] sm:$0xff] %vm1787, %v1702
        %1794 = vst.msk [vmem:[#allocation3 + $0x90] sm:$0xff] %vm1787, %v1704
        %1795 = vst.msk [vmem:[#allocation3 + $0xa8] sm:$0xff] %vm1787, %v1706
        %1796 = vst.msk [vmem:[#allocation3 + $0xc0] sm:$0xff] %vm1787, %v1708
        %1797 = vst.msk [vmem:[#allocation3 + $0xd8] sm:$0xff] %vm1787, %v1710
        %1798 = vst.msk [vmem:[#allocation3 + $0xf0] sm:$0xff] %vm1787, %v1712
        %1799 = vst.msk [vmem:[#allocation3 + $0x108] sm:$0xff] %vm1787, %v1714
        %1800 = vst.msk [vmem:[#allocation3 + $0x120] sm:$0xff] %vm1787, %v1716
        %1801 = vst.msk [vmem:[#allocation3 + $0x138] sm:$0xff] %vm1787, %v1718
        %1802 = vst.msk [vmem:[#allocation3 + $0x150] sm:$0xff] %vm1787, %v1720
        %1803 = vst.msk [vmem:[#allocation3 + $0x168] sm:$0xff] %vm1787, %v1722
        %1804 = vst.msk [vmem:[#allocation3 + $0x180] sm:$0xff] %vm1787, %v1724
        %1805 = vst.msk [vmem:[#allocation3 + $0x198] sm:$0xff] %vm1787, %v1726
        %1806 = vst.msk [vmem:[#allocation3 + $0x1b0] sm:$0xff] %vm1787, %v1728
        %1807 = vst.msk [vmem:[#allocation3 + $0x1c8] sm:$0xff] %vm1787, %v1730
        %1808 = vst.msk [vmem:[#allocation3 + $0x1e0] sm:$0xff] %vm1787, %v1732
        %1809 = vst.msk [vmem:[#allocation3 + $0x1f8] sm:$0xff] %vm1787, %v1734
        %1810 = vst.msk [vmem:[#allocation3 + $0x210] sm:$0xff] %vm1787, %v1736
        %1811 = vst.msk [vmem:[#allocation3 + $0x228] sm:$0xff] %vm1787, %v1738
        %1812 = vst.msk [vmem:[#allocation3 + $0x240] sm:$0xff] %vm1787, %v1740
        %1813 = vst.msk [vmem:[#allocation3 + $0x258] sm:$0xff] %vm1787, %v1742
        %1814 = vst.msk [vmem:[#allocation3 + $0x270] sm:$0xff] %vm1787, %v1744
        %1815 = vst.msk [vmem:[#allocation3 + $0x288] sm:$0xff] %vm1787, %v1746
        %1816 = vst.msk [vmem:[#allocation3 + $0x2a0] sm:$0xff] %vm1787, %v1748
        %1817 = vst.msk [vmem:[#allocation3 + $0x2b8] sm:$0xff] %vm1787, %v1750
        %1818 = vst.msk [vmem:[#allocation3 + $0x2d0] sm:$0xff] %vm1787, %v1752
        %1819 = vst.msk [vmem:[#allocation3 + $0x2e8] sm:$0xff] %vm1787, %v1754
        %v1820 = vld [vmem:[%s1337 + $0x7] sm:$0xff]
        %v1821 = vld [vmem:[%s1337 + $0xf] sm:$0xff]
        %v1822 = vld [vmem:[%s1337 + $0x27] sm:$0xff]
        %v1823 = vld [vmem:[%s1337 + $0x2f] sm:$0xff]
        %v1824 = vld [vmem:[%s1337 + $0x47] sm:$0xff]
        %v1825 = vld [vmem:[%s1337 + $0x4f] sm:$0xff]
        %v1826 = vld [vmem:[%s1337 + $0x67] sm:$0xff]
        %v1827 = vld [vmem:[%s1337 + $0x6f] sm:$0xff]
        %v1828 = vld [vmem:[%s1337 + $0x87] sm:$0xff]
        %v1829 = vld [vmem:[%s1337 + $0x8f] sm:$0xff]
        %v1830 = vld [vmem:[%s1337 + $0xa7] sm:$0xff]
        %v1831 = vld [vmem:[%s1337 + $0xaf] sm:$0xff]
        %v1832 = vld [vmem:[%s1337 + $0xc7] sm:$0xff]
        %v1833 = vld [vmem:[%s1337 + $0xcf] sm:$0xff]
        %v1834 = vld [vmem:[%s1337 + $0xe7] sm:$0xff]
        %v1835 = vld [vmem:[%s1337 + $0xef] sm:$0xff]
        %v1836 = vld [vmem:[%s1337 + $0x107] sm:$0xff]
        %v1837 = vld [vmem:[%s1337 + $0x10f] sm:$0xff]
        %v1838 = vld [vmem:[%s1337 + $0x127] sm:$0xff]
        %v1839 = vld [vmem:[%s1337 + $0x12f] sm:$0xff]
        %v1840 = vld [vmem:[%s1337 + $0x147] sm:$0xff]
        %v1841 = vld [vmem:[%s1337 + $0x14f] sm:$0xff]
        %v1842 = vld [vmem:[%s1337 + $0x167] sm:$0xff]
        %v1843 = vld [vmem:[%s1337 + $0x16f] sm:$0xff]
        %v1844 = vld [vmem:[%s1337 + $0x187] sm:$0xff]
        %v1845 = vld [vmem:[%s1337 + $0x18f] sm:$0xff]
        %v1846 = vld [vmem:[%s1337 + $0x1a7] sm:$0xff]
        %v1847 = vld [vmem:[%s1337 + $0x1af] sm:$0xff]
        %v1848 = vld [vmem:[%s1337 + $0x1c7] sm:$0xff]
        %v1849 = vld [vmem:[%s1337 + $0x1cf] sm:$0xff]
        %v1850 = vld [vmem:[%s1337 + $0x1e7] sm:$0xff]
        %v1851 = vld [vmem:[%s1337 + $0x1ef] sm:$0xff]
        %1884 = vrot.lane.b32.xlu0 %v1820, 96
        %v1885 = vpop.permute.xlu0 %1884
        %1886 = vrot.lane.b32.xlu0 %v1821, 96
        %v1887 = vpop.permute.xlu0 %1886
        %1888 = vrot.lane.b32.xlu0 %v1822, 96
        %v1889 = vpop.permute.xlu0 %1888
        %1890 = vrot.lane.b32.xlu0 %v1823, 96
        %v1891 = vpop.permute.xlu0 %1890
        %1892 = vrot.lane.b32.xlu0 %v1824, 96
        %v1893 = vpop.permute.xlu0 %1892
        %1894 = vrot.lane.b32.xlu0 %v1825, 96
        %v1895 = vpop.permute.xlu0 %1894
        %1896 = vrot.lane.b32.xlu0 %v1826, 96
        %v1897 = vpop.permute.xlu0 %1896
        %1898 = vrot.lane.b32.xlu0 %v1827, 96
        %v1899 = vpop.permute.xlu0 %1898
        %1900 = vrot.lane.b32.xlu0 %v1828, 96
        %v1901 = vpop.permute.xlu0 %1900
        %1902 = vrot.lane.b32.xlu0 %v1829, 96
        %v1903 = vpop.permute.xlu0 %1902
        %1904 = vrot.lane.b32.xlu0 %v1830, 96
        %v1905 = vpop.permute.xlu0 %1904
        %1906 = vrot.lane.b32.xlu0 %v1831, 96
        %v1907 = vpop.permute.xlu0 %1906
        %1908 = vrot.lane.b32.xlu0 %v1832, 96
        %v1909 = vpop.permute.xlu0 %1908
        %1910 = vrot.lane.b32.xlu0 %v1833, 96
        %v1911 = vpop.permute.xlu0 %1910
        %1912 = vrot.lane.b32.xlu0 %v1834, 96
        %v1913 = vpop.permute.xlu0 %1912
        %1914 = vrot.lane.b32.xlu0 %v1835, 96
        %v1915 = vpop.permute.xlu0 %1914
        %1916 = vrot.lane.b32.xlu0 %v1836, 96
        %v1917 = vpop.permute.xlu0 %1916
        %1918 = vrot.lane.b32.xlu0 %v1837, 96
        %v1919 = vpop.permute.xlu0 %1918
        %1920 = vrot.lane.b32.xlu0 %v1838, 96
        %v1921 = vpop.permute.xlu0 %1920
        %1922 = vrot.lane.b32.xlu0 %v1839, 96
        %v1923 = vpop.permute.xlu0 %1922
        %1924 = vrot.lane.b32.xlu0 %v1840, 96
        %v1925 = vpop.permute.xlu0 %1924
        %1926 = vrot.lane.b32.xlu0 %v1841, 96
        %v1927 = vpop.permute.xlu0 %1926
        %1928 = vrot.lane.b32.xlu0 %v1842, 96
        %v1929 = vpop.permute.xlu0 %1928
        %1930 = vrot.lane.b32.xlu0 %v1843, 96
        %v1931 = vpop.permute.xlu0 %1930
        %1932 = vrot.lane.b32.xlu0 %v1844, 96
        %v1933 = vpop.permute.xlu0 %1932
        %1934 = vrot.lane.b32.xlu0 %v1845, 96
        %v1935 = vpop.permute.xlu0 %1934
        %1936 = vrot.lane.b32.xlu0 %v1846, 96
        %v1937 = vpop.permute.xlu0 %1936
        %1938 = vrot.lane.b32.xlu0 %v1847, 96
        %v1939 = vpop.permute.xlu0 %1938
        %1940 = vrot.lane.b32.xlu0 %v1848, 96
        %v1941 = vpop.permute.xlu0 %1940
        %1942 = vrot.lane.b32.xlu0 %v1849, 96
        %v1943 = vpop.permute.xlu0 %1942
        %1944 = vrot.lane.b32.xlu0 %v1850, 96
        %v1945 = vpop.permute.xlu0 %1944
        %1946 = vrot.lane.b32.xlu0 %v1851, 96
        %v1947 = vpop.permute.xlu0 %1946
        %vm1980 = vcmask 1048320
        %1981 = vst.msk [vmem:[#allocation3] sm:$0xff] %vm1980, %v1885
        %1982 = vst.msk [vmem:[#allocation3 + $0x18] sm:$0xff] %vm1980, %v1887
        %1983 = vst.msk [vmem:[#allocation3 + $0x30] sm:$0xff] %vm1980, %v1889
        %1984 = vst.msk [vmem:[#allocation3 + $0x48] sm:$0xff] %vm1980, %v1891
        %1985 = vst.msk [vmem:[#allocation3 + $0x60] sm:$0xff] %vm1980, %v1893
        %1986 = vst.msk [vmem:[#allocation3 + $0x78] sm:$0xff] %vm1980, %v1895
        %1987 = vst.msk [vmem:[#allocation3 + $0x90] sm:$0xff] %vm1980, %v1897
        %1988 = vst.msk [vmem:[#allocation3 + $0xa8] sm:$0xff] %vm1980, %v1899
        %1989 = vst.msk [vmem:[#allocation3 + $0xc0] sm:$0xff] %vm1980, %v1901
        %1990 = vst.msk [vmem:[#allocation3 + $0xd8] sm:$0xff] %vm1980, %v1903
        %1991 = vst.msk [vmem:[#allocation3 + $0xf0] sm:$0xff] %vm1980, %v1905
        %1992 = vst.msk [vmem:[#allocation3 + $0x108] sm:$0xff] %vm1980, %v1907
        %1993 = vst.msk [vmem:[#allocation3 + $0x120] sm:$0xff] %vm1980, %v1909
        %1994 = vst.msk [vmem:[#allocation3 + $0x138] sm:$0xff] %vm1980, %v1911
        %1995 = vst.msk [vmem:[#allocation3 + $0x150] sm:$0xff] %vm1980, %v1913
        %1996 = vst.msk [vmem:[#allocation3 + $0x168] sm:$0xff] %vm1980, %v1915
        %1997 = vst.msk [vmem:[#allocation3 + $0x180] sm:$0xff] %vm1980, %v1917
        %1998 = vst.msk [vmem:[#allocation3 + $0x198] sm:$0xff] %vm1980, %v1919
        %1999 = vst.msk [vmem:[#allocation3 + $0x1b0] sm:$0xff] %vm1980, %v1921
        %2000 = vst.msk [vmem:[#allocation3 + $0x1c8] sm:$0xff] %vm1980, %v1923
        %2001 = vst.msk [vmem:[#allocation3 + $0x1e0] sm:$0xff] %vm1980, %v1925
        %2002 = vst.msk [vmem:[#allocation3 + $0x1f8] sm:$0xff] %vm1980, %v1927
        %2003 = vst.msk [vmem:[#allocation3 + $0x210] sm:$0xff] %vm1980, %v1929
        %2004 = vst.msk [vmem:[#allocation3 + $0x228] sm:$0xff] %vm1980, %v1931
        %2005 = vst.msk [vmem:[#allocation3 + $0x240] sm:$0xff] %vm1980, %v1933
        %2006 = vst.msk [vmem:[#allocation3 + $0x258] sm:$0xff] %vm1980, %v1935
        %2007 = vst.msk [vmem:[#allocation3 + $0x270] sm:$0xff] %vm1980, %v1937
        %2008 = vst.msk [vmem:[#allocation3 + $0x288] sm:$0xff] %vm1980, %v1939
        %2009 = vst.msk [vmem:[#allocation3 + $0x2a0] sm:$0xff] %vm1980, %v1941
        %2010 = vst.msk [vmem:[#allocation3 + $0x2b8] sm:$0xff] %vm1980, %v1943
        %2011 = vst.msk [vmem:[#allocation3 + $0x2d0] sm:$0xff] %vm1980, %v1945
        %2012 = vst.msk [vmem:[#allocation3 + $0x2e8] sm:$0xff] %vm1980, %v1947
        %v2013 = vld [vmem:[%s1337 + $0x8] sm:$0xff]
        %v2014 = vld [vmem:[%s1337 + $0x10] sm:$0xff]
        %v2015 = vld [vmem:[%s1337 + $0x28] sm:$0xff]
        %v2016 = vld [vmem:[%s1337 + $0x30] sm:$0xff]
        %v2017 = vld [vmem:[%s1337 + $0x48] sm:$0xff]
        %v2018 = vld [vmem:[%s1337 + $0x50] sm:$0xff]
        %v2019 = vld [vmem:[%s1337 + $0x68] sm:$0xff]
        %v2020 = vld [vmem:[%s1337 + $0x70] sm:$0xff]
        %v2021 = vld [vmem:[%s1337 + $0x88] sm:$0xff]
        %v2022 = vld [vmem:[%s1337 + $0x90] sm:$0xff]
        %v2023 = vld [vmem:[%s1337 + $0xa8] sm:$0xff]
        %v2024 = vld [vmem:[%s1337 + $0xb0] sm:$0xff]
        %v2025 = vld [vmem:[%s1337 + $0xc8] sm:$0xff]
        %v2026 = vld [vmem:[%s1337 + $0xd0] sm:$0xff]
        %v2027 = vld [vmem:[%s1337 + $0xe8] sm:$0xff]
        %v2028 = vld [vmem:[%s1337 + $0xf0] sm:$0xff]
        %v2029 = vld [vmem:[%s1337 + $0x108] sm:$0xff]
        %v2030 = vld [vmem:[%s1337 + $0x110] sm:$0xff]
        %v2031 = vld [vmem:[%s1337 + $0x128] sm:$0xff]
        %v2032 = vld [vmem:[%s1337 + $0x130] sm:$0xff]
        %v2033 = vld [vmem:[%s1337 + $0x148] sm:$0xff]
        %v2034 = vld [vmem:[%s1337 + $0x150] sm:$0xff]
        %v2035 = vld [vmem:[%s1337 + $0x168] sm:$0xff]
        %v2036 = vld [vmem:[%s1337 + $0x170] sm:$0xff]
        %v2037 = vld [vmem:[%s1337 + $0x188] sm:$0xff]
        %v2038 = vld [vmem:[%s1337 + $0x190] sm:$0xff]
        %v2039 = vld [vmem:[%s1337 + $0x1a8] sm:$0xff]
        %v2040 = vld [vmem:[%s1337 + $0x1b0] sm:$0xff]
        %v2041 = vld [vmem:[%s1337 + $0x1c8] sm:$0xff]
        %v2042 = vld [vmem:[%s1337 + $0x1d0] sm:$0xff]
        %v2043 = vld [vmem:[%s1337 + $0x1e8] sm:$0xff]
        %v2044 = vld [vmem:[%s1337 + $0x1f0] sm:$0xff]
        %2045 = vst.msk [vmem:[#allocation3 + $0x8] sm:$0xff] %vm895, %v2013
        %2046 = vst.msk [vmem:[#allocation3 + $0x20] sm:$0xff] %vm895, %v2014
        %2047 = vst.msk [vmem:[#allocation3 + $0x38] sm:$0xff] %vm895, %v2015
        %2048 = vst.msk [vmem:[#allocation3 + $0x50] sm:$0xff] %vm895, %v2016
        %2049 = vst.msk [vmem:[#allocation3 + $0x68] sm:$0xff] %vm895, %v2017
        %2050 = vst.msk [vmem:[#allocation3 + $0x80] sm:$0xff] %vm895, %v2018
        %2051 = vst.msk [vmem:[#allocation3 + $0x98] sm:$0xff] %vm895, %v2019
        %2052 = vst.msk [vmem:[#allocation3 + $0xb0] sm:$0xff] %vm895, %v2020
        %2053 = vst.msk [vmem:[#allocation3 + $0xc8] sm:$0xff] %vm895, %v2021
        %2054 = vst.msk [vmem:[#allocation3 + $0xe0] sm:$0xff] %vm895, %v2022
        %2055 = vst.msk [vmem:[#allocation3 + $0xf8] sm:$0xff] %vm895, %v2023
        %2056 = vst.msk [vmem:[#allocation3 + $0x110] sm:$0xff] %vm895, %v2024
        %2057 = vst.msk [vmem:[#allocation3 + $0x128] sm:$0xff] %vm895, %v2025
        %2058 = vst.msk [vmem:[#allocation3 + $0x140] sm:$0xff] %vm895, %v2026
        %2059 = vst.msk [vmem:[#allocation3 + $0x158] sm:$0xff] %vm895, %v2027
        %2060 = vst.msk [vmem:[#allocation3 + $0x170] sm:$0xff] %vm895, %v2028
        %2061 = vst.msk [vmem:[#allocation3 + $0x188] sm:$0xff] %vm895, %v2029
        %2062 = vst.msk [vmem:[#allocation3 + $0x1a0] sm:$0xff] %vm895, %v2030
        %2063 = vst.msk [vmem:[#allocation3 + $0x1b8] sm:$0xff] %vm895, %v2031
        %2064 = vst.msk [vmem:[#allocation3 + $0x1d0] sm:$0xff] %vm895, %v2032
        %2065 = vst.msk [vmem:[#allocation3 + $0x1e8] sm:$0xff] %vm895, %v2033
        %2066 = vst.msk [vmem:[#allocation3 + $0x200] sm:$0xff] %vm895, %v2034
        %2067 = vst.msk [vmem:[#allocation3 + $0x218] sm:$0xff] %vm895, %v2035
        %2068 = vst.msk [vmem:[#allocation3 + $0x230] sm:$0xff] %vm895, %v2036
        %2069 = vst.msk [vmem:[#allocation3 + $0x248] sm:$0xff] %vm895, %v2037
        %2070 = vst.msk [vmem:[#allocation3 + $0x260] sm:$0xff] %vm895, %v2038
        %2071 = vst.msk [vmem:[#allocation3 + $0x278] sm:$0xff] %vm895, %v2039
        %2072 = vst.msk [vmem:[#allocation3 + $0x290] sm:$0xff] %vm895, %v2040
        %2073 = vst.msk [vmem:[#allocation3 + $0x2a8] sm:$0xff] %vm895, %v2041
        %2074 = vst.msk [vmem:[#allocation3 + $0x2c0] sm:$0xff] %vm895, %v2042
        %2075 = vst.msk [vmem:[#allocation3 + $0x2d8] sm:$0xff] %vm895, %v2043
        %2076 = vst.msk [vmem:[#allocation3 + $0x2f0] sm:$0xff] %vm895, %v2044
        %v2077 = vld [vmem:[%s1337 + $0x9] sm:$0xff]
        %v2078 = vld [vmem:[%s1337 + $0x11] sm:$0xff]
        %v2079 = vld [vmem:[%s1337 + $0x29] sm:$0xff]
        %v2080 = vld [vmem:[%s1337 + $0x31] sm:$0xff]
        %v2081 = vld [vmem:[%s1337 + $0x49] sm:$0xff]
        %v2082 = vld [vmem:[%s1337 + $0x51] sm:$0xff]
        %v2083 = vld [vmem:[%s1337 + $0x69] sm:$0xff]
        %v2084 = vld [vmem:[%s1337 + $0x71] sm:$0xff]
        %v2085 = vld [vmem:[%s1337 + $0x89] sm:$0xff]
        %v2086 = vld [vmem:[%s1337 + $0x91] sm:$0xff]
        %v2087 = vld [vmem:[%s1337 + $0xa9] sm:$0xff]
        %v2088 = vld [vmem:[%s1337 + $0xb1] sm:$0xff]
        %v2089 = vld [vmem:[%s1337 + $0xc9] sm:$0xff]
        %v2090 = vld [vmem:[%s1337 + $0xd1] sm:$0xff]
        %v2091 = vld [vmem:[%s1337 + $0xe9] sm:$0xff]
        %v2092 = vld [vmem:[%s1337 + $0xf1] sm:$0xff]
        %v2093 = vld [vmem:[%s1337 + $0x109] sm:$0xff]
        %v2094 = vld [vmem:[%s1337 + $0x111] sm:$0xff]
        %v2095 = vld [vmem:[%s1337 + $0x129] sm:$0xff]
        %v2096 = vld [vmem:[%s1337 + $0x131] sm:$0xff]
        %v2097 = vld [vmem:[%s1337 + $0x149] sm:$0xff]
        %v2098 = vld [vmem:[%s1337 + $0x151] sm:$0xff]
        %v2099 = vld [vmem:[%s1337 + $0x169] sm:$0xff]
        %v2100 = vld [vmem:[%s1337 + $0x171] sm:$0xff]
        %v2101 = vld [vmem:[%s1337 + $0x189] sm:$0xff]
        %v2102 = vld [vmem:[%s1337 + $0x191] sm:$0xff]
        %v2103 = vld [vmem:[%s1337 + $0x1a9] sm:$0xff]
        %v2104 = vld [vmem:[%s1337 + $0x1b1] sm:$0xff]
        %v2105 = vld [vmem:[%s1337 + $0x1c9] sm:$0xff]
        %v2106 = vld [vmem:[%s1337 + $0x1d1] sm:$0xff]
        %v2107 = vld [vmem:[%s1337 + $0x1e9] sm:$0xff]
        %v2108 = vld [vmem:[%s1337 + $0x1f1] sm:$0xff]
        %2141 = vrot.lane.b32.xlu0 %v2077, 32
        %v2142 = vpop.permute.xlu0 %2141
        %2143 = vrot.lane.b32.xlu0 %v2078, 32
        %v2144 = vpop.permute.xlu0 %2143
        %2145 = vrot.lane.b32.xlu0 %v2079, 32
        %v2146 = vpop.permute.xlu0 %2145
        %2147 = vrot.lane.b32.xlu0 %v2080, 32
        %v2148 = vpop.permute.xlu0 %2147
        %2149 = vrot.lane.b32.xlu0 %v2081, 32
        %v2150 = vpop.permute.xlu0 %2149
        %2151 = vrot.lane.b32.xlu0 %v2082, 32
        %v2152 = vpop.permute.xlu0 %2151
        %2153 = vrot.lane.b32.xlu0 %v2083, 32
        %v2154 = vpop.permute.xlu0 %2153
        %2155 = vrot.lane.b32.xlu0 %v2084, 32
        %v2156 = vpop.permute.xlu0 %2155
        %2157 = vrot.lane.b32.xlu0 %v2085, 32
        %v2158 = vpop.permute.xlu0 %2157
        %2159 = vrot.lane.b32.xlu0 %v2086, 32
        %v2160 = vpop.permute.xlu0 %2159
        %2161 = vrot.lane.b32.xlu0 %v2087, 32
        %v2162 = vpop.permute.xlu0 %2161
        %2163 = vrot.lane.b32.xlu0 %v2088, 32
        %v2164 = vpop.permute.xlu0 %2163
        %2165 = vrot.lane.b32.xlu0 %v2089, 32
        %v2166 = vpop.permute.xlu0 %2165
        %2167 = vrot.lane.b32.xlu0 %v2090, 32
        %v2168 = vpop.permute.xlu0 %2167
        %2169 = vrot.lane.b32.xlu0 %v2091, 32
        %v2170 = vpop.permute.xlu0 %2169
        %2171 = vrot.lane.b32.xlu0 %v2092, 32
        %v2172 = vpop.permute.xlu0 %2171
        %2173 = vrot.lane.b32.xlu0 %v2093, 32
        %v2174 = vpop.permute.xlu0 %2173
        %2175 = vrot.lane.b32.xlu0 %v2094, 32
        %v2176 = vpop.permute.xlu0 %2175
        %2177 = vrot.lane.b32.xlu0 %v2095, 32
        %v2178 = vpop.permute.xlu0 %2177
        %2179 = vrot.lane.b32.xlu0 %v2096, 32
        %v2180 = vpop.permute.xlu0 %2179
        %2181 = vrot.lane.b32.xlu0 %v2097, 32
        %v2182 = vpop.permute.xlu0 %2181
        %2183 = vrot.lane.b32.xlu0 %v2098, 32
        %v2184 = vpop.permute.xlu0 %2183
        %2185 = vrot.lane.b32.xlu0 %v2099, 32
        %v2186 = vpop.permute.xlu0 %2185
        %2187 = vrot.lane.b32.xlu0 %v2100, 32
        %v2188 = vpop.permute.xlu0 %2187
        %2189 = vrot.lane.b32.xlu0 %v2101, 32
        %v2190 = vpop.permute.xlu0 %2189
        %2191 = vrot.lane.b32.xlu0 %v2102, 32
        %v2192 = vpop.permute.xlu0 %2191
        %2193 = vrot.lane.b32.xlu0 %v2103, 32
        %v2194 = vpop.permute.xlu0 %2193
        %2195 = vrot.lane.b32.xlu0 %v2104, 32
        %v2196 = vpop.permute.xlu0 %2195
        %2197 = vrot.lane.b32.xlu0 %v2105, 32
        %v2198 = vpop.permute.xlu0 %2197
        %2199 = vrot.lane.b32.xlu0 %v2106, 32
        %v2200 = vpop.permute.xlu0 %2199
        %2201 = vrot.lane.b32.xlu0 %v2107, 32
        %v2202 = vpop.permute.xlu0 %2201
        %2203 = vrot.lane.b32.xlu0 %v2108, 32
        %v2204 = vpop.permute.xlu0 %2203
        %2237 = vst.msk [vmem:[#allocation3 + $0x8] sm:$0xff] %vm1594, %v2142
        %2238 = vst.msk [vmem:[#allocation3 + $0x20] sm:$0xff] %vm1594, %v2144
        %2239 = vst.msk [vmem:[#allocation3 + $0x38] sm:$0xff] %vm1594, %v2146
        %2240 = vst.msk [vmem:[#allocation3 + $0x50] sm:$0xff] %vm1594, %v2148
        %2241 = vst.msk [vmem:[#allocation3 + $0x68] sm:$0xff] %vm1594, %v2150
        %2242 = vst.msk [vmem:[#allocation3 + $0x80] sm:$0xff] %vm1594, %v2152
        %2243 = vst.msk [vmem:[#allocation3 + $0x98] sm:$0xff] %vm1594, %v2154
        %2244 = vst.msk [vmem:[#allocation3 + $0xb0] sm:$0xff] %vm1594, %v2156
        %2245 = vst.msk [vmem:[#allocation3 + $0xc8] sm:$0xff] %vm1594, %v2158
        %2246 = vst.msk [vmem:[#allocation3 + $0xe0] sm:$0xff] %vm1594, %v2160
        %2247 = vst.msk [vmem:[#allocation3 + $0xf8] sm:$0xff] %vm1594, %v2162
        %2248 = vst.msk [vmem:[#allocation3 + $0x110] sm:$0xff] %vm1594, %v2164
        %2249 = vst.msk [vmem:[#allocation3 + $0x128] sm:$0xff] %vm1594, %v2166
        %2250 = vst.msk [vmem:[#allocation3 + $0x140] sm:$0xff] %vm1594, %v2168
        %2251 = vst.msk [vmem:[#allocation3 + $0x158] sm:$0xff] %vm1594, %v2170
        %2252 = vst.msk [vmem:[#allocation3 + $0x170] sm:$0xff] %vm1594, %v2172
        %2253 = vst.msk [vmem:[#allocation3 + $0x188] sm:$0xff] %vm1594, %v2174
        %2254 = vst.msk [vmem:[#allocation3 + $0x1a0] sm:$0xff] %vm1594, %v2176
        %2255 = vst.msk [vmem:[#allocation3 + $0x1b8] sm:$0xff] %vm1594, %v2178
        %2256 = vst.msk [vmem:[#allocation3 + $0x1d0] sm:$0xff] %vm1594, %v2180
        %2257 = vst.msk [vmem:[#allocation3 + $0x1e8] sm:$0xff] %vm1594, %v2182
        %2258 = vst.msk [vmem:[#allocation3 + $0x200] sm:$0xff] %vm1594, %v2184
        %2259 = vst.msk [vmem:[#allocation3 + $0x218] sm:$0xff] %vm1594, %v2186
        %2260 = vst.msk [vmem:[#allocation3 + $0x230] sm:$0xff] %vm1594, %v2188
        %2261 = vst.msk [vmem:[#allocation3 + $0x248] sm:$0xff] %vm1594, %v2190
        %2262 = vst.msk [vmem:[#allocation3 + $0x260] sm:$0xff] %vm1594, %v2192
        %2263 = vst.msk [vmem:[#allocation3 + $0x278] sm:$0xff] %vm1594, %v2194
        %2264 = vst.msk [vmem:[#allocation3 + $0x290] sm:$0xff] %vm1594, %v2196
        %2265 = vst.msk [vmem:[#allocation3 + $0x2a8] sm:$0xff] %vm1594, %v2198
        %2266 = vst.msk [vmem:[#allocation3 + $0x2c0] sm:$0xff] %vm1594, %v2200
        %2267 = vst.msk [vmem:[#allocation3 + $0x2d8] sm:$0xff] %vm1594, %v2202
        %2268 = vst.msk [vmem:[#allocation3 + $0x2f0] sm:$0xff] %vm1594, %v2204
        %s2269 = scalar_lea.vmem [#allocation2], 64
        %v2270 = vld [vmem:[%s2269 + $0x7] sm:$0xff]
        %v2271 = vld [vmem:[%s2269 + $0xf] sm:$0xff]
        %v2272 = vld [vmem:[%s2269 + $0x27] sm:$0xff]
        %v2273 = vld [vmem:[%s2269 + $0x2f] sm:$0xff]
        %v2274 = vld [vmem:[%s2269 + $0x47] sm:$0xff]
        %v2275 = vld [vmem:[%s2269 + $0x4f] sm:$0xff]
        %v2276 = vld [vmem:[%s2269 + $0x67] sm:$0xff]
        %v2277 = vld [vmem:[%s2269 + $0x6f] sm:$0xff]
        %v2278 = vld [vmem:[%s2269 + $0x87] sm:$0xff]
        %v2279 = vld [vmem:[%s2269 + $0x8f] sm:$0xff]
        %v2280 = vld [vmem:[%s2269 + $0xa7] sm:$0xff]
        %v2281 = vld [vmem:[%s2269 + $0xaf] sm:$0xff]
        %v2282 = vld [vmem:[%s2269 + $0xc7] sm:$0xff]
        %v2283 = vld [vmem:[%s2269 + $0xcf] sm:$0xff]
        %v2284 = vld [vmem:[%s2269 + $0xe7] sm:$0xff]
        %v2285 = vld [vmem:[%s2269 + $0xef] sm:$0xff]
        %v2286 = vld [vmem:[%s2269 + $0x107] sm:$0xff]
        %v2287 = vld [vmem:[%s2269 + $0x10f] sm:$0xff]
        %v2288 = vld [vmem:[%s2269 + $0x127] sm:$0xff]
        %v2289 = vld [vmem:[%s2269 + $0x12f] sm:$0xff]
        %v2290 = vld [vmem:[%s2269 + $0x147] sm:$0xff]
        %v2291 = vld [vmem:[%s2269 + $0x14f] sm:$0xff]
        %v2292 = vld [vmem:[%s2269 + $0x167] sm:$0xff]
        %v2293 = vld [vmem:[%s2269 + $0x16f] sm:$0xff]
        %v2294 = vld [vmem:[%s2269 + $0x187] sm:$0xff]
        %v2295 = vld [vmem:[%s2269 + $0x18f] sm:$0xff]
        %v2296 = vld [vmem:[%s2269 + $0x1a7] sm:$0xff]
        %v2297 = vld [vmem:[%s2269 + $0x1af] sm:$0xff]
        %v2298 = vld [vmem:[%s2269 + $0x1c7] sm:$0xff]
        %v2299 = vld [vmem:[%s2269 + $0x1cf] sm:$0xff]
        %v2300 = vld [vmem:[%s2269 + $0x1e7] sm:$0xff]
        %v2301 = vld [vmem:[%s2269 + $0x1ef] sm:$0xff]
        %2334 = vrot.lane.b32.xlu0 %v2270, 64
        %v2335 = vpop.permute.xlu0 %2334
        %2336 = vrot.lane.b32.xlu0 %v2271, 64
        %v2337 = vpop.permute.xlu0 %2336
        %2338 = vrot.lane.b32.xlu0 %v2272, 64
        %v2339 = vpop.permute.xlu0 %2338
        %2340 = vrot.lane.b32.xlu0 %v2273, 64
        %v2341 = vpop.permute.xlu0 %2340
        %2342 = vrot.lane.b32.xlu0 %v2274, 64
        %v2343 = vpop.permute.xlu0 %2342
        %2344 = vrot.lane.b32.xlu0 %v2275, 64
        %v2345 = vpop.permute.xlu0 %2344
        %2346 = vrot.lane.b32.xlu0 %v2276, 64
        %v2347 = vpop.permute.xlu0 %2346
        %2348 = vrot.lane.b32.xlu0 %v2277, 64
        %v2349 = vpop.permute.xlu0 %2348
        %2350 = vrot.lane.b32.xlu0 %v2278, 64
        %v2351 = vpop.permute.xlu0 %2350
        %2352 = vrot.lane.b32.xlu0 %v2279, 64
        %v2353 = vpop.permute.xlu0 %2352
        %2354 = vrot.lane.b32.xlu0 %v2280, 64
        %v2355 = vpop.permute.xlu0 %2354
        %2356 = vrot.lane.b32.xlu0 %v2281, 64
        %v2357 = vpop.permute.xlu0 %2356
        %2358 = vrot.lane.b32.xlu0 %v2282, 64
        %v2359 = vpop.permute.xlu0 %2358
        %2360 = vrot.lane.b32.xlu0 %v2283, 64
        %v2361 = vpop.permute.xlu0 %2360
        %2362 = vrot.lane.b32.xlu0 %v2284, 64
        %v2363 = vpop.permute.xlu0 %2362
        %2364 = vrot.lane.b32.xlu0 %v2285, 64
        %v2365 = vpop.permute.xlu0 %2364
        %2366 = vrot.lane.b32.xlu0 %v2286, 64
        %v2367 = vpop.permute.xlu0 %2366
        %2368 = vrot.lane.b32.xlu0 %v2287, 64
        %v2369 = vpop.permute.xlu0 %2368
        %2370 = vrot.lane.b32.xlu0 %v2288, 64
        %v2371 = vpop.permute.xlu0 %2370
        %2372 = vrot.lane.b32.xlu0 %v2289, 64
        %v2373 = vpop.permute.xlu0 %2372
        %2374 = vrot.lane.b32.xlu0 %v2290, 64
        %v2375 = vpop.permute.xlu0 %2374
        %2376 = vrot.lane.b32.xlu0 %v2291, 64
        %v2377 = vpop.permute.xlu0 %2376
        %2378 = vrot.lane.b32.xlu0 %v2292, 64
        %v2379 = vpop.permute.xlu0 %2378
        %2380 = vrot.lane.b32.xlu0 %v2293, 64
        %v2381 = vpop.permute.xlu0 %2380
        %2382 = vrot.lane.b32.xlu0 %v2294, 64
        %v2383 = vpop.permute.xlu0 %2382
        %2384 = vrot.lane.b32.xlu0 %v2295, 64
        %v2385 = vpop.permute.xlu0 %2384
        %2386 = vrot.lane.b32.xlu0 %v2296, 64
        %v2387 = vpop.permute.xlu0 %2386
        %2388 = vrot.lane.b32.xlu0 %v2297, 64
        %v2389 = vpop.permute.xlu0 %2388
        %2390 = vrot.lane.b32.xlu0 %v2298, 64
        %v2391 = vpop.permute.xlu0 %2390
        %2392 = vrot.lane.b32.xlu0 %v2299, 64
        %v2393 = vpop.permute.xlu0 %2392
        %2394 = vrot.lane.b32.xlu0 %v2300, 64
        %v2395 = vpop.permute.xlu0 %2394
        %2396 = vrot.lane.b32.xlu0 %v2301, 64
        %v2397 = vpop.permute.xlu0 %2396
        %2430 = vst.msk [vmem:[#allocation3 + $0x8] sm:$0xff] %vm1787, %v2335
        %2431 = vst.msk [vmem:[#allocation3 + $0x20] sm:$0xff] %vm1787, %v2337
        %2432 = vst.msk [vmem:[#allocation3 + $0x38] sm:$0xff] %vm1787, %v2339
        %2433 = vst.msk [vmem:[#allocation3 + $0x50] sm:$0xff] %vm1787, %v2341
        %2434 = vst.msk [vmem:[#allocation3 + $0x68] sm:$0xff] %vm1787, %v2343
        %2435 = vst.msk [vmem:[#allocation3 + $0x80] sm:$0xff] %vm1787, %v2345
        %2436 = vst.msk [vmem:[#allocation3 + $0x98] sm:$0xff] %vm1787, %v2347
        %2437 = vst.msk [vmem:[#allocation3 + $0xb0] sm:$0xff] %vm1787, %v2349
        %2438 = vst.msk [vmem:[#allocation3 + $0xc8] sm:$0xff] %vm1787, %v2351
        %2439 = vst.msk [vmem:[#allocation3 + $0xe0] sm:$0xff] %vm1787, %v2353
        %2440 = vst.msk [vmem:[#allocation3 + $0xf8] sm:$0xff] %vm1787, %v2355
        %2441 = vst.msk [vmem:[#allocation3 + $0x110] sm:$0xff] %vm1787, %v2357
        %2442 = vst.msk [vmem:[#allocation3 + $0x128] sm:$0xff] %vm1787, %v2359
        %2443 = vst.msk [vmem:[#allocation3 + $0x140] sm:$0xff] %vm1787, %v2361
        %2444 = vst.msk [vmem:[#allocation3 + $0x158] sm:$0xff] %vm1787, %v2363
        %2445 = vst.msk [vmem:[#allocation3 + $0x170] sm:$0xff] %vm1787, %v2365
        %2446 = vst.msk [vmem:[#allocation3 + $0x188] sm:$0xff] %vm1787, %v2367
        %2447 = vst.msk [vmem:[#allocation3 + $0x1a0] sm:$0xff] %vm1787, %v2369
        %2448 = vst.msk [vmem:[#allocation3 + $0x1b8] sm:$0xff] %vm1787, %v2371
        %2449 = vst.msk [vmem:[#allocation3 + $0x1d0] sm:$0xff] %vm1787, %v2373
        %2450 = vst.msk [vmem:[#allocation3 + $0x1e8] sm:$0xff] %vm1787, %v2375
        %2451 = vst.msk [vmem:[#allocation3 + $0x200] sm:$0xff] %vm1787, %v2377
        %2452 = vst.msk [vmem:[#allocation3 + $0x218] sm:$0xff] %vm1787, %v2379
        %2453 = vst.msk [vmem:[#allocation3 + $0x230] sm:$0xff] %vm1787, %v2381
        %2454 = vst.msk [vmem:[#allocation3 + $0x248] sm:$0xff] %vm1787, %v2383
        %2455 = vst.msk [vmem:[#allocation3 + $0x260] sm:$0xff] %vm1787, %v2385
        %2456 = vst.msk [vmem:[#allocation3 + $0x278] sm:$0xff] %vm1787, %v2387
        %2457 = vst.msk [vmem:[#allocation3 + $0x290] sm:$0xff] %vm1787, %v2389
        %2458 = vst.msk [vmem:[#allocation3 + $0x2a8] sm:$0xff] %vm1787, %v2391
        %2459 = vst.msk [vmem:[#allocation3 + $0x2c0] sm:$0xff] %vm1787, %v2393
        %2460 = vst.msk [vmem:[#allocation3 + $0x2d8] sm:$0xff] %vm1787, %v2395
        %2461 = vst.msk [vmem:[#allocation3 + $0x2f0] sm:$0xff] %vm1787, %v2397
        %v2462 = vld [vmem:[%s2269 + $0x8] sm:$0xff]
        %v2463 = vld [vmem:[%s2269 + $0x10] sm:$0xff]
        %v2464 = vld [vmem:[%s2269 + $0x28] sm:$0xff]
        %v2465 = vld [vmem:[%s2269 + $0x30] sm:$0xff]
        %v2466 = vld [vmem:[%s2269 + $0x48] sm:$0xff]
        %v2467 = vld [vmem:[%s2269 + $0x50] sm:$0xff]
        %v2468 = vld [vmem:[%s2269 + $0x68] sm:$0xff]
        %v2469 = vld [vmem:[%s2269 + $0x70] sm:$0xff]
        %v2470 = vld [vmem:[%s2269 + $0x88] sm:$0xff]
        %v2471 = vld [vmem:[%s2269 + $0x90] sm:$0xff]
        %v2472 = vld [vmem:[%s2269 + $0xa8] sm:$0xff]
        %v2473 = vld [vmem:[%s2269 + $0xb0] sm:$0xff]
        %v2474 = vld [vmem:[%s2269 + $0xc8] sm:$0xff]
        %v2475 = vld [vmem:[%s2269 + $0xd0] sm:$0xff]
        %v2476 = vld [vmem:[%s2269 + $0xe8] sm:$0xff]
        %v2477 = vld [vmem:[%s2269 + $0xf0] sm:$0xff]
        %v2478 = vld [vmem:[%s2269 + $0x108] sm:$0xff]
        %v2479 = vld [vmem:[%s2269 + $0x110] sm:$0xff]
        %v2480 = vld [vmem:[%s2269 + $0x128] sm:$0xff]
        %v2481 = vld [vmem:[%s2269 + $0x130] sm:$0xff]
        %v2482 = vld [vmem:[%s2269 + $0x148] sm:$0xff]
        %v2483 = vld [vmem:[%s2269 + $0x150] sm:$0xff]
        %v2484 = vld [vmem:[%s2269 + $0x168] sm:$0xff]
        %v2485 = vld [vmem:[%s2269 + $0x170] sm:$0xff]
        %v2486 = vld [vmem:[%s2269 + $0x188] sm:$0xff]
        %v2487 = vld [vmem:[%s2269 + $0x190] sm:$0xff]
        %v2488 = vld [vmem:[%s2269 + $0x1a8] sm:$0xff]
        %v2489 = vld [vmem:[%s2269 + $0x1b0] sm:$0xff]
        %v2490 = vld [vmem:[%s2269 + $0x1c8] sm:$0xff]
        %v2491 = vld [vmem:[%s2269 + $0x1d0] sm:$0xff]
        %v2492 = vld [vmem:[%s2269 + $0x1e8] sm:$0xff]
        %v2493 = vld [vmem:[%s2269 + $0x1f0] sm:$0xff]
        %2526 = vrot.lane.b32.xlu0 %v2462, 96
        %v2527 = vpop.permute.xlu0 %2526
        %2528 = vrot.lane.b32.xlu0 %v2463, 96
        %v2529 = vpop.permute.xlu0 %2528
        %2530 = vrot.lane.b32.xlu0 %v2464, 96
        %v2531 = vpop.permute.xlu0 %2530
        %2532 = vrot.lane.b32.xlu0 %v2465, 96
        %v2533 = vpop.permute.xlu0 %2532
        %2534 = vrot.lane.b32.xlu0 %v2466, 96
        %v2535 = vpop.permute.xlu0 %2534
        %2536 = vrot.lane.b32.xlu0 %v2467, 96
        %v2537 = vpop.permute.xlu0 %2536
        %2538 = vrot.lane.b32.xlu0 %v2468, 96
        %v2539 = vpop.permute.xlu0 %2538
        %2540 = vrot.lane.b32.xlu0 %v2469, 96
        %v2541 = vpop.permute.xlu0 %2540
        %2542 = vrot.lane.b32.xlu0 %v2470, 96
        %v2543 = vpop.permute.xlu0 %2542
        %2544 = vrot.lane.b32.xlu0 %v2471, 96
        %v2545 = vpop.permute.xlu0 %2544
        %2546 = vrot.lane.b32.xlu0 %v2472, 96
        %v2547 = vpop.permute.xlu0 %2546
        %2548 = vrot.lane.b32.xlu0 %v2473, 96
        %v2549 = vpop.permute.xlu0 %2548
        %2550 = vrot.lane.b32.xlu0 %v2474, 96
        %v2551 = vpop.permute.xlu0 %2550
        %2552 = vrot.lane.b32.xlu0 %v2475, 96
        %v2553 = vpop.permute.xlu0 %2552
        %2554 = vrot.lane.b32.xlu0 %v2476, 96
        %v2555 = vpop.permute.xlu0 %2554
        %2556 = vrot.lane.b32.xlu0 %v2477, 96
        %v2557 = vpop.permute.xlu0 %2556
        %2558 = vrot.lane.b32.xlu0 %v2478, 96
        %v2559 = vpop.permute.xlu0 %2558
        %2560 = vrot.lane.b32.xlu0 %v2479, 96
        %v2561 = vpop.permute.xlu0 %2560
        %2562 = vrot.lane.b32.xlu0 %v2480, 96
        %v2563 = vpop.permute.xlu0 %2562
        %2564 = vrot.lane.b32.xlu0 %v2481, 96
        %v2565 = vpop.permute.xlu0 %2564
        %2566 = vrot.lane.b32.xlu0 %v2482, 96
        %v2567 = vpop.permute.xlu0 %2566
        %2568 = vrot.lane.b32.xlu0 %v2483, 96
        %v2569 = vpop.permute.xlu0 %2568
        %2570 = vrot.lane.b32.xlu0 %v2484, 96
        %v2571 = vpop.permute.xlu0 %2570
        %2572 = vrot.lane.b32.xlu0 %v2485, 96
        %v2573 = vpop.permute.xlu0 %2572
        %2574 = vrot.lane.b32.xlu0 %v2486, 96
        %v2575 = vpop.permute.xlu0 %2574
        %2576 = vrot.lane.b32.xlu0 %v2487, 96
        %v2577 = vpop.permute.xlu0 %2576
        %2578 = vrot.lane.b32.xlu0 %v2488, 96
        %v2579 = vpop.permute.xlu0 %2578
        %2580 = vrot.lane.b32.xlu0 %v2489, 96
        %v2581 = vpop.permute.xlu0 %2580
        %2582 = vrot.lane.b32.xlu0 %v2490, 96
        %v2583 = vpop.permute.xlu0 %2582
        %2584 = vrot.lane.b32.xlu0 %v2491, 96
        %v2585 = vpop.permute.xlu0 %2584
        %2586 = vrot.lane.b32.xlu0 %v2492, 96
        %v2587 = vpop.permute.xlu0 %2586
        %2588 = vrot.lane.b32.xlu0 %v2493, 96
        %v2589 = vpop.permute.xlu0 %2588
        %2622 = vst.msk [vmem:[#allocation3 + $0x8] sm:$0xff] %vm1980, %v2527
        %2623 = vst.msk [vmem:[#allocation3 + $0x20] sm:$0xff] %vm1980, %v2529
        %2624 = vst.msk [vmem:[#allocation3 + $0x38] sm:$0xff] %vm1980, %v2531
        %2625 = vst.msk [vmem:[#allocation3 + $0x50] sm:$0xff] %vm1980, %v2533
        %2626 = vst.msk [vmem:[#allocation3 + $0x68] sm:$0xff] %vm1980, %v2535
        %2627 = vst.msk [vmem:[#allocation3 + $0x80] sm:$0xff] %vm1980, %v2537
        %2628 = vst.msk [vmem:[#allocation3 + $0x98] sm:$0xff] %vm1980, %v2539
        %2629 = vst.msk [vmem:[#allocation3 + $0xb0] sm:$0xff] %vm1980, %v2541
        %2630 = vst.msk [vmem:[#allocation3 + $0xc8] sm:$0xff] %vm1980, %v2543
        %2631 = vst.msk [vmem:[#allocation3 + $0xe0] sm:$0xff] %vm1980, %v2545
        %2632 = vst.msk [vmem:[#allocation3 + $0xf8] sm:$0xff] %vm1980, %v2547
        %2633 = vst.msk [vmem:[#allocation3 + $0x110] sm:$0xff] %vm1980, %v2549
        %2634 = vst.msk [vmem:[#allocation3 + $0x128] sm:$0xff] %vm1980, %v2551
        %2635 = vst.msk [vmem:[#allocation3 + $0x140] sm:$0xff] %vm1980, %v2553
        %2636 = vst.msk [vmem:[#allocation3 + $0x158] sm:$0xff] %vm1980, %v2555
        %2637 = vst.msk [vmem:[#allocation3 + $0x170] sm:$0xff] %vm1980, %v2557
        %2638 = vst.msk [vmem:[#allocation3 + $0x188] sm:$0xff] %vm1980, %v2559
        %2639 = vst.msk [vmem:[#allocation3 + $0x1a0] sm:$0xff] %vm1980, %v2561
        %2640 = vst.msk [vmem:[#allocation3 + $0x1b8] sm:$0xff] %vm1980, %v2563
        %2641 = vst.msk [vmem:[#allocation3 + $0x1d0] sm:$0xff] %vm1980, %v2565
        %2642 = vst.msk [vmem:[#allocation3 + $0x1e8] sm:$0xff] %vm1980, %v2567
        %2643 = vst.msk [vmem:[#allocation3 + $0x200] sm:$0xff] %vm1980, %v2569
        %2644 = vst.msk [vmem:[#allocation3 + $0x218] sm:$0xff] %vm1980, %v2571
        %2645 = vst.msk [vmem:[#allocation3 + $0x230] sm:$0xff] %vm1980, %v2573
        %2646 = vst.msk [vmem:[#allocation3 + $0x248] sm:$0xff] %vm1980, %v2575
        %2647 = vst.msk [vmem:[#allocation3 + $0x260] sm:$0xff] %vm1980, %v2577
        %2648 = vst.msk [vmem:[#allocation3 + $0x278] sm:$0xff] %vm1980, %v2579
        %2649 = vst.msk [vmem:[#allocation3 + $0x290] sm:$0xff] %vm1980, %v2581
        %2650 = vst.msk [vmem:[#allocation3 + $0x2a8] sm:$0xff] %vm1980, %v2583
        %2651 = vst.msk [vmem:[#allocation3 + $0x2c0] sm:$0xff] %vm1980, %v2585
        %2652 = vst.msk [vmem:[#allocation3 + $0x2d8] sm:$0xff] %vm1980, %v2587
        %2653 = vst.msk [vmem:[#allocation3 + $0x2f0] sm:$0xff] %vm1980, %v2589
        %v2654 = vld [vmem:[%s2269 + $0x9] sm:$0xff]
        %v2655 = vld [vmem:[%s2269 + $0x11] sm:$0xff]
        %v2656 = vld [vmem:[%s2269 + $0x29] sm:$0xff]
        %v2657 = vld [vmem:[%s2269 + $0x31] sm:$0xff]
        %v2658 = vld [vmem:[%s2269 + $0x49] sm:$0xff]
        %v2659 = vld [vmem:[%s2269 + $0x51] sm:$0xff]
        %v2660 = vld [vmem:[%s2269 + $0x69] sm:$0xff]
        %v2661 = vld [vmem:[%s2269 + $0x71] sm:$0xff]
        %v2662 = vld [vmem:[%s2269 + $0x89] sm:$0xff]
        %v2663 = vld [vmem:[%s2269 + $0x91] sm:$0xff]
        %v2664 = vld [vmem:[%s2269 + $0xa9] sm:$0xff]
        %v2665 = vld [vmem:[%s2269 + $0xb1] sm:$0xff]
        %v2666 = vld [vmem:[%s2269 + $0xc9] sm:$0xff]
        %v2667 = vld [vmem:[%s2269 + $0xd1] sm:$0xff]
        %v2668 = vld [vmem:[%s2269 + $0xe9] sm:$0xff]
        %v2669 = vld [vmem:[%s2269 + $0xf1] sm:$0xff]
        %v2670 = vld [vmem:[%s2269 + $0x109] sm:$0xff]
        %v2671 = vld [vmem:[%s2269 + $0x111] sm:$0xff]
        %v2672 = vld [vmem:[%s2269 + $0x129] sm:$0xff]
        %v2673 = vld [vmem:[%s2269 + $0x131] sm:$0xff]
        %v2674 = vld [vmem:[%s2269 + $0x149] sm:$0xff]
        %v2675 = vld [vmem:[%s2269 + $0x151] sm:$0xff]
        %v2676 = vld [vmem:[%s2269 + $0x169] sm:$0xff]
        %v2677 = vld [vmem:[%s2269 + $0x171] sm:$0xff]
        %v2678 = vld [vmem:[%s2269 + $0x189] sm:$0xff]
        %v2679 = vld [vmem:[%s2269 + $0x191] sm:$0xff]
        %v2680 = vld [vmem:[%s2269 + $0x1a9] sm:$0xff]
        %v2681 = vld [vmem:[%s2269 + $0x1b1] sm:$0xff]
        %v2682 = vld [vmem:[%s2269 + $0x1c9] sm:$0xff]
        %v2683 = vld [vmem:[%s2269 + $0x1d1] sm:$0xff]
        %v2684 = vld [vmem:[%s2269 + $0x1e9] sm:$0xff]
        %v2685 = vld [vmem:[%s2269 + $0x1f1] sm:$0xff]
        %2686 = vst.msk [vmem:[#allocation3 + $0x10] sm:$0xff] %vm895, %v2654
        %2687 = vst.msk [vmem:[#allocation3 + $0x28] sm:$0xff] %vm895, %v2655
        %2688 = vst.msk [vmem:[#allocation3 + $0x40] sm:$0xff] %vm895, %v2656
        %2689 = vst.msk [vmem:[#allocation3 + $0x58] sm:$0xff] %vm895, %v2657
        %2690 = vst.msk [vmem:[#allocation3 + $0x70] sm:$0xff] %vm895, %v2658
        %2691 = vst.msk [vmem:[#allocation3 + $0x88] sm:$0xff] %vm895, %v2659
        %2692 = vst.msk [vmem:[#allocation3 + $0xa0] sm:$0xff] %vm895, %v2660
        %2693 = vst.msk [vmem:[#allocation3 + $0xb8] sm:$0xff] %vm895, %v2661
        %2694 = vst.msk [vmem:[#allocation3 + $0xd0] sm:$0xff] %vm895, %v2662
        %2695 = vst.msk [vmem:[#allocation3 + $0xe8] sm:$0xff] %vm895, %v2663
        %2696 = vst.msk [vmem:[#allocation3 + $0x100] sm:$0xff] %vm895, %v2664
        %2697 = vst.msk [vmem:[#allocation3 + $0x118] sm:$0xff] %vm895, %v2665
        %2698 = vst.msk [vmem:[#allocation3 + $0x130] sm:$0xff] %vm895, %v2666
        %2699 = vst.msk [vmem:[#allocation3 + $0x148] sm:$0xff] %vm895, %v2667
        %2700 = vst.msk [vmem:[#allocation3 + $0x160] sm:$0xff] %vm895, %v2668
        %2701 = vst.msk [vmem:[#allocation3 + $0x178] sm:$0xff] %vm895, %v2669
        %2702 = vst.msk [vmem:[#allocation3 + $0x190] sm:$0xff] %vm895, %v2670
        %2703 = vst.msk [vmem:[#allocation3 + $0x1a8] sm:$0xff] %vm895, %v2671
        %2704 = vst.msk [vmem:[#allocation3 + $0x1c0] sm:$0xff] %vm895, %v2672
        %2705 = vst.msk [vmem:[#allocation3 + $0x1d8] sm:$0xff] %vm895, %v2673
        %2706 = vst.msk [vmem:[#allocation3 + $0x1f0] sm:$0xff] %vm895, %v2674
        %2707 = vst.msk [vmem:[#allocation3 + $0x208] sm:$0xff] %vm895, %v2675
        %2708 = vst.msk [vmem:[#allocation3 + $0x220] sm:$0xff] %vm895, %v2676
        %2709 = vst.msk [vmem:[#allocation3 + $0x238] sm:$0xff] %vm895, %v2677
        %2710 = vst.msk [vmem:[#allocation3 + $0x250] sm:$0xff] %vm895, %v2678
        %2711 = vst.msk [vmem:[#allocation3 + $0x268] sm:$0xff] %vm895, %v2679
        %2712 = vst.msk [vmem:[#allocation3 + $0x280] sm:$0xff] %vm895, %v2680
        %2713 = vst.msk [vmem:[#allocation3 + $0x298] sm:$0xff] %vm895, %v2681
        %2714 = vst.msk [vmem:[#allocation3 + $0x2b0] sm:$0xff] %vm895, %v2682
        %2715 = vst.msk [vmem:[#allocation3 + $0x2c8] sm:$0xff] %vm895, %v2683
        %2716 = vst.msk [vmem:[#allocation3 + $0x2e0] sm:$0xff] %vm895, %v2684
        %2717 = vst.msk [vmem:[#allocation3 + $0x2f8] sm:$0xff] %vm895, %v2685
        %v2718 = vld [vmem:[#allocation3] sm:$0xff]
        %v2719 = vld [vmem:[#allocation3 + $0x8] sm:$0xff]
        %v2720 = vld [vmem:[#allocation3 + $0x10] sm:$0xff]
        %v2721 = vld [vmem:[#allocation3 + $0x18] sm:$0xff]
        %v2722 = vld [vmem:[#allocation3 + $0x20] sm:$0xff]
        %v2723 = vld [vmem:[#allocation3 + $0x28] sm:$0xff]
        %v2724 = vld [vmem:[#allocation3 + $0x30] sm:$0xff]
        %v2725 = vld [vmem:[#allocation3 + $0x38] sm:$0xff]
        %v2726 = vld [vmem:[#allocation3 + $0x40] sm:$0xff]
        %v2727 = vld [vmem:[#allocation3 + $0x48] sm:$0xff]
        %v2728 = vld [vmem:[#allocation3 + $0x50] sm:$0xff]
        %v2729 = vld [vmem:[#allocation3 + $0x58] sm:$0xff]
        %v2730 = vld [vmem:[#allocation3 + $0x60] sm:$0xff]
        %v2731 = vld [vmem:[#allocation3 + $0x68] sm:$0xff]
        %v2732 = vld [vmem:[#allocation3 + $0x70] sm:$0xff]
        %v2733 = vld [vmem:[#allocation3 + $0x78] sm:$0xff]
        %v2734 = vld [vmem:[#allocation3 + $0x80] sm:$0xff]
        %v2735 = vld [vmem:[#allocation3 + $0x88] sm:$0xff]
        %v2736 = vld [vmem:[#allocation3 + $0x90] sm:$0xff]
        %v2737 = vld [vmem:[#allocation3 + $0x98] sm:$0xff]
        %v2738 = vld [vmem:[#allocation3 + $0xa0] sm:$0xff]
        %v2739 = vld [vmem:[#allocation3 + $0xa8] sm:$0xff]
        %v2740 = vld [vmem:[#allocation3 + $0xb0] sm:$0xff]
        %v2741 = vld [vmem:[#allocation3 + $0xb8] sm:$0xff]
        %v2742 = vld [vmem:[#allocation3 + $0xc0] sm:$0xff]
        %v2743 = vld [vmem:[#allocation3 + $0xc8] sm:$0xff]
        %v2744 = vld [vmem:[#allocation3 + $0xd0] sm:$0xff]
        %v2745 = vld [vmem:[#allocation3 + $0xd8] sm:$0xff]
        %v2746 = vld [vmem:[#allocation3 + $0xe0] sm:$0xff]
        %v2747 = vld [vmem:[#allocation3 + $0xe8] sm:$0xff]
        %v2748 = vld [vmem:[#allocation3 + $0xf0] sm:$0xff]
        %v2749 = vld [vmem:[#allocation3 + $0xf8] sm:$0xff]
        %v2750 = vld [vmem:[#allocation3 + $0x100] sm:$0xff]
        %v2751 = vld [vmem:[#allocation3 + $0x108] sm:$0xff]
        %v2752 = vld [vmem:[#allocation3 + $0x110] sm:$0xff]
        %v2753 = vld [vmem:[#allocation3 + $0x118] sm:$0xff]
        %v2754 = vld [vmem:[#allocation3 + $0x120] sm:$0xff]
        %v2755 = vld [vmem:[#allocation3 + $0x128] sm:$0xff]
        %v2756 = vld [vmem:[#allocation3 + $0x130] sm:$0xff]
        %v2757 = vld [vmem:[#allocation3 + $0x138] sm:$0xff]
        %v2758 = vld [vmem:[#allocation3 + $0x140] sm:$0xff]
        %v2759 = vld [vmem:[#allocation3 + $0x148] sm:$0xff]
        %v2760 = vld [vmem:[#allocation3 + $0x150] sm:$0xff]
        %v2761 = vld [vmem:[#allocation3 + $0x158] sm:$0xff]
        %v2762 = vld [vmem:[#allocation3 + $0x160] sm:$0xff]
        %v2763 = vld [vmem:[#allocation3 + $0x168] sm:$0xff]
        %v2764 = vld [vmem:[#allocation3 + $0x170] sm:$0xff]
        %v2765 = vld [vmem:[#allocation3 + $0x178] sm:$0xff]
        %v2766 = vld [vmem:[#allocation3 + $0x180] sm:$0xff]
        %v2767 = vld [vmem:[#allocation3 + $0x188] sm:$0xff]
        %v2768 = vld [vmem:[#allocation3 + $0x190] sm:$0xff]
        %v2769 = vld [vmem:[#allocation3 + $0x198] sm:$0xff]
        %v2770 = vld [vmem:[#allocation3 + $0x1a0] sm:$0xff]
        %v2771 = vld [vmem:[#allocation3 + $0x1a8] sm:$0xff]
        %v2772 = vld [vmem:[#allocation3 + $0x1b0] sm:$0xff]
        %v2773 = vld [vmem:[#allocation3 + $0x1b8] sm:$0xff]
        %v2774 = vld [vmem:[#allocation3 + $0x1c0] sm:$0xff]
        %v2775 = vld [vmem:[#allocation3 + $0x1c8] sm:$0xff]
        %v2776 = vld [vmem:[#allocation3 + $0x1d0] sm:$0xff]
        %v2777 = vld [vmem:[#allocation3 + $0x1d8] sm:$0xff]
        %v2778 = vld [vmem:[#allocation3 + $0x1e0] sm:$0xff]
        %v2779 = vld [vmem:[#allocation3 + $0x1e8] sm:$0xff]
        %v2780 = vld [vmem:[#allocation3 + $0x1f0] sm:$0xff]
        %v2781 = vld [vmem:[#allocation3 + $0x1f8] sm:$0xff]
        %v2782 = vld [vmem:[#allocation3 + $0x200] sm:$0xff]
        %v2783 = vld [vmem:[#allocation3 + $0x208] sm:$0xff]
        %v2784 = vld [vmem:[#allocation3 + $0x210] sm:$0xff]
        %v2785 = vld [vmem:[#allocation3 + $0x218] sm:$0xff]
        %v2786 = vld [vmem:[#allocation3 + $0x220] sm:$0xff]
        %v2787 = vld [vmem:[#allocation3 + $0x228] sm:$0xff]
        %v2788 = vld [vmem:[#allocation3 + $0x230] sm:$0xff]
        %v2789 = vld [vmem:[#allocation3 + $0x238] sm:$0xff]
        %v2790 = vld [vmem:[#allocation3 + $0x240] sm:$0xff]
        %v2791 = vld [vmem:[#allocation3 + $0x248] sm:$0xff]
        %v2792 = vld [vmem:[#allocation3 + $0x250] sm:$0xff]
        %v2793 = vld [vmem:[#allocation3 + $0x258] sm:$0xff]
        %v2794 = vld [vmem:[#allocation3 + $0x260] sm:$0xff]
        %v2795 = vld [vmem:[#allocation3 + $0x268] sm:$0xff]
        %v2796 = vld [vmem:[#allocation3 + $0x270] sm:$0xff]
        %v2797 = vld [vmem:[#allocation3 + $0x278] sm:$0xff]
        %v2798 = vld [vmem:[#allocation3 + $0x280] sm:$0xff]
        %v2799 = vld [vmem:[#allocation3 + $0x288] sm:$0xff]
        %v2800 = vld [vmem:[#allocation3 + $0x290] sm:$0xff]
        %v2801 = vld [vmem:[#allocation3 + $0x298] sm:$0xff]
        %v2802 = vld [vmem:[#allocation3 + $0x2a0] sm:$0xff]
        %v2803 = vld [vmem:[#allocation3 + $0x2a8] sm:$0xff]
        %v2804 = vld [vmem:[#allocation3 + $0x2b0] sm:$0xff]
        %v2805 = vld [vmem:[#allocation3 + $0x2b8] sm:$0xff]
        %v2806 = vld [vmem:[#allocation3 + $0x2c0] sm:$0xff]
        %v2807 = vld [vmem:[#allocation3 + $0x2c8] sm:$0xff]
        %v2808 = vld [vmem:[#allocation3 + $0x2d0] sm:$0xff]
        %v2809 = vld [vmem:[#allocation3 + $0x2d8] sm:$0xff]
        %v2810 = vld [vmem:[#allocation3 + $0x2e0] sm:$0xff]
        %v2811 = vld [vmem:[#allocation3 + $0x2e8] sm:$0xff]
        %v2812 = vld [vmem:[#allocation3 + $0x2f0] sm:$0xff]
        %v2813 = vld [vmem:[#allocation3 + $0x2f8] sm:$0xff]
        %v2814 = vpack.c.bf16 %v2721, %v2718
        %v2815 = vpack.c.bf16 %v2722, %v2719
        %v2816 = vpack.c.bf16 %v2723, %v2720
        %v2817 = vpack.c.bf16 %v2727, %v2724
        %v2818 = vpack.c.bf16 %v2728, %v2725
        %v2819 = vpack.c.bf16 %v2729, %v2726
        %v2820 = vpack.c.bf16 %v2733, %v2730
        %v2821 = vpack.c.bf16 %v2734, %v2731
        %v2822 = vpack.c.bf16 %v2735, %v2732
        %v2823 = vpack.c.bf16 %v2739, %v2736
        %v2824 = vpack.c.bf16 %v2740, %v2737
        %v2825 = vpack.c.bf16 %v2741, %v2738
        %v2826 = vpack.c.bf16 %v2745, %v2742
        %v2827 = vpack.c.bf16 %v2746, %v2743
        %v2828 = vpack.c.bf16 %v2747, %v2744
        %v2829 = vpack.c.bf16 %v2751, %v2748
        %v2830 = vpack.c.bf16 %v2752, %v2749
        %v2831 = vpack.c.bf16 %v2753, %v2750
        %v2832 = vpack.c.bf16 %v2757, %v2754
        %v2833 = vpack.c.bf16 %v2758, %v2755
        %v2834 = vpack.c.bf16 %v2759, %v2756
        %v2835 = vpack.c.bf16 %v2763, %v2760
        %v2836 = vpack.c.bf16 %v2764, %v2761
        %v2837 = vpack.c.bf16 %v2765, %v2762
        %v2838 = vpack.c.bf16 %v2769, %v2766
        %v2839 = vpack.c.bf16 %v2770, %v2767
        %v2840 = vpack.c.bf16 %v2771, %v2768
        %v2841 = vpack.c.bf16 %v2775, %v2772
        %v2842 = vpack.c.bf16 %v2776, %v2773
        %v2843 = vpack.c.bf16 %v2777, %v2774
        %v2844 = vpack.c.bf16 %v2781, %v2778
        %v2845 = vpack.c.bf16 %v2782, %v2779
        %v2846 = vpack.c.bf16 %v2783, %v2780
        %v2847 = vpack.c.bf16 %v2787, %v2784
        %v2848 = vpack.c.bf16 %v2788, %v2785
        %v2849 = vpack.c.bf16 %v2789, %v2786
        %v2850 = vpack.c.bf16 %v2793, %v2790
        %v2851 = vpack.c.bf16 %v2794, %v2791
        %v2852 = vpack.c.bf16 %v2795, %v2792
        %v2853 = vpack.c.bf16 %v2799, %v2796
        %v2854 = vpack.c.bf16 %v2800, %v2797
        %v2855 = vpack.c.bf16 %v2801, %v2798
        %v2856 = vpack.c.bf16 %v2805, %v2802
        %v2857 = vpack.c.bf16 %v2806, %v2803
        %v2858 = vpack.c.bf16 %v2807, %v2804
        %v2859 = vpack.c.bf16 %v2811, %v2808
        %v2860 = vpack.c.bf16 %v2812, %v2809
        %v2861 = vpack.c.bf16 %v2813, %v2810
        %v2862 = vld [vmem:[%s836] sm:$0xf]
        %v2863 = vld [vmem:[%s836 + $0x4] sm:$0xf]
        %v2864 = vld [vmem:[%s836 + $0x8] sm:$0xf]
        %v2865 = vld [vmem:[%s836 + $0xc] sm:$0xf]
        %v2866 = vld [vmem:[%s836 + $0x10] sm:$0xf]
        %v2867 = vld [vmem:[%s836 + $0x14] sm:$0xf]
        %v2868 = vld [vmem:[%s836 + $0x18] sm:$0xf]
        %v2869 = vld [vmem:[%s836 + $0x1c] sm:$0xf]
        %v2870 = vld [vmem:[%s836 + $0x20] sm:$0xf]
        %v2871 = vld [vmem:[%s836 + $0x24] sm:$0xf]
        %v2872 = vld [vmem:[%s836 + $0x28] sm:$0xf]
        %v2873 = vld [vmem:[%s836 + $0x2c] sm:$0xf]
        %v2874 = vld [vmem:[%s836 + $0x30] sm:$0xf]
        %v2875 = vld [vmem:[%s836 + $0x34] sm:$0xf]
        %v2876 = vld [vmem:[%s836 + $0x38] sm:$0xf]
        %v2877 = vld [vmem:[%s836 + $0x3c] sm:$0xf]
        %v2878 = vld [vmem:[%s836 + $0x40] sm:$0xf]
        %v2879 = vld [vmem:[%s836 + $0x44] sm:$0xf]
        %v2880 = vld [vmem:[%s836 + $0x48] sm:$0xf]
        %v2881 = vld [vmem:[%s836 + $0x4c] sm:$0xf]
        %v2882 = vld [vmem:[%s836 + $0x50] sm:$0xf]
        %v2883 = vld [vmem:[%s836 + $0x54] sm:$0xf]
        %v2884 = vld [vmem:[%s836 + $0x58] sm:$0xf]
        %v2885 = vld [vmem:[%s836 + $0x5c] sm:$0xf]
        %v2886 = vld [vmem:[%s836 + $0x60] sm:$0xf]
        %v2887 = vld [vmem:[%s836 + $0x64] sm:$0xf]
        %v2888 = vld [vmem:[%s836 + $0x68] sm:$0xf]
        %v2889 = vld [vmem:[%s836 + $0x6c] sm:$0xf]
        %v2890 = vld [vmem:[%s836 + $0x70] sm:$0xf]
        %v2891 = vld [vmem:[%s836 + $0x74] sm:$0xf]
        %v2892 = vld [vmem:[%s836 + $0x78] sm:$0xf]
        %v2893 = vld [vmem:[%s836 + $0x7c] sm:$0xf]
        %v2894 = vld [vmem:[%s836 + $0x80] sm:$0xf]
        %v2895 = vld [vmem:[%s836 + $0x84] sm:$0xf]
        %v2896 = vld [vmem:[%s836 + $0x88] sm:$0xf]
        %v2897 = vld [vmem:[%s836 + $0x8c] sm:$0xf]
        %v2934 = vunpack.c.l.b16 %v2862
        %v2935 = vunpack.c.l.b16 %v2863
        %v2936 = vunpack.c.l.b16 %v2864
        %v2937 = vunpack.c.l.b16 %v2865
        %v2938 = vunpack.c.l.b16 %v2866
        %v2939 = vunpack.c.l.b16 %v2867
        %v2940 = vunpack.c.l.b16 %v2868
        %v2941 = vunpack.c.l.b16 %v2869
        %v2942 = vunpack.c.l.b16 %v2870
        %v2943 = vunpack.c.l.b16 %v2871
        %v2944 = vunpack.c.l.b16 %v2872
        %v2945 = vunpack.c.l.b16 %v2873
        %v2946 = vunpack.c.l.b16 %v2874
        %v2947 = vunpack.c.l.b16 %v2875
        %v2948 = vunpack.c.l.b16 %v2876
        %v2949 = vunpack.c.l.b16 %v2877
        %v2950 = vunpack.c.l.b16 %v2878
        %v2951 = vunpack.c.l.b16 %v2879
        %v2952 = vunpack.c.l.b16 %v2880
        %v2953 = vunpack.c.l.b16 %v2881
        %v2954 = vunpack.c.l.b16 %v2882
        %v2955 = vunpack.c.l.b16 %v2883
        %v2956 = vunpack.c.l.b16 %v2884
        %v2957 = vunpack.c.l.b16 %v2885
        %v2958 = vunpack.c.l.b16 %v2886
        %v2959 = vunpack.c.l.b16 %v2887
        %v2960 = vunpack.c.l.b16 %v2888
        %v2961 = vunpack.c.l.b16 %v2889
        %v2962 = vunpack.c.l.b16 %v2890
        %v2963 = vunpack.c.l.b16 %v2891
        %v2964 = vunpack.c.l.b16 %v2892
        %v2965 = vunpack.c.l.b16 %v2893
        %v2966 = vunpack.c.l.b16 %v2894
        %v2967 = vunpack.c.l.b16 %v2895
        %v2968 = vunpack.c.l.b16 %v2896
        %v2969 = vunpack.c.l.b16 %v2897
        %v2970 = vpack.c.b16 %v2935, %v2934
        %v2971 = vpack.c.b16 %v2937, %v2936
        %v2972 = vpack.c.b16 %v2939, %v2938
        %v2973 = vpack.c.b16 %v2941, %v2940
        %v2974 = vpack.c.b16 %v2943, %v2942
        %v2975 = vpack.c.b16 %v2945, %v2944
        %v2976 = vpack.c.b16 %v2947, %v2946
        %v2977 = vpack.c.b16 %v2949, %v2948
        %v2978 = vpack.c.b16 %v2951, %v2950
        %v2979 = vpack.c.b16 %v2953, %v2952
        %v2980 = vpack.c.b16 %v2955, %v2954
        %v2981 = vpack.c.b16 %v2957, %v2956
        %v2982 = vpack.c.b16 %v2959, %v2958
        %v2983 = vpack.c.b16 %v2961, %v2960
        %v2984 = vpack.c.b16 %v2963, %v2962
        %v2985 = vpack.c.b16 %v2965, %v2964
        %v2986 = vpack.c.b16 %v2967, %v2966
        %v2987 = vpack.c.b16 %v2969, %v2968
        %v3007 = vsel %vm895, %v2816, 0
        %v3010 = vsel %vm895, %v2819, 0
        %v3013 = vsel %vm895, %v2822, 0
        %v3016 = vsel %vm895, %v2825, 0
        %v3019 = vsel %vm895, %v2828, 0
        %v3022 = vsel %vm895, %v2831, 0
        %v3025 = vsel %vm895, %v2834, 0
        %v3028 = vsel %vm895, %v2837, 0
        %v3031 = vsel %vm895, %v2840, 0
        %v3034 = vsel %vm895, %v2843, 0
        %v3037 = vsel %vm895, %v2846, 0
        %v3040 = vsel %vm895, %v2849, 0
        %v3043 = vsel %vm895, %v2852, 0
        %v3046 = vsel %vm895, %v2855, 0
        %v3049 = vsel %vm895, %v2858, 0
        %v3052 = vsel %vm895, %v2861, 0
        %3054 = vmatprep.subr.bf16.mxu0 0
        %3055 = vmatpush1.bf16.msra.mxu0 %v2970
        %3056 = vmatprep.subr.bf16.mxu0 0
        %3057 = vmatpush1.bf16.msra.mxu0 %v2971
        %3058 = vmatprep.subr.bf16.mxu0 0
        %3059 = vmatpush1.bf16.msra.mxu0 %v2972
        %3060 = vmatprep.subr.bf16.mxu0 0
        %3061 = vmatpush1.bf16.msra.mxu0 %v2973
        %3062 = vmatprep.subr.bf16.mxu0 0
        %3063 = vmatpush1.bf16.msra.mxu0 %v2974
        %3064 = vmatprep.subr.bf16.mxu0 0
        %3065 = vmatpush1.bf16.msra.mxu0 %v2975
        %3066 = vmatprep.subr.bf16.mxu0 0
        %3067 = vmatpush1.bf16.msra.mxu0 %v2976
        %3068 = vmatprep.subr.bf16.mxu0 0
        %3069 = vmatpush1.bf16.msra.mxu0 %v2977
        %3070 = vmatprep.subr.bf16.mxu0 0
        %3071 = vmatpush1.bf16.msra.mxu0 %v2978
        %3072 = vmatprep.subr.bf16.mxu0 0
        %3073 = vmatpush1.bf16.msra.mxu0 %v2979
        %3074 = vmatprep.subr.bf16.mxu0 0
        %3075 = vmatpush1.bf16.msra.mxu0 %v2980
        %3076 = vmatprep.subr.bf16.mxu0 0
        %3077 = vmatpush1.bf16.msra.mxu0 %v2981
        %3078 = vmatprep.subr.bf16.mxu0 0
        %3079 = vmatpush1.bf16.msra.mxu0 %v2982
        %3080 = vmatprep.subr.bf16.mxu0 0
        %3081 = vmatpush1.bf16.msra.mxu0 %v2983
        %3082 = vmatprep.subr.bf16.mxu0 0
        %3083 = vmatpush1.bf16.msra.mxu0 %v2984
        %3084 = vmatprep.subr.bf16.mxu0 0
        %3085 = vmatpush1.bf16.msra.mxu0 %v2985
        %3086 = vmatprep.mubr.bf16.mxu0 %v2815
        %3087 = vmatmul.mubr.bf16.gmra.mrb[0].mxu0 %v2814
        %v3088 = vpop.f32.mrb[0].mxu0
        %v3089 = vadd.f32 0.0, %v3088
        %v3090 = vpop.f32.mrb[0].mxu0
        %v3091 = vpop.f32.mrb[0].mxu0
        %v3092 = vadd.f32 0.0, %v3091
        %v3093 = vpop.f32.mrb[0].mxu0
        %3094 = vmatprep.mubr.bf16.mxu0 %v2818
        %3095 = vmatmul.mubr.bf16.gmra.mrb[0].mxu0 %v2817
        %v3096 = vpop.f32.mrb[0].mxu0
        %v3097 = vadd.f32 0.0, %v3096
        %v3098 = vpop.f32.mrb[0].mxu0
        %v3099 = vpop.f32.mrb[0].mxu0
        %v3100 = vadd.f32 0.0, %v3099
        %v3101 = vpop.f32.mrb[0].mxu0
        %3102 = vmatprep.mubr.bf16.mxu0 %v2821
        %3103 = vmatmul.mubr.bf16.gmra.mrb[0].mxu0 %v2820
        %v3104 = vpop.f32.mrb[0].mxu0
        %v3105 = vadd.f32 0.0, %v3104
        %v3106 = vpop.f32.mrb[0].mxu0
        %v3107 = vpop.f32.mrb[0].mxu0
        %v3108 = vadd.f32 0.0, %v3107
        %v3109 = vpop.f32.mrb[0].mxu0
        %3110 = vmatprep.mubr.bf16.mxu0 %v2824
        %3111 = vmatmul.mubr.bf16.gmra.mrb[0].mxu0 %v2823
        %v3112 = vpop.f32.mrb[0].mxu0
        %v3113 = vadd.f32 0.0, %v3112
        %v3114 = vpop.f32.mrb[0].mxu0
        %v3115 = vpop.f32.mrb[0].mxu0
        %v3116 = vadd.f32 0.0, %v3115
        %v3117 = vpop.f32.mrb[0].mxu0
        %3118 = vmatprep.mubr.bf16.mxu0 %v2827
        %3119 = vmatmul.mubr.bf16.gmra.mrb[0].mxu0 %v2826
        %v3120 = vpop.f32.mrb[0].mxu0
        %v3121 = vadd.f32 0.0, %v3120
        %v3122 = vpop.f32.mrb[0].mxu0
        %v3123 = vpop.f32.mrb[0].mxu0
        %v3124 = vadd.f32 0.0, %v3123
        %v3125 = vpop.f32.mrb[0].mxu0
        %3126 = vmatprep.mubr.bf16.mxu0 %v2830
        %3127 = vmatmul.mubr.bf16.gmra.mrb[0].mxu0 %v2829
        %v3128 = vpop.f32.mrb[0].mxu0
        %v3129 = vadd.f32 0.0, %v3128
        %v3130 = vpop.f32.mrb[0].mxu0
        %v3131 = vpop.f32.mrb[0].mxu0
        %v3132 = vadd.f32 0.0, %v3131
        %v3133 = vpop.f32.mrb[0].mxu0
        %3134 = vmatprep.mubr.bf16.mxu0 %v2833
        %3135 = vmatmul.mubr.bf16.gmra.mrb[0].mxu0 %v2832
        %v3136 = vpop.f32.mrb[0].mxu0
        %v3137 = vadd.f32 0.0, %v3136
        %v3138 = vpop.f32.mrb[0].mxu0
        %v3139 = vpop.f32.mrb[0].mxu0
        %v3140 = vadd.f32 0.0, %v3139
        %v3141 = vpop.f32.mrb[0].mxu0
        %3142 = vmatprep.mubr.bf16.mxu0 %v2836
        %3143 = vmatmul.mubr.bf16.gmra.mrb[0].mxu0 %v2835
        %v3144 = vpop.f32.mrb[0].mxu0
        %v3145 = vadd.f32 0.0, %v3144
        %v3146 = vpop.f32.mrb[0].mxu0
        %v3147 = vpop.f32.mrb[0].mxu0
        %v3148 = vadd.f32 0.0, %v3147
        %v3149 = vpop.f32.mrb[0].mxu0
        %3150 = vmatprep.mubr.bf16.mxu0 %v2839
        %3151 = vmatmul.mubr.bf16.gmra.mrb[0].mxu0 %v2838
        %v3152 = vpop.f32.mrb[0].mxu0
        %v3153 = vadd.f32 0.0, %v3152
        %v3154 = vpop.f32.mrb[0].mxu0
        %v3155 = vpop.f32.mrb[0].mxu0
        %v3156 = vadd.f32 0.0, %v3155
        %v3157 = vpop.f32.mrb[0].mxu0
        %3158 = vmatprep.mubr.bf16.mxu0 %v2842
        %3159 = vmatmul.mubr.bf16.gmra.mrb[0].mxu0 %v2841
        %v3160 = vpop.f32.mrb[0].mxu0
        %v3161 = vadd.f32 0.0, %v3160
        %v3162 = vpop.f32.mrb[0].mxu0
        %v3163 = vpop.f32.mrb[0].mxu0
        %v3164 = vadd.f32 0.0, %v3163
        %v3165 = vpop.f32.mrb[0].mxu0
        %3166 = vmatprep.mubr.bf16.mxu0 %v2845
        %3167 = vmatmul.mubr.bf16.gmra.mrb[0].mxu0 %v2844
        %v3168 = vpop.f32.mrb[0].mxu0
        %v3169 = vadd.f32 0.0, %v3168
        %v3170 = vpop.f32.mrb[0].mxu0
        %v3171 = vpop.f32.mrb[0].mxu0
        %v3172 = vadd.f32 0.0, %v3171
        %v3173 = vpop.f32.mrb[0].mxu0
        %3174 = vmatprep.mubr.bf16.mxu0 %v2848
        %3175 = vmatmul.mubr.bf16.gmra.mrb[0].mxu0 %v2847
        %v3176 = vpop.f32.mrb[0].mxu0
        %v3177 = vadd.f32 0.0, %v3176
        %v3178 = vpop.f32.mrb[0].mxu0
        %v3179 = vpop.f32.mrb[0].mxu0
        %v3180 = vadd.f32 0.0, %v3179
        %v3181 = vpop.f32.mrb[0].mxu0
        %3182 = vmatprep.mubr.bf16.mxu0 %v2851
        %3183 = vmatmul.mubr.bf16.gmra.mrb[0].mxu0 %v2850
        %v3184 = vpop.f32.mrb[0].mxu0
        %v3185 = vadd.f32 0.0, %v3184
        %v3186 = vpop.f32.mrb[0].mxu0
        %v3187 = vpop.f32.mrb[0].mxu0
        %v3188 = vadd.f32 0.0, %v3187
        %v3189 = vpop.f32.mrb[0].mxu0
        %3190 = vmatprep.mubr.bf16.mxu0 %v2854
        %3191 = vmatmul.mubr.bf16.gmra.mrb[0].mxu0 %v2853
        %v3192 = vpop.f32.mrb[0].mxu0
        %v3193 = vadd.f32 0.0, %v3192
        %v3194 = vpop.f32.mrb[0].mxu0
        %v3195 = vpop.f32.mrb[0].mxu0
        %v3196 = vadd.f32 0.0, %v3195
        %v3197 = vpop.f32.mrb[0].mxu0
        %3198 = vmatprep.mubr.bf16.mxu0 %v2857
        %3199 = vmatmul.mubr.bf16.gmra.mrb[0].mxu0 %v2856
        %v3200 = vpop.f32.mrb[0].mxu0
        %v3201 = vadd.f32 0.0, %v3200
        %v3202 = vpop.f32.mrb[0].mxu0
        %v3203 = vpop.f32.mrb[0].mxu0
        %v3204 = vadd.f32 0.0, %v3203
        %v3205 = vpop.f32.mrb[0].mxu0
        %3206 = vmatprep.mubr.bf16.mxu0 %v2860
        %3207 = vmatmul.mubr.bf16.gmra.mrb[0].mxu0 %v2859
        %v3208 = vpop.f32.mrb[0].mxu0
        %v3209 = vadd.f32 0.0, %v3208
        %v3210 = vpop.f32.mrb[0].mxu0
        %v3211 = vpop.f32.mrb[0].mxu0
        %v3212 = vadd.f32 0.0, %v3211
        %v3213 = vpop.f32.mrb[0].mxu0
        %3214 = vdwg.mxu0
        %3215 = vmatprep.subr.bf16.mxu0 0
        %3216 = vmatpush1.bf16.msra.mxu0 %v2986
        %3217 = vmatprep.subr.bf16.mxu0 0
        %3218 = vmatpush1.bf16.msra.mxu0 %v2987
        %3219 = vmatprep.subr.bf16.mxu0 0
        %3220 = vmatpush1.bf16.msra.mxu0 0
        %3221 = vmatprep.subr.bf16.mxu0 0
        %3222 = vmatpush1.bf16.msra.mxu0 0
        %3223 = vmatprep.subr.bf16.mxu0 0
        %3224 = vmatpush1.bf16.msra.mxu0 0
        %3225 = vmatprep.subr.bf16.mxu0 0
        %3226 = vmatpush1.bf16.msra.mxu0 0
        %3227 = vmatprep.subr.bf16.mxu0 0
        %3228 = vmatpush1.bf16.msra.mxu0 0
        %3229 = vmatprep.subr.bf16.mxu0 0
        %3230 = vmatpush1.bf16.msra.mxu0 0
        %3231 = vmatprep.subr.bf16.mxu0 0
        %3232 = vmatpush1.bf16.msra.mxu0 0
        %3233 = vmatprep.subr.bf16.mxu0 0
        %3234 = vmatpush1.bf16.msra.mxu0 0
        %3235 = vmatprep.subr.bf16.mxu0 0
        %3236 = vmatpush1.bf16.msra.mxu0 0
        %3237 = vmatprep.subr.bf16.mxu0 0
        %3238 = vmatpush1.bf16.msra.mxu0 0
        %3239 = vmatprep.subr.bf16.mxu0 0
        %3240 = vmatpush1.bf16.msra.mxu0 0
        %3241 = vmatprep.subr.bf16.mxu0 0
        %3242 = vmatpush1.bf16.msra.mxu0 0
        %3243 = vmatprep.subr.bf16.mxu0 0
        %3244 = vmatpush1.bf16.msra.mxu0 0
        %3245 = vmatprep.subr.bf16.mxu0 0
        %3246 = vmatpush1.bf16.msra.mxu0 0
        %3247 = vmatprep.mubr.bf16.mxu0 0
        %3248 = vmatmul.mubr.bf16.gmra.mrb[0].mxu0 %v3007
        %v3249 = vpop.f32.mrb[0].mxu0
        %v3250 = vadd.f32 %v3089, %v3249
        %v3251 = vpop.f32.mrb[0].mxu0
        %v3252 = vpop.f32.mrb[0].mxu0
        %v3253 = vadd.f32 %v3092, %v3252
        %v3254 = vpop.f32.mrb[0].mxu0
        %3255 = vmatprep.mubr.bf16.mxu0 0
        %3256 = vmatmul.mubr.bf16.gmra.mrb[0].mxu0 %v3010
        %v3257 = vpop.f32.mrb[0].mxu0
        %v3258 = vadd.f32 %v3097, %v3257
        %v3259 = vpop.f32.mrb[0].mxu0
        %v3260 = vpop.f32.mrb[0].mxu0
        %v3261 = vadd.f32 %v3100, %v3260
        %v3262 = vpop.f32.mrb[0].mxu0
        %3263 = vmatprep.mubr.bf16.mxu0 0
        %3264 = vmatmul.mubr.bf16.gmra.mrb[0].mxu0 %v3013
        %v3265 = vpop.f32.mrb[0].mxu0
        %v3266 = vadd.f32 %v3105, %v3265
        %v3267 = vpop.f32.mrb[0].mxu0
        %v3268 = vpop.f32.mrb[0].mxu0
        %v3269 = vadd.f32 %v3108, %v3268
        %v3270 = vpop.f32.mrb[0].mxu0
        %3271 = vmatprep.mubr.bf16.mxu0 0
        %3272 = vmatmul.mubr.bf16.gmra.mrb[0].mxu0 %v3016
        %v3273 = vpop.f32.mrb[0].mxu0
        %v3274 = vadd.f32 %v3113, %v3273
        %v3275 = vpop.f32.mrb[0].mxu0
        %v3276 = vpop.f32.mrb[0].mxu0
        %v3277 = vadd.f32 %v3116, %v3276
        %v3278 = vpop.f32.mrb[0].mxu0
        %3279 = vmatprep.mubr.bf16.mxu0 0
        %3280 = vmatmul.mubr.bf16.gmra.mrb[0].mxu0 %v3019
        %v3281 = vpop.f32.mrb[0].mxu0
        %v3282 = vadd.f32 %v3121, %v3281
        %v3283 = vpop.f32.mrb[0].mxu0
        %v3284 = vpop.f32.mrb[0].mxu0
        %v3285 = vadd.f32 %v3124, %v3284
        %v3286 = vpop.f32.mrb[0].mxu0
        %3287 = vmatprep.mubr.bf16.mxu0 0
        %3288 = vmatmul.mubr.bf16.gmra.mrb[0].mxu0 %v3022
        %v3289 = vpop.f32.mrb[0].mxu0
        %v3290 = vadd.f32 %v3129, %v3289
        %v3291 = vpop.f32.mrb[0].mxu0
        %v3292 = vpop.f32.mrb[0].mxu0
        %v3293 = vadd.f32 %v3132, %v3292
        %v3294 = vpop.f32.mrb[0].mxu0
        %3295 = vmatprep.mubr.bf16.mxu0 0
        %3296 = vmatmul.mubr.bf16.gmra.mrb[0].mxu0 %v3025
        %v3297 = vpop.f32.mrb[0].mxu0
        %v3298 = vadd.f32 %v3137, %v3297
        %v3299 = vpop.f32.mrb[0].mxu0
        %v3300 = vpop.f32.mrb[0].mxu0
        %v3301 = vadd.f32 %v3140, %v3300
        %v3302 = vpop.f32.mrb[0].mxu0
        %3303 = vmatprep.mubr.bf16.mxu0 0
        %3304 = vmatmul.mubr.bf16.gmra.mrb[0].mxu0 %v3028
        %v3305 = vpop.f32.mrb[0].mxu0
        %v3306 = vadd.f32 %v3145, %v3305
        %v3307 = vpop.f32.mrb[0].mxu0
        %v3308 = vpop.f32.mrb[0].mxu0
        %v3309 = vadd.f32 %v3148, %v3308
        %v3310 = vpop.f32.mrb[0].mxu0
        %3311 = vmatprep.mubr.bf16.mxu0 0
        %3312 = vmatmul.mubr.bf16.gmra.mrb[0].mxu0 %v3031
        %v3313 = vpop.f32.mrb[0].mxu0
        %v3314 = vadd.f32 %v3153, %v3313
        %v3315 = vpop.f32.mrb[0].mxu0
        %v3316 = vpop.f32.mrb[0].mxu0
        %v3317 = vadd.f32 %v3156, %v3316
        %v3318 = vpop.f32.mrb[0].mxu0
        %3319 = vmatprep.mubr.bf16.mxu0 0
        %3320 = vmatmul.mubr.bf16.gmra.mrb[0].mxu0 %v3034
        %v3321 = vpop.f32.mrb[0].mxu0
        %v3322 = vadd.f32 %v3161, %v3321
        %v3323 = vpop.f32.mrb[0].mxu0
        %v3324 = vpop.f32.mrb[0].mxu0
        %v3325 = vadd.f32 %v3164, %v3324
        %v3326 = vpop.f32.mrb[0].mxu0
        %3327 = vmatprep.mubr.bf16.mxu0 0
        %3328 = vmatmul.mubr.bf16.gmra.mrb[0].mxu0 %v3037
        %v3329 = vpop.f32.mrb[0].mxu0
        %v3330 = vadd.f32 %v3169, %v3329
        %v3331 = vpop.f32.mrb[0].mxu0
        %v3332 = vpop.f32.mrb[0].mxu0
        %v3333 = vadd.f32 %v3172, %v3332
        %v3334 = vpop.f32.mrb[0].mxu0
        %3335 = vmatprep.mubr.bf16.mxu0 0
        %3336 = vmatmul.mubr.bf16.gmra.mrb[0].mxu0 %v3040
        %v3337 = vpop.f32.mrb[0].mxu0
        %v3338 = vadd.f32 %v3177, %v3337
        %v3339 = vpop.f32.mrb[0].mxu0
        %v3340 = vpop.f32.mrb[0].mxu0
        %v3341 = vadd.f32 %v3180, %v3340
        %v3342 = vpop.f32.mrb[0].mxu0
        %3343 = vmatprep.mubr.bf16.mxu0 0
        %3344 = vmatmul.mubr.bf16.gmra.mrb[0].mxu0 %v3043
        %v3345 = vpop.f32.mrb[0].mxu0
        %v3346 = vadd.f32 %v3185, %v3345
        %v3347 = vpop.f32.mrb[0].mxu0
        %v3348 = vpop.f32.mrb[0].mxu0
        %v3349 = vadd.f32 %v3188, %v3348
        %v3350 = vpop.f32.mrb[0].mxu0
        %3351 = vmatprep.mubr.bf16.mxu0 0
        %3352 = vmatmul.mubr.bf16.gmra.mrb[0].mxu0 %v3046
        %v3353 = vpop.f32.mrb[0].mxu0
        %v3354 = vadd.f32 %v3193, %v3353
        %v3355 = vpop.f32.mrb[0].mxu0
        %v3356 = vpop.f32.mrb[0].mxu0
        %v3357 = vadd.f32 %v3196, %v3356
        %v3358 = vpop.f32.mrb[0].mxu0
        %3359 = vmatprep.mubr.bf16.mxu0 0
        %3360 = vmatmul.mubr.bf16.gmra.mrb[0].mxu0 %v3049
        %v3361 = vpop.f32.mrb[0].mxu0
        %v3362 = vadd.f32 %v3201, %v3361
        %v3363 = vpop.f32.mrb[0].mxu0
        %v3364 = vpop.f32.mrb[0].mxu0
        %v3365 = vadd.f32 %v3204, %v3364
        %v3366 = vpop.f32.mrb[0].mxu0
        %3367 = vmatprep.mubr.bf16.mxu0 0
        %3368 = vmatmul.mubr.bf16.gmra.mrb[0].mxu0 %v3052
        %v3369 = vpop.f32.mrb[0].mxu0
        %v3370 = vadd.f32 %v3209, %v3369
        %v3371 = vpop.f32.mrb[0].mxu0
        %v3372 = vpop.f32.mrb[0].mxu0
        %v3373 = vadd.f32 %v3212, %v3372
        %v3374 = vpop.f32.mrb[0].mxu0
        %3375 = vdwg.mxu0
        %v3376 = vld [vmem:[%s840] sm:$0x1]
        %v3377 = vlaneseq
        %v3378 = vshrl.u32 %v3377, 7
        %v3379 = vsub.s32 0, %v3378
        %v3380 = vrot.slane %v3376, %v3379
        %v3381 = vmul.f32 %v3250, %v3380
        %v3382 = vmul.f32 %v3253, %v3380
        %v3383 = vmul.f32 %v3258, %v3380
        %v3384 = vmul.f32 %v3261, %v3380
        %v3385 = vmul.f32 %v3266, %v3380
        %v3386 = vmul.f32 %v3269, %v3380
        %v3387 = vmul.f32 %v3274, %v3380
        %v3388 = vmul.f32 %v3277, %v3380
        %v3389 = vmul.f32 %v3282, %v3380
        %v3390 = vmul.f32 %v3285, %v3380
        %v3391 = vmul.f32 %v3290, %v3380
        %v3392 = vmul.f32 %v3293, %v3380
        %v3393 = vmul.f32 %v3298, %v3380
        %v3394 = vmul.f32 %v3301, %v3380
        %v3395 = vmul.f32 %v3306, %v3380
        %v3396 = vmul.f32 %v3309, %v3380
        %v3397 = vmul.f32 %v3314, %v3380
        %v3398 = vmul.f32 %v3317, %v3380
        %v3399 = vmul.f32 %v3322, %v3380
        %v3400 = vmul.f32 %v3325, %v3380
        %v3401 = vmul.f32 %v3330, %v3380
        %v3402 = vmul.f32 %v3333, %v3380
        %v3403 = vmul.f32 %v3338, %v3380
        %v3404 = vmul.f32 %v3341, %v3380
        %v3405 = vmul.f32 %v3346, %v3380
        %v3406 = vmul.f32 %v3349, %v3380
        %v3407 = vmul.f32 %v3354, %v3380
        %v3408 = vmul.f32 %v3357, %v3380
        %v3409 = vmul.f32 %v3362, %v3380
        %v3410 = vmul.f32 %v3365, %v3380
        %v3411 = vmul.f32 %v3370, %v3380
        %v3412 = vmul.f32 %v3373, %v3380
        %v3413 = vld [vmem:[%s840 + $0x1] sm:$0x1]
        %v3414 = vlaneseq
        %v3415 = vshrl.u32 %v3414, 7
        %v3416 = vsub.s32 0, %v3415
        %v3417 = vrot.slane %v3413, %v3416
        %v3418 = vadd.f32 %v3381, %v3417
        %v3419 = vadd.f32 %v3382, %v3417
        %v3420 = vadd.f32 %v3383, %v3417
        %v3421 = vadd.f32 %v3384, %v3417
        %v3422 = vadd.f32 %v3385, %v3417
        %v3423 = vadd.f32 %v3386, %v3417
        %v3424 = vadd.f32 %v3387, %v3417
        %v3425 = vadd.f32 %v3388, %v3417
        %v3426 = vadd.f32 %v3389, %v3417
        %v3427 = vadd.f32 %v3390, %v3417
        %v3428 = vadd.f32 %v3391, %v3417
        %v3429 = vadd.f32 %v3392, %v3417
        %v3430 = vadd.f32 %v3393, %v3417
        %v3431 = vadd.f32 %v3394, %v3417
        %v3432 = vadd.f32 %v3395, %v3417
        %v3433 = vadd.f32 %v3396, %v3417
        %v3434 = vadd.f32 %v3397, %v3417
        %v3435 = vadd.f32 %v3398, %v3417
        %v3436 = vadd.f32 %v3399, %v3417
        %v3437 = vadd.f32 %v3400, %v3417
        %v3438 = vadd.f32 %v3401, %v3417
        %v3439 = vadd.f32 %v3402, %v3417
        %v3440 = vadd.f32 %v3403, %v3417
        %v3441 = vadd.f32 %v3404, %v3417
        %v3442 = vadd.f32 %v3405, %v3417
        %v3443 = vadd.f32 %v3406, %v3417
        %v3444 = vadd.f32 %v3407, %v3417
        %v3445 = vadd.f32 %v3408, %v3417
        %v3446 = vadd.f32 %v3409, %v3417
        %v3447 = vadd.f32 %v3410, %v3417
        %v3448 = vadd.f32 %v3411, %v3417
        %v3449 = vadd.f32 %v3412, %v3417
        %v3450 = vmax.f32 %v3418, 0.0
        %v3451 = vmax.f32 %v3419, 0.0
        %v3452 = vmax.f32 %v3420, 0.0
        %v3453 = vmax.f32 %v3421, 0.0
        %v3454 = vmax.f32 %v3422, 0.0
        %v3455 = vmax.f32 %v3423, 0.0
        %v3456 = vmax.f32 %v3424, 0.0
        %v3457 = vmax.f32 %v3425, 0.0
        %v3458 = vmax.f32 %v3426, 0.0
        %v3459 = vmax.f32 %v3427, 0.0
        %v3460 = vmax.f32 %v3428, 0.0
        %v3461 = vmax.f32 %v3429, 0.0
        %v3462 = vmax.f32 %v3430, 0.0
        %v3463 = vmax.f32 %v3431, 0.0
        %v3464 = vmax.f32 %v3432, 0.0
        %v3465 = vmax.f32 %v3433, 0.0
        %v3466 = vmax.f32 %v3434, 0.0
        %v3467 = vmax.f32 %v3435, 0.0
        %v3468 = vmax.f32 %v3436, 0.0
        %v3469 = vmax.f32 %v3437, 0.0
        %v3470 = vmax.f32 %v3438, 0.0
        %v3471 = vmax.f32 %v3439, 0.0
        %v3472 = vmax.f32 %v3440, 0.0
        %v3473 = vmax.f32 %v3441, 0.0
        %v3474 = vmax.f32 %v3442, 0.0
        %v3475 = vmax.f32 %v3443, 0.0
        %v3476 = vmax.f32 %v3444, 0.0
        %v3477 = vmax.f32 %v3445, 0.0
        %v3478 = vmax.f32 %v3446, 0.0
        %v3479 = vmax.f32 %v3447, 0.0
        %v3480 = vmax.f32 %v3448, 0.0
        %v3481 = vmax.f32 %v3449, 0.0
        %v3482 = vpack.c.bf16 %v3451, %v3450
        %v3483 = vpack.c.bf16 %v3453, %v3452
        %v3484 = vpack.c.bf16 %v3455, %v3454
        %v3485 = vpack.c.bf16 %v3457, %v3456
        %v3486 = vpack.c.bf16 %v3459, %v3458
        %v3487 = vpack.c.bf16 %v3461, %v3460
        %v3488 = vpack.c.bf16 %v3463, %v3462
        %v3489 = vpack.c.bf16 %v3465, %v3464
        %v3490 = vpack.c.bf16 %v3467, %v3466
        %v3491 = vpack.c.bf16 %v3469, %v3468
        %v3492 = vpack.c.bf16 %v3471, %v3470
        %v3493 = vpack.c.bf16 %v3473, %v3472
        %v3494 = vpack.c.bf16 %v3475, %v3474
        %v3495 = vpack.c.bf16 %v3477, %v3476
        %v3496 = vpack.c.bf16 %v3479, %v3478
        %v3497 = vpack.c.bf16 %v3481, %v3480
        %v3498 = vld [vmem:[%s845] sm:$0xf]
        %v3499 = vld [vmem:[%s845 + $0x4] sm:$0xf]
        %v3500 = vld [vmem:[%s845 + $0x8] sm:$0xf]
        %v3501 = vld [vmem:[%s845 + $0xc] sm:$0xf]
        %v3506 = vunpack.c.l.b16 %v3498
        %v3507 = vunpack.c.l.b16 %v3499
        %v3508 = vunpack.c.l.b16 %v3500
        %v3509 = vunpack.c.l.b16 %v3501
        %v3510 = vpack.c.b16 %v3507, %v3506
        %v3511 = vpack.c.b16 %v3509, %v3508
        %v3515 = vsel %vm895, %v3482, 0
        %v3518 = vsel %vm895, %v3483, 0
        %v3521 = vsel %vm895, %v3484, 0
        %v3524 = vsel %vm895, %v3485, 0
        %v3527 = vsel %vm895, %v3486, 0
        %v3530 = vsel %vm895, %v3487, 0
        %v3533 = vsel %vm895, %v3488, 0
        %v3536 = vsel %vm895, %v3489, 0
        %v3539 = vsel %vm895, %v3490, 0
        %v3542 = vsel %vm895, %v3491, 0
        %v3545 = vsel %vm895, %v3492, 0
        %v3548 = vsel %vm895, %v3493, 0
        %v3551 = vsel %vm895, %v3494, 0
        %v3554 = vsel %vm895, %v3495, 0
        %v3557 = vsel %vm895, %v3496, 0
        %v3560 = vsel %vm895, %v3497, 0
        %3562 = vmatprep.subr.bf16.mxu0 0
        %3563 = vmatpush1.bf16.msra.mxu0 %v3510
        %3564 = vmatprep.subr.bf16.mxu0 0
        %3565 = vmatpush1.bf16.msra.mxu0 %v3511
        %3566 = vmatprep.subr.bf16.mxu0 0
        %3567 = vmatpush1.bf16.msra.mxu0 0
        %3568 = vmatprep.subr.bf16.mxu0 0
        %3569 = vmatpush1.bf16.msra.mxu0 0
        %3570 = vmatprep.subr.bf16.mxu0 0
        %3571 = vmatpush1.bf16.msra.mxu0 0
        %3572 = vmatprep.subr.bf16.mxu0 0
        %3573 = vmatpush1.bf16.msra.mxu0 0
        %3574 = vmatprep.subr.bf16.mxu0 0
        %3575 = vmatpush1.bf16.msra.mxu0 0
        %3576 = vmatprep.subr.bf16.mxu0 0
        %3577 = vmatpush1.bf16.msra.mxu0 0
        %3578 = vmatprep.subr.bf16.mxu0 0
        %3579 = vmatpush1.bf16.msra.mxu0 0
        %3580 = vmatprep.subr.bf16.mxu0 0
        %3581 = vmatpush1.bf16.msra.mxu0 0
        %3582 = vmatprep.subr.bf16.mxu0 0
        %3583 = vmatpush1.bf16.msra.mxu0 0
        %3584 = vmatprep.subr.bf16.mxu0 0
        %3585 = vmatpush1.bf16.msra.mxu0 0
        %3586 = vmatprep.subr.bf16.mxu0 0
        %3587 = vmatpush1.bf16.msra.mxu0 0
        %3588 = vmatprep.subr.bf16.mxu0 0
        %3589 = vmatpush1.bf16.msra.mxu0 0
        %3590 = vmatprep.subr.bf16.mxu0 0
        %3591 = vmatpush1.bf16.msra.mxu0 0
        %3592 = vmatprep.subr.bf16.mxu0 0
        %3593 = vmatpush1.bf16.msra.mxu0 0
        %3594 = vmatprep.mubr.bf16.mxu0 0
        %3595 = vmatmul.mubr.bf16.gmra.mrb[0].mxu0 %v3515
        %v3596 = vpop.f32.mrb[0].mxu0
        %v3597 = vadd.f32 0.0, %v3596
        %v3598 = vpop.f32.mrb[0].mxu0
        %v3599 = vpop.f32.mrb[0].mxu0
        %v3600 = vadd.f32 0.0, %v3599
        %v3601 = vpop.f32.mrb[0].mxu0
        %3602 = vmatprep.mubr.bf16.mxu0 0
        %3603 = vmatmul.mubr.bf16.gmra.mrb[0].mxu0 %v3518
        %v3604 = vpop.f32.mrb[0].mxu0
        %v3605 = vadd.f32 0.0, %v3604
        %v3606 = vpop.f32.mrb[0].mxu0
        %v3607 = vpop.f32.mrb[0].mxu0
        %v3608 = vadd.f32 0.0, %v3607
        %v3609 = vpop.f32.mrb[0].mxu0
        %3610 = vmatprep.mubr.bf16.mxu0 0
        %3611 = vmatmul.mubr.bf16.gmra.mrb[0].mxu0 %v3521
        %v3612 = vpop.f32.mrb[0].mxu0
        %v3613 = vadd.f32 0.0, %v3612
        %v3614 = vpop.f32.mrb[0].mxu0
        %v3615 = vpop.f32.mrb[0].mxu0
        %v3616 = vadd.f32 0.0, %v3615
        %v3617 = vpop.f32.mrb[0].mxu0
        %3618 = vmatprep.mubr.bf16.mxu0 0
        %3619 = vmatmul.mubr.bf16.gmra.mrb[0].mxu0 %v3524
        %v3620 = vpop.f32.mrb[0].mxu0
        %v3621 = vadd.f32 0.0, %v3620
        %v3622 = vpop.f32.mrb[0].mxu0
        %v3623 = vpop.f32.mrb[0].mxu0
        %v3624 = vadd.f32 0.0, %v3623
        %v3625 = vpop.f32.mrb[0].mxu0
        %3626 = vmatprep.mubr.bf16.mxu0 0
        %3627 = vmatmul.mubr.bf16.gmra.mrb[0].mxu0 %v3527
        %v3628 = vpop.f32.mrb[0].mxu0
        %v3629 = vadd.f32 0.0, %v3628
        %v3630 = vpop.f32.mrb[0].mxu0
        %v3631 = vpop.f32.mrb[0].mxu0
        %v3632 = vadd.f32 0.0, %v3631
        %v3633 = vpop.f32.mrb[0].mxu0
        %3634 = vmatprep.mubr.bf16.mxu0 0
        %3635 = vmatmul.mubr.bf16.gmra.mrb[0].mxu0 %v3530
        %v3636 = vpop.f32.mrb[0].mxu0
        %v3637 = vadd.f32 0.0, %v3636
        %v3638 = vpop.f32.mrb[0].mxu0
        %v3639 = vpop.f32.mrb[0].mxu0
        %v3640 = vadd.f32 0.0, %v3639
        %v3641 = vpop.f32.mrb[0].mxu0
        %3642 = vmatprep.mubr.bf16.mxu0 0
        %3643 = vmatmul.mubr.bf16.gmra.mrb[0].mxu0 %v3533
        %v3644 = vpop.f32.mrb[0].mxu0
        %v3645 = vadd.f32 0.0, %v3644
        %v3646 = vpop.f32.mrb[0].mxu0
        %v3647 = vpop.f32.mrb[0].mxu0
        %v3648 = vadd.f32 0.0, %v3647
        %v3649 = vpop.f32.mrb[0].mxu0
        %3650 = vmatprep.mubr.bf16.mxu0 0
        %3651 = vmatmul.mubr.bf16.gmra.mrb[0].mxu0 %v3536
        %v3652 = vpop.f32.mrb[0].mxu0
        %v3653 = vadd.f32 0.0, %v3652
        %v3654 = vpop.f32.mrb[0].mxu0
        %v3655 = vpop.f32.mrb[0].mxu0
        %v3656 = vadd.f32 0.0, %v3655
        %v3657 = vpop.f32.mrb[0].mxu0
        %3658 = vmatprep.mubr.bf16.mxu0 0
        %3659 = vmatmul.mubr.bf16.gmra.mrb[0].mxu0 %v3539
        %v3660 = vpop.f32.mrb[0].mxu0
        %v3661 = vadd.f32 0.0, %v3660
        %v3662 = vpop.f32.mrb[0].mxu0
        %v3663 = vpop.f32.mrb[0].mxu0
        %v3664 = vadd.f32 0.0, %v3663
        %v3665 = vpop.f32.mrb[0].mxu0
        %3666 = vmatprep.mubr.bf16.mxu0 0
        %3667 = vmatmul.mubr.bf16.gmra.mrb[0].mxu0 %v3542
        %v3668 = vpop.f32.mrb[0].mxu0
        %v3669 = vadd.f32 0.0, %v3668
        %v3670 = vpop.f32.mrb[0].mxu0
        %v3671 = vpop.f32.mrb[0].mxu0
        %v3672 = vadd.f32 0.0, %v3671
        %v3673 = vpop.f32.mrb[0].mxu0
        %3674 = vmatprep.mubr.bf16.mxu0 0
        %3675 = vmatmul.mubr.bf16.gmra.mrb[0].mxu0 %v3545
        %v3676 = vpop.f32.mrb[0].mxu0
        %v3677 = vadd.f32 0.0, %v3676
        %v3678 = vpop.f32.mrb[0].mxu0
        %v3679 = vpop.f32.mrb[0].mxu0
        %v3680 = vadd.f32 0.0, %v3679
        %v3681 = vpop.f32.mrb[0].mxu0
        %3682 = vmatprep.mubr.bf16.mxu0 0
        %3683 = vmatmul.mubr.bf16.gmra.mrb[0].mxu0 %v3548
        %v3684 = vpop.f32.mrb[0].mxu0
        %v3685 = vadd.f32 0.0, %v3684
        %v3686 = vpop.f32.mrb[0].mxu0
        %v3687 = vpop.f32.mrb[0].mxu0
        %v3688 = vadd.f32 0.0, %v3687
        %v3689 = vpop.f32.mrb[0].mxu0
        %3690 = vmatprep.mubr.bf16.mxu0 0
        %3691 = vmatmul.mubr.bf16.gmra.mrb[0].mxu0 %v3551
        %v3692 = vpop.f32.mrb[0].mxu0
        %v3693 = vadd.f32 0.0, %v3692
        %v3694 = vpop.f32.mrb[0].mxu0
        %v3695 = vpop.f32.mrb[0].mxu0
        %v3696 = vadd.f32 0.0, %v3695
        %v3697 = vpop.f32.mrb[0].mxu0
        %3698 = vmatprep.mubr.bf16.mxu0 0
        %3699 = vmatmul.mubr.bf16.gmra.mrb[0].mxu0 %v3554
        %v3700 = vpop.f32.mrb[0].mxu0
        %v3701 = vadd.f32 0.0, %v3700
        %v3702 = vpop.f32.mrb[0].mxu0
        %v3703 = vpop.f32.mrb[0].mxu0
        %v3704 = vadd.f32 0.0, %v3703
        %v3705 = vpop.f32.mrb[0].mxu0
        %3706 = vmatprep.mubr.bf16.mxu0 0
        %3707 = vmatmul.mubr.bf16.gmra.mrb[0].mxu0 %v3557
        %v3708 = vpop.f32.mrb[0].mxu0
        %v3709 = vadd.f32 0.0, %v3708
        %v3710 = vpop.f32.mrb[0].mxu0
        %v3711 = vpop.f32.mrb[0].mxu0
        %v3712 = vadd.f32 0.0, %v3711
        %v3713 = vpop.f32.mrb[0].mxu0
        %3714 = vmatprep.mubr.bf16.mxu0 0
        %3715 = vmatmul.mubr.bf16.gmra.mrb[0].mxu0 %v3560
        %v3716 = vpop.f32.mrb[0].mxu0
        %v3717 = vadd.f32 0.0, %v3716
        %v3718 = vpop.f32.mrb[0].mxu0
        %v3719 = vpop.f32.mrb[0].mxu0
        %v3720 = vadd.f32 0.0, %v3719
        %v3721 = vpop.f32.mrb[0].mxu0
        %3722 = vdwg.mxu0
        %v3723 = vld [vmem:[%s849] sm:$0x1]
        %v3724 = vlaneseq
        %v3725 = vshrl.u32 %v3724, 7
        %v3726 = vsub.s32 0, %v3725
        %v3727 = vrot.slane %v3723, %v3726
        %v3728 = vmul.f32 %v3597, %v3727
        %v3729 = vmul.f32 %v3600, %v3727
        %v3730 = vmul.f32 %v3605, %v3727
        %v3731 = vmul.f32 %v3608, %v3727
        %v3732 = vmul.f32 %v3613, %v3727
        %v3733 = vmul.f32 %v3616, %v3727
        %v3734 = vmul.f32 %v3621, %v3727
        %v3735 = vmul.f32 %v3624, %v3727
        %v3736 = vmul.f32 %v3629, %v3727
        %v3737 = vmul.f32 %v3632, %v3727
        %v3738 = vmul.f32 %v3637, %v3727
        %v3739 = vmul.f32 %v3640, %v3727
        %v3740 = vmul.f32 %v3645, %v3727
        %v3741 = vmul.f32 %v3648, %v3727
        %v3742 = vmul.f32 %v3653, %v3727
        %v3743 = vmul.f32 %v3656, %v3727
        %v3744 = vmul.f32 %v3661, %v3727
        %v3745 = vmul.f32 %v3664, %v3727
        %v3746 = vmul.f32 %v3669, %v3727
        %v3747 = vmul.f32 %v3672, %v3727
        %v3748 = vmul.f32 %v3677, %v3727
        %v3749 = vmul.f32 %v3680, %v3727
        %v3750 = vmul.f32 %v3685, %v3727
        %v3751 = vmul.f32 %v3688, %v3727
        %v3752 = vmul.f32 %v3693, %v3727
        %v3753 = vmul.f32 %v3696, %v3727
        %v3754 = vmul.f32 %v3701, %v3727
        %v3755 = vmul.f32 %v3704, %v3727
        %v3756 = vmul.f32 %v3709, %v3727
        %v3757 = vmul.f32 %v3712, %v3727
        %v3758 = vmul.f32 %v3717, %v3727
        %v3759 = vmul.f32 %v3720, %v3727
        %v3760 = vld [vmem:[%s849 + $0x1] sm:$0x1]
        %v3761 = vlaneseq
        %v3762 = vshrl.u32 %v3761, 7
        %v3763 = vsub.s32 0, %v3762
        %v3764 = vrot.slane %v3760, %v3763
        %v3765 = vadd.f32 %v3728, %v3764
        %v3766 = vadd.f32 %v3729, %v3764
        %v3767 = vadd.f32 %v3730, %v3764
        %v3768 = vadd.f32 %v3731, %v3764
        %v3769 = vadd.f32 %v3732, %v3764
        %v3770 = vadd.f32 %v3733, %v3764
        %v3771 = vadd.f32 %v3734, %v3764
        %v3772 = vadd.f32 %v3735, %v3764
        %v3773 = vadd.f32 %v3736, %v3764
        %v3774 = vadd.f32 %v3737, %v3764
        %v3775 = vadd.f32 %v3738, %v3764
        %v3776 = vadd.f32 %v3739, %v3764
        %v3777 = vadd.f32 %v3740, %v3764
        %v3778 = vadd.f32 %v3741, %v3764
        %v3779 = vadd.f32 %v3742, %v3764
        %v3780 = vadd.f32 %v3743, %v3764
        %v3781 = vadd.f32 %v3744, %v3764
        %v3782 = vadd.f32 %v3745, %v3764
        %v3783 = vadd.f32 %v3746, %v3764
        %v3784 = vadd.f32 %v3747, %v3764
        %v3785 = vadd.f32 %v3748, %v3764
        %v3786 = vadd.f32 %v3749, %v3764
        %v3787 = vadd.f32 %v3750, %v3764
        %v3788 = vadd.f32 %v3751, %v3764
        %v3789 = vadd.f32 %v3752, %v3764
        %v3790 = vadd.f32 %v3753, %v3764
        %v3791 = vadd.f32 %v3754, %v3764
        %v3792 = vadd.f32 %v3755, %v3764
        %v3793 = vadd.f32 %v3756, %v3764
        %v3794 = vadd.f32 %v3757, %v3764
        %v3795 = vadd.f32 %v3758, %v3764
        %v3796 = vadd.f32 %v3759, %v3764
        %v3797 = vld [vmem:[%s854] sm:$0xf]
        %v3798 = vld [vmem:[%s854 + $0x4] sm:$0xf]
        %v3799 = vld [vmem:[%s854 + $0x8] sm:$0xf]
        %v3800 = vld [vmem:[%s854 + $0xc] sm:$0xf]
        %v3801 = vld [vmem:[%s854 + $0x10] sm:$0xf]
        %v3802 = vld [vmem:[%s854 + $0x14] sm:$0xf]
        %v3803 = vld [vmem:[%s854 + $0x18] sm:$0xf]
        %v3804 = vld [vmem:[%s854 + $0x1c] sm:$0xf]
        %v3813 = vunpack.c.l.b16 %v3797
        %v3814 = vunpack.c.l.b16 %v3798
        %v3815 = vunpack.c.l.b16 %v3799
        %v3816 = vunpack.c.l.b16 %v3800
        %v3817 = vunpack.c.l.b16 %v3801
        %v3818 = vunpack.c.l.b16 %v3802
        %v3819 = vunpack.c.l.b16 %v3803
        %v3820 = vunpack.c.l.b16 %v3804
        %v3821 = vpack.c.b16 %v3814, %v3813
        %v3822 = vpack.c.b16 %v3816, %v3815
        %v3823 = vpack.c.b16 %v3818, %v3817
        %v3824 = vpack.c.b16 %v3820, %v3819
        %3829 = vmatprep.subr.bf16.mxu0 0
        %3830 = vmatpush1.bf16.msra.mxu0 %v3821
        %3831 = vmatprep.subr.bf16.mxu0 0
        %3832 = vmatpush1.bf16.msra.mxu0 %v3822
        %3833 = vmatprep.subr.bf16.mxu0 0
        %3834 = vmatpush1.bf16.msra.mxu0 %v3823
        %3835 = vmatprep.subr.bf16.mxu0 0
        %3836 = vmatpush1.bf16.msra.mxu0 %v3824
        %3837 = vmatprep.subr.bf16.mxu0 0
        %3838 = vmatpush1.bf16.msra.mxu0 0
        %3839 = vmatprep.subr.bf16.mxu0 0
        %3840 = vmatpush1.bf16.msra.mxu0 0
        %3841 = vmatprep.subr.bf16.mxu0 0
        %3842 = vmatpush1.bf16.msra.mxu0 0
        %3843 = vmatprep.subr.bf16.mxu0 0
        %3844 = vmatpush1.bf16.msra.mxu0 0
        %3845 = vmatprep.subr.bf16.mxu0 0
        %3846 = vmatpush1.bf16.msra.mxu0 0
        %3847 = vmatprep.subr.bf16.mxu0 0
        %3848 = vmatpush1.bf16.msra.mxu0 0
        %3849 = vmatprep.subr.bf16.mxu0 0
        %3850 = vmatpush1.bf16.msra.mxu0 0
        %3851 = vmatprep.subr.bf16.mxu0 0
        %3852 = vmatpush1.bf16.msra.mxu0 0
        %3853 = vmatprep.subr.bf16.mxu0 0
        %3854 = vmatpush1.bf16.msra.mxu0 0
        %3855 = vmatprep.subr.bf16.mxu0 0
        %3856 = vmatpush1.bf16.msra.mxu0 0
        %3857 = vmatprep.subr.bf16.mxu0 0
        %3858 = vmatpush1.bf16.msra.mxu0 0
        %3859 = vmatprep.subr.bf16.mxu0 0
        %3860 = vmatpush1.bf16.msra.mxu0 0
        %3861 = vmatprep.mubr.bf16.mxu0 0
        %3862 = vmatmul.mubr.bf16.gmra.mrb[0].mxu0 %v1023
        %v3863 = vpop.f32.mrb[0].mxu0
        %v3864 = vadd.f32 0.0, %v3863
        %v3865 = vpop.f32.mrb[0].mxu0
        %v3866 = vpop.f32.mrb[0].mxu0
        %v3867 = vadd.f32 0.0, %v3866
        %v3868 = vpop.f32.mrb[0].mxu0
        %3869 = vmatprep.mubr.bf16.mxu0 0
        %3870 = vmatmul.mubr.bf16.gmra.mrb[0].mxu0 %v1026
        %v3871 = vpop.f32.mrb[0].mxu0
        %v3872 = vadd.f32 0.0, %v3871
        %v3873 = vpop.f32.mrb[0].mxu0
        %v3874 = vpop.f32.mrb[0].mxu0
        %v3875 = vadd.f32 0.0, %v3874
        %v3876 = vpop.f32.mrb[0].mxu0
        %3877 = vmatprep.mubr.bf16.mxu0 0
        %3878 = vmatmul.mubr.bf16.gmra.mrb[0].mxu0 %v1029
        %v3879 = vpop.f32.mrb[0].mxu0
        %v3880 = vadd.f32 0.0, %v3879
        %v3881 = vpop.f32.mrb[0].mxu0
        %v3882 = vpop.f32.mrb[0].mxu0
        %v3883 = vadd.f32 0.0, %v3882
        %v3884 = vpop.f32.mrb[0].mxu0
        %3885 = vmatprep.mubr.bf16.mxu0 0
        %3886 = vmatmul.mubr.bf16.gmra.mrb[0].mxu0 %v1032
        %v3887 = vpop.f32.mrb[0].mxu0
        %v3888 = vadd.f32 0.0, %v3887
        %v3889 = vpop.f32.mrb[0].mxu0
        %v3890 = vpop.f32.mrb[0].mxu0
        %v3891 = vadd.f32 0.0, %v3890
        %v3892 = vpop.f32.mrb[0].mxu0
        %3893 = vmatprep.mubr.bf16.mxu0 0
        %3894 = vmatmul.mubr.bf16.gmra.mrb[0].mxu0 %v1035
        %v3895 = vpop.f32.mrb[0].mxu0
        %v3896 = vadd.f32 0.0, %v3895
        %v3897 = vpop.f32.mrb[0].mxu0
        %v3898 = vpop.f32.mrb[0].mxu0
        %v3899 = vadd.f32 0.0, %v3898
        %v3900 = vpop.f32.mrb[0].mxu0
        %3901 = vmatprep.mubr.bf16.mxu0 0
        %3902 = vmatmul.mubr.bf16.gmra.mrb[0].mxu0 %v1038
        %v3903 = vpop.f32.mrb[0].mxu0
        %v3904 = vadd.f32 0.0, %v3903
        %v3905 = vpop.f32.mrb[0].mxu0
        %v3906 = vpop.f32.mrb[0].mxu0
        %v3907 = vadd.f32 0.0, %v3906
        %v3908 = vpop.f32.mrb[0].mxu0
        %3909 = vmatprep.mubr.bf16.mxu0 0
        %3910 = vmatmul.mubr.bf16.gmra.mrb[0].mxu0 %v1041
        %v3911 = vpop.f32.mrb[0].mxu0
        %v3912 = vadd.f32 0.0, %v3911
        %v3913 = vpop.f32.mrb[0].mxu0
        %v3914 = vpop.f32.mrb[0].mxu0
        %v3915 = vadd.f32 0.0, %v3914
        %v3916 = vpop.f32.mrb[0].mxu0
        %3917 = vmatprep.mubr.bf16.mxu0 0
        %3918 = vmatmul.mubr.bf16.gmra.mrb[0].mxu0 %v1044
        %v3919 = vpop.f32.mrb[0].mxu0
        %v3920 = vadd.f32 0.0, %v3919
        %v3921 = vpop.f32.mrb[0].mxu0
        %v3922 = vpop.f32.mrb[0].mxu0
        %v3923 = vadd.f32 0.0, %v3922
        %v3924 = vpop.f32.mrb[0].mxu0
        %3925 = vmatprep.mubr.bf16.mxu0 0
        %3926 = vmatmul.mubr.bf16.gmra.mrb[0].mxu0 %v1047
        %v3927 = vpop.f32.mrb[0].mxu0
        %v3928 = vadd.f32 0.0, %v3927
        %v3929 = vpop.f32.mrb[0].mxu0
        %v3930 = vpop.f32.mrb[0].mxu0
        %v3931 = vadd.f32 0.0, %v3930
        %v3932 = vpop.f32.mrb[0].mxu0
        %3933 = vmatprep.mubr.bf16.mxu0 0
        %3934 = vmatmul.mubr.bf16.gmra.mrb[0].mxu0 %v1050
        %v3935 = vpop.f32.mrb[0].mxu0
        %v3936 = vadd.f32 0.0, %v3935
        %v3937 = vpop.f32.mrb[0].mxu0
        %v3938 = vpop.f32.mrb[0].mxu0
        %v3939 = vadd.f32 0.0, %v3938
        %v3940 = vpop.f32.mrb[0].mxu0
        %3941 = vmatprep.mubr.bf16.mxu0 0
        %3942 = vmatmul.mubr.bf16.gmra.mrb[0].mxu0 %v1053
        %v3943 = vpop.f32.mrb[0].mxu0
        %v3944 = vadd.f32 0.0, %v3943
        %v3945 = vpop.f32.mrb[0].mxu0
        %v3946 = vpop.f32.mrb[0].mxu0
        %v3947 = vadd.f32 0.0, %v3946
        %v3948 = vpop.f32.mrb[0].mxu0
        %3949 = vmatprep.mubr.bf16.mxu0 0
        %3950 = vmatmul.mubr.bf16.gmra.mrb[0].mxu0 %v1056
        %v3951 = vpop.f32.mrb[0].mxu0
        %v3952 = vadd.f32 0.0, %v3951
        %v3953 = vpop.f32.mrb[0].mxu0
        %v3954 = vpop.f32.mrb[0].mxu0
        %v3955 = vadd.f32 0.0, %v3954
        %v3956 = vpop.f32.mrb[0].mxu0
        %3957 = vmatprep.mubr.bf16.mxu0 0
        %3958 = vmatmul.mubr.bf16.gmra.mrb[0].mxu0 %v1059
        %v3959 = vpop.f32.mrb[0].mxu0
        %v3960 = vadd.f32 0.0, %v3959
        %v3961 = vpop.f32.mrb[0].mxu0
        %v3962 = vpop.f32.mrb[0].mxu0
        %v3963 = vadd.f32 0.0, %v3962
        %v3964 = vpop.f32.mrb[0].mxu0
        %3965 = vmatprep.mubr.bf16.mxu0 0
        %3966 = vmatmul.mubr.bf16.gmra.mrb[0].mxu0 %v1062
        %v3967 = vpop.f32.mrb[0].mxu0
        %v3968 = vadd.f32 0.0, %v3967
        %v3969 = vpop.f32.mrb[0].mxu0
        %v3970 = vpop.f32.mrb[0].mxu0
        %v3971 = vadd.f32 0.0, %v3970
        %v3972 = vpop.f32.mrb[0].mxu0
        %3973 = vmatprep.mubr.bf16.mxu0 0
        %3974 = vmatmul.mubr.bf16.gmra.mrb[0].mxu0 %v1065
        %v3975 = vpop.f32.mrb[0].mxu0
        %v3976 = vadd.f32 0.0, %v3975
        %v3977 = vpop.f32.mrb[0].mxu0
        %v3978 = vpop.f32.mrb[0].mxu0
        %v3979 = vadd.f32 0.0, %v3978
        %v3980 = vpop.f32.mrb[0].mxu0
        %3981 = vmatprep.mubr.bf16.mxu0 0
        %3982 = vmatmul.mubr.bf16.gmra.mrb[0].mxu0 %v1068
        %v3983 = vpop.f32.mrb[0].mxu0
        %v3984 = vadd.f32 0.0, %v3983
        %v3985 = vpop.f32.mrb[0].mxu0
        %v3986 = vpop.f32.mrb[0].mxu0
        %v3987 = vadd.f32 0.0, %v3986
        %v3988 = vpop.f32.mrb[0].mxu0
        %3989 = vdwg.mxu0
        %v3990 = vld [vmem:[%s858] sm:$0x1]
        %v3991 = vlaneseq
        %v3992 = vshrl.u32 %v3991, 7
        %v3993 = vsub.s32 0, %v3992
        %v3994 = vrot.slane %v3990, %v3993
        %v3995 = vmul.f32 %v3864, %v3994
        %v3996 = vmul.f32 %v3867, %v3994
        %v3997 = vmul.f32 %v3872, %v3994
        %v3998 = vmul.f32 %v3875, %v3994
        %v3999 = vmul.f32 %v3880, %v3994
        %v4000 = vmul.f32 %v3883, %v3994
        %v4001 = vmul.f32 %v3888, %v3994
        %v4002 = vmul.f32 %v3891, %v3994
        %v4003 = vmul.f32 %v3896, %v3994
        %v4004 = vmul.f32 %v3899, %v3994
        %v4005 = vmul.f32 %v3904, %v3994
        %v4006 = vmul.f32 %v3907, %v3994
        %v4007 = vmul.f32 %v3912, %v3994
        %v4008 = vmul.f32 %v3915, %v3994
        %v4009 = vmul.f32 %v3920, %v3994
        %v4010 = vmul.f32 %v3923, %v3994
        %v4011 = vmul.f32 %v3928, %v3994
        %v4012 = vmul.f32 %v3931, %v3994
        %v4013 = vmul.f32 %v3936, %v3994
        %v4014 = vmul.f32 %v3939, %v3994
        %v4015 = vmul.f32 %v3944, %v3994
        %v4016 = vmul.f32 %v3947, %v3994
        %v4017 = vmul.f32 %v3952, %v3994
        %v4018 = vmul.f32 %v3955, %v3994
        %v4019 = vmul.f32 %v3960, %v3994
        %v4020 = vmul.f32 %v3963, %v3994
        %v4021 = vmul.f32 %v3968, %v3994
        %v4022 = vmul.f32 %v3971, %v3994
        %v4023 = vmul.f32 %v3976, %v3994
        %v4024 = vmul.f32 %v3979, %v3994
        %v4025 = vmul.f32 %v3984, %v3994
        %v4026 = vmul.f32 %v3987, %v3994
        %v4027 = vld [vmem:[%s858 + $0x1] sm:$0x1]
        %v4028 = vlaneseq
        %v4029 = vshrl.u32 %v4028, 7
        %v4030 = vsub.s32 0, %v4029
        %v4031 = vrot.slane %v4027, %v4030
        %v4032 = vadd.f32 %v3995, %v4031
        %v4033 = vadd.f32 %v3996, %v4031
        %v4034 = vadd.f32 %v3997, %v4031
        %v4035 = vadd.f32 %v3998, %v4031
        %v4036 = vadd.f32 %v3999, %v4031
        %v4037 = vadd.f32 %v4000, %v4031
        %v4038 = vadd.f32 %v4001, %v4031
        %v4039 = vadd.f32 %v4002, %v4031
        %v4040 = vadd.f32 %v4003, %v4031
        %v4041 = vadd.f32 %v4004, %v4031
        %v4042 = vadd.f32 %v4005, %v4031
        %v4043 = vadd.f32 %v4006, %v4031
        %v4044 = vadd.f32 %v4007, %v4031
        %v4045 = vadd.f32 %v4008, %v4031
        %v4046 = vadd.f32 %v4009, %v4031
        %v4047 = vadd.f32 %v4010, %v4031
        %v4048 = vadd.f32 %v4011, %v4031
        %v4049 = vadd.f32 %v4012, %v4031
        %v4050 = vadd.f32 %v4013, %v4031
        %v4051 = vadd.f32 %v4014, %v4031
        %v4052 = vadd.f32 %v4015, %v4031
        %v4053 = vadd.f32 %v4016, %v4031
        %v4054 = vadd.f32 %v4017, %v4031
        %v4055 = vadd.f32 %v4018, %v4031
        %v4056 = vadd.f32 %v4019, %v4031
        %v4057 = vadd.f32 %v4020, %v4031
        %v4058 = vadd.f32 %v4021, %v4031
        %v4059 = vadd.f32 %v4022, %v4031
        %v4060 = vadd.f32 %v4023, %v4031
        %v4061 = vadd.f32 %v4024, %v4031
        %v4062 = vadd.f32 %v4025, %v4031
        %v4063 = vadd.f32 %v4026, %v4031
        %v4064 = vadd.f32 %v3765, %v4032
        %v4065 = vadd.f32 %v3766, %v4033
        %v4066 = vadd.f32 %v3767, %v4034
        %v4067 = vadd.f32 %v3768, %v4035
        %v4068 = vadd.f32 %v3769, %v4036
        %v4069 = vadd.f32 %v3770, %v4037
        %v4070 = vadd.f32 %v3771, %v4038
        %v4071 = vadd.f32 %v3772, %v4039
        %v4072 = vadd.f32 %v3773, %v4040
        %v4073 = vadd.f32 %v3774, %v4041
        %v4074 = vadd.f32 %v3775, %v4042
        %v4075 = vadd.f32 %v3776, %v4043
        %v4076 = vadd.f32 %v3777, %v4044
        %v4077 = vadd.f32 %v3778, %v4045
        %v4078 = vadd.f32 %v3779, %v4046
        %v4079 = vadd.f32 %v3780, %v4047
        %v4080 = vadd.f32 %v3781, %v4048
        %v4081 = vadd.f32 %v3782, %v4049
        %v4082 = vadd.f32 %v3783, %v4050
        %v4083 = vadd.f32 %v3784, %v4051
        %v4084 = vadd.f32 %v3785, %v4052
        %v4085 = vadd.f32 %v3786, %v4053
        %v4086 = vadd.f32 %v3787, %v4054
        %v4087 = vadd.f32 %v3788, %v4055
        %v4088 = vadd.f32 %v3789, %v4056
        %v4089 = vadd.f32 %v3790, %v4057
        %v4090 = vadd.f32 %v3791, %v4058
        %v4091 = vadd.f32 %v3792, %v4059
        %v4092 = vadd.f32 %v3793, %v4060
        %v4093 = vadd.f32 %v3794, %v4061
        %v4094 = vadd.f32 %v3795, %v4062
        %v4095 = vadd.f32 %v3796, %v4063
        %v4096 = vmax.f32 %v4064, 0.0
        %v4097 = vmax.f32 %v4065, 0.0
        %v4098 = vmax.f32 %v4066, 0.0
        %v4099 = vmax.f32 %v4067, 0.0
        %v4100 = vmax.f32 %v4068, 0.0
        %v4101 = vmax.f32 %v4069, 0.0
        %v4102 = vmax.f32 %v4070, 0.0
        %v4103 = vmax.f32 %v4071, 0.0
        %v4104 = vmax.f32 %v4072, 0.0
        %v4105 = vmax.f32 %v4073, 0.0
        %v4106 = vmax.f32 %v4074, 0.0
        %v4107 = vmax.f32 %v4075, 0.0
        %v4108 = vmax.f32 %v4076, 0.0
        %v4109 = vmax.f32 %v4077, 0.0
        %v4110 = vmax.f32 %v4078, 0.0
        %v4111 = vmax.f32 %v4079, 0.0
        %v4112 = vmax.f32 %v4080, 0.0
        %v4113 = vmax.f32 %v4081, 0.0
        %v4114 = vmax.f32 %v4082, 0.0
        %v4115 = vmax.f32 %v4083, 0.0
        %v4116 = vmax.f32 %v4084, 0.0
        %v4117 = vmax.f32 %v4085, 0.0
        %v4118 = vmax.f32 %v4086, 0.0
        %v4119 = vmax.f32 %v4087, 0.0
        %v4120 = vmax.f32 %v4088, 0.0
        %v4121 = vmax.f32 %v4089, 0.0
        %v4122 = vmax.f32 %v4090, 0.0
        %v4123 = vmax.f32 %v4091, 0.0
        %v4124 = vmax.f32 %v4092, 0.0
        %v4125 = vmax.f32 %v4093, 0.0
        %v4126 = vmax.f32 %v4094, 0.0
        %v4127 = vmax.f32 %v4095, 0.0
        %v4128 = vpack.c.bf16 %v4097, %v4096
        %v4129 = vpack.c.bf16 %v4099, %v4098
        %v4130 = vpack.c.bf16 %v4101, %v4100
        %v4131 = vpack.c.bf16 %v4103, %v4102
        %v4132 = vpack.c.bf16 %v4105, %v4104
        %v4133 = vpack.c.bf16 %v4107, %v4106
        %v4134 = vpack.c.bf16 %v4109, %v4108
        %v4135 = vpack.c.bf16 %v4111, %v4110
        %v4136 = vpack.c.bf16 %v4113, %v4112
        %v4137 = vpack.c.bf16 %v4115, %v4114
        %v4138 = vpack.c.bf16 %v4117, %v4116
        %v4139 = vpack.c.bf16 %v4119, %v4118
        %v4140 = vpack.c.bf16 %v4121, %v4120
        %v4141 = vpack.c.bf16 %v4123, %v4122
        %v4142 = vpack.c.bf16 %v4125, %v4124
        %v4143 = vpack.c.bf16 %v4127, %v4126
        %v4144 = vld [vmem:[%s863] sm:$0xf]
        %v4145 = vld [vmem:[%s863 + $0x4] sm:$0xf]
        %v4146 = vld [vmem:[%s863 + $0x8] sm:$0xf]
        %v4147 = vld [vmem:[%s863 + $0xc] sm:$0xf]
        %v4148 = vld [vmem:[%s863 + $0x10] sm:$0xf]
        %v4149 = vld [vmem:[%s863 + $0x14] sm:$0xf]
        %v4150 = vld [vmem:[%s863 + $0x18] sm:$0xf]
        %v4151 = vld [vmem:[%s863 + $0x1c] sm:$0xf]
        %v4152 = vld [vmem:[%s863 + $0x20] sm:$0xf]
        %v4153 = vld [vmem:[%s863 + $0x24] sm:$0xf]
        %v4154 = vld [vmem:[%s863 + $0x28] sm:$0xf]
        %v4155 = vld [vmem:[%s863 + $0x2c] sm:$0xf]
        %v4156 = vld [vmem:[%s863 + $0x30] sm:$0xf]
        %v4157 = vld [vmem:[%s863 + $0x34] sm:$0xf]
        %v4158 = vld [vmem:[%s863 + $0x38] sm:$0xf]
        %v4159 = vld [vmem:[%s863 + $0x3c] sm:$0xf]
        %v4176 = vunpack.c.l.b16 %v4144
        %v4177 = vunpack.c.l.b16 %v4145
        %v4178 = vunpack.c.l.b16 %v4146
        %v4179 = vunpack.c.l.b16 %v4147
        %v4180 = vunpack.c.l.b16 %v4148
        %v4181 = vunpack.c.l.b16 %v4149
        %v4182 = vunpack.c.l.b16 %v4150
        %v4183 = vunpack.c.l.b16 %v4151
        %v4184 = vunpack.c.l.b16 %v4152
        %v4185 = vunpack.c.l.b16 %v4153
        %v4186 = vunpack.c.l.b16 %v4154
        %v4187 = vunpack.c.l.b16 %v4155
        %v4188 = vunpack.c.l.b16 %v4156
        %v4189 = vunpack.c.l.b16 %v4157
        %v4190 = vunpack.c.l.b16 %v4158
        %v4191 = vunpack.c.l.b16 %v4159
        %v4192 = vpack.c.b16 %v4177, %v4176
        %v4193 = vpack.c.b16 %v4179, %v4178
        %v4194 = vpack.c.b16 %v4181, %v4180
        %v4195 = vpack.c.b16 %v4183, %v4182
        %v4196 = vpack.c.b16 %v4185, %v4184
        %v4197 = vpack.c.b16 %v4187, %v4186
        %v4198 = vpack.c.b16 %v4189, %v4188
        %v4199 = vpack.c.b16 %v4191, %v4190
        %4208 = vmatprep.subr.bf16.mxu0 0
        %4209 = vmatpush1.bf16.msra.mxu0 %v4192
        %4210 = vmatprep.subr.bf16.mxu0 0
        %4211 = vmatpush1.bf16.msra.mxu0 %v4193
        %4212 = vmatprep.subr.bf16.mxu0 0
        %4213 = vmatpush1.bf16.msra.mxu0 %v4194
        %4214 = vmatprep.subr.bf16.mxu0 0
        %4215 = vmatpush1.bf16.msra.mxu0 %v4195
        %4216 = vmatprep.subr.bf16.mxu0 0
        %4217 = vmatpush1.bf16.msra.mxu0 %v4196
        %4218 = vmatprep.subr.bf16.mxu0 0
        %4219 = vmatpush1.bf16.msra.mxu0 %v4197
        %4220 = vmatprep.subr.bf16.mxu0 0
        %4221 = vmatpush1.bf16.msra.mxu0 %v4198
        %4222 = vmatprep.subr.bf16.mxu0 0
        %4223 = vmatpush1.bf16.msra.mxu0 %v4199
        %4224 = vmatprep.subr.bf16.mxu0 0
        %4225 = vmatpush1.bf16.msra.mxu0 0
        %4226 = vmatprep.subr.bf16.mxu0 0
        %4227 = vmatpush1.bf16.msra.mxu0 0
        %4228 = vmatprep.subr.bf16.mxu0 0
        %4229 = vmatpush1.bf16.msra.mxu0 0
        %4230 = vmatprep.subr.bf16.mxu0 0
        %4231 = vmatpush1.bf16.msra.mxu0 0
        %4232 = vmatprep.subr.bf16.mxu0 0
        %4233 = vmatpush1.bf16.msra.mxu0 0
        %4234 = vmatprep.subr.bf16.mxu0 0
        %4235 = vmatpush1.bf16.msra.mxu0 0
        %4236 = vmatprep.subr.bf16.mxu0 0
        %4237 = vmatpush1.bf16.msra.mxu0 0
        %4238 = vmatprep.subr.bf16.mxu0 0
        %4239 = vmatpush1.bf16.msra.mxu0 0
        %4240 = vmatprep.mubr.bf16.mxu0 0
        %4241 = vmatmul.mubr.bf16.gmra.mrb[0].mxu0 %v4128
        %v4242 = vpop.f32.mrb[0].mxu0
        %v4243 = vadd.f32 0.0, %v4242
        %v4244 = vpop.f32.mrb[0].mxu0
        %v4245 = vpop.f32.mrb[0].mxu0
        %v4246 = vadd.f32 0.0, %v4245
        %v4247 = vpop.f32.mrb[0].mxu0
        %4248 = vmatprep.mubr.bf16.mxu0 0
        %4249 = vmatmul.mubr.bf16.gmra.mrb[0].mxu0 %v4129
        %v4250 = vpop.f32.mrb[0].mxu0
        %v4251 = vadd.f32 0.0, %v4250
        %v4252 = vpop.f32.mrb[0].mxu0
        %v4253 = vpop.f32.mrb[0].mxu0
        %v4254 = vadd.f32 0.0, %v4253
        %v4255 = vpop.f32.mrb[0].mxu0
        %4256 = vmatprep.mubr.bf16.mxu0 0
        %4257 = vmatmul.mubr.bf16.gmra.mrb[0].mxu0 %v4130
        %v4258 = vpop.f32.mrb[0].mxu0
        %v4259 = vadd.f32 0.0, %v4258
        %v4260 = vpop.f32.mrb[0].mxu0
        %v4261 = vpop.f32.mrb[0].mxu0
        %v4262 = vadd.f32 0.0, %v4261
        %v4263 = vpop.f32.mrb[0].mxu0
        %4264 = vmatprep.mubr.bf16.mxu0 0
        %4265 = vmatmul.mubr.bf16.gmra.mrb[0].mxu0 %v4131
        %v4266 = vpop.f32.mrb[0].mxu0
        %v4267 = vadd.f32 0.0, %v4266
        %v4268 = vpop.f32.mrb[0].mxu0
        %v4269 = vpop.f32.mrb[0].mxu0
        %v4270 = vadd.f32 0.0, %v4269
        %v4271 = vpop.f32.mrb[0].mxu0
        %4272 = vmatprep.mubr.bf16.mxu0 0
        %4273 = vmatmul.mubr.bf16.gmra.mrb[0].mxu0 %v4132
        %v4274 = vpop.f32.mrb[0].mxu0
        %v4275 = vadd.f32 0.0, %v4274
        %v4276 = vpop.f32.mrb[0].mxu0
        %v4277 = vpop.f32.mrb[0].mxu0
        %v4278 = vadd.f32 0.0, %v4277
        %v4279 = vpop.f32.mrb[0].mxu0
        %4280 = vmatprep.mubr.bf16.mxu0 0
        %4281 = vmatmul.mubr.bf16.gmra.mrb[0].mxu0 %v4133
        %v4282 = vpop.f32.mrb[0].mxu0
        %v4283 = vadd.f32 0.0, %v4282
        %v4284 = vpop.f32.mrb[0].mxu0
        %v4285 = vpop.f32.mrb[0].mxu0
        %v4286 = vadd.f32 0.0, %v4285
        %v4287 = vpop.f32.mrb[0].mxu0
        %4288 = vmatprep.mubr.bf16.mxu0 0
        %4289 = vmatmul.mubr.bf16.gmra.mrb[0].mxu0 %v4134
        %v4290 = vpop.f32.mrb[0].mxu0
        %v4291 = vadd.f32 0.0, %v4290
        %v4292 = vpop.f32.mrb[0].mxu0
        %v4293 = vpop.f32.mrb[0].mxu0
        %v4294 = vadd.f32 0.0, %v4293
        %v4295 = vpop.f32.mrb[0].mxu0
        %4296 = vmatprep.mubr.bf16.mxu0 0
        %4297 = vmatmul.mubr.bf16.gmra.mrb[0].mxu0 %v4135
        %v4298 = vpop.f32.mrb[0].mxu0
        %v4299 = vadd.f32 0.0, %v4298
        %v4300 = vpop.f32.mrb[0].mxu0
        %v4301 = vpop.f32.mrb[0].mxu0
        %v4302 = vadd.f32 0.0, %v4301
        %v4303 = vpop.f32.mrb[0].mxu0
        %4304 = vmatprep.mubr.bf16.mxu0 0
        %4305 = vmatmul.mubr.bf16.gmra.mrb[0].mxu0 %v4136
        %v4306 = vpop.f32.mrb[0].mxu0
        %v4307 = vadd.f32 0.0, %v4306
        %v4308 = vpop.f32.mrb[0].mxu0
        %v4309 = vpop.f32.mrb[0].mxu0
        %v4310 = vadd.f32 0.0, %v4309
        %v4311 = vpop.f32.mrb[0].mxu0
        %4312 = vmatprep.mubr.bf16.mxu0 0
        %4313 = vmatmul.mubr.bf16.gmra.mrb[0].mxu0 %v4137
        %v4314 = vpop.f32.mrb[0].mxu0
        %v4315 = vadd.f32 0.0, %v4314
        %v4316 = vpop.f32.mrb[0].mxu0
        %v4317 = vpop.f32.mrb[0].mxu0
        %v4318 = vadd.f32 0.0, %v4317
        %v4319 = vpop.f32.mrb[0].mxu0
        %4320 = vmatprep.mubr.bf16.mxu0 0
        %4321 = vmatmul.mubr.bf16.gmra.mrb[0].mxu0 %v4138
        %v4322 = vpop.f32.mrb[0].mxu0
        %v4323 = vadd.f32 0.0, %v4322
        %v4324 = vpop.f32.mrb[0].mxu0
        %v4325 = vpop.f32.mrb[0].mxu0
        %v4326 = vadd.f32 0.0, %v4325
        %v4327 = vpop.f32.mrb[0].mxu0
        %4328 = vmatprep.mubr.bf16.mxu0 0
        %4329 = vmatmul.mubr.bf16.gmra.mrb[0].mxu0 %v4139
        %v4330 = vpop.f32.mrb[0].mxu0
        %v4331 = vadd.f32 0.0, %v4330
        %v4332 = vpop.f32.mrb[0].mxu0
        %v4333 = vpop.f32.mrb[0].mxu0
        %v4334 = vadd.f32 0.0, %v4333
        %v4335 = vpop.f32.mrb[0].mxu0
        %4336 = vmatprep.mubr.bf16.mxu0 0
        %4337 = vmatmul.mubr.bf16.gmra.mrb[0].mxu0 %v4140
        %v4338 = vpop.f32.mrb[0].mxu0
        %v4339 = vadd.f32 0.0, %v4338
        %v4340 = vpop.f32.mrb[0].mxu0
        %v4341 = vpop.f32.mrb[0].mxu0
        %v4342 = vadd.f32 0.0, %v4341
        %v4343 = vpop.f32.mrb[0].mxu0
        %4344 = vmatprep.mubr.bf16.mxu0 0
        %4345 = vmatmul.mubr.bf16.gmra.mrb[0].mxu0 %v4141
        %v4346 = vpop.f32.mrb[0].mxu0
        %v4347 = vadd.f32 0.0, %v4346
        %v4348 = vpop.f32.mrb[0].mxu0
        %v4349 = vpop.f32.mrb[0].mxu0
        %v4350 = vadd.f32 0.0, %v4349
        %v4351 = vpop.f32.mrb[0].mxu0
        %4352 = vmatprep.mubr.bf16.mxu0 0
        %4353 = vmatmul.mubr.bf16.gmra.mrb[0].mxu0 %v4142
        %v4354 = vpop.f32.mrb[0].mxu0
        %v4355 = vadd.f32 0.0, %v4354
        %v4356 = vpop.f32.mrb[0].mxu0
        %v4357 = vpop.f32.mrb[0].mxu0
        %v4358 = vadd.f32 0.0, %v4357
        %v4359 = vpop.f32.mrb[0].mxu0
        %4360 = vmatprep.mubr.bf16.mxu0 0
        %4361 = vmatmul.mubr.bf16.gmra.mrb[0].mxu0 %v4143
        %v4362 = vpop.f32.mrb[0].mxu0
        %v4363 = vadd.f32 0.0, %v4362
        %v4364 = vpop.f32.mrb[0].mxu0
        %v4365 = vpop.f32.mrb[0].mxu0
        %v4366 = vadd.f32 0.0, %v4365
        %v4367 = vpop.f32.mrb[0].mxu0
        %4368 = vdwg.mxu0
        %v4369 = vld [vmem:[%s867] sm:$0x1]
        %v4370 = vlaneseq
        %v4371 = vshrl.u32 %v4370, 7
        %v4372 = vsub.s32 0, %v4371
        %v4373 = vrot.slane %v4369, %v4372
        %v4374 = vmul.f32 %v4243, %v4373
        %v4375 = vmul.f32 %v4246, %v4373
        %v4376 = vmul.f32 %v4251, %v4373
        %v4377 = vmul.f32 %v4254, %v4373
        %v4378 = vmul.f32 %v4259, %v4373
        %v4379 = vmul.f32 %v4262, %v4373
        %v4380 = vmul.f32 %v4267, %v4373
        %v4381 = vmul.f32 %v4270, %v4373
        %v4382 = vmul.f32 %v4275, %v4373
        %v4383 = vmul.f32 %v4278, %v4373
        %v4384 = vmul.f32 %v4283, %v4373
        %v4385 = vmul.f32 %v4286, %v4373
        %v4386 = vmul.f32 %v4291, %v4373
        %v4387 = vmul.f32 %v4294, %v4373
        %v4388 = vmul.f32 %v4299, %v4373
        %v4389 = vmul.f32 %v4302, %v4373
        %v4390 = vmul.f32 %v4307, %v4373
        %v4391 = vmul.f32 %v4310, %v4373
        %v4392 = vmul.f32 %v4315, %v4373
        %v4393 = vmul.f32 %v4318, %v4373
        %v4394 = vmul.f32 %v4323, %v4373
        %v4395 = vmul.f32 %v4326, %v4373
        %v4396 = vmul.f32 %v4331, %v4373
        %v4397 = vmul.f32 %v4334, %v4373
        %v4398 = vmul.f32 %v4339, %v4373
        %v4399 = vmul.f32 %v4342, %v4373
        %v4400 = vmul.f32 %v4347, %v4373
        %v4401 = vmul.f32 %v4350, %v4373
        %v4402 = vmul.f32 %v4355, %v4373
        %v4403 = vmul.f32 %v4358, %v4373
        %v4404 = vmul.f32 %v4363, %v4373
        %v4405 = vmul.f32 %v4366, %v4373
        %v4406 = vld [vmem:[%s867 + $0x1] sm:$0x1]
        %v4407 = vlaneseq
        %v4408 = vshrl.u32 %v4407, 7
        %v4409 = vsub.s32 0, %v4408
        %v4410 = vrot.slane %v4406, %v4409
        %v4411 = vadd.f32 %v4374, %v4410
        %v4412 = vadd.f32 %v4375, %v4410
        %v4413 = vadd.f32 %v4376, %v4410
        %v4414 = vadd.f32 %v4377, %v4410
        %v4415 = vadd.f32 %v4378, %v4410
        %v4416 = vadd.f32 %v4379, %v4410
        %v4417 = vadd.f32 %v4380, %v4410
        %v4418 = vadd.f32 %v4381, %v4410
        %v4419 = vadd.f32 %v4382, %v4410
        %v4420 = vadd.f32 %v4383, %v4410
        %v4421 = vadd.f32 %v4384, %v4410
        %v4422 = vadd.f32 %v4385, %v4410
        %v4423 = vadd.f32 %v4386, %v4410
        %v4424 = vadd.f32 %v4387, %v4410
        %v4425 = vadd.f32 %v4388, %v4410
        %v4426 = vadd.f32 %v4389, %v4410
        %v4427 = vadd.f32 %v4390, %v4410
        %v4428 = vadd.f32 %v4391, %v4410
        %v4429 = vadd.f32 %v4392, %v4410
        %v4430 = vadd.f32 %v4393, %v4410
        %v4431 = vadd.f32 %v4394, %v4410
        %v4432 = vadd.f32 %v4395, %v4410
        %v4433 = vadd.f32 %v4396, %v4410
        %v4434 = vadd.f32 %v4397, %v4410
        %v4435 = vadd.f32 %v4398, %v4410
        %v4436 = vadd.f32 %v4399, %v4410
        %v4437 = vadd.f32 %v4400, %v4410
        %v4438 = vadd.f32 %v4401, %v4410
        %v4439 = vadd.f32 %v4402, %v4410
        %v4440 = vadd.f32 %v4403, %v4410
        %v4441 = vadd.f32 %v4404, %v4410
        %v4442 = vadd.f32 %v4405, %v4410
        %v4443 = vmax.f32 %v4411, 0.0
        %v4444 = vmax.f32 %v4412, 0.0
        %v4445 = vmax.f32 %v4413, 0.0
        %v4446 = vmax.f32 %v4414, 0.0
        %v4447 = vmax.f32 %v4415, 0.0
        %v4448 = vmax.f32 %v4416, 0.0
        %v4449 = vmax.f32 %v4417, 0.0
        %v4450 = vmax.f32 %v4418, 0.0
        %v4451 = vmax.f32 %v4419, 0.0
        %v4452 = vmax.f32 %v4420, 0.0
        %v4453 = vmax.f32 %v4421, 0.0
        %v4454 = vmax.f32 %v4422, 0.0
        %v4455 = vmax.f32 %v4423, 0.0
        %v4456 = vmax.f32 %v4424, 0.0
        %v4457 = vmax.f32 %v4425, 0.0
        %v4458 = vmax.f32 %v4426, 0.0
        %v4459 = vmax.f32 %v4427, 0.0
        %v4460 = vmax.f32 %v4428, 0.0
        %v4461 = vmax.f32 %v4429, 0.0
        %v4462 = vmax.f32 %v4430, 0.0
        %v4463 = vmax.f32 %v4431, 0.0
        %v4464 = vmax.f32 %v4432, 0.0
        %v4465 = vmax.f32 %v4433, 0.0
        %v4466 = vmax.f32 %v4434, 0.0
        %v4467 = vmax.f32 %v4435, 0.0
        %v4468 = vmax.f32 %v4436, 0.0
        %v4469 = vmax.f32 %v4437, 0.0
        %v4470 = vmax.f32 %v4438, 0.0
        %v4471 = vmax.f32 %v4439, 0.0
        %v4472 = vmax.f32 %v4440, 0.0
        %v4473 = vmax.f32 %v4441, 0.0
        %v4474 = vmax.f32 %v4442, 0.0
        %4475 = vst.msk [vmem:[%s1337 + $0x8] sm:$0xff] %vm895, %v4443
        %4476 = vst.msk [vmem:[%s1337 + $0x10] sm:$0xff] %vm895, %v4444
        %4477 = vst.msk [vmem:[%s1337 + $0x28] sm:$0xff] %vm895, %v4445
        %4478 = vst.msk [vmem:[%s1337 + $0x30] sm:$0xff] %vm895, %v4446
        %4479 = vst.msk [vmem:[%s1337 + $0x48] sm:$0xff] %vm895, %v4447
        %4480 = vst.msk [vmem:[%s1337 + $0x50] sm:$0xff] %vm895, %v4448
        %4481 = vst.msk [vmem:[%s1337 + $0x68] sm:$0xff] %vm895, %v4449
        %4482 = vst.msk [vmem:[%s1337 + $0x70] sm:$0xff] %vm895, %v4450
        %4483 = vst.msk [vmem:[%s1337 + $0x88] sm:$0xff] %vm895, %v4451
        %4484 = vst.msk [vmem:[%s1337 + $0x90] sm:$0xff] %vm895, %v4452
        %4485 = vst.msk [vmem:[%s1337 + $0xa8] sm:$0xff] %vm895, %v4453
        %4486 = vst.msk [vmem:[%s1337 + $0xb0] sm:$0xff] %vm895, %v4454
        %4487 = vst.msk [vmem:[%s1337 + $0xc8] sm:$0xff] %vm895, %v4455
        %4488 = vst.msk [vmem:[%s1337 + $0xd0] sm:$0xff] %vm895, %v4456
        %4489 = vst.msk [vmem:[%s1337 + $0xe8] sm:$0xff] %vm895, %v4457
        %4490 = vst.msk [vmem:[%s1337 + $0xf0] sm:$0xff] %vm895, %v4458
        %4491 = vst.msk [vmem:[%s1337 + $0x108] sm:$0xff] %vm895, %v4459
        %4492 = vst.msk [vmem:[%s1337 + $0x110] sm:$0xff] %vm895, %v4460
        %4493 = vst.msk [vmem:[%s1337 + $0x128] sm:$0xff] %vm895, %v4461
        %4494 = vst.msk [vmem:[%s1337 + $0x130] sm:$0xff] %vm895, %v4462
        %4495 = vst.msk [vmem:[%s1337 + $0x148] sm:$0xff] %vm895, %v4463
        %4496 = vst.msk [vmem:[%s1337 + $0x150] sm:$0xff] %vm895, %v4464
        %4497 = vst.msk [vmem:[%s1337 + $0x168] sm:$0xff] %vm895, %v4465
        %4498 = vst.msk [vmem:[%s1337 + $0x170] sm:$0xff] %vm895, %v4466
        %4499 = vst.msk [vmem:[%s1337 + $0x188] sm:$0xff] %vm895, %v4467
        %4500 = vst.msk [vmem:[%s1337 + $0x190] sm:$0xff] %vm895, %v4468
        %4501 = vst.msk [vmem:[%s1337 + $0x1a8] sm:$0xff] %vm895, %v4469
        %4502 = vst.msk [vmem:[%s1337 + $0x1b0] sm:$0xff] %vm895, %v4470
        %4503 = vst.msk [vmem:[%s1337 + $0x1c8] sm:$0xff] %vm895, %v4471
        %4504 = vst.msk [vmem:[%s1337 + $0x1d0] sm:$0xff] %vm895, %v4472
        %4505 = vst.msk [vmem:[%s1337 + $0x1e8] sm:$0xff] %vm895, %v4473
        %4506 = vst.msk [vmem:[%s1337 + $0x1f0] sm:$0xff] %vm895, %v4474
        %v4507 = vld [vmem:[#allocation2 + $0x7] sm:$0xff]
        %v4508 = vld [vmem:[#allocation2 + $0xf] sm:$0xff]
        %v4509 = vld [vmem:[#allocation2 + $0x27] sm:$0xff]
        %v4510 = vld [vmem:[#allocation2 + $0x2f] sm:$0xff]
        %v4511 = vld [vmem:[#allocation2 + $0x47] sm:$0xff]
        %v4512 = vld [vmem:[#allocation2 + $0x4f] sm:$0xff]
        %v4513 = vld [vmem:[#allocation2 + $0x67] sm:$0xff]
        %v4514 = vld [vmem:[#allocation2 + $0x6f] sm:$0xff]
        %v4515 = vld [vmem:[#allocation2 + $0x87] sm:$0xff]
        %v4516 = vld [vmem:[#allocation2 + $0x8f] sm:$0xff]
        %v4517 = vld [vmem:[#allocation2 + $0xa7] sm:$0xff]
        %v4518 = vld [vmem:[#allocation2 + $0xaf] sm:$0xff]
        %v4519 = vld [vmem:[#allocation2 + $0xc7] sm:$0xff]
        %v4520 = vld [vmem:[#allocation2 + $0xcf] sm:$0xff]
        %v4521 = vld [vmem:[#allocation2 + $0xe7] sm:$0xff]
        %v4522 = vld [vmem:[#allocation2 + $0xef] sm:$0xff]
        %v4523 = vld [vmem:[#allocation2 + $0x107] sm:$0xff]
        %v4524 = vld [vmem:[#allocation2 + $0x10f] sm:$0xff]
        %v4525 = vld [vmem:[#allocation2 + $0x127] sm:$0xff]
        %v4526 = vld [vmem:[#allocation2 + $0x12f] sm:$0xff]
        %v4527 = vld [vmem:[#allocation2 + $0x147] sm:$0xff]
        %v4528 = vld [vmem:[#allocation2 + $0x14f] sm:$0xff]
        %v4529 = vld [vmem:[#allocation2 + $0x167] sm:$0xff]
        %v4530 = vld [vmem:[#allocation2 + $0x16f] sm:$0xff]
        %v4531 = vld [vmem:[#allocation2 + $0x187] sm:$0xff]
        %v4532 = vld [vmem:[#allocation2 + $0x18f] sm:$0xff]
        %v4533 = vld [vmem:[#allocation2 + $0x1a7] sm:$0xff]
        %v4534 = vld [vmem:[#allocation2 + $0x1af] sm:$0xff]
        %v4535 = vld [vmem:[#allocation2 + $0x1c7] sm:$0xff]
        %v4536 = vld [vmem:[#allocation2 + $0x1cf] sm:$0xff]
        %v4537 = vld [vmem:[#allocation2 + $0x1e7] sm:$0xff]
        %v4538 = vld [vmem:[#allocation2 + $0x1ef] sm:$0xff]
        %4539 = vst.msk [vmem:[#allocation3] sm:$0xff] %vm895, %v4507
        %4540 = vst.msk [vmem:[#allocation3 + $0x18] sm:$0xff] %vm895, %v4508
        %4541 = vst.msk [vmem:[#allocation3 + $0x30] sm:$0xff] %vm895, %v4509
        %4542 = vst.msk [vmem:[#allocation3 + $0x48] sm:$0xff] %vm895, %v4510
        %4543 = vst.msk [vmem:[#allocation3 + $0x60] sm:$0xff] %vm895, %v4511
        %4544 = vst.msk [vmem:[#allocation3 + $0x78] sm:$0xff] %vm895, %v4512
        %4545 = vst.msk [vmem:[#allocation3 + $0x90] sm:$0xff] %vm895, %v4513
        %4546 = vst.msk [vmem:[#allocation3 + $0xa8] sm:$0xff] %vm895, %v4514
        %4547 = vst.msk [vmem:[#allocation3 + $0xc0] sm:$0xff] %vm895, %v4515
        %4548 = vst.msk [vmem:[#allocation3 + $0xd8] sm:$0xff] %vm895, %v4516
        %4549 = vst.msk [vmem:[#allocation3 + $0xf0] sm:$0xff] %vm895, %v4517
        %4550 = vst.msk [vmem:[#allocation3 + $0x108] sm:$0xff] %vm895, %v4518
        %4551 = vst.msk [vmem:[#allocation3 + $0x120] sm:$0xff] %vm895, %v4519
        %4552 = vst.msk [vmem:[#allocation3 + $0x138] sm:$0xff] %vm895, %v4520
        %4553 = vst.msk [vmem:[#allocation3 + $0x150] sm:$0xff] %vm895, %v4521
        %4554 = vst.msk [vmem:[#allocation3 + $0x168] sm:$0xff] %vm895, %v4522
        %4555 = vst.msk [vmem:[#allocation3 + $0x180] sm:$0xff] %vm895, %v4523
        %4556 = vst.msk [vmem:[#allocation3 + $0x198] sm:$0xff] %vm895, %v4524
        %4557 = vst.msk [vmem:[#allocation3 + $0x1b0] sm:$0xff] %vm895, %v4525
        %4558 = vst.msk [vmem:[#allocation3 + $0x1c8] sm:$0xff] %vm895, %v4526
        %4559 = vst.msk [vmem:[#allocation3 + $0x1e0] sm:$0xff] %vm895, %v4527
        %4560 = vst.msk [vmem:[#allocation3 + $0x1f8] sm:$0xff] %vm895, %v4528
        %4561 = vst.msk [vmem:[#allocation3 + $0x210] sm:$0xff] %vm895, %v4529
        %4562 = vst.msk [vmem:[#allocation3 + $0x228] sm:$0xff] %vm895, %v4530
        %4563 = vst.msk [vmem:[#allocation3 + $0x240] sm:$0xff] %vm895, %v4531
        %4564 = vst.msk [vmem:[#allocation3 + $0x258] sm:$0xff] %vm895, %v4532
        %4565 = vst.msk [vmem:[#allocation3 + $0x270] sm:$0xff] %vm895, %v4533
        %4566 = vst.msk [vmem:[#allocation3 + $0x288] sm:$0xff] %vm895, %v4534
        %4567 = vst.msk [vmem:[#allocation3 + $0x2a0] sm:$0xff] %vm895, %v4535
        %4568 = vst.msk [vmem:[#allocation3 + $0x2b8] sm:$0xff] %vm895, %v4536
        %4569 = vst.msk [vmem:[#allocation3 + $0x2d0] sm:$0xff] %vm895, %v4537
        %4570 = vst.msk [vmem:[#allocation3 + $0x2e8] sm:$0xff] %vm895, %v4538
        %v4571 = vld [vmem:[#allocation2 + $0x8] sm:$0xff]
        %v4572 = vld [vmem:[#allocation2 + $0x10] sm:$0xff]
        %v4573 = vld [vmem:[#allocation2 + $0x28] sm:$0xff]
        %v4574 = vld [vmem:[#allocation2 + $0x30] sm:$0xff]
        %v4575 = vld [vmem:[#allocation2 + $0x48] sm:$0xff]
        %v4576 = vld [vmem:[#allocation2 + $0x50] sm:$0xff]
        %v4577 = vld [vmem:[#allocation2 + $0x68] sm:$0xff]
        %v4578 = vld [vmem:[#allocation2 + $0x70] sm:$0xff]
        %v4579 = vld [vmem:[#allocation2 + $0x88] sm:$0xff]
        %v4580 = vld [vmem:[#allocation2 + $0x90] sm:$0xff]
        %v4581 = vld [vmem:[#allocation2 + $0xa8] sm:$0xff]
        %v4582 = vld [vmem:[#allocation2 + $0xb0] sm:$0xff]
        %v4583 = vld [vmem:[#allocation2 + $0xc8] sm:$0xff]
        %v4584 = vld [vmem:[#allocation2 + $0xd0] sm:$0xff]
        %v4585 = vld [vmem:[#allocation2 + $0xe8] sm:$0xff]
        %v4586 = vld [vmem:[#allocation2 + $0xf0] sm:$0xff]
        %v4587 = vld [vmem:[#allocation2 + $0x108] sm:$0xff]
        %v4588 = vld [vmem:[#allocation2 + $0x110] sm:$0xff]
        %v4589 = vld [vmem:[#allocation2 + $0x128] sm:$0xff]
        %v4590 = vld [vmem:[#allocation2 + $0x130] sm:$0xff]
        %v4591 = vld [vmem:[#allocation2 + $0x148] sm:$0xff]
        %v4592 = vld [vmem:[#allocation2 + $0x150] sm:$0xff]
        %v4593 = vld [vmem:[#allocation2 + $0x168] sm:$0xff]
        %v4594 = vld [vmem:[#allocation2 + $0x170] sm:$0xff]
        %v4595 = vld [vmem:[#allocation2 + $0x188] sm:$0xff]
        %v4596 = vld [vmem:[#allocation2 + $0x190] sm:$0xff]
        %v4597 = vld [vmem:[#allocation2 + $0x1a8] sm:$0xff]
        %v4598 = vld [vmem:[#allocation2 + $0x1b0] sm:$0xff]
        %v4599 = vld [vmem:[#allocation2 + $0x1c8] sm:$0xff]
        %v4600 = vld [vmem:[#allocation2 + $0x1d0] sm:$0xff]
        %v4601 = vld [vmem:[#allocation2 + $0x1e8] sm:$0xff]
        %v4602 = vld [vmem:[#allocation2 + $0x1f0] sm:$0xff]
        %4635 = vrot.lane.b32.xlu0 %v4571, 32
        %v4636 = vpop.permute.xlu0 %4635
        %4637 = vrot.lane.b32.xlu0 %v4572, 32
        %v4638 = vpop.permute.xlu0 %4637
        %4639 = vrot.lane.b32.xlu0 %v4573, 32
        %v4640 = vpop.permute.xlu0 %4639
        %4641 = vrot.lane.b32.xlu0 %v4574, 32
        %v4642 = vpop.permute.xlu0 %4641
        %4643 = vrot.lane.b32.xlu0 %v4575, 32
        %v4644 = vpop.permute.xlu0 %4643
        %4645 = vrot.lane.b32.xlu0 %v4576, 32
        %v4646 = vpop.permute.xlu0 %4645
        %4647 = vrot.lane.b32.xlu0 %v4577, 32
        %v4648 = vpop.permute.xlu0 %4647
        %4649 = vrot.lane.b32.xlu0 %v4578, 32
        %v4650 = vpop.permute.xlu0 %4649
        %4651 = vrot.lane.b32.xlu0 %v4579, 32
        %v4652 = vpop.permute.xlu0 %4651
        %4653 = vrot.lane.b32.xlu0 %v4580, 32
        %v4654 = vpop.permute.xlu0 %4653
        %4655 = vrot.lane.b32.xlu0 %v4581, 32
        %v4656 = vpop.permute.xlu0 %4655
        %4657 = vrot.lane.b32.xlu0 %v4582, 32
        %v4658 = vpop.permute.xlu0 %4657
        %4659 = vrot.lane.b32.xlu0 %v4583, 32
        %v4660 = vpop.permute.xlu0 %4659
        %4661 = vrot.lane.b32.xlu0 %v4584, 32
        %v4662 = vpop.permute.xlu0 %4661
        %4663 = vrot.lane.b32.xlu0 %v4585, 32
        %v4664 = vpop.permute.xlu0 %4663
        %4665 = vrot.lane.b32.xlu0 %v4586, 32
        %v4666 = vpop.permute.xlu0 %4665
        %4667 = vrot.lane.b32.xlu0 %v4587, 32
        %v4668 = vpop.permute.xlu0 %4667
        %4669 = vrot.lane.b32.xlu0 %v4588, 32
        %v4670 = vpop.permute.xlu0 %4669
        %4671 = vrot.lane.b32.xlu0 %v4589, 32
        %v4672 = vpop.permute.xlu0 %4671
        %4673 = vrot.lane.b32.xlu0 %v4590, 32
        %v4674 = vpop.permute.xlu0 %4673
        %4675 = vrot.lane.b32.xlu0 %v4591, 32
        %v4676 = vpop.permute.xlu0 %4675
        %4677 = vrot.lane.b32.xlu0 %v4592, 32
        %v4678 = vpop.permute.xlu0 %4677
        %4679 = vrot.lane.b32.xlu0 %v4593, 32
        %v4680 = vpop.permute.xlu0 %4679
        %4681 = vrot.lane.b32.xlu0 %v4594, 32
        %v4682 = vpop.permute.xlu0 %4681
        %4683 = vrot.lane.b32.xlu0 %v4595, 32
        %v4684 = vpop.permute.xlu0 %4683
        %4685 = vrot.lane.b32.xlu0 %v4596, 32
        %v4686 = vpop.permute.xlu0 %4685
        %4687 = vrot.lane.b32.xlu0 %v4597, 32
        %v4688 = vpop.permute.xlu0 %4687
        %4689 = vrot.lane.b32.xlu0 %v4598, 32
        %v4690 = vpop.permute.xlu0 %4689
        %4691 = vrot.lane.b32.xlu0 %v4599, 32
        %v4692 = vpop.permute.xlu0 %4691
        %4693 = vrot.lane.b32.xlu0 %v4600, 32
        %v4694 = vpop.permute.xlu0 %4693
        %4695 = vrot.lane.b32.xlu0 %v4601, 32
        %v4696 = vpop.permute.xlu0 %4695
        %4697 = vrot.lane.b32.xlu0 %v4602, 32
        %v4698 = vpop.permute.xlu0 %4697
        %4731 = vst.msk [vmem:[#allocation3] sm:$0xff] %vm1594, %v4636
        %4732 = vst.msk [vmem:[#allocation3 + $0x18] sm:$0xff] %vm1594, %v4638
        %4733 = vst.msk [vmem:[#allocation3 + $0x30] sm:$0xff] %vm1594, %v4640
        %4734 = vst.msk [vmem:[#allocation3 + $0x48] sm:$0xff] %vm1594, %v4642
        %4735 = vst.msk [vmem:[#allocation3 + $0x60] sm:$0xff] %vm1594, %v4644
        %4736 = vst.msk [vmem:[#allocation3 + $0x78] sm:$0xff] %vm1594, %v4646
        %4737 = vst.msk [vmem:[#allocation3 + $0x90] sm:$0xff] %vm1594, %v4648
        %4738 = vst.msk [vmem:[#allocation3 + $0xa8] sm:$0xff] %vm1594, %v4650
        %4739 = vst.msk [vmem:[#allocation3 + $0xc0] sm:$0xff] %vm1594, %v4652
        %4740 = vst.msk [vmem:[#allocation3 + $0xd8] sm:$0xff] %vm1594, %v4654
        %4741 = vst.msk [vmem:[#allocation3 + $0xf0] sm:$0xff] %vm1594, %v4656
        %4742 = vst.msk [vmem:[#allocation3 + $0x108] sm:$0xff] %vm1594, %v4658
        %4743 = vst.msk [vmem:[#allocation3 + $0x120] sm:$0xff] %vm1594, %v4660
        %4744 = vst.msk [vmem:[#allocation3 + $0x138] sm:$0xff] %vm1594, %v4662
        %4745 = vst.msk [vmem:[#allocation3 + $0x150] sm:$0xff] %vm1594, %v4664
        %4746 = vst.msk [vmem:[#allocation3 + $0x168] sm:$0xff] %vm1594, %v4666
        %4747 = vst.msk [vmem:[#allocation3 + $0x180] sm:$0xff] %vm1594, %v4668
        %4748 = vst.msk [vmem:[#allocation3 + $0x198] sm:$0xff] %vm1594, %v4670
        %4749 = vst.msk [vmem:[#allocation3 + $0x1b0] sm:$0xff] %vm1594, %v4672
        %4750 = vst.msk [vmem:[#allocation3 + $0x1c8] sm:$0xff] %vm1594, %v4674
        %4751 = vst.msk [vmem:[#allocation3 + $0x1e0] sm:$0xff] %vm1594, %v4676
        %4752 = vst.msk [vmem:[#allocation3 + $0x1f8] sm:$0xff] %vm1594, %v4678
        %4753 = vst.msk [vmem:[#allocation3 + $0x210] sm:$0xff] %vm1594, %v4680
        %4754 = vst.msk [vmem:[#allocation3 + $0x228] sm:$0xff] %vm1594, %v4682
        %4755 = vst.msk [vmem:[#allocation3 + $0x240] sm:$0xff] %vm1594, %v4684
        %4756 = vst.msk [vmem:[#allocation3 + $0x258] sm:$0xff] %vm1594, %v4686
        %4757 = vst.msk [vmem:[#allocation3 + $0x270] sm:$0xff] %vm1594, %v4688
        %4758 = vst.msk [vmem:[#allocation3 + $0x288] sm:$0xff] %vm1594, %v4690
        %4759 = vst.msk [vmem:[#allocation3 + $0x2a0] sm:$0xff] %vm1594, %v4692
        %4760 = vst.msk [vmem:[#allocation3 + $0x2b8] sm:$0xff] %vm1594, %v4694
        %4761 = vst.msk [vmem:[#allocation3 + $0x2d0] sm:$0xff] %vm1594, %v4696
        %4762 = vst.msk [vmem:[#allocation3 + $0x2e8] sm:$0xff] %vm1594, %v4698
        %v4763 = vld [vmem:[#allocation2 + $0x9] sm:$0xff]
        %v4764 = vld [vmem:[#allocation2 + $0x11] sm:$0xff]
        %v4765 = vld [vmem:[#allocation2 + $0x29] sm:$0xff]
        %v4766 = vld [vmem:[#allocation2 + $0x31] sm:$0xff]
        %v4767 = vld [vmem:[#allocation2 + $0x49] sm:$0xff]
        %v4768 = vld [vmem:[#allocation2 + $0x51] sm:$0xff]
        %v4769 = vld [vmem:[#allocation2 + $0x69] sm:$0xff]
        %v4770 = vld [vmem:[#allocation2 + $0x71] sm:$0xff]
        %v4771 = vld [vmem:[#allocation2 + $0x89] sm:$0xff]
        %v4772 = vld [vmem:[#allocation2 + $0x91] sm:$0xff]
        %v4773 = vld [vmem:[#allocation2 + $0xa9] sm:$0xff]
        %v4774 = vld [vmem:[#allocation2 + $0xb1] sm:$0xff]
        %v4775 = vld [vmem:[#allocation2 + $0xc9] sm:$0xff]
        %v4776 = vld [vmem:[#allocation2 + $0xd1] sm:$0xff]
        %v4777 = vld [vmem:[#allocation2 + $0xe9] sm:$0xff]
        %v4778 = vld [vmem:[#allocation2 + $0xf1] sm:$0xff]
        %v4779 = vld [vmem:[#allocation2 + $0x109] sm:$0xff]
        %v4780 = vld [vmem:[#allocation2 + $0x111] sm:$0xff]
        %v4781 = vld [vmem:[#allocation2 + $0x129] sm:$0xff]
        %v4782 = vld [vmem:[#allocation2 + $0x131] sm:$0xff]
        %v4783 = vld [vmem:[#allocation2 + $0x149] sm:$0xff]
        %v4784 = vld [vmem:[#allocation2 + $0x151] sm:$0xff]
        %v4785 = vld [vmem:[#allocation2 + $0x169] sm:$0xff]
        %v4786 = vld [vmem:[#allocation2 + $0x171] sm:$0xff]
        %v4787 = vld [vmem:[#allocation2 + $0x189] sm:$0xff]
        %v4788 = vld [vmem:[#allocation2 + $0x191] sm:$0xff]
        %v4789 = vld [vmem:[#allocation2 + $0x1a9] sm:$0xff]
        %v4790 = vld [vmem:[#allocation2 + $0x1b1] sm:$0xff]
        %v4791 = vld [vmem:[#allocation2 + $0x1c9] sm:$0xff]
        %v4792 = vld [vmem:[#allocation2 + $0x1d1] sm:$0xff]
        %v4793 = vld [vmem:[#allocation2 + $0x1e9] sm:$0xff]
        %v4794 = vld [vmem:[#allocation2 + $0x1f1] sm:$0xff]
        %4827 = vrot.lane.b32.xlu0 %v4763, 64
        %v4828 = vpop.permute.xlu0 %4827
        %4829 = vrot.lane.b32.xlu0 %v4764, 64
        %v4830 = vpop.permute.xlu0 %4829
        %4831 = vrot.lane.b32.xlu0 %v4765, 64
        %v4832 = vpop.permute.xlu0 %4831
        %4833 = vrot.lane.b32.xlu0 %v4766, 64
        %v4834 = vpop.permute.xlu0 %4833
        %4835 = vrot.lane.b32.xlu0 %v4767, 64
        %v4836 = vpop.permute.xlu0 %4835
        %4837 = vrot.lane.b32.xlu0 %v4768, 64
        %v4838 = vpop.permute.xlu0 %4837
        %4839 = vrot.lane.b32.xlu0 %v4769, 64
        %v4840 = vpop.permute.xlu0 %4839
        %4841 = vrot.lane.b32.xlu0 %v4770, 64
        %v4842 = vpop.permute.xlu0 %4841
        %4843 = vrot.lane.b32.xlu0 %v4771, 64
        %v4844 = vpop.permute.xlu0 %4843
        %4845 = vrot.lane.b32.xlu0 %v4772, 64
        %v4846 = vpop.permute.xlu0 %4845
        %4847 = vrot.lane.b32.xlu0 %v4773, 64
        %v4848 = vpop.permute.xlu0 %4847
        %4849 = vrot.lane.b32.xlu0 %v4774, 64
        %v4850 = vpop.permute.xlu0 %4849
        %4851 = vrot.lane.b32.xlu0 %v4775, 64
        %v4852 = vpop.permute.xlu0 %4851
        %4853 = vrot.lane.b32.xlu0 %v4776, 64
        %v4854 = vpop.permute.xlu0 %4853
        %4855 = vrot.lane.b32.xlu0 %v4777, 64
        %v4856 = vpop.permute.xlu0 %4855
        %4857 = vrot.lane.b32.xlu0 %v4778, 64
        %v4858 = vpop.permute.xlu0 %4857
        %4859 = vrot.lane.b32.xlu0 %v4779, 64
        %v4860 = vpop.permute.xlu0 %4859
        %4861 = vrot.lane.b32.xlu0 %v4780, 64
        %v4862 = vpop.permute.xlu0 %4861
        %4863 = vrot.lane.b32.xlu0 %v4781, 64
        %v4864 = vpop.permute.xlu0 %4863
        %4865 = vrot.lane.b32.xlu0 %v4782, 64
        %v4866 = vpop.permute.xlu0 %4865
        %4867 = vrot.lane.b32.xlu0 %v4783, 64
        %v4868 = vpop.permute.xlu0 %4867
        %4869 = vrot.lane.b32.xlu0 %v4784, 64
        %v4870 = vpop.permute.xlu0 %4869
        %4871 = vrot.lane.b32.xlu0 %v4785, 64
        %v4872 = vpop.permute.xlu0 %4871
        %4873 = vrot.lane.b32.xlu0 %v4786, 64
        %v4874 = vpop.permute.xlu0 %4873
        %4875 = vrot.lane.b32.xlu0 %v4787, 64
        %v4876 = vpop.permute.xlu0 %4875
        %4877 = vrot.lane.b32.xlu0 %v4788, 64
        %v4878 = vpop.permute.xlu0 %4877
        %4879 = vrot.lane.b32.xlu0 %v4789, 64
        %v4880 = vpop.permute.xlu0 %4879
        %4881 = vrot.lane.b32.xlu0 %v4790, 64
        %v4882 = vpop.permute.xlu0 %4881
        %4883 = vrot.lane.b32.xlu0 %v4791, 64
        %v4884 = vpop.permute.xlu0 %4883
        %4885 = vrot.lane.b32.xlu0 %v4792, 64
        %v4886 = vpop.permute.xlu0 %4885
        %4887 = vrot.lane.b32.xlu0 %v4793, 64
        %v4888 = vpop.permute.xlu0 %4887
        %4889 = vrot.lane.b32.xlu0 %v4794, 64
        %v4890 = vpop.permute.xlu0 %4889
        %4923 = vst.msk [vmem:[#allocation3] sm:$0xff] %vm1787, %v4828
        %4924 = vst.msk [vmem:[#allocation3 + $0x18] sm:$0xff] %vm1787, %v4830
        %4925 = vst.msk [vmem:[#allocation3 + $0x30] sm:$0xff] %vm1787, %v4832
        %4926 = vst.msk [vmem:[#allocation3 + $0x48] sm:$0xff] %vm1787, %v4834
        %4927 = vst.msk [vmem:[#allocation3 + $0x60] sm:$0xff] %vm1787, %v4836
        %4928 = vst.msk [vmem:[#allocation3 + $0x78] sm:$0xff] %vm1787, %v4838
        %4929 = vst.msk [vmem:[#allocation3 + $0x90] sm:$0xff] %vm1787, %v4840
        %4930 = vst.msk [vmem:[#allocation3 + $0xa8] sm:$0xff] %vm1787, %v4842
        %4931 = vst.msk [vmem:[#allocation3 + $0xc0] sm:$0xff] %vm1787, %v4844
        %4932 = vst.msk [vmem:[#allocation3 + $0xd8] sm:$0xff] %vm1787, %v4846
        %4933 = vst.msk [vmem:[#allocation3 + $0xf0] sm:$0xff] %vm1787, %v4848
        %4934 = vst.msk [vmem:[#allocation3 + $0x108] sm:$0xff] %vm1787, %v4850
        %4935 = vst.msk [vmem:[#allocation3 + $0x120] sm:$0xff] %vm1787, %v4852
        %4936 = vst.msk [vmem:[#allocation3 + $0x138] sm:$0xff] %vm1787, %v4854
        %4937 = vst.msk [vmem:[#allocation3 + $0x150] sm:$0xff] %vm1787, %v4856
        %4938 = vst.msk [vmem:[#allocation3 + $0x168] sm:$0xff] %vm1787, %v4858
        %4939 = vst.msk [vmem:[#allocation3 + $0x180] sm:$0xff] %vm1787, %v4860
        %4940 = vst.msk [vmem:[#allocation3 + $0x198] sm:$0xff] %vm1787, %v4862
        %4941 = vst.msk [vmem:[#allocation3 + $0x1b0] sm:$0xff] %vm1787, %v4864
        %4942 = vst.msk [vmem:[#allocation3 + $0x1c8] sm:$0xff] %vm1787, %v4866
        %4943 = vst.msk [vmem:[#allocation3 + $0x1e0] sm:$0xff] %vm1787, %v4868
        %4944 = vst.msk [vmem:[#allocation3 + $0x1f8] sm:$0xff] %vm1787, %v4870
        %4945 = vst.msk [vmem:[#allocation3 + $0x210] sm:$0xff] %vm1787, %v4872
        %4946 = vst.msk [vmem:[#allocation3 + $0x228] sm:$0xff] %vm1787, %v4874
        %4947 = vst.msk [vmem:[#allocation3 + $0x240] sm:$0xff] %vm1787, %v4876
        %4948 = vst.msk [vmem:[#allocation3 + $0x258] sm:$0xff] %vm1787, %v4878
        %4949 = vst.msk [vmem:[#allocation3 + $0x270] sm:$0xff] %vm1787, %v4880
        %4950 = vst.msk [vmem:[#allocation3 + $0x288] sm:$0xff] %vm1787, %v4882
        %4951 = vst.msk [vmem:[#allocation3 + $0x2a0] sm:$0xff] %vm1787, %v4884
        %4952 = vst.msk [vmem:[#allocation3 + $0x2b8] sm:$0xff] %vm1787, %v4886
        %4953 = vst.msk [vmem:[#allocation3 + $0x2d0] sm:$0xff] %vm1787, %v4888
        %4954 = vst.msk [vmem:[#allocation3 + $0x2e8] sm:$0xff] %vm1787, %v4890
        %v4955 = vld [vmem:[%s1337 + $0x7] sm:$0xff]
        %v4956 = vld [vmem:[%s1337 + $0xf] sm:$0xff]
        %v4957 = vld [vmem:[%s1337 + $0x27] sm:$0xff]
        %v4958 = vld [vmem:[%s1337 + $0x2f] sm:$0xff]
        %v4959 = vld [vmem:[%s1337 + $0x47] sm:$0xff]
        %v4960 = vld [vmem:[%s1337 + $0x4f] sm:$0xff]
        %v4961 = vld [vmem:[%s1337 + $0x67] sm:$0xff]
        %v4962 = vld [vmem:[%s1337 + $0x6f] sm:$0xff]
        %v4963 = vld [vmem:[%s1337 + $0x87] sm:$0xff]
        %v4964 = vld [vmem:[%s1337 + $0x8f] sm:$0xff]
        %v4965 = vld [vmem:[%s1337 + $0xa7] sm:$0xff]
        %v4966 = vld [vmem:[%s1337 + $0xaf] sm:$0xff]
        %v4967 = vld [vmem:[%s1337 + $0xc7] sm:$0xff]
        %v4968 = vld [vmem:[%s1337 + $0xcf] sm:$0xff]
        %v4969 = vld [vmem:[%s1337 + $0xe7] sm:$0xff]
        %v4970 = vld [vmem:[%s1337 + $0xef] sm:$0xff]
        %v4971 = vld [vmem:[%s1337 + $0x107] sm:$0xff]
        %v4972 = vld [vmem:[%s1337 + $0x10f] sm:$0xff]
        %v4973 = vld [vmem:[%s1337 + $0x127] sm:$0xff]
        %v4974 = vld [vmem:[%s1337 + $0x12f] sm:$0xff]
        %v4975 = vld [vmem:[%s1337 + $0x147] sm:$0xff]
        %v4976 = vld [vmem:[%s1337 + $0x14f] sm:$0xff]
        %v4977 = vld [vmem:[%s1337 + $0x167] sm:$0xff]
        %v4978 = vld [vmem:[%s1337 + $0x16f] sm:$0xff]
        %v4979 = vld [vmem:[%s1337 + $0x187] sm:$0xff]
        %v4980 = vld [vmem:[%s1337 + $0x18f] sm:$0xff]
        %v4981 = vld [vmem:[%s1337 + $0x1a7] sm:$0xff]
        %v4982 = vld [vmem:[%s1337 + $0x1af] sm:$0xff]
        %v4983 = vld [vmem:[%s1337 + $0x1c7] sm:$0xff]
        %v4984 = vld [vmem:[%s1337 + $0x1cf] sm:$0xff]
        %v4985 = vld [vmem:[%s1337 + $0x1e7] sm:$0xff]
        %v4986 = vld [vmem:[%s1337 + $0x1ef] sm:$0xff]
        %5019 = vrot.lane.b32.xlu0 %v4955, 96
        %v5020 = vpop.permute.xlu0 %5019
        %5021 = vrot.lane.b32.xlu0 %v4956, 96
        %v5022 = vpop.permute.xlu0 %5021
        %5023 = vrot.lane.b32.xlu0 %v4957, 96
        %v5024 = vpop.permute.xlu0 %5023
        %5025 = vrot.lane.b32.xlu0 %v4958, 96
        %v5026 = vpop.permute.xlu0 %5025
        %5027 = vrot.lane.b32.xlu0 %v4959, 96
        %v5028 = vpop.permute.xlu0 %5027
        %5029 = vrot.lane.b32.xlu0 %v4960, 96
        %v5030 = vpop.permute.xlu0 %5029
        %5031 = vrot.lane.b32.xlu0 %v4961, 96
        %v5032 = vpop.permute.xlu0 %5031
        %5033 = vrot.lane.b32.xlu0 %v4962, 96
        %v5034 = vpop.permute.xlu0 %5033
        %5035 = vrot.lane.b32.xlu0 %v4963, 96
        %v5036 = vpop.permute.xlu0 %5035
        %5037 = vrot.lane.b32.xlu0 %v4964, 96
        %v5038 = vpop.permute.xlu0 %5037
        %5039 = vrot.lane.b32.xlu0 %v4965, 96
        %v5040 = vpop.permute.xlu0 %5039
        %5041 = vrot.lane.b32.xlu0 %v4966, 96
        %v5042 = vpop.permute.xlu0 %5041
        %5043 = vrot.lane.b32.xlu0 %v4967, 96
        %v5044 = vpop.permute.xlu0 %5043
        %5045 = vrot.lane.b32.xlu0 %v4968, 96
        %v5046 = vpop.permute.xlu0 %5045
        %5047 = vrot.lane.b32.xlu0 %v4969, 96
        %v5048 = vpop.permute.xlu0 %5047
        %5049 = vrot.lane.b32.xlu0 %v4970, 96
        %v5050 = vpop.permute.xlu0 %5049
        %5051 = vrot.lane.b32.xlu0 %v4971, 96
        %v5052 = vpop.permute.xlu0 %5051
        %5053 = vrot.lane.b32.xlu0 %v4972, 96
        %v5054 = vpop.permute.xlu0 %5053
        %5055 = vrot.lane.b32.xlu0 %v4973, 96
        %v5056 = vpop.permute.xlu0 %5055
        %5057 = vrot.lane.b32.xlu0 %v4974, 96
        %v5058 = vpop.permute.xlu0 %5057
        %5059 = vrot.lane.b32.xlu0 %v4975, 96
        %v5060 = vpop.permute.xlu0 %5059
        %5061 = vrot.lane.b32.xlu0 %v4976, 96
        %v5062 = vpop.permute.xlu0 %5061
        %5063 = vrot.lane.b32.xlu0 %v4977, 96
        %v5064 = vpop.permute.xlu0 %5063
        %5065 = vrot.lane.b32.xlu0 %v4978, 96
        %v5066 = vpop.permute.xlu0 %5065
        %5067 = vrot.lane.b32.xlu0 %v4979, 96
        %v5068 = vpop.permute.xlu0 %5067
        %5069 = vrot.lane.b32.xlu0 %v4980, 96
        %v5070 = vpop.permute.xlu0 %5069
        %5071 = vrot.lane.b32.xlu0 %v4981, 96
        %v5072 = vpop.permute.xlu0 %5071
        %5073 = vrot.lane.b32.xlu0 %v4982, 96
        %v5074 = vpop.permute.xlu0 %5073
        %5075 = vrot.lane.b32.xlu0 %v4983, 96
        %v5076 = vpop.permute.xlu0 %5075
        %5077 = vrot.lane.b32.xlu0 %v4984, 96
        %v5078 = vpop.permute.xlu0 %5077
        %5079 = vrot.lane.b32.xlu0 %v4985, 96
        %v5080 = vpop.permute.xlu0 %5079
        %5081 = vrot.lane.b32.xlu0 %v4986, 96
        %v5082 = vpop.permute.xlu0 %5081
        %5115 = vst.msk [vmem:[#allocation3] sm:$0xff] %vm1980, %v5020
        %5116 = vst.msk [vmem:[#allocation3 + $0x18] sm:$0xff] %vm1980, %v5022
        %5117 = vst.msk [vmem:[#allocation3 + $0x30] sm:$0xff] %vm1980, %v5024
        %5118 = vst.msk [vmem:[#allocation3 + $0x48] sm:$0xff] %vm1980, %v5026
        %5119 = vst.msk [vmem:[#allocation3 + $0x60] sm:$0xff] %vm1980, %v5028
        %5120 = vst.msk [vmem:[#allocation3 + $0x78] sm:$0xff] %vm1980, %v5030
        %5121 = vst.msk [vmem:[#allocation3 + $0x90] sm:$0xff] %vm1980, %v5032
        %5122 = vst.msk [vmem:[#allocation3 + $0xa8] sm:$0xff] %vm1980, %v5034
        %5123 = vst.msk [vmem:[#allocation3 + $0xc0] sm:$0xff] %vm1980, %v5036
        %5124 = vst.msk [vmem:[#allocation3 + $0xd8] sm:$0xff] %vm1980, %v5038
        %5125 = vst.msk [vmem:[#allocation3 + $0xf0] sm:$0xff] %vm1980, %v5040
        %5126 = vst.msk [vmem:[#allocation3 + $0x108] sm:$0xff] %vm1980, %v5042
        %5127 = vst.msk [vmem:[#allocation3 + $0x120] sm:$0xff] %vm1980, %v5044
        %5128 = vst.msk [vmem:[#allocation3 + $0x138] sm:$0xff] %vm1980, %v5046
        %5129 = vst.msk [vmem:[#allocation3 + $0x150] sm:$0xff] %vm1980, %v5048
        %5130 = vst.msk [vmem:[#allocation3 + $0x168] sm:$0xff] %vm1980, %v5050
        %5131 = vst.msk [vmem:[#allocation3 + $0x180] sm:$0xff] %vm1980, %v5052
        %5132 = vst.msk [vmem:[#allocation3 + $0x198] sm:$0xff] %vm1980, %v5054
        %5133 = vst.msk [vmem:[#allocation3 + $0x1b0] sm:$0xff] %vm1980, %v5056
        %5134 = vst.msk [vmem:[#allocation3 + $0x1c8] sm:$0xff] %vm1980, %v5058
        %5135 = vst.msk [vmem:[#allocation3 + $0x1e0] sm:$0xff] %vm1980, %v5060
        %5136 = vst.msk [vmem:[#allocation3 + $0x1f8] sm:$0xff] %vm1980, %v5062
        %5137 = vst.msk [vmem:[#allocation3 + $0x210] sm:$0xff] %vm1980, %v5064
        %5138 = vst.msk [vmem:[#allocation3 + $0x228] sm:$0xff] %vm1980, %v5066
        %5139 = vst.msk [vmem:[#allocation3 + $0x240] sm:$0xff] %vm1980, %v5068
        %5140 = vst.msk [vmem:[#allocation3 + $0x258] sm:$0xff] %vm1980, %v5070
        %5141 = vst.msk [vmem:[#allocation3 + $0x270] sm:$0xff] %vm1980, %v5072
        %5142 = vst.msk [vmem:[#allocation3 + $0x288] sm:$0xff] %vm1980, %v5074
        %5143 = vst.msk [vmem:[#allocation3 + $0x2a0] sm:$0xff] %vm1980, %v5076
        %5144 = vst.msk [vmem:[#allocation3 + $0x2b8] sm:$0xff] %vm1980, %v5078
        %5145 = vst.msk [vmem:[#allocation3 + $0x2d0] sm:$0xff] %vm1980, %v5080
        %5146 = vst.msk [vmem:[#allocation3 + $0x2e8] sm:$0xff] %vm1980, %v5082
        %v5147 = vld [vmem:[%s1337 + $0x8] sm:$0xff]
        %v5148 = vld [vmem:[%s1337 + $0x10] sm:$0xff]
        %v5149 = vld [vmem:[%s1337 + $0x28] sm:$0xff]
        %v5150 = vld [vmem:[%s1337 + $0x30] sm:$0xff]
        %v5151 = vld [vmem:[%s1337 + $0x48] sm:$0xff]
        %v5152 = vld [vmem:[%s1337 + $0x50] sm:$0xff]
        %v5153 = vld [vmem:[%s1337 + $0x68] sm:$0xff]
        %v5154 = vld [vmem:[%s1337 + $0x70] sm:$0xff]
        %v5155 = vld [vmem:[%s1337 + $0x88] sm:$0xff]
        %v5156 = vld [vmem:[%s1337 + $0x90] sm:$0xff]
        %v5157 = vld [vmem:[%s1337 + $0xa8] sm:$0xff]
        %v5158 = vld [vmem:[%s1337 + $0xb0] sm:$0xff]
        %v5159 = vld [vmem:[%s1337 + $0xc8] sm:$0xff]
        %v5160 = vld [vmem:[%s1337 + $0xd0] sm:$0xff]
        %v5161 = vld [vmem:[%s1337 + $0xe8] sm:$0xff]
        %v5162 = vld [vmem:[%s1337 + $0xf0] sm:$0xff]
        %v5163 = vld [vmem:[%s1337 + $0x108] sm:$0xff]
        %v5164 = vld [vmem:[%s1337 + $0x110] sm:$0xff]
        %v5165 = vld [vmem:[%s1337 + $0x128] sm:$0xff]
        %v5166 = vld [vmem:[%s1337 + $0x130] sm:$0xff]
        %v5167 = vld [vmem:[%s1337 + $0x148] sm:$0xff]
        %v5168 = vld [vmem:[%s1337 + $0x150] sm:$0xff]
        %v5169 = vld [vmem:[%s1337 + $0x168] sm:$0xff]
        %v5170 = vld [vmem:[%s1337 + $0x170] sm:$0xff]
        %v5171 = vld [vmem:[%s1337 + $0x188] sm:$0xff]
        %v5172 = vld [vmem:[%s1337 + $0x190] sm:$0xff]
        %v5173 = vld [vmem:[%s1337 + $0x1a8] sm:$0xff]
        %v5174 = vld [vmem:[%s1337 + $0x1b0] sm:$0xff]
        %v5175 = vld [vmem:[%s1337 + $0x1c8] sm:$0xff]
        %v5176 = vld [vmem:[%s1337 + $0x1d0] sm:$0xff]
        %v5177 = vld [vmem:[%s1337 + $0x1e8] sm:$0xff]
        %v5178 = vld [vmem:[%s1337 + $0x1f0] sm:$0xff]
        %5179 = vst.msk [vmem:[#allocation3 + $0x8] sm:$0xff] %vm895, %v5147
        %5180 = vst.msk [vmem:[#allocation3 + $0x20] sm:$0xff] %vm895, %v5148
        %5181 = vst.msk [vmem:[#allocation3 + $0x38] sm:$0xff] %vm895, %v5149
        %5182 = vst.msk [vmem:[#allocation3 + $0x50] sm:$0xff] %vm895, %v5150
        %5183 = vst.msk [vmem:[#allocation3 + $0x68] sm:$0xff] %vm895, %v5151
        %5184 = vst.msk [vmem:[#allocation3 + $0x80] sm:$0xff] %vm895, %v5152
        %5185 = vst.msk [vmem:[#allocation3 + $0x98] sm:$0xff] %vm895, %v5153
        %5186 = vst.msk [vmem:[#allocation3 + $0xb0] sm:$0xff] %vm895, %v5154
        %5187 = vst.msk [vmem:[#allocation3 + $0xc8] sm:$0xff] %vm895, %v5155
        %5188 = vst.msk [vmem:[#allocation3 + $0xe0] sm:$0xff] %vm895, %v5156
        %5189 = vst.msk [vmem:[#allocation3 + $0xf8] sm:$0xff] %vm895, %v5157
        %5190 = vst.msk [vmem:[#allocation3 + $0x110] sm:$0xff] %vm895, %v5158
        %5191 = vst.msk [vmem:[#allocation3 + $0x128] sm:$0xff] %vm895, %v5159
        %5192 = vst.msk [vmem:[#allocation3 + $0x140] sm:$0xff] %vm895, %v5160
        %5193 = vst.msk [vmem:[#allocation3 + $0x158] sm:$0xff] %vm895, %v5161
        %5194 = vst.msk [vmem:[#allocation3 + $0x170] sm:$0xff] %vm895, %v5162
        %5195 = vst.msk [vmem:[#allocation3 + $0x188] sm:$0xff] %vm895, %v5163
        %5196 = vst.msk [vmem:[#allocation3 + $0x1a0] sm:$0xff] %vm895, %v5164
        %5197 = vst.msk [vmem:[#allocation3 + $0x1b8] sm:$0xff] %vm895, %v5165
        %5198 = vst.msk [vmem:[#allocation3 + $0x1d0] sm:$0xff] %vm895, %v5166
        %5199 = vst.msk [vmem:[#allocation3 + $0x1e8] sm:$0xff] %vm895, %v5167
        %5200 = vst.msk [vmem:[#allocation3 + $0x200] sm:$0xff] %vm895, %v5168
        %5201 = vst.msk [vmem:[#allocation3 + $0x218] sm:$0xff] %vm895, %v5169
        %5202 = vst.msk [vmem:[#allocation3 + $0x230] sm:$0xff] %vm895, %v5170
        %5203 = vst.msk [vmem:[#allocation3 + $0x248] sm:$0xff] %vm895, %v5171
        %5204 = vst.msk [vmem:[#allocation3 + $0x260] sm:$0xff] %vm895, %v5172
        %5205 = vst.msk [vmem:[#allocation3 + $0x278] sm:$0xff] %vm895, %v5173
        %5206 = vst.msk [vmem:[#allocation3 + $0x290] sm:$0xff] %vm895, %v5174
        %5207 = vst.msk [vmem:[#allocation3 + $0x2a8] sm:$0xff] %vm895, %v5175
        %5208 = vst.msk [vmem:[#allocation3 + $0x2c0] sm:$0xff] %vm895, %v5176
        %5209 = vst.msk [vmem:[#allocation3 + $0x2d8] sm:$0xff] %vm895, %v5177
        %5210 = vst.msk [vmem:[#allocation3 + $0x2f0] sm:$0xff] %vm895, %v5178
        %v5211 = vld [vmem:[%s1337 + $0x9] sm:$0xff]
        %v5212 = vld [vmem:[%s1337 + $0x11] sm:$0xff]
        %v5213 = vld [vmem:[%s1337 + $0x29] sm:$0xff]
        %v5214 = vld [vmem:[%s1337 + $0x31] sm:$0xff]
        %v5215 = vld [vmem:[%s1337 + $0x49] sm:$0xff]
        %v5216 = vld [vmem:[%s1337 + $0x51] sm:$0xff]
        %v5217 = vld [vmem:[%s1337 + $0x69] sm:$0xff]
        %v5218 = vld [vmem:[%s1337 + $0x71] sm:$0xff]
        %v5219 = vld [vmem:[%s1337 + $0x89] sm:$0xff]
        %v5220 = vld [vmem:[%s1337 + $0x91] sm:$0xff]
        %v5221 = vld [vmem:[%s1337 + $0xa9] sm:$0xff]
        %v5222 = vld [vmem:[%s1337 + $0xb1] sm:$0xff]
        %v5223 = vld [vmem:[%s1337 + $0xc9] sm:$0xff]
        %v5224 = vld [vmem:[%s1337 + $0xd1] sm:$0xff]
        %v5225 = vld [vmem:[%s1337 + $0xe9] sm:$0xff]
        %v5226 = vld [vmem:[%s1337 + $0xf1] sm:$0xff]
        %v5227 = vld [vmem:[%s1337 + $0x109] sm:$0xff]
        %v5228 = vld [vmem:[%s1337 + $0x111] sm:$0xff]
        %v5229 = vld [vmem:[%s1337 + $0x129] sm:$0xff]
        %v5230 = vld [vmem:[%s1337 + $0x131] sm:$0xff]
        %v5231 = vld [vmem:[%s1337 + $0x149] sm:$0xff]
        %v5232 = vld [vmem:[%s1337 + $0x151] sm:$0xff]
        %v5233 = vld [vmem:[%s1337 + $0x169] sm:$0xff]
        %v5234 = vld [vmem:[%s1337 + $0x171] sm:$0xff]
        %v5235 = vld [vmem:[%s1337 + $0x189] sm:$0xff]
        %v5236 = vld [vmem:[%s1337 + $0x191] sm:$0xff]
        %v5237 = vld [vmem:[%s1337 + $0x1a9] sm:$0xff]
        %v5238 = vld [vmem:[%s1337 + $0x1b1] sm:$0xff]
        %v5239 = vld [vmem:[%s1337 + $0x1c9] sm:$0xff]
        %v5240 = vld [vmem:[%s1337 + $0x1d1] sm:$0xff]
        %v5241 = vld [vmem:[%s1337 + $0x1e9] sm:$0xff]
        %v5242 = vld [vmem:[%s1337 + $0x1f1] sm:$0xff]
        %5275 = vrot.lane.b32.xlu0 %v5211, 32
        %v5276 = vpop.permute.xlu0 %5275
        %5277 = vrot.lane.b32.xlu0 %v5212, 32
        %v5278 = vpop.permute.xlu0 %5277
        %5279 = vrot.lane.b32.xlu0 %v5213, 32
        %v5280 = vpop.permute.xlu0 %5279
        %5281 = vrot.lane.b32.xlu0 %v5214, 32
        %v5282 = vpop.permute.xlu0 %5281
        %5283 = vrot.lane.b32.xlu0 %v5215, 32
        %v5284 = vpop.permute.xlu0 %5283
        %5285 = vrot.lane.b32.xlu0 %v5216, 32
        %v5286 = vpop.permute.xlu0 %5285
        %5287 = vrot.lane.b32.xlu0 %v5217, 32
        %v5288 = vpop.permute.xlu0 %5287
        %5289 = vrot.lane.b32.xlu0 %v5218, 32
        %v5290 = vpop.permute.xlu0 %5289
        %5291 = vrot.lane.b32.xlu0 %v5219, 32
        %v5292 = vpop.permute.xlu0 %5291
        %5293 = vrot.lane.b32.xlu0 %v5220, 32
        %v5294 = vpop.permute.xlu0 %5293
        %5295 = vrot.lane.b32.xlu0 %v5221, 32
        %v5296 = vpop.permute.xlu0 %5295
        %5297 = vrot.lane.b32.xlu0 %v5222, 32
        %v5298 = vpop.permute.xlu0 %5297
        %5299 = vrot.lane.b32.xlu0 %v5223, 32
        %v5300 = vpop.permute.xlu0 %5299
        %5301 = vrot.lane.b32.xlu0 %v5224, 32
        %v5302 = vpop.permute.xlu0 %5301
        %5303 = vrot.lane.b32.xlu0 %v5225, 32
        %v5304 = vpop.permute.xlu0 %5303
        %5305 = vrot.lane.b32.xlu0 %v5226, 32
        %v5306 = vpop.permute.xlu0 %5305
        %5307 = vrot.lane.b32.xlu0 %v5227, 32
        %v5308 = vpop.permute.xlu0 %5307
        %5309 = vrot.lane.b32.xlu0 %v5228, 32
        %v5310 = vpop.permute.xlu0 %5309
        %5311 = vrot.lane.b32.xlu0 %v5229, 32
        %v5312 = vpop.permute.xlu0 %5311
        %5313 = vrot.lane.b32.xlu0 %v5230, 32
        %v5314 = vpop.permute.xlu0 %5313
        %5315 = vrot.lane.b32.xlu0 %v5231, 32
        %v5316 = vpop.permute.xlu0 %5315
        %5317 = vrot.lane.b32.xlu0 %v5232, 32
        %v5318 = vpop.permute.xlu0 %5317
        %5319 = vrot.lane.b32.xlu0 %v5233, 32
        %v5320 = vpop.permute.xlu0 %5319
        %5321 = vrot.lane.b32.xlu0 %v5234, 32
        %v5322 = vpop.permute.xlu0 %5321
        %5323 = vrot.lane.b32.xlu0 %v5235, 32
        %v5324 = vpop.permute.xlu0 %5323
        %5325 = vrot.lane.b32.xlu0 %v5236, 32
        %v5326 = vpop.permute.xlu0 %5325
        %5327 = vrot.lane.b32.xlu0 %v5237, 32
        %v5328 = vpop.permute.xlu0 %5327
        %5329 = vrot.lane.b32.xlu0 %v5238, 32
        %v5330 = vpop.permute.xlu0 %5329
        %5331 = vrot.lane.b32.xlu0 %v5239, 32
        %v5332 = vpop.permute.xlu0 %5331
        %5333 = vrot.lane.b32.xlu0 %v5240, 32
        %v5334 = vpop.permute.xlu0 %5333
        %5335 = vrot.lane.b32.xlu0 %v5241, 32
        %v5336 = vpop.permute.xlu0 %5335
        %5337 = vrot.lane.b32.xlu0 %v5242, 32
        %v5338 = vpop.permute.xlu0 %5337
        %5371 = vst.msk [vmem:[#allocation3 + $0x8] sm:$0xff] %vm1594, %v5276
        %5372 = vst.msk [vmem:[#allocation3 + $0x20] sm:$0xff] %vm1594, %v5278
        %5373 = vst.msk [vmem:[#allocation3 + $0x38] sm:$0xff] %vm1594, %v5280
        %5374 = vst.msk [vmem:[#allocation3 + $0x50] sm:$0xff] %vm1594, %v5282
        %5375 = vst.msk [vmem:[#allocation3 + $0x68] sm:$0xff] %vm1594, %v5284
        %5376 = vst.msk [vmem:[#allocation3 + $0x80] sm:$0xff] %vm1594, %v5286
        %5377 = vst.msk [vmem:[#allocation3 + $0x98] sm:$0xff] %vm1594, %v5288
        %5378 = vst.msk [vmem:[#allocation3 + $0xb0] sm:$0xff] %vm1594, %v5290
        %5379 = vst.msk [vmem:[#allocation3 + $0xc8] sm:$0xff] %vm1594, %v5292
        %5380 = vst.msk [vmem:[#allocation3 + $0xe0] sm:$0xff] %vm1594, %v5294
        %5381 = vst.msk [vmem:[#allocation3 + $0xf8] sm:$0xff] %vm1594, %v5296
        %5382 = vst.msk [vmem:[#allocation3 + $0x110] sm:$0xff] %vm1594, %v5298
        %5383 = vst.msk [vmem:[#allocation3 + $0x128] sm:$0xff] %vm1594, %v5300
        %5384 = vst.msk [vmem:[#allocation3 + $0x140] sm:$0xff] %vm1594, %v5302
        %5385 = vst.msk [vmem:[#allocation3 + $0x158] sm:$0xff] %vm1594, %v5304
        %5386 = vst.msk [vmem:[#allocation3 + $0x170] sm:$0xff] %vm1594, %v5306
        %5387 = vst.msk [vmem:[#allocation3 + $0x188] sm:$0xff] %vm1594, %v5308
        %5388 = vst.msk [vmem:[#allocation3 + $0x1a0] sm:$0xff] %vm1594, %v5310
        %5389 = vst.msk [vmem:[#allocation3 + $0x1b8] sm:$0xff] %vm1594, %v5312
        %5390 = vst.msk [vmem:[#allocation3 + $0x1d0] sm:$0xff] %vm1594, %v5314
        %5391 = vst.msk [vmem:[#allocation3 + $0x1e8] sm:$0xff] %vm1594, %v5316
        %5392 = vst.msk [vmem:[#allocation3 + $0x200] sm:$0xff] %vm1594, %v5318
        %5393 = vst.msk [vmem:[#allocation3 + $0x218] sm:$0xff] %vm1594, %v5320
        %5394 = vst.msk [vmem:[#allocation3 + $0x230] sm:$0xff] %vm1594, %v5322
        %5395 = vst.msk [vmem:[#allocation3 + $0x248] sm:$0xff] %vm1594, %v5324
        %5396 = vst.msk [vmem:[#allocation3 + $0x260] sm:$0xff] %vm1594, %v5326
        %5397 = vst.msk [vmem:[#allocation3 + $0x278] sm:$0xff] %vm1594, %v5328
        %5398 = vst.msk [vmem:[#allocation3 + $0x290] sm:$0xff] %vm1594, %v5330
        %5399 = vst.msk [vmem:[#allocation3 + $0x2a8] sm:$0xff] %vm1594, %v5332
        %5400 = vst.msk [vmem:[#allocation3 + $0x2c0] sm:$0xff] %vm1594, %v5334
        %5401 = vst.msk [vmem:[#allocation3 + $0x2d8] sm:$0xff] %vm1594, %v5336
        %5402 = vst.msk [vmem:[#allocation3 + $0x2f0] sm:$0xff] %vm1594, %v5338
        %v5403 = vld [vmem:[%s2269 + $0x7] sm:$0xff]
        %v5404 = vld [vmem:[%s2269 + $0xf] sm:$0xff]
        %v5405 = vld [vmem:[%s2269 + $0x27] sm:$0xff]
        %v5406 = vld [vmem:[%s2269 + $0x2f] sm:$0xff]
        %v5407 = vld [vmem:[%s2269 + $0x47] sm:$0xff]
        %v5408 = vld [vmem:[%s2269 + $0x4f] sm:$0xff]
        %v5409 = vld [vmem:[%s2269 + $0x67] sm:$0xff]
        %v5410 = vld [vmem:[%s2269 + $0x6f] sm:$0xff]
        %v5411 = vld [vmem:[%s2269 + $0x87] sm:$0xff]
        %v5412 = vld [vmem:[%s2269 + $0x8f] sm:$0xff]
        %v5413 = vld [vmem:[%s2269 + $0xa7] sm:$0xff]
        %v5414 = vld [vmem:[%s2269 + $0xaf] sm:$0xff]
        %v5415 = vld [vmem:[%s2269 + $0xc7] sm:$0xff]
        %v5416 = vld [vmem:[%s2269 + $0xcf] sm:$0xff]
        %v5417 = vld [vmem:[%s2269 + $0xe7] sm:$0xff]
        %v5418 = vld [vmem:[%s2269 + $0xef] sm:$0xff]
        %v5419 = vld [vmem:[%s2269 + $0x107] sm:$0xff]
        %v5420 = vld [vmem:[%s2269 + $0x10f] sm:$0xff]
        %v5421 = vld [vmem:[%s2269 + $0x127] sm:$0xff]
        %v5422 = vld [vmem:[%s2269 + $0x12f] sm:$0xff]
        %v5423 = vld [vmem:[%s2269 + $0x147] sm:$0xff]
        %v5424 = vld [vmem:[%s2269 + $0x14f] sm:$0xff]
        %v5425 = vld [vmem:[%s2269 + $0x167] sm:$0xff]
        %v5426 = vld [vmem:[%s2269 + $0x16f] sm:$0xff]
        %v5427 = vld [vmem:[%s2269 + $0x187] sm:$0xff]
        %v5428 = vld [vmem:[%s2269 + $0x18f] sm:$0xff]
        %v5429 = vld [vmem:[%s2269 + $0x1a7] sm:$0xff]
        %v5430 = vld [vmem:[%s2269 + $0x1af] sm:$0xff]
        %v5431 = vld [vmem:[%s2269 + $0x1c7] sm:$0xff]
        %v5432 = vld [vmem:[%s2269 + $0x1cf] sm:$0xff]
        %v5433 = vld [vmem:[%s2269 + $0x1e7] sm:$0xff]
        %v5434 = vld [vmem:[%s2269 + $0x1ef] sm:$0xff]
        %5467 = vrot.lane.b32.xlu0 %v5403, 64
        %v5468 = vpop.permute.xlu0 %5467
        %5469 = vrot.lane.b32.xlu0 %v5404, 64
        %v5470 = vpop.permute.xlu0 %5469
        %5471 = vrot.lane.b32.xlu0 %v5405, 64
        %v5472 = vpop.permute.xlu0 %5471
        %5473 = vrot.lane.b32.xlu0 %v5406, 64
        %v5474 = vpop.permute.xlu0 %5473
        %5475 = vrot.lane.b32.xlu0 %v5407, 64
        %v5476 = vpop.permute.xlu0 %5475
        %5477 = vrot.lane.b32.xlu0 %v5408, 64
        %v5478 = vpop.permute.xlu0 %5477
        %5479 = vrot.lane.b32.xlu0 %v5409, 64
        %v5480 = vpop.permute.xlu0 %5479
        %5481 = vrot.lane.b32.xlu0 %v5410, 64
        %v5482 = vpop.permute.xlu0 %5481
        %5483 = vrot.lane.b32.xlu0 %v5411, 64
        %v5484 = vpop.permute.xlu0 %5483
        %5485 = vrot.lane.b32.xlu0 %v5412, 64
        %v5486 = vpop.permute.xlu0 %5485
        %5487 = vrot.lane.b32.xlu0 %v5413, 64
        %v5488 = vpop.permute.xlu0 %5487
        %5489 = vrot.lane.b32.xlu0 %v5414, 64
        %v5490 = vpop.permute.xlu0 %5489
        %5491 = vrot.lane.b32.xlu0 %v5415, 64
        %v5492 = vpop.permute.xlu0 %5491
        %5493 = vrot.lane.b32.xlu0 %v5416, 64
        %v5494 = vpop.permute.xlu0 %5493
        %5495 = vrot.lane.b32.xlu0 %v5417, 64
        %v5496 = vpop.permute.xlu0 %5495
        %5497 = vrot.lane.b32.xlu0 %v5418, 64
        %v5498 = vpop.permute.xlu0 %5497
        %5499 = vrot.lane.b32.xlu0 %v5419, 64
        %v5500 = vpop.permute.xlu0 %5499
        %5501 = vrot.lane.b32.xlu0 %v5420, 64
        %v5502 = vpop.permute.xlu0 %5501
        %5503 = vrot.lane.b32.xlu0 %v5421, 64
        %v5504 = vpop.permute.xlu0 %5503
        %5505 = vrot.lane.b32.xlu0 %v5422, 64
        %v5506 = vpop.permute.xlu0 %5505
        %5507 = vrot.lane.b32.xlu0 %v5423, 64
        %v5508 = vpop.permute.xlu0 %5507
        %5509 = vrot.lane.b32.xlu0 %v5424, 64
        %v5510 = vpop.permute.xlu0 %5509
        %5511 = vrot.lane.b32.xlu0 %v5425, 64
        %v5512 = vpop.permute.xlu0 %5511
        %5513 = vrot.lane.b32.xlu0 %v5426, 64
        %v5514 = vpop.permute.xlu0 %5513
        %5515 = vrot.lane.b32.xlu0 %v5427, 64
        %v5516 = vpop.permute.xlu0 %5515
        %5517 = vrot.lane.b32.xlu0 %v5428, 64
        %v5518 = vpop.permute.xlu0 %5517
        %5519 = vrot.lane.b32.xlu0 %v5429, 64
        %v5520 = vpop.permute.xlu0 %5519
        %5521 = vrot.lane.b32.xlu0 %v5430, 64
        %v5522 = vpop.permute.xlu0 %5521
        %5523 = vrot.lane.b32.xlu0 %v5431, 64
        %v5524 = vpop.permute.xlu0 %5523
        %5525 = vrot.lane.b32.xlu0 %v5432, 64
        %v5526 = vpop.permute.xlu0 %5525
        %5527 = vrot.lane.b32.xlu0 %v5433, 64
        %v5528 = vpop.permute.xlu0 %5527
        %5529 = vrot.lane.b32.xlu0 %v5434, 64
        %v5530 = vpop.permute.xlu0 %5529
        %5563 = vst.msk [vmem:[#allocation3 + $0x8] sm:$0xff] %vm1787, %v5468
        %5564 = vst.msk [vmem:[#allocation3 + $0x20] sm:$0xff] %vm1787, %v5470
        %5565 = vst.msk [vmem:[#allocation3 + $0x38] sm:$0xff] %vm1787, %v5472
        %5566 = vst.msk [vmem:[#allocation3 + $0x50] sm:$0xff] %vm1787, %v5474
        %5567 = vst.msk [vmem:[#allocation3 + $0x68] sm:$0xff] %vm1787, %v5476
        %5568 = vst.msk [vmem:[#allocation3 + $0x80] sm:$0xff] %vm1787, %v5478
        %5569 = vst.msk [vmem:[#allocation3 + $0x98] sm:$0xff] %vm1787, %v5480
        %5570 = vst.msk [vmem:[#allocation3 + $0xb0] sm:$0xff] %vm1787, %v5482
        %5571 = vst.msk [vmem:[#allocation3 + $0xc8] sm:$0xff] %vm1787, %v5484
        %5572 = vst.msk [vmem:[#allocation3 + $0xe0] sm:$0xff] %vm1787, %v5486
        %5573 = vst.msk [vmem:[#allocation3 + $0xf8] sm:$0xff] %vm1787, %v5488
        %5574 = vst.msk [vmem:[#allocation3 + $0x110] sm:$0xff] %vm1787, %v5490
        %5575 = vst.msk [vmem:[#allocation3 + $0x128] sm:$0xff] %vm1787, %v5492
        %5576 = vst.msk [vmem:[#allocation3 + $0x140] sm:$0xff] %vm1787, %v5494
        %5577 = vst.msk [vmem:[#allocation3 + $0x158] sm:$0xff] %vm1787, %v5496
        %5578 = vst.msk [vmem:[#allocation3 + $0x170] sm:$0xff] %vm1787, %v5498
        %5579 = vst.msk [vmem:[#allocation3 + $0x188] sm:$0xff] %vm1787, %v5500
        %5580 = vst.msk [vmem:[#allocation3 + $0x1a0] sm:$0xff] %vm1787, %v5502
        %5581 = vst.msk [vmem:[#allocation3 + $0x1b8] sm:$0xff] %vm1787, %v5504
        %5582 = vst.msk [vmem:[#allocation3 + $0x1d0] sm:$0xff] %vm1787, %v5506
        %5583 = vst.msk [vmem:[#allocation3 + $0x1e8] sm:$0xff] %vm1787, %v5508
        %5584 = vst.msk [vmem:[#allocation3 + $0x200] sm:$0xff] %vm1787, %v5510
        %5585 = vst.msk [vmem:[#allocation3 + $0x218] sm:$0xff] %vm1787, %v5512
        %5586 = vst.msk [vmem:[#allocation3 + $0x230] sm:$0xff] %vm1787, %v5514
        %5587 = vst.msk [vmem:[#allocation3 + $0x248] sm:$0xff] %vm1787, %v5516
        %5588 = vst.msk [vmem:[#allocation3 + $0x260] sm:$0xff] %vm1787, %v5518
        %5589 = vst.msk [vmem:[#allocation3 + $0x278] sm:$0xff] %vm1787, %v5520
        %5590 = vst.msk [vmem:[#allocation3 + $0x290] sm:$0xff] %vm1787, %v5522
        %5591 = vst.msk [vmem:[#allocation3 + $0x2a8] sm:$0xff] %vm1787, %v5524
        %5592 = vst.msk [vmem:[#allocation3 + $0x2c0] sm:$0xff] %vm1787, %v5526
        %5593 = vst.msk [vmem:[#allocation3 + $0x2d8] sm:$0xff] %vm1787, %v5528
        %5594 = vst.msk [vmem:[#allocation3 + $0x2f0] sm:$0xff] %vm1787, %v5530
        %v5595 = vld [vmem:[%s2269 + $0x8] sm:$0xff]
        %v5596 = vld [vmem:[%s2269 + $0x10] sm:$0xff]
        %v5597 = vld [vmem:[%s2269 + $0x28] sm:$0xff]
        %v5598 = vld [vmem:[%s2269 + $0x30] sm:$0xff]
        %v5599 = vld [vmem:[%s2269 + $0x48] sm:$0xff]
        %v5600 = vld [vmem:[%s2269 + $0x50] sm:$0xff]
        %v5601 = vld [vmem:[%s2269 + $0x68] sm:$0xff]
        %v5602 = vld [vmem:[%s2269 + $0x70] sm:$0xff]
        %v5603 = vld [vmem:[%s2269 + $0x88] sm:$0xff]
        %v5604 = vld [vmem:[%s2269 + $0x90] sm:$0xff]
        %v5605 = vld [vmem:[%s2269 + $0xa8] sm:$0xff]
        %v5606 = vld [vmem:[%s2269 + $0xb0] sm:$0xff]
        %v5607 = vld [vmem:[%s2269 + $0xc8] sm:$0xff]
        %v5608 = vld [vmem:[%s2269 + $0xd0] sm:$0xff]
        %v5609 = vld [vmem:[%s2269 + $0xe8] sm:$0xff]
        %v5610 = vld [vmem:[%s2269 + $0xf0] sm:$0xff]
        %v5611 = vld [vmem:[%s2269 + $0x108] sm:$0xff]
        %v5612 = vld [vmem:[%s2269 + $0x110] sm:$0xff]
        %v5613 = vld [vmem:[%s2269 + $0x128] sm:$0xff]
        %v5614 = vld [vmem:[%s2269 + $0x130] sm:$0xff]
        %v5615 = vld [vmem:[%s2269 + $0x148] sm:$0xff]
        %v5616 = vld [vmem:[%s2269 + $0x150] sm:$0xff]
        %v5617 = vld [vmem:[%s2269 + $0x168] sm:$0xff]
        %v5618 = vld [vmem:[%s2269 + $0x170] sm:$0xff]
        %v5619 = vld [vmem:[%s2269 + $0x188] sm:$0xff]
        %v5620 = vld [vmem:[%s2269 + $0x190] sm:$0xff]
        %v5621 = vld [vmem:[%s2269 + $0x1a8] sm:$0xff]
        %v5622 = vld [vmem:[%s2269 + $0x1b0] sm:$0xff]
        %v5623 = vld [vmem:[%s2269 + $0x1c8] sm:$0xff]
        %v5624 = vld [vmem:[%s2269 + $0x1d0] sm:$0xff]
        %v5625 = vld [vmem:[%s2269 + $0x1e8] sm:$0xff]
        %v5626 = vld [vmem:[%s2269 + $0x1f0] sm:$0xff]
        %5659 = vrot.lane.b32.xlu0 %v5595, 96
        %v5660 = vpop.permute.xlu0 %5659
        %5661 = vrot.lane.b32.xlu0 %v5596, 96
        %v5662 = vpop.permute.xlu0 %5661
        %5663 = vrot.lane.b32.xlu0 %v5597, 96
        %v5664 = vpop.permute.xlu0 %5663
        %5665 = vrot.lane.b32.xlu0 %v5598, 96
        %v5666 = vpop.permute.xlu0 %5665
        %5667 = vrot.lane.b32.xlu0 %v5599, 96
        %v5668 = vpop.permute.xlu0 %5667
        %5669 = vrot.lane.b32.xlu0 %v5600, 96
        %v5670 = vpop.permute.xlu0 %5669
        %5671 = vrot.lane.b32.xlu0 %v5601, 96
        %v5672 = vpop.permute.xlu0 %5671
        %5673 = vrot.lane.b32.xlu0 %v5602, 96
        %v5674 = vpop.permute.xlu0 %5673
        %5675 = vrot.lane.b32.xlu0 %v5603, 96
        %v5676 = vpop.permute.xlu0 %5675
        %5677 = vrot.lane.b32.xlu0 %v5604, 96
        %v5678 = vpop.permute.xlu0 %5677
        %5679 = vrot.lane.b32.xlu0 %v5605, 96
        %v5680 = vpop.permute.xlu0 %5679
        %5681 = vrot.lane.b32.xlu0 %v5606, 96
        %v5682 = vpop.permute.xlu0 %5681
        %5683 = vrot.lane.b32.xlu0 %v5607, 96
        %v5684 = vpop.permute.xlu0 %5683
        %5685 = vrot.lane.b32.xlu0 %v5608, 96
        %v5686 = vpop.permute.xlu0 %5685
        %5687 = vrot.lane.b32.xlu0 %v5609, 96
        %v5688 = vpop.permute.xlu0 %5687
        %5689 = vrot.lane.b32.xlu0 %v5610, 96
        %v5690 = vpop.permute.xlu0 %5689
        %5691 = vrot.lane.b32.xlu0 %v5611, 96
        %v5692 = vpop.permute.xlu0 %5691
        %5693 = vrot.lane.b32.xlu0 %v5612, 96
        %v5694 = vpop.permute.xlu0 %5693
        %5695 = vrot.lane.b32.xlu0 %v5613, 96
        %v5696 = vpop.permute.xlu0 %5695
        %5697 = vrot.lane.b32.xlu0 %v5614, 96
        %v5698 = vpop.permute.xlu0 %5697
        %5699 = vrot.lane.b32.xlu0 %v5615, 96
        %v5700 = vpop.permute.xlu0 %5699
        %5701 = vrot.lane.b32.xlu0 %v5616, 96
        %v5702 = vpop.permute.xlu0 %5701
        %5703 = vrot.lane.b32.xlu0 %v5617, 96
        %v5704 = vpop.permute.xlu0 %5703
        %5705 = vrot.lane.b32.xlu0 %v5618, 96
        %v5706 = vpop.permute.xlu0 %5705
        %5707 = vrot.lane.b32.xlu0 %v5619, 96
        %v5708 = vpop.permute.xlu0 %5707
        %5709 = vrot.lane.b32.xlu0 %v5620, 96
        %v5710 = vpop.permute.xlu0 %5709
        %5711 = vrot.lane.b32.xlu0 %v5621, 96
        %v5712 = vpop.permute.xlu0 %5711
        %5713 = vrot.lane.b32.xlu0 %v5622, 96
        %v5714 = vpop.permute.xlu0 %5713
        %5715 = vrot.lane.b32.xlu0 %v5623, 96
        %v5716 = vpop.permute.xlu0 %5715
        %5717 = vrot.lane.b32.xlu0 %v5624, 96
        %v5718 = vpop.permute.xlu0 %5717
        %5719 = vrot.lane.b32.xlu0 %v5625, 96
        %v5720 = vpop.permute.xlu0 %5719
        %5721 = vrot.lane.b32.xlu0 %v5626, 96
        %v5722 = vpop.permute.xlu0 %5721
        %5755 = vst.msk [vmem:[#allocation3 + $0x8] sm:$0xff] %vm1980, %v5660
        %5756 = vst.msk [vmem:[#allocation3 + $0x20] sm:$0xff] %vm1980, %v5662
        %5757 = vst.msk [vmem:[#allocation3 + $0x38] sm:$0xff] %vm1980, %v5664
        %5758 = vst.msk [vmem:[#allocation3 + $0x50] sm:$0xff] %vm1980, %v5666
        %5759 = vst.msk [vmem:[#allocation3 + $0x68] sm:$0xff] %vm1980, %v5668
        %5760 = vst.msk [vmem:[#allocation3 + $0x80] sm:$0xff] %vm1980, %v5670
        %5761 = vst.msk [vmem:[#allocation3 + $0x98] sm:$0xff] %vm1980, %v5672
        %5762 = vst.msk [vmem:[#allocation3 + $0xb0] sm:$0xff] %vm1980, %v5674
        %5763 = vst.msk [vmem:[#allocation3 + $0xc8] sm:$0xff] %vm1980, %v5676
        %5764 = vst.msk [vmem:[#allocation3 + $0xe0] sm:$0xff] %vm1980, %v5678
        %5765 = vst.msk [vmem:[#allocation3 + $0xf8] sm:$0xff] %vm1980, %v5680
        %5766 = vst.msk [vmem:[#allocation3 + $0x110] sm:$0xff] %vm1980, %v5682
        %5767 = vst.msk [vmem:[#allocation3 + $0x128] sm:$0xff] %vm1980, %v5684
        %5768 = vst.msk [vmem:[#allocation3 + $0x140] sm:$0xff] %vm1980, %v5686
        %5769 = vst.msk [vmem:[#allocation3 + $0x158] sm:$0xff] %vm1980, %v5688
        %5770 = vst.msk [vmem:[#allocation3 + $0x170] sm:$0xff] %vm1980, %v5690
        %5771 = vst.msk [vmem:[#allocation3 + $0x188] sm:$0xff] %vm1980, %v5692
        %5772 = vst.msk [vmem:[#allocation3 + $0x1a0] sm:$0xff] %vm1980, %v5694
        %5773 = vst.msk [vmem:[#allocation3 + $0x1b8] sm:$0xff] %vm1980, %v5696
        %5774 = vst.msk [vmem:[#allocation3 + $0x1d0] sm:$0xff] %vm1980, %v5698
        %5775 = vst.msk [vmem:[#allocation3 + $0x1e8] sm:$0xff] %vm1980, %v5700
        %5776 = vst.msk [vmem:[#allocation3 + $0x200] sm:$0xff] %vm1980, %v5702
        %5777 = vst.msk [vmem:[#allocation3 + $0x218] sm:$0xff] %vm1980, %v5704
        %5778 = vst.msk [vmem:[#allocation3 + $0x230] sm:$0xff] %vm1980, %v5706
        %5779 = vst.msk [vmem:[#allocation3 + $0x248] sm:$0xff] %vm1980, %v5708
        %5780 = vst.msk [vmem:[#allocation3 + $0x260] sm:$0xff] %vm1980, %v5710
        %5781 = vst.msk [vmem:[#allocation3 + $0x278] sm:$0xff] %vm1980, %v5712
        %5782 = vst.msk [vmem:[#allocation3 + $0x290] sm:$0xff] %vm1980, %v5714
        %5783 = vst.msk [vmem:[#allocation3 + $0x2a8] sm:$0xff] %vm1980, %v5716
        %5784 = vst.msk [vmem:[#allocation3 + $0x2c0] sm:$0xff] %vm1980, %v5718
        %5785 = vst.msk [vmem:[#allocation3 + $0x2d8] sm:$0xff] %vm1980, %v5720
        %5786 = vst.msk [vmem:[#allocation3 + $0x2f0] sm:$0xff] %vm1980, %v5722
        %v5787 = vld [vmem:[%s2269 + $0x9] sm:$0xff]
        %v5788 = vld [vmem:[%s2269 + $0x11] sm:$0xff]
        %v5789 = vld [vmem:[%s2269 + $0x29] sm:$0xff]
        %v5790 = vld [vmem:[%s2269 + $0x31] sm:$0xff]
        %v5791 = vld [vmem:[%s2269 + $0x49] sm:$0xff]
        %v5792 = vld [vmem:[%s2269 + $0x51] sm:$0xff]
        %v5793 = vld [vmem:[%s2269 + $0x69] sm:$0xff]
        %v5794 = vld [vmem:[%s2269 + $0x71] sm:$0xff]
        %v5795 = vld [vmem:[%s2269 + $0x89] sm:$0xff]
        %v5796 = vld [vmem:[%s2269 + $0x91] sm:$0xff]
        %v5797 = vld [vmem:[%s2269 + $0xa9] sm:$0xff]
        %v5798 = vld [vmem:[%s2269 + $0xb1] sm:$0xff]
        %v5799 = vld [vmem:[%s2269 + $0xc9] sm:$0xff]
        %v5800 = vld [vmem:[%s2269 + $0xd1] sm:$0xff]
        %v5801 = vld [vmem:[%s2269 + $0xe9] sm:$0xff]
        %v5802 = vld [vmem:[%s2269 + $0xf1] sm:$0xff]
        %v5803 = vld [vmem:[%s2269 + $0x109] sm:$0xff]
        %v5804 = vld [vmem:[%s2269 + $0x111] sm:$0xff]
        %v5805 = vld [vmem:[%s2269 + $0x129] sm:$0xff]
        %v5806 = vld [vmem:[%s2269 + $0x131] sm:$0xff]
        %v5807 = vld [vmem:[%s2269 + $0x149] sm:$0xff]
        %v5808 = vld [vmem:[%s2269 + $0x151] sm:$0xff]
        %v5809 = vld [vmem:[%s2269 + $0x169] sm:$0xff]
        %v5810 = vld [vmem:[%s2269 + $0x171] sm:$0xff]
        %v5811 = vld [vmem:[%s2269 + $0x189] sm:$0xff]
        %v5812 = vld [vmem:[%s2269 + $0x191] sm:$0xff]
        %v5813 = vld [vmem:[%s2269 + $0x1a9] sm:$0xff]
        %v5814 = vld [vmem:[%s2269 + $0x1b1] sm:$0xff]
        %v5815 = vld [vmem:[%s2269 + $0x1c9] sm:$0xff]
        %v5816 = vld [vmem:[%s2269 + $0x1d1] sm:$0xff]
        %v5817 = vld [vmem:[%s2269 + $0x1e9] sm:$0xff]
        %v5818 = vld [vmem:[%s2269 + $0x1f1] sm:$0xff]
        %5819 = vst.msk [vmem:[#allocation3 + $0x10] sm:$0xff] %vm895, %v5787
        %5820 = vst.msk [vmem:[#allocation3 + $0x28] sm:$0xff] %vm895, %v5788
        %5821 = vst.msk [vmem:[#allocation3 + $0x40] sm:$0xff] %vm895, %v5789
        %5822 = vst.msk [vmem:[#allocation3 + $0x58] sm:$0xff] %vm895, %v5790
        %5823 = vst.msk [vmem:[#allocation3 + $0x70] sm:$0xff] %vm895, %v5791
        %5824 = vst.msk [vmem:[#allocation3 + $0x88] sm:$0xff] %vm895, %v5792
        %5825 = vst.msk [vmem:[#allocation3 + $0xa0] sm:$0xff] %vm895, %v5793
        %5826 = vst.msk [vmem:[#allocation3 + $0xb8] sm:$0xff] %vm895, %v5794
        %5827 = vst.msk [vmem:[#allocation3 + $0xd0] sm:$0xff] %vm895, %v5795
        %5828 = vst.msk [vmem:[#allocation3 + $0xe8] sm:$0xff] %vm895, %v5796
        %5829 = vst.msk [vmem:[#allocation3 + $0x100] sm:$0xff] %vm895, %v5797
        %5830 = vst.msk [vmem:[#allocation3 + $0x118] sm:$0xff] %vm895, %v5798
        %5831 = vst.msk [vmem:[#allocation3 + $0x130] sm:$0xff] %vm895, %v5799
        %5832 = vst.msk [vmem:[#allocation3 + $0x148] sm:$0xff] %vm895, %v5800
        %5833 = vst.msk [vmem:[#allocation3 + $0x160] sm:$0xff] %vm895, %v5801
        %5834 = vst.msk [vmem:[#allocation3 + $0x178] sm:$0xff] %vm895, %v5802
        %5835 = vst.msk [vmem:[#allocation3 + $0x190] sm:$0xff] %vm895, %v5803
        %5836 = vst.msk [vmem:[#allocation3 + $0x1a8] sm:$0xff] %vm895, %v5804
        %5837 = vst.msk [vmem:[#allocation3 + $0x1c0] sm:$0xff] %vm895, %v5805
        %5838 = vst.msk [vmem:[#allocation3 + $0x1d8] sm:$0xff] %vm895, %v5806
        %5839 = vst.msk [vmem:[#allocation3 + $0x1f0] sm:$0xff] %vm895, %v5807
        %5840 = vst.msk [vmem:[#allocation3 + $0x208] sm:$0xff] %vm895, %v5808
        %5841 = vst.msk [vmem:[#allocation3 + $0x220] sm:$0xff] %vm895, %v5809
        %5842 = vst.msk [vmem:[#allocation3 + $0x238] sm:$0xff] %vm895, %v5810
        %5843 = vst.msk [vmem:[#allocation3 + $0x250] sm:$0xff] %vm895, %v5811
        %5844 = vst.msk [vmem:[#allocation3 + $0x268] sm:$0xff] %vm895, %v5812
        %5845 = vst.msk [vmem:[#allocation3 + $0x280] sm:$0xff] %vm895, %v5813
        %5846 = vst.msk [vmem:[#allocation3 + $0x298] sm:$0xff] %vm895, %v5814
        %5847 = vst.msk [vmem:[#allocation3 + $0x2b0] sm:$0xff] %vm895, %v5815
        %5848 = vst.msk [vmem:[#allocation3 + $0x2c8] sm:$0xff] %vm895, %v5816
        %5849 = vst.msk [vmem:[#allocation3 + $0x2e0] sm:$0xff] %vm895, %v5817
        %5850 = vst.msk [vmem:[#allocation3 + $0x2f8] sm:$0xff] %vm895, %v5818
        %v5851 = vld [vmem:[#allocation3] sm:$0xff]
        %v5852 = vld [vmem:[#allocation3 + $0x8] sm:$0xff]
        %v5853 = vld [vmem:[#allocation3 + $0x10] sm:$0xff]
        %v5854 = vld [vmem:[#allocation3 + $0x18] sm:$0xff]
        %v5855 = vld [vmem:[#allocation3 + $0x20] sm:$0xff]
        %v5856 = vld [vmem:[#allocation3 + $0x28] sm:$0xff]
        %v5857 = vld [vmem:[#allocation3 + $0x30] sm:$0xff]
        %v5858 = vld [vmem:[#allocation3 + $0x38] sm:$0xff]
        %v5859 = vld [vmem:[#allocation3 + $0x40] sm:$0xff]
        %v5860 = vld [vmem:[#allocation3 + $0x48] sm:$0xff]
        %v5861 = vld [vmem:[#allocation3 + $0x50] sm:$0xff]
        %v5862 = vld [vmem:[#allocation3 + $0x58] sm:$0xff]
        %v5863 = vld [vmem:[#allocation3 + $0x60] sm:$0xff]
        %v5864 = vld [vmem:[#allocation3 + $0x68] sm:$0xff]
        %v5865 = vld [vmem:[#allocation3 + $0x70] sm:$0xff]
        %v5866 = vld [vmem:[#allocation3 + $0x78] sm:$0xff]
        %v5867 = vld [vmem:[#allocation3 + $0x80] sm:$0xff]
        %v5868 = vld [vmem:[#allocation3 + $0x88] sm:$0xff]
        %v5869 = vld [vmem:[#allocation3 + $0x90] sm:$0xff]
        %v5870 = vld [vmem:[#allocation3 + $0x98] sm:$0xff]
        %v5871 = vld [vmem:[#allocation3 + $0xa0] sm:$0xff]
        %v5872 = vld [vmem:[#allocation3 + $0xa8] sm:$0xff]
        %v5873 = vld [vmem:[#allocation3 + $0xb0] sm:$0xff]
        %v5874 = vld [vmem:[#allocation3 + $0xb8] sm:$0xff]
        %v5875 = vld [vmem:[#allocation3 + $0xc0] sm:$0xff]
        %v5876 = vld [vmem:[#allocation3 + $0xc8] sm:$0xff]
        %v5877 = vld [vmem:[#allocation3 + $0xd0] sm:$0xff]
        %v5878 = vld [vmem:[#allocation3 + $0xd8] sm:$0xff]
        %v5879 = vld [vmem:[#allocation3 + $0xe0] sm:$0xff]
        %v5880 = vld [vmem:[#allocation3 + $0xe8] sm:$0xff]
        %v5881 = vld [vmem:[#allocation3 + $0xf0] sm:$0xff]
        %v5882 = vld [vmem:[#allocation3 + $0xf8] sm:$0xff]
        %v5883 = vld [vmem:[#allocation3 + $0x100] sm:$0xff]
        %v5884 = vld [vmem:[#allocation3 + $0x108] sm:$0xff]
        %v5885 = vld [vmem:[#allocation3 + $0x110] sm:$0xff]
        %v5886 = vld [vmem:[#allocation3 + $0x118] sm:$0xff]
        %v5887 = vld [vmem:[#allocation3 + $0x120] sm:$0xff]
        %v5888 = vld [vmem:[#allocation3 + $0x128] sm:$0xff]
        %v5889 = vld [vmem:[#allocation3 + $0x130] sm:$0xff]
        %v5890 = vld [vmem:[#allocation3 + $0x138] sm:$0xff]
        %v5891 = vld [vmem:[#allocation3 + $0x140] sm:$0xff]
        %v5892 = vld [vmem:[#allocation3 + $0x148] sm:$0xff]
        %v5893 = vld [vmem:[#allocation3 + $0x150] sm:$0xff]
        %v5894 = vld [vmem:[#allocation3 + $0x158] sm:$0xff]
        %v5895 = vld [vmem:[#allocation3 + $0x160] sm:$0xff]
        %v5896 = vld [vmem:[#allocation3 + $0x168] sm:$0xff]
        %v5897 = vld [vmem:[#allocation3 + $0x170] sm:$0xff]
        %v5898 = vld [vmem:[#allocation3 + $0x178] sm:$0xff]
        %v5899 = vld [vmem:[#allocation3 + $0x180] sm:$0xff]
        %v5900 = vld [vmem:[#allocation3 + $0x188] sm:$0xff]
        %v5901 = vld [vmem:[#allocation3 + $0x190] sm:$0xff]
        %v5902 = vld [vmem:[#allocation3 + $0x198] sm:$0xff]
        %v5903 = vld [vmem:[#allocation3 + $0x1a0] sm:$0xff]
        %v5904 = vld [vmem:[#allocation3 + $0x1a8] sm:$0xff]
        %v5905 = vld [vmem:[#allocation3 + $0x1b0] sm:$0xff]
        %v5906 = vld [vmem:[#allocation3 + $0x1b8] sm:$0xff]
        %v5907 = vld [vmem:[#allocation3 + $0x1c0] sm:$0xff]
        %v5908 = vld [vmem:[#allocation3 + $0x1c8] sm:$0xff]
        %v5909 = vld [vmem:[#allocation3 + $0x1d0] sm:$0xff]
        %v5910 = vld [vmem:[#allocation3 + $0x1d8] sm:$0xff]
        %v5911 = vld [vmem:[#allocation3 + $0x1e0] sm:$0xff]
        %v5912 = vld [vmem:[#allocation3 + $0x1e8] sm:$0xff]
        %v5913 = vld [vmem:[#allocation3 + $0x1f0] sm:$0xff]
        %v5914 = vld [vmem:[#allocation3 + $0x1f8] sm:$0xff]
        %v5915 = vld [vmem:[#allocation3 + $0x200] sm:$0xff]
        %v5916 = vld [vmem:[#allocation3 + $0x208] sm:$0xff]
        %v5917 = vld [vmem:[#allocation3 + $0x210] sm:$0xff]
        %v5918 = vld [vmem:[#allocation3 + $0x218] sm:$0xff]
        %v5919 = vld [vmem:[#allocation3 + $0x220] sm:$0xff]
        %v5920 = vld [vmem:[#allocation3 + $0x228] sm:$0xff]
        %v5921 = vld [vmem:[#allocation3 + $0x230] sm:$0xff]
        %v5922 = vld [vmem:[#allocation3 + $0x238] sm:$0xff]
        %v5923 = vld [vmem:[#allocation3 + $0x240] sm:$0xff]
        %v5924 = vld [vmem:[#allocation3 + $0x248] sm:$0xff]
        %v5925 = vld [vmem:[#allocation3 + $0x250] sm:$0xff]
        %v5926 = vld [vmem:[#allocation3 + $0x258] sm:$0xff]
        %v5927 = vld [vmem:[#allocation3 + $0x260] sm:$0xff]
        %v5928 = vld [vmem:[#allocation3 + $0x268] sm:$0xff]
        %v5929 = vld [vmem:[#allocation3 + $0x270] sm:$0xff]
        %v5930 = vld [vmem:[#allocation3 + $0x278] sm:$0xff]
        %v5931 = vld [vmem:[#allocation3 + $0x280] sm:$0xff]
        %v5932 = vld [vmem:[#allocation3 + $0x288] sm:$0xff]
        %v5933 = vld [vmem:[#allocation3 + $0x290] sm:$0xff]
        %v5934 = vld [vmem:[#allocation3 + $0x298] sm:$0xff]
        %v5935 = vld [vmem:[#allocation3 + $0x2a0] sm:$0xff]
        %v5936 = vld [vmem:[#allocation3 + $0x2a8] sm:$0xff]
        %v5937 = vld [vmem:[#allocation3 + $0x2b0] sm:$0xff]
        %v5938 = vld [vmem:[#allocation3 + $0x2b8] sm:$0xff]
        %v5939 = vld [vmem:[#allocation3 + $0x2c0] sm:$0xff]
        %v5940 = vld [vmem:[#allocation3 + $0x2c8] sm:$0xff]
        %v5941 = vld [vmem:[#allocation3 + $0x2d0] sm:$0xff]
        %v5942 = vld [vmem:[#allocation3 + $0x2d8] sm:$0xff]
        %v5943 = vld [vmem:[#allocation3 + $0x2e0] sm:$0xff]
        %v5944 = vld [vmem:[#allocation3 + $0x2e8] sm:$0xff]
        %v5945 = vld [vmem:[#allocation3 + $0x2f0] sm:$0xff]
        %v5946 = vld [vmem:[#allocation3 + $0x2f8] sm:$0xff]
        %v5947 = vpack.c.bf16 %v5854, %v5851
        %v5948 = vpack.c.bf16 %v5855, %v5852
        %v5949 = vpack.c.bf16 %v5856, %v5853
        %v5950 = vpack.c.bf16 %v5860, %v5857
        %v5951 = vpack.c.bf16 %v5861, %v5858
        %v5952 = vpack.c.bf16 %v5862, %v5859
        %v5953 = vpack.c.bf16 %v5866, %v5863
        %v5954 = vpack.c.bf16 %v5867, %v5864
        %v5955 = vpack.c.bf16 %v5868, %v5865
        %v5956 = vpack.c.bf16 %v5872, %v5869
        %v5957 = vpack.c.bf16 %v5873, %v5870
        %v5958 = vpack.c.bf16 %v5874, %v5871
        %v5959 = vpack.c.bf16 %v5878, %v5875
        %v5960 = vpack.c.bf16 %v5879, %v5876
        %v5961 = vpack.c.bf16 %v5880, %v5877
        %v5962 = vpack.c.bf16 %v5884, %v5881
        %v5963 = vpack.c.bf16 %v5885, %v5882
        %v5964 = vpack.c.bf16 %v5886, %v5883
        %v5965 = vpack.c.bf16 %v5890, %v5887
        %v5966 = vpack.c.bf16 %v5891, %v5888
        %v5967 = vpack.c.bf16 %v5892, %v5889
        %v5968 = vpack.c.bf16 %v5896, %v5893
        %v5969 = vpack.c.bf16 %v5897, %v5894
        %v5970 = vpack.c.bf16 %v5898, %v5895
        %v5971 = vpack.c.bf16 %v5902, %v5899
        %v5972 = vpack.c.bf16 %v5903, %v5900
        %v5973 = vpack.c.bf16 %v5904, %v5901
        %v5974 = vpack.c.bf16 %v5908, %v5905
        %v5975 = vpack.c.bf16 %v5909, %v5906
        %v5976 = vpack.c.bf16 %v5910, %v5907
        %v5977 = vpack.c.bf16 %v5914, %v5911
        %v5978 = vpack.c.bf16 %v5915, %v5912
        %v5979 = vpack.c.bf16 %v5916, %v5913
        %v5980 = vpack.c.bf16 %v5920, %v5917
        %v5981 = vpack.c.bf16 %v5921, %v5918
        %v5982 = vpack.c.bf16 %v5922, %v5919
        %v5983 = vpack.c.bf16 %v5926, %v5923
        %v5984 = vpack.c.bf16 %v5927, %v5924
        %v5985 = vpack.c.bf16 %v5928, %v5925
        %v5986 = vpack.c.bf16 %v5932, %v5929
        %v5987 = vpack.c.bf16 %v5933, %v5930
        %v5988 = vpack.c.bf16 %v5934, %v5931
        %v5989 = vpack.c.bf16 %v5938, %v5935
        %v5990 = vpack.c.bf16 %v5939, %v5936
        %v5991 = vpack.c.bf16 %v5940, %v5937
        %v5992 = vpack.c.bf16 %v5944, %v5941
        %v5993 = vpack.c.bf16 %v5945, %v5942
        %v5994 = vpack.c.bf16 %v5946, %v5943
        %v5995 = vld [vmem:[%s872] sm:$0xf]
        %v5996 = vld [vmem:[%s872 + $0x4] sm:$0xf]
        %v5997 = vld [vmem:[%s872 + $0x8] sm:$0xf]
        %v5998 = vld [vmem:[%s872 + $0xc] sm:$0xf]
        %v5999 = vld [vmem:[%s872 + $0x10] sm:$0xf]
        %v6000 = vld [vmem:[%s872 + $0x14] sm:$0xf]
        %v6001 = vld [vmem:[%s872 + $0x18] sm:$0xf]
        %v6002 = vld [vmem:[%s872 + $0x1c] sm:$0xf]
        %v6003 = vld [vmem:[%s872 + $0x20] sm:$0xf]
        %v6004 = vld [vmem:[%s872 + $0x24] sm:$0xf]
        %v6005 = vld [vmem:[%s872 + $0x28] sm:$0xf]
        %v6006 = vld [vmem:[%s872 + $0x2c] sm:$0xf]
        %v6007 = vld [vmem:[%s872 + $0x30] sm:$0xf]
        %v6008 = vld [vmem:[%s872 + $0x34] sm:$0xf]
        %v6009 = vld [vmem:[%s872 + $0x38] sm:$0xf]
        %v6010 = vld [vmem:[%s872 + $0x3c] sm:$0xf]
        %v6011 = vld [vmem:[%s872 + $0x40] sm:$0xf]
        %v6012 = vld [vmem:[%s872 + $0x44] sm:$0xf]
        %v6013 = vld [vmem:[%s872 + $0x48] sm:$0xf]
        %v6014 = vld [vmem:[%s872 + $0x4c] sm:$0xf]
        %v6015 = vld [vmem:[%s872 + $0x50] sm:$0xf]
        %v6016 = vld [vmem:[%s872 + $0x54] sm:$0xf]
        %v6017 = vld [vmem:[%s872 + $0x58] sm:$0xf]
        %v6018 = vld [vmem:[%s872 + $0x5c] sm:$0xf]
        %v6019 = vld [vmem:[%s872 + $0x60] sm:$0xf]
        %v6020 = vld [vmem:[%s872 + $0x64] sm:$0xf]
        %v6021 = vld [vmem:[%s872 + $0x68] sm:$0xf]
        %v6022 = vld [vmem:[%s872 + $0x6c] sm:$0xf]
        %v6023 = vld [vmem:[%s872 + $0x70] sm:$0xf]
        %v6024 = vld [vmem:[%s872 + $0x74] sm:$0xf]
        %v6025 = vld [vmem:[%s872 + $0x78] sm:$0xf]
        %v6026 = vld [vmem:[%s872 + $0x7c] sm:$0xf]
        %v6027 = vld [vmem:[%s872 + $0x80] sm:$0xf]
        %v6028 = vld [vmem:[%s872 + $0x84] sm:$0xf]
        %v6029 = vld [vmem:[%s872 + $0x88] sm:$0xf]
        %v6030 = vld [vmem:[%s872 + $0x8c] sm:$0xf]
        %v6067 = vunpack.c.l.b16 %v5995
        %v6068 = vunpack.c.l.b16 %v5996
        %v6069 = vunpack.c.l.b16 %v5997
        %v6070 = vunpack.c.l.b16 %v5998
        %v6071 = vunpack.c.l.b16 %v5999
        %v6072 = vunpack.c.l.b16 %v6000
        %v6073 = vunpack.c.l.b16 %v6001
        %v6074 = vunpack.c.l.b16 %v6002
        %v6075 = vunpack.c.l.b16 %v6003
        %v6076 = vunpack.c.l.b16 %v6004
        %v6077 = vunpack.c.l.b16 %v6005
        %v6078 = vunpack.c.l.b16 %v6006
        %v6079 = vunpack.c.l.b16 %v6007
        %v6080 = vunpack.c.l.b16 %v6008
        %v6081 = vunpack.c.l.b16 %v6009
        %v6082 = vunpack.c.l.b16 %v6010
        %v6083 = vunpack.c.l.b16 %v6011
        %v6084 = vunpack.c.l.b16 %v6012
        %v6085 = vunpack.c.l.b16 %v6013
        %v6086 = vunpack.c.l.b16 %v6014
        %v6087 = vunpack.c.l.b16 %v6015
        %v6088 = vunpack.c.l.b16 %v6016
        %v6089 = vunpack.c.l.b16 %v6017
        %v6090 = vunpack.c.l.b16 %v6018
        %v6091 = vunpack.c.l.b16 %v6019
        %v6092 = vunpack.c.l.b16 %v6020
        %v6093 = vunpack.c.l.b16 %v6021
        %v6094 = vunpack.c.l.b16 %v6022
        %v6095 = vunpack.c.l.b16 %v6023
        %v6096 = vunpack.c.l.b16 %v6024
        %v6097 = vunpack.c.l.b16 %v6025
        %v6098 = vunpack.c.l.b16 %v6026
        %v6099 = vunpack.c.l.b16 %v6027
        %v6100 = vunpack.c.l.b16 %v6028
        %v6101 = vunpack.c.l.b16 %v6029
        %v6102 = vunpack.c.l.b16 %v6030
        %v6103 = vpack.c.b16 %v6068, %v6067
        %v6104 = vpack.c.b16 %v6070, %v6069
        %v6105 = vpack.c.b16 %v6072, %v6071
        %v6106 = vpack.c.b16 %v6074, %v6073
        %v6107 = vpack.c.b16 %v6076, %v6075
        %v6108 = vpack.c.b16 %v6078, %v6077
        %v6109 = vpack.c.b16 %v6080, %v6079
        %v6110 = vpack.c.b16 %v6082, %v6081
        %v6111 = vpack.c.b16 %v6084, %v6083
        %v6112 = vpack.c.b16 %v6086, %v6085
        %v6113 = vpack.c.b16 %v6088, %v6087
        %v6114 = vpack.c.b16 %v6090, %v6089
        %v6115 = vpack.c.b16 %v6092, %v6091
        %v6116 = vpack.c.b16 %v6094, %v6093
        %v6117 = vpack.c.b16 %v6096, %v6095
        %v6118 = vpack.c.b16 %v6098, %v6097
        %v6119 = vpack.c.b16 %v6100, %v6099
        %v6120 = vpack.c.b16 %v6102, %v6101
        %v6140 = vsel %vm895, %v5949, 0
        %v6143 = vsel %vm895, %v5952, 0
        %v6146 = vsel %vm895, %v5955, 0
        %v6149 = vsel %vm895, %v5958, 0
        %v6152 = vsel %vm895, %v5961, 0
        %v6155 = vsel %vm895, %v5964, 0
        %v6158 = vsel %vm895, %v5967, 0
        %v6161 = vsel %vm895, %v5970, 0
        %v6164 = vsel %vm895, %v5973, 0
        %v6167 = vsel %vm895, %v5976, 0
        %v6170 = vsel %vm895, %v5979, 0
        %v6173 = vsel %vm895, %v5982, 0
        %v6176 = vsel %vm895, %v5985, 0
        %v6179 = vsel %vm895, %v5988, 0
        %v6182 = vsel %vm895, %v5991, 0
        %v6185 = vsel %vm895, %v5994, 0
        %6187 = vmatprep.subr.bf16.mxu0 0
        %6188 = vmatpush1.bf16.msra.mxu0 %v6103
        %6189 = vmatprep.subr.bf16.mxu0 0
        %6190 = vmatpush1.bf16.msra.mxu0 %v6104
        %6191 = vmatprep.subr.bf16.mxu0 0
        %6192 = vmatpush1.bf16.msra.mxu0 %v6105
        %6193 = vmatprep.subr.bf16.mxu0 0
        %6194 = vmatpush1.bf16.msra.mxu0 %v6106
        %6195 = vmatprep.subr.bf16.mxu0 0
        %6196 = vmatpush1.bf16.msra.mxu0 %v6107
        %6197 = vmatprep.subr.bf16.mxu0 0
        %6198 = vmatpush1.bf16.msra.mxu0 %v6108
        %6199 = vmatprep.subr.bf16.mxu0 0
        %6200 = vmatpush1.bf16.msra.mxu0 %v6109
        %6201 = vmatprep.subr.bf16.mxu0 0
        %6202 = vmatpush1.bf16.msra.mxu0 %v6110
        %6203 = vmatprep.subr.bf16.mxu0 0
        %6204 = vmatpush1.bf16.msra.mxu0 %v6111
        %6205 = vmatprep.subr.bf16.mxu0 0
        %6206 = vmatpush1.bf16.msra.mxu0 %v6112
        %6207 = vmatprep.subr.bf16.mxu0 0
        %6208 = vmatpush1.bf16.msra.mxu0 %v6113
        %6209 = vmatprep.subr.bf16.mxu0 0
        %6210 = vmatpush1.bf16.msra.mxu0 %v6114
        %6211 = vmatprep.subr.bf16.mxu0 0
        %6212 = vmatpush1.bf16.msra.mxu0 %v6115
        %6213 = vmatprep.subr.bf16.mxu0 0
        %6214 = vmatpush1.bf16.msra.mxu0 %v6116
        %6215 = vmatprep.subr.bf16.mxu0 0
        %6216 = vmatpush1.bf16.msra.mxu0 %v6117
        %6217 = vmatprep.subr.bf16.mxu0 0
        %6218 = vmatpush1.bf16.msra.mxu0 %v6118
        %6219 = vmatprep.mubr.bf16.mxu0 %v5948
        %6220 = vmatmul.mubr.bf16.gmra.mrb[0].mxu0 %v5947
        %v6221 = vpop.f32.mrb[0].mxu0
        %v6222 = vadd.f32 0.0, %v6221
        %v6223 = vpop.f32.mrb[0].mxu0
        %v6224 = vpop.f32.mrb[0].mxu0
        %v6225 = vadd.f32 0.0, %v6224
        %v6226 = vpop.f32.mrb[0].mxu0
        %6227 = vmatprep.mubr.bf16.mxu0 %v5951
        %6228 = vmatmul.mubr.bf16.gmra.mrb[0].mxu0 %v5950
        %v6229 = vpop.f32.mrb[0].mxu0
        %v6230 = vadd.f32 0.0, %v6229
        %v6231 = vpop.f32.mrb[0].mxu0
        %v6232 = vpop.f32.mrb[0].mxu0
        %v6233 = vadd.f32 0.0, %v6232
        %v6234 = vpop.f32.mrb[0].mxu0
        %6235 = vmatprep.mubr.bf16.mxu0 %v5954
        %6236 = vmatmul.mubr.bf16.gmra.mrb[0].mxu0 %v5953
        %v6237 = vpop.f32.mrb[0].mxu0
        %v6238 = vadd.f32 0.0, %v6237
        %v6239 = vpop.f32.mrb[0].mxu0
        %v6240 = vpop.f32.mrb[0].mxu0
        %v6241 = vadd.f32 0.0, %v6240
        %v6242 = vpop.f32.mrb[0].mxu0
        %6243 = vmatprep.mubr.bf16.mxu0 %v5957
        %6244 = vmatmul.mubr.bf16.gmra.mrb[0].mxu0 %v5956
        %v6245 = vpop.f32.mrb[0].mxu0
        %v6246 = vadd.f32 0.0, %v6245
        %v6247 = vpop.f32.mrb[0].mxu0
        %v6248 = vpop.f32.mrb[0].mxu0
        %v6249 = vadd.f32 0.0, %v6248
        %v6250 = vpop.f32.mrb[0].mxu0
        %6251 = vmatprep.mubr.bf16.mxu0 %v5960
        %6252 = vmatmul.mubr.bf16.gmra.mrb[0].mxu0 %v5959
        %v6253 = vpop.f32.mrb[0].mxu0
        %v6254 = vadd.f32 0.0, %v6253
        %v6255 = vpop.f32.mrb[0].mxu0
        %v6256 = vpop.f32.mrb[0].mxu0
        %v6257 = vadd.f32 0.0, %v6256
        %v6258 = vpop.f32.mrb[0].mxu0
        %6259 = vmatprep.mubr.bf16.mxu0 %v5963
        %6260 = vmatmul.mubr.bf16.gmra.mrb[0].mxu0 %v5962
        %v6261 = vpop.f32.mrb[0].mxu0
        %v6262 = vadd.f32 0.0, %v6261
        %v6263 = vpop.f32.mrb[0].mxu0
        %v6264 = vpop.f32.mrb[0].mxu0
        %v6265 = vadd.f32 0.0, %v6264
        %v6266 = vpop.f32.mrb[0].mxu0
        %6267 = vmatprep.mubr.bf16.mxu0 %v5966
        %6268 = vmatmul.mubr.bf16.gmra.mrb[0].mxu0 %v5965
        %v6269 = vpop.f32.mrb[0].mxu0
        %v6270 = vadd.f32 0.0, %v6269
        %v6271 = vpop.f32.mrb[0].mxu0
        %v6272 = vpop.f32.mrb[0].mxu0
        %v6273 = vadd.f32 0.0, %v6272
        %v6274 = vpop.f32.mrb[0].mxu0
        %6275 = vmatprep.mubr.bf16.mxu0 %v5969
        %6276 = vmatmul.mubr.bf16.gmra.mrb[0].mxu0 %v5968
        %v6277 = vpop.f32.mrb[0].mxu0
        %v6278 = vadd.f32 0.0, %v6277
        %v6279 = vpop.f32.mrb[0].mxu0
        %v6280 = vpop.f32.mrb[0].mxu0
        %v6281 = vadd.f32 0.0, %v6280
        %v6282 = vpop.f32.mrb[0].mxu0
        %6283 = vmatprep.mubr.bf16.mxu0 %v5972
        %6284 = vmatmul.mubr.bf16.gmra.mrb[0].mxu0 %v5971
        %v6285 = vpop.f32.mrb[0].mxu0
        %v6286 = vadd.f32 0.0, %v6285
        %v6287 = vpop.f32.mrb[0].mxu0
        %v6288 = vpop.f32.mrb[0].mxu0
        %v6289 = vadd.f32 0.0, %v6288
        %v6290 = vpop.f32.mrb[0].mxu0
        %6291 = vmatprep.mubr.bf16.mxu0 %v5975
        %6292 = vmatmul.mubr.bf16.gmra.mrb[0].mxu0 %v5974
        %v6293 = vpop.f32.mrb[0].mxu0
        %v6294 = vadd.f32 0.0, %v6293
        %v6295 = vpop.f32.mrb[0].mxu0
        %v6296 = vpop.f32.mrb[0].mxu0
        %v6297 = vadd.f32 0.0, %v6296
        %v6298 = vpop.f32.mrb[0].mxu0
        %6299 = vmatprep.mubr.bf16.mxu0 %v5978
        %6300 = vmatmul.mubr.bf16.gmra.mrb[0].mxu0 %v5977
        %v6301 = vpop.f32.mrb[0].mxu0
        %v6302 = vadd.f32 0.0, %v6301
        %v6303 = vpop.f32.mrb[0].mxu0
        %v6304 = vpop.f32.mrb[0].mxu0
        %v6305 = vadd.f32 0.0, %v6304
        %v6306 = vpop.f32.mrb[0].mxu0
        %6307 = vmatprep.mubr.bf16.mxu0 %v5981
        %6308 = vmatmul.mubr.bf16.gmra.mrb[0].mxu0 %v5980
        %v6309 = vpop.f32.mrb[0].mxu0
        %v6310 = vadd.f32 0.0, %v6309
        %v6311 = vpop.f32.mrb[0].mxu0
        %v6312 = vpop.f32.mrb[0].mxu0
        %v6313 = vadd.f32 0.0, %v6312
        %v6314 = vpop.f32.mrb[0].mxu0
        %6315 = vmatprep.mubr.bf16.mxu0 %v5984
        %6316 = vmatmul.mubr.bf16.gmra.mrb[0].mxu0 %v5983
        %v6317 = vpop.f32.mrb[0].mxu0
        %v6318 = vadd.f32 0.0, %v6317
        %v6319 = vpop.f32.mrb[0].mxu0
        %v6320 = vpop.f32.mrb[0].mxu0
        %v6321 = vadd.f32 0.0, %v6320
        %v6322 = vpop.f32.mrb[0].mxu0
        %6323 = vmatprep.mubr.bf16.mxu0 %v5987
        %6324 = vmatmul.mubr.bf16.gmra.mrb[0].mxu0 %v5986
        %v6325 = vpop.f32.mrb[0].mxu0
        %v6326 = vadd.f32 0.0, %v6325
        %v6327 = vpop.f32.mrb[0].mxu0
        %v6328 = vpop.f32.mrb[0].mxu0
        %v6329 = vadd.f32 0.0, %v6328
        %v6330 = vpop.f32.mrb[0].mxu0
        %6331 = vmatprep.mubr.bf16.mxu0 %v5990
        %6332 = vmatmul.mubr.bf16.gmra.mrb[0].mxu0 %v5989
        %v6333 = vpop.f32.mrb[0].mxu0
        %v6334 = vadd.f32 0.0, %v6333
        %v6335 = vpop.f32.mrb[0].mxu0
        %v6336 = vpop.f32.mrb[0].mxu0
        %v6337 = vadd.f32 0.0, %v6336
        %v6338 = vpop.f32.mrb[0].mxu0
        %6339 = vmatprep.mubr.bf16.mxu0 %v5993
        %6340 = vmatmul.mubr.bf16.gmra.mrb[0].mxu0 %v5992
        %v6341 = vpop.f32.mrb[0].mxu0
        %v6342 = vadd.f32 0.0, %v6341
        %v6343 = vpop.f32.mrb[0].mxu0
        %v6344 = vpop.f32.mrb[0].mxu0
        %v6345 = vadd.f32 0.0, %v6344
        %v6346 = vpop.f32.mrb[0].mxu0
        %6347 = vdwg.mxu0
        %6348 = vmatprep.subr.bf16.mxu0 0
        %6349 = vmatpush1.bf16.msra.mxu0 %v6119
        %6350 = vmatprep.subr.bf16.mxu0 0
        %6351 = vmatpush1.bf16.msra.mxu0 %v6120
        %6352 = vmatprep.subr.bf16.mxu0 0
        %6353 = vmatpush1.bf16.msra.mxu0 0
        %6354 = vmatprep.subr.bf16.mxu0 0
        %6355 = vmatpush1.bf16.msra.mxu0 0
        %6356 = vmatprep.subr.bf16.mxu0 0
        %6357 = vmatpush1.bf16.msra.mxu0 0
        %6358 = vmatprep.subr.bf16.mxu0 0
        %6359 = vmatpush1.bf16.msra.mxu0 0
        %6360 = vmatprep.subr.bf16.mxu0 0
        %6361 = vmatpush1.bf16.msra.mxu0 0
        %6362 = vmatprep.subr.bf16.mxu0 0
        %6363 = vmatpush1.bf16.msra.mxu0 0
        %6364 = vmatprep.subr.bf16.mxu0 0
        %6365 = vmatpush1.bf16.msra.mxu0 0
        %6366 = vmatprep.subr.bf16.mxu0 0
        %6367 = vmatpush1.bf16.msra.mxu0 0
        %6368 = vmatprep.subr.bf16.mxu0 0
        %6369 = vmatpush1.bf16.msra.mxu0 0
        %6370 = vmatprep.subr.bf16.mxu0 0
        %6371 = vmatpush1.bf16.msra.mxu0 0
        %6372 = vmatprep.subr.bf16.mxu0 0
        %6373 = vmatpush1.bf16.msra.mxu0 0
        %6374 = vmatprep.subr.bf16.mxu0 0
        %6375 = vmatpush1.bf16.msra.mxu0 0
        %6376 = vmatprep.subr.bf16.mxu0 0
        %6377 = vmatpush1.bf16.msra.mxu0 0
        %6378 = vmatprep.subr.bf16.mxu0 0
        %6379 = vmatpush1.bf16.msra.mxu0 0
        %6380 = vmatprep.mubr.bf16.mxu0 0
        %6381 = vmatmul.mubr.bf16.gmra.mrb[0].mxu0 %v6140
        %v6382 = vpop.f32.mrb[0].mxu0
        %v6383 = vadd.f32 %v6222, %v6382
        %v6384 = vpop.f32.mrb[0].mxu0
        %v6385 = vpop.f32.mrb[0].mxu0
        %v6386 = vadd.f32 %v6225, %v6385
        %v6387 = vpop.f32.mrb[0].mxu0
        %6388 = vmatprep.mubr.bf16.mxu0 0
        %6389 = vmatmul.mubr.bf16.gmra.mrb[0].mxu0 %v6143
        %v6390 = vpop.f32.mrb[0].mxu0
        %v6391 = vadd.f32 %v6230, %v6390
        %v6392 = vpop.f32.mrb[0].mxu0
        %v6393 = vpop.f32.mrb[0].mxu0
        %v6394 = vadd.f32 %v6233, %v6393
        %v6395 = vpop.f32.mrb[0].mxu0
        %6396 = vmatprep.mubr.bf16.mxu0 0
        %6397 = vmatmul.mubr.bf16.gmra.mrb[0].mxu0 %v6146
        %v6398 = vpop.f32.mrb[0].mxu0
        %v6399 = vadd.f32 %v6238, %v6398
        %v6400 = vpop.f32.mrb[0].mxu0
        %v6401 = vpop.f32.mrb[0].mxu0
        %v6402 = vadd.f32 %v6241, %v6401
        %v6403 = vpop.f32.mrb[0].mxu0
        %6404 = vmatprep.mubr.bf16.mxu0 0
        %6405 = vmatmul.mubr.bf16.gmra.mrb[0].mxu0 %v6149
        %v6406 = vpop.f32.mrb[0].mxu0
        %v6407 = vadd.f32 %v6246, %v6406
        %v6408 = vpop.f32.mrb[0].mxu0
        %v6409 = vpop.f32.mrb[0].mxu0
        %v6410 = vadd.f32 %v6249, %v6409
        %v6411 = vpop.f32.mrb[0].mxu0
        %6412 = vmatprep.mubr.bf16.mxu0 0
        %6413 = vmatmul.mubr.bf16.gmra.mrb[0].mxu0 %v6152
        %v6414 = vpop.f32.mrb[0].mxu0
        %v6415 = vadd.f32 %v6254, %v6414
        %v6416 = vpop.f32.mrb[0].mxu0
        %v6417 = vpop.f32.mrb[0].mxu0
        %v6418 = vadd.f32 %v6257, %v6417
        %v6419 = vpop.f32.mrb[0].mxu0
        %6420 = vmatprep.mubr.bf16.mxu0 0
        %6421 = vmatmul.mubr.bf16.gmra.mrb[0].mxu0 %v6155
        %v6422 = vpop.f32.mrb[0].mxu0
        %v6423 = vadd.f32 %v6262, %v6422
        %v6424 = vpop.f32.mrb[0].mxu0
        %v6425 = vpop.f32.mrb[0].mxu0
        %v6426 = vadd.f32 %v6265, %v6425
        %v6427 = vpop.f32.mrb[0].mxu0
        %6428 = vmatprep.mubr.bf16.mxu0 0
        %6429 = vmatmul.mubr.bf16.gmra.mrb[0].mxu0 %v6158
        %v6430 = vpop.f32.mrb[0].mxu0
        %v6431 = vadd.f32 %v6270, %v6430
        %v6432 = vpop.f32.mrb[0].mxu0
        %v6433 = vpop.f32.mrb[0].mxu0
        %v6434 = vadd.f32 %v6273, %v6433
        %v6435 = vpop.f32.mrb[0].mxu0
        %6436 = vmatprep.mubr.bf16.mxu0 0
        %6437 = vmatmul.mubr.bf16.gmra.mrb[0].mxu0 %v6161
        %v6438 = vpop.f32.mrb[0].mxu0
        %v6439 = vadd.f32 %v6278, %v6438
        %v6440 = vpop.f32.mrb[0].mxu0
        %v6441 = vpop.f32.mrb[0].mxu0
        %v6442 = vadd.f32 %v6281, %v6441
        %v6443 = vpop.f32.mrb[0].mxu0
        %6444 = vmatprep.mubr.bf16.mxu0 0
        %6445 = vmatmul.mubr.bf16.gmra.mrb[0].mxu0 %v6164
        %v6446 = vpop.f32.mrb[0].mxu0
        %v6447 = vadd.f32 %v6286, %v6446
        %v6448 = vpop.f32.mrb[0].mxu0
        %v6449 = vpop.f32.mrb[0].mxu0
        %v6450 = vadd.f32 %v6289, %v6449
        %v6451 = vpop.f32.mrb[0].mxu0
        %6452 = vmatprep.mubr.bf16.mxu0 0
        %6453 = vmatmul.mubr.bf16.gmra.mrb[0].mxu0 %v6167
        %v6454 = vpop.f32.mrb[0].mxu0
        %v6455 = vadd.f32 %v6294, %v6454
        %v6456 = vpop.f32.mrb[0].mxu0
        %v6457 = vpop.f32.mrb[0].mxu0
        %v6458 = vadd.f32 %v6297, %v6457
        %v6459 = vpop.f32.mrb[0].mxu0
        %6460 = vmatprep.mubr.bf16.mxu0 0
        %6461 = vmatmul.mubr.bf16.gmra.mrb[0].mxu0 %v6170
        %v6462 = vpop.f32.mrb[0].mxu0
        %v6463 = vadd.f32 %v6302, %v6462
        %v6464 = vpop.f32.mrb[0].mxu0
        %v6465 = vpop.f32.mrb[0].mxu0
        %v6466 = vadd.f32 %v6305, %v6465
        %v6467 = vpop.f32.mrb[0].mxu0
        %6468 = vmatprep.mubr.bf16.mxu0 0
        %6469 = vmatmul.mubr.bf16.gmra.mrb[0].mxu0 %v6173
        %v6470 = vpop.f32.mrb[0].mxu0
        %v6471 = vadd.f32 %v6310, %v6470
        %v6472 = vpop.f32.mrb[0].mxu0
        %v6473 = vpop.f32.mrb[0].mxu0
        %v6474 = vadd.f32 %v6313, %v6473
        %v6475 = vpop.f32.mrb[0].mxu0
        %6476 = vmatprep.mubr.bf16.mxu0 0
        %6477 = vmatmul.mubr.bf16.gmra.mrb[0].mxu0 %v6176
        %v6478 = vpop.f32.mrb[0].mxu0
        %v6479 = vadd.f32 %v6318, %v6478
        %v6480 = vpop.f32.mrb[0].mxu0
        %v6481 = vpop.f32.mrb[0].mxu0
        %v6482 = vadd.f32 %v6321, %v6481
        %v6483 = vpop.f32.mrb[0].mxu0
        %6484 = vmatprep.mubr.bf16.mxu0 0
        %6485 = vmatmul.mubr.bf16.gmra.mrb[0].mxu0 %v6179
        %v6486 = vpop.f32.mrb[0].mxu0
        %v6487 = vadd.f32 %v6326, %v6486
        %v6488 = vpop.f32.mrb[0].mxu0
        %v6489 = vpop.f32.mrb[0].mxu0
        %v6490 = vadd.f32 %v6329, %v6489
        %v6491 = vpop.f32.mrb[0].mxu0
        %6492 = vmatprep.mubr.bf16.mxu0 0
        %6493 = vmatmul.mubr.bf16.gmra.mrb[0].mxu0 %v6182
        %v6494 = vpop.f32.mrb[0].mxu0
        %v6495 = vadd.f32 %v6334, %v6494
        %v6496 = vpop.f32.mrb[0].mxu0
        %v6497 = vpop.f32.mrb[0].mxu0
        %v6498 = vadd.f32 %v6337, %v6497
        %v6499 = vpop.f32.mrb[0].mxu0
        %6500 = vmatprep.mubr.bf16.mxu0 0
        %6501 = vmatmul.mubr.bf16.gmra.mrb[0].mxu0 %v6185
        %v6502 = vpop.f32.mrb[0].mxu0
        %v6503 = vadd.f32 %v6342, %v6502
        %v6504 = vpop.f32.mrb[0].mxu0
        %v6505 = vpop.f32.mrb[0].mxu0
        %v6506 = vadd.f32 %v6345, %v6505
        %v6507 = vpop.f32.mrb[0].mxu0
        %6508 = vdwg.mxu0
        %v6509 = vld [vmem:[%s876] sm:$0x1]
        %v6510 = vlaneseq
        %v6511 = vshrl.u32 %v6510, 7
        %v6512 = vsub.s32 0, %v6511
        %v6513 = vrot.slane %v6509, %v6512
        %v6514 = vmul.f32 %v6383, %v6513
        %v6515 = vmul.f32 %v6386, %v6513
        %v6516 = vmul.f32 %v6391, %v6513
        %v6517 = vmul.f32 %v6394, %v6513
        %v6518 = vmul.f32 %v6399, %v6513
        %v6519 = vmul.f32 %v6402, %v6513
        %v6520 = vmul.f32 %v6407, %v6513
        %v6521 = vmul.f32 %v6410, %v6513
        %v6522 = vmul.f32 %v6415, %v6513
        %v6523 = vmul.f32 %v6418, %v6513
        %v6524 = vmul.f32 %v6423, %v6513
        %v6525 = vmul.f32 %v6426, %v6513
        %v6526 = vmul.f32 %v6431, %v6513
        %v6527 = vmul.f32 %v6434, %v6513
        %v6528 = vmul.f32 %v6439, %v6513
        %v6529 = vmul.f32 %v6442, %v6513
        %v6530 = vmul.f32 %v6447, %v6513
        %v6531 = vmul.f32 %v6450, %v6513
        %v6532 = vmul.f32 %v6455, %v6513
        %v6533 = vmul.f32 %v6458, %v6513
        %v6534 = vmul.f32 %v6463, %v6513
        %v6535 = vmul.f32 %v6466, %v6513
        %v6536 = vmul.f32 %v6471, %v6513
        %v6537 = vmul.f32 %v6474, %v6513
        %v6538 = vmul.f32 %v6479, %v6513
        %v6539 = vmul.f32 %v6482, %v6513
        %v6540 = vmul.f32 %v6487, %v6513
        %v6541 = vmul.f32 %v6490, %v6513
        %v6542 = vmul.f32 %v6495, %v6513
        %v6543 = vmul.f32 %v6498, %v6513
        %v6544 = vmul.f32 %v6503, %v6513
        %v6545 = vmul.f32 %v6506, %v6513
        %v6546 = vld [vmem:[%s876 + $0x1] sm:$0x1]
        %v6547 = vlaneseq
        %v6548 = vshrl.u32 %v6547, 7
        %v6549 = vsub.s32 0, %v6548
        %v6550 = vrot.slane %v6546, %v6549
        %v6551 = vadd.f32 %v6514, %v6550
        %v6552 = vadd.f32 %v6515, %v6550
        %v6553 = vadd.f32 %v6516, %v6550
        %v6554 = vadd.f32 %v6517, %v6550
        %v6555 = vadd.f32 %v6518, %v6550
        %v6556 = vadd.f32 %v6519, %v6550
        %v6557 = vadd.f32 %v6520, %v6550
        %v6558 = vadd.f32 %v6521, %v6550
        %v6559 = vadd.f32 %v6522, %v6550
        %v6560 = vadd.f32 %v6523, %v6550
        %v6561 = vadd.f32 %v6524, %v6550
        %v6562 = vadd.f32 %v6525, %v6550
        %v6563 = vadd.f32 %v6526, %v6550
        %v6564 = vadd.f32 %v6527, %v6550
        %v6565 = vadd.f32 %v6528, %v6550
        %v6566 = vadd.f32 %v6529, %v6550
        %v6567 = vadd.f32 %v6530, %v6550
        %v6568 = vadd.f32 %v6531, %v6550
        %v6569 = vadd.f32 %v6532, %v6550
        %v6570 = vadd.f32 %v6533, %v6550
        %v6571 = vadd.f32 %v6534, %v6550
        %v6572 = vadd.f32 %v6535, %v6550
        %v6573 = vadd.f32 %v6536, %v6550
        %v6574 = vadd.f32 %v6537, %v6550
        %v6575 = vadd.f32 %v6538, %v6550
        %v6576 = vadd.f32 %v6539, %v6550
        %v6577 = vadd.f32 %v6540, %v6550
        %v6578 = vadd.f32 %v6541, %v6550
        %v6579 = vadd.f32 %v6542, %v6550
        %v6580 = vadd.f32 %v6543, %v6550
        %v6581 = vadd.f32 %v6544, %v6550
        %v6582 = vadd.f32 %v6545, %v6550
        %v6583 = vmax.f32 %v6551, 0.0
        %v6584 = vmax.f32 %v6552, 0.0
        %v6585 = vmax.f32 %v6553, 0.0
        %v6586 = vmax.f32 %v6554, 0.0
        %v6587 = vmax.f32 %v6555, 0.0
        %v6588 = vmax.f32 %v6556, 0.0
        %v6589 = vmax.f32 %v6557, 0.0
        %v6590 = vmax.f32 %v6558, 0.0
        %v6591 = vmax.f32 %v6559, 0.0
        %v6592 = vmax.f32 %v6560, 0.0
        %v6593 = vmax.f32 %v6561, 0.0
        %v6594 = vmax.f32 %v6562, 0.0
        %v6595 = vmax.f32 %v6563, 0.0
        %v6596 = vmax.f32 %v6564, 0.0
        %v6597 = vmax.f32 %v6565, 0.0
        %v6598 = vmax.f32 %v6566, 0.0
        %v6599 = vmax.f32 %v6567, 0.0
        %v6600 = vmax.f32 %v6568, 0.0
        %v6601 = vmax.f32 %v6569, 0.0
        %v6602 = vmax.f32 %v6570, 0.0
        %v6603 = vmax.f32 %v6571, 0.0
        %v6604 = vmax.f32 %v6572, 0.0
        %v6605 = vmax.f32 %v6573, 0.0
        %v6606 = vmax.f32 %v6574, 0.0
        %v6607 = vmax.f32 %v6575, 0.0
        %v6608 = vmax.f32 %v6576, 0.0
        %v6609 = vmax.f32 %v6577, 0.0
        %v6610 = vmax.f32 %v6578, 0.0
        %v6611 = vmax.f32 %v6579, 0.0
        %v6612 = vmax.f32 %v6580, 0.0
        %v6613 = vmax.f32 %v6581, 0.0
        %v6614 = vmax.f32 %v6582, 0.0
        %v6615 = vpack.c.bf16 %v6584, %v6583
        %v6616 = vpack.c.bf16 %v6586, %v6585
        %v6617 = vpack.c.bf16 %v6588, %v6587
        %v6618 = vpack.c.bf16 %v6590, %v6589
        %v6619 = vpack.c.bf16 %v6592, %v6591
        %v6620 = vpack.c.bf16 %v6594, %v6593
        %v6621 = vpack.c.bf16 %v6596, %v6595
        %v6622 = vpack.c.bf16 %v6598, %v6597
        %v6623 = vpack.c.bf16 %v6600, %v6599
        %v6624 = vpack.c.bf16 %v6602, %v6601
        %v6625 = vpack.c.bf16 %v6604, %v6603
        %v6626 = vpack.c.bf16 %v6606, %v6605
        %v6627 = vpack.c.bf16 %v6608, %v6607
        %v6628 = vpack.c.bf16 %v6610, %v6609
        %v6629 = vpack.c.bf16 %v6612, %v6611
        %v6630 = vpack.c.bf16 %v6614, %v6613
        %v6631 = vld [vmem:[%s881] sm:$0xf]
        %v6632 = vld [vmem:[%s881 + $0x4] sm:$0xf]
        %v6633 = vld [vmem:[%s881 + $0x8] sm:$0xf]
        %v6634 = vld [vmem:[%s881 + $0xc] sm:$0xf]
        %v6639 = vunpack.c.l.b16 %v6631
        %v6640 = vunpack.c.l.b16 %v6632
        %v6641 = vunpack.c.l.b16 %v6633
        %v6642 = vunpack.c.l.b16 %v6634
        %v6643 = vpack.c.b16 %v6640, %v6639
        %v6644 = vpack.c.b16 %v6642, %v6641
        %v6648 = vsel %vm895, %v6615, 0
        %v6651 = vsel %vm895, %v6616, 0
        %v6654 = vsel %vm895, %v6617, 0
        %v6657 = vsel %vm895, %v6618, 0
        %v6660 = vsel %vm895, %v6619, 0
        %v6663 = vsel %vm895, %v6620, 0
        %v6666 = vsel %vm895, %v6621, 0
        %v6669 = vsel %vm895, %v6622, 0
        %v6672 = vsel %vm895, %v6623, 0
        %v6675 = vsel %vm895, %v6624, 0
        %v6678 = vsel %vm895, %v6625, 0
        %v6681 = vsel %vm895, %v6626, 0
        %v6684 = vsel %vm895, %v6627, 0
        %v6687 = vsel %vm895, %v6628, 0
        %v6690 = vsel %vm895, %v6629, 0
        %v6693 = vsel %vm895, %v6630, 0
        %6695 = vmatprep.subr.bf16.mxu0 0
        %6696 = vmatpush1.bf16.msra.mxu0 %v6643
        %6697 = vmatprep.subr.bf16.mxu0 0
        %6698 = vmatpush1.bf16.msra.mxu0 %v6644
        %6699 = vmatprep.subr.bf16.mxu0 0
        %6700 = vmatpush1.bf16.msra.mxu0 0
        %6701 = vmatprep.subr.bf16.mxu0 0
        %6702 = vmatpush1.bf16.msra.mxu0 0
        %6703 = vmatprep.subr.bf16.mxu0 0
        %6704 = vmatpush1.bf16.msra.mxu0 0
        %6705 = vmatprep.subr.bf16.mxu0 0
        %6706 = vmatpush1.bf16.msra.mxu0 0
        %6707 = vmatprep.subr.bf16.mxu0 0
        %6708 = vmatpush1.bf16.msra.mxu0 0
        %6709 = vmatprep.subr.bf16.mxu0 0
        %6710 = vmatpush1.bf16.msra.mxu0 0
        %6711 = vmatprep.subr.bf16.mxu0 0
        %6712 = vmatpush1.bf16.msra.mxu0 0
        %6713 = vmatprep.subr.bf16.mxu0 0
        %6714 = vmatpush1.bf16.msra.mxu0 0
        %6715 = vmatprep.subr.bf16.mxu0 0
        %6716 = vmatpush1.bf16.msra.mxu0 0
        %6717 = vmatprep.subr.bf16.mxu0 0
        %6718 = vmatpush1.bf16.msra.mxu0 0
        %6719 = vmatprep.subr.bf16.mxu0 0
        %6720 = vmatpush1.bf16.msra.mxu0 0
        %6721 = vmatprep.subr.bf16.mxu0 0
        %6722 = vmatpush1.bf16.msra.mxu0 0
        %6723 = vmatprep.subr.bf16.mxu0 0
        %6724 = vmatpush1.bf16.msra.mxu0 0
        %6725 = vmatprep.subr.bf16.mxu0 0
        %6726 = vmatpush1.bf16.msra.mxu0 0
        %6727 = vmatprep.mubr.bf16.mxu0 0
        %6728 = vmatmul.mubr.bf16.gmra.mrb[0].mxu0 %v6648
        %v6729 = vpop.f32.mrb[0].mxu0
        %v6730 = vadd.f32 0.0, %v6729
        %v6731 = vpop.f32.mrb[0].mxu0
        %v6732 = vpop.f32.mrb[0].mxu0
        %v6733 = vadd.f32 0.0, %v6732
        %v6734 = vpop.f32.mrb[0].mxu0
        %6735 = vmatprep.mubr.bf16.mxu0 0
        %6736 = vmatmul.mubr.bf16.gmra.mrb[0].mxu0 %v6651
        %v6737 = vpop.f32.mrb[0].mxu0
        %v6738 = vadd.f32 0.0, %v6737
        %v6739 = vpop.f32.mrb[0].mxu0
        %v6740 = vpop.f32.mrb[0].mxu0
        %v6741 = vadd.f32 0.0, %v6740
        %v6742 = vpop.f32.mrb[0].mxu0
        %6743 = vmatprep.mubr.bf16.mxu0 0
        %6744 = vmatmul.mubr.bf16.gmra.mrb[0].mxu0 %v6654
        %v6745 = vpop.f32.mrb[0].mxu0
        %v6746 = vadd.f32 0.0, %v6745
        %v6747 = vpop.f32.mrb[0].mxu0
        %v6748 = vpop.f32.mrb[0].mxu0
        %v6749 = vadd.f32 0.0, %v6748
        %v6750 = vpop.f32.mrb[0].mxu0
        %6751 = vmatprep.mubr.bf16.mxu0 0
        %6752 = vmatmul.mubr.bf16.gmra.mrb[0].mxu0 %v6657
        %v6753 = vpop.f32.mrb[0].mxu0
        %v6754 = vadd.f32 0.0, %v6753
        %v6755 = vpop.f32.mrb[0].mxu0
        %v6756 = vpop.f32.mrb[0].mxu0
        %v6757 = vadd.f32 0.0, %v6756
        %v6758 = vpop.f32.mrb[0].mxu0
        %6759 = vmatprep.mubr.bf16.mxu0 0
        %6760 = vmatmul.mubr.bf16.gmra.mrb[0].mxu0 %v6660
        %v6761 = vpop.f32.mrb[0].mxu0
        %v6762 = vadd.f32 0.0, %v6761
        %v6763 = vpop.f32.mrb[0].mxu0
        %v6764 = vpop.f32.mrb[0].mxu0
        %v6765 = vadd.f32 0.0, %v6764
        %v6766 = vpop.f32.mrb[0].mxu0
        %6767 = vmatprep.mubr.bf16.mxu0 0
        %6768 = vmatmul.mubr.bf16.gmra.mrb[0].mxu0 %v6663
        %v6769 = vpop.f32.mrb[0].mxu0
        %v6770 = vadd.f32 0.0, %v6769
        %v6771 = vpop.f32.mrb[0].mxu0
        %v6772 = vpop.f32.mrb[0].mxu0
        %v6773 = vadd.f32 0.0, %v6772
        %v6774 = vpop.f32.mrb[0].mxu0
        %6775 = vmatprep.mubr.bf16.mxu0 0
        %6776 = vmatmul.mubr.bf16.gmra.mrb[0].mxu0 %v6666
        %v6777 = vpop.f32.mrb[0].mxu0
        %v6778 = vadd.f32 0.0, %v6777
        %v6779 = vpop.f32.mrb[0].mxu0
        %v6780 = vpop.f32.mrb[0].mxu0
        %v6781 = vadd.f32 0.0, %v6780
        %v6782 = vpop.f32.mrb[0].mxu0
        %6783 = vmatprep.mubr.bf16.mxu0 0
        %6784 = vmatmul.mubr.bf16.gmra.mrb[0].mxu0 %v6669
        %v6785 = vpop.f32.mrb[0].mxu0
        %v6786 = vadd.f32 0.0, %v6785
        %v6787 = vpop.f32.mrb[0].mxu0
        %v6788 = vpop.f32.mrb[0].mxu0
        %v6789 = vadd.f32 0.0, %v6788
        %v6790 = vpop.f32.mrb[0].mxu0
        %6791 = vmatprep.mubr.bf16.mxu0 0
        %6792 = vmatmul.mubr.bf16.gmra.mrb[0].mxu0 %v6672
        %v6793 = vpop.f32.mrb[0].mxu0
        %v6794 = vadd.f32 0.0, %v6793
        %v6795 = vpop.f32.mrb[0].mxu0
        %v6796 = vpop.f32.mrb[0].mxu0
        %v6797 = vadd.f32 0.0, %v6796
        %v6798 = vpop.f32.mrb[0].mxu0
        %6799 = vmatprep.mubr.bf16.mxu0 0
        %6800 = vmatmul.mubr.bf16.gmra.mrb[0].mxu0 %v6675
        %v6801 = vpop.f32.mrb[0].mxu0
        %v6802 = vadd.f32 0.0, %v6801
        %v6803 = vpop.f32.mrb[0].mxu0
        %v6804 = vpop.f32.mrb[0].mxu0
        %v6805 = vadd.f32 0.0, %v6804
        %v6806 = vpop.f32.mrb[0].mxu0
        %6807 = vmatprep.mubr.bf16.mxu0 0
        %6808 = vmatmul.mubr.bf16.gmra.mrb[0].mxu0 %v6678
        %v6809 = vpop.f32.mrb[0].mxu0
        %v6810 = vadd.f32 0.0, %v6809
        %v6811 = vpop.f32.mrb[0].mxu0
        %v6812 = vpop.f32.mrb[0].mxu0
        %v6813 = vadd.f32 0.0, %v6812
        %v6814 = vpop.f32.mrb[0].mxu0
        %6815 = vmatprep.mubr.bf16.mxu0 0
        %6816 = vmatmul.mubr.bf16.gmra.mrb[0].mxu0 %v6681
        %v6817 = vpop.f32.mrb[0].mxu0
        %v6818 = vadd.f32 0.0, %v6817
        %v6819 = vpop.f32.mrb[0].mxu0
        %v6820 = vpop.f32.mrb[0].mxu0
        %v6821 = vadd.f32 0.0, %v6820
        %v6822 = vpop.f32.mrb[0].mxu0
        %6823 = vmatprep.mubr.bf16.mxu0 0
        %6824 = vmatmul.mubr.bf16.gmra.mrb[0].mxu0 %v6684
        %v6825 = vpop.f32.mrb[0].mxu0
        %v6826 = vadd.f32 0.0, %v6825
        %v6827 = vpop.f32.mrb[0].mxu0
        %v6828 = vpop.f32.mrb[0].mxu0
        %v6829 = vadd.f32 0.0, %v6828
        %v6830 = vpop.f32.mrb[0].mxu0
        %6831 = vmatprep.mubr.bf16.mxu0 0
        %6832 = vmatmul.mubr.bf16.gmra.mrb[0].mxu0 %v6687
        %v6833 = vpop.f32.mrb[0].mxu0
        %v6834 = vadd.f32 0.0, %v6833
        %v6835 = vpop.f32.mrb[0].mxu0
        %v6836 = vpop.f32.mrb[0].mxu0
        %v6837 = vadd.f32 0.0, %v6836
        %v6838 = vpop.f32.mrb[0].mxu0
        %6839 = vmatprep.mubr.bf16.mxu0 0
        %6840 = vmatmul.mubr.bf16.gmra.mrb[0].mxu0 %v6690
        %v6841 = vpop.f32.mrb[0].mxu0
        %v6842 = vadd.f32 0.0, %v6841
        %v6843 = vpop.f32.mrb[0].mxu0
        %v6844 = vpop.f32.mrb[0].mxu0
        %v6845 = vadd.f32 0.0, %v6844
        %v6846 = vpop.f32.mrb[0].mxu0
        %6847 = vmatprep.mubr.bf16.mxu0 0
        %6848 = vmatmul.mubr.bf16.gmra.mrb[0].mxu0 %v6693
        %v6849 = vpop.f32.mrb[0].mxu0
        %v6850 = vadd.f32 0.0, %v6849
        %v6851 = vpop.f32.mrb[0].mxu0
        %v6852 = vpop.f32.mrb[0].mxu0
        %v6853 = vadd.f32 0.0, %v6852
        %v6854 = vpop.f32.mrb[0].mxu0
        %6855 = vdwg.mxu0
        %v6856 = vld [vmem:[%s885] sm:$0x1]
        %v6857 = vlaneseq
        %v6858 = vshrl.u32 %v6857, 7
        %v6859 = vsub.s32 0, %v6858
        %v6860 = vrot.slane %v6856, %v6859
        %v6861 = vmul.f32 %v6730, %v6860
        %v6862 = vmul.f32 %v6733, %v6860
        %v6863 = vmul.f32 %v6738, %v6860
        %v6864 = vmul.f32 %v6741, %v6860
        %v6865 = vmul.f32 %v6746, %v6860
        %v6866 = vmul.f32 %v6749, %v6860
        %v6867 = vmul.f32 %v6754, %v6860
        %v6868 = vmul.f32 %v6757, %v6860
        %v6869 = vmul.f32 %v6762, %v6860
        %v6870 = vmul.f32 %v6765, %v6860
        %v6871 = vmul.f32 %v6770, %v6860
        %v6872 = vmul.f32 %v6773, %v6860
        %v6873 = vmul.f32 %v6778, %v6860
        %v6874 = vmul.f32 %v6781, %v6860
        %v6875 = vmul.f32 %v6786, %v6860
        %v6876 = vmul.f32 %v6789, %v6860
        %v6877 = vmul.f32 %v6794, %v6860
        %v6878 = vmul.f32 %v6797, %v6860
        %v6879 = vmul.f32 %v6802, %v6860
        %v6880 = vmul.f32 %v6805, %v6860
        %v6881 = vmul.f32 %v6810, %v6860
        %v6882 = vmul.f32 %v6813, %v6860
        %v6883 = vmul.f32 %v6818, %v6860
        %v6884 = vmul.f32 %v6821, %v6860
        %v6885 = vmul.f32 %v6826, %v6860
        %v6886 = vmul.f32 %v6829, %v6860
        %v6887 = vmul.f32 %v6834, %v6860
        %v6888 = vmul.f32 %v6837, %v6860
        %v6889 = vmul.f32 %v6842, %v6860
        %v6890 = vmul.f32 %v6845, %v6860
        %v6891 = vmul.f32 %v6850, %v6860
        %v6892 = vmul.f32 %v6853, %v6860
        %v6893 = vld [vmem:[%s885 + $0x1] sm:$0x1]
        %v6894 = vlaneseq
        %v6895 = vshrl.u32 %v6894, 7
        %v6896 = vsub.s32 0, %v6895
        %v6897 = vrot.slane %v6893, %v6896
        %v6898 = vadd.f32 %v6861, %v6897
        %v6899 = vadd.f32 %v6862, %v6897
        %v6900 = vadd.f32 %v6863, %v6897
        %v6901 = vadd.f32 %v6864, %v6897
        %v6902 = vadd.f32 %v6865, %v6897
        %v6903 = vadd.f32 %v6866, %v6897
        %v6904 = vadd.f32 %v6867, %v6897
        %v6905 = vadd.f32 %v6868, %v6897
        %v6906 = vadd.f32 %v6869, %v6897
        %v6907 = vadd.f32 %v6870, %v6897
        %v6908 = vadd.f32 %v6871, %v6897
        %v6909 = vadd.f32 %v6872, %v6897
        %v6910 = vadd.f32 %v6873, %v6897
        %v6911 = vadd.f32 %v6874, %v6897
        %v6912 = vadd.f32 %v6875, %v6897
        %v6913 = vadd.f32 %v6876, %v6897
        %v6914 = vadd.f32 %v6877, %v6897
        %v6915 = vadd.f32 %v6878, %v6897
        %v6916 = vadd.f32 %v6879, %v6897
        %v6917 = vadd.f32 %v6880, %v6897
        %v6918 = vadd.f32 %v6881, %v6897
        %v6919 = vadd.f32 %v6882, %v6897
        %v6920 = vadd.f32 %v6883, %v6897
        %v6921 = vadd.f32 %v6884, %v6897
        %v6922 = vadd.f32 %v6885, %v6897
        %v6923 = vadd.f32 %v6886, %v6897
        %v6924 = vadd.f32 %v6887, %v6897
        %v6925 = vadd.f32 %v6888, %v6897
        %v6926 = vadd.f32 %v6889, %v6897
        %v6927 = vadd.f32 %v6890, %v6897
        %v6928 = vadd.f32 %v6891, %v6897
        %v6929 = vadd.f32 %v6892, %v6897
        %v6930 = vadd.f32 %v6898, %v4096
        %v6931 = vadd.f32 %v6899, %v4097
        %v6932 = vadd.f32 %v6900, %v4098
        %v6933 = vadd.f32 %v6901, %v4099
        %v6934 = vadd.f32 %v6902, %v4100
        %v6935 = vadd.f32 %v6903, %v4101
        %v6936 = vadd.f32 %v6904, %v4102
        %v6937 = vadd.f32 %v6905, %v4103
        %v6938 = vadd.f32 %v6906, %v4104
        %v6939 = vadd.f32 %v6907, %v4105
        %v6940 = vadd.f32 %v6908, %v4106
        %v6941 = vadd.f32 %v6909, %v4107
        %v6942 = vadd.f32 %v6910, %v4108
        %v6943 = vadd.f32 %v6911, %v4109
        %v6944 = vadd.f32 %v6912, %v4110
        %v6945 = vadd.f32 %v6913, %v4111
        %v6946 = vadd.f32 %v6914, %v4112
        %v6947 = vadd.f32 %v6915, %v4113
        %v6948 = vadd.f32 %v6916, %v4114
        %v6949 = vadd.f32 %v6917, %v4115
        %v6950 = vadd.f32 %v6918, %v4116
        %v6951 = vadd.f32 %v6919, %v4117
        %v6952 = vadd.f32 %v6920, %v4118
        %v6953 = vadd.f32 %v6921, %v4119
        %v6954 = vadd.f32 %v6922, %v4120
        %v6955 = vadd.f32 %v6923, %v4121
        %v6956 = vadd.f32 %v6924, %v4122
        %v6957 = vadd.f32 %v6925, %v4123
        %v6958 = vadd.f32 %v6926, %v4124
        %v6959 = vadd.f32 %v6927, %v4125
        %v6960 = vadd.f32 %v6928, %v4126
        %v6961 = vadd.f32 %v6929, %v4127
        %v6962 = vmax.f32 %v6930, 0.0
        %v6963 = vmax.f32 %v6931, 0.0
        %v6964 = vmax.f32 %v6932, 0.0
        %v6965 = vmax.f32 %v6933, 0.0
        %v6966 = vmax.f32 %v6934, 0.0
        %v6967 = vmax.f32 %v6935, 0.0
        %v6968 = vmax.f32 %v6936, 0.0
        %v6969 = vmax.f32 %v6937, 0.0
        %v6970 = vmax.f32 %v6938, 0.0
        %v6971 = vmax.f32 %v6939, 0.0
        %v6972 = vmax.f32 %v6940, 0.0
        %v6973 = vmax.f32 %v6941, 0.0
        %v6974 = vmax.f32 %v6942, 0.0
        %v6975 = vmax.f32 %v6943, 0.0
        %v6976 = vmax.f32 %v6944, 0.0
        %v6977 = vmax.f32 %v6945, 0.0
        %v6978 = vmax.f32 %v6946, 0.0
        %v6979 = vmax.f32 %v6947, 0.0
        %v6980 = vmax.f32 %v6948, 0.0
        %v6981 = vmax.f32 %v6949, 0.0
        %v6982 = vmax.f32 %v6950, 0.0
        %v6983 = vmax.f32 %v6951, 0.0
        %v6984 = vmax.f32 %v6952, 0.0
        %v6985 = vmax.f32 %v6953, 0.0
        %v6986 = vmax.f32 %v6954, 0.0
        %v6987 = vmax.f32 %v6955, 0.0
        %v6988 = vmax.f32 %v6956, 0.0
        %v6989 = vmax.f32 %v6957, 0.0
        %v6990 = vmax.f32 %v6958, 0.0
        %v6991 = vmax.f32 %v6959, 0.0
        %v6992 = vmax.f32 %v6960, 0.0
        %v6993 = vmax.f32 %v6961, 0.0
        %6994 = vst [vmem:[%s810] sm:$0xff] %v6962
        %6995 = vst [vmem:[%s810 + $0x8] sm:$0xff] %v6963
        %6996 = vst [vmem:[%s810 + $0x10] sm:$0xff] %v6964
        %6997 = vst [vmem:[%s810 + $0x18] sm:$0xff] %v6965
        %6998 = vst [vmem:[%s810 + $0x20] sm:$0xff] %v6966
        %6999 = vst [vmem:[%s810 + $0x28] sm:$0xff] %v6967
        %7000 = vst [vmem:[%s810 + $0x30] sm:$0xff] %v6968
        %7001 = vst [vmem:[%s810 + $0x38] sm:$0xff] %v6969
        %7002 = vst [vmem:[%s810 + $0x40] sm:$0xff] %v6970
        %7003 = vst [vmem:[%s810 + $0x48] sm:$0xff] %v6971
        %7004 = vst [vmem:[%s810 + $0x50] sm:$0xff] %v6972
        %7005 = vst [vmem:[%s810 + $0x58] sm:$0xff] %v6973
        %7006 = vst [vmem:[%s810 + $0x60] sm:$0xff] %v6974
        %7007 = vst [vmem:[%s810 + $0x68] sm:$0xff] %v6975
        %7008 = vst [vmem:[%s810 + $0x70] sm:$0xff] %v6976
        %7009 = vst [vmem:[%s810 + $0x78] sm:$0xff] %v6977
        %7010 = vst [vmem:[%s810 + $0x80] sm:$0xff] %v6978
        %7011 = vst [vmem:[%s810 + $0x88] sm:$0xff] %v6979
        %7012 = vst [vmem:[%s810 + $0x90] sm:$0xff] %v6980
        %7013 = vst [vmem:[%s810 + $0x98] sm:$0xff] %v6981
        %7014 = vst [vmem:[%s810 + $0xa0] sm:$0xff] %v6982
        %7015 = vst [vmem:[%s810 + $0xa8] sm:$0xff] %v6983
        %7016 = vst [vmem:[%s810 + $0xb0] sm:$0xff] %v6984
        %7017 = vst [vmem:[%s810 + $0xb8] sm:$0xff] %v6985
        %7018 = vst [vmem:[%s810 + $0xc0] sm:$0xff] %v6986
        %7019 = vst [vmem:[%s810 + $0xc8] sm:$0xff] %v6987
        %7020 = vst [vmem:[%s810 + $0xd0] sm:$0xff] %v6988
        %7021 = vst [vmem:[%s810 + $0xd8] sm:$0xff] %v6989
        %7022 = vst [vmem:[%s810 + $0xe0] sm:$0xff] %v6990
        %7023 = vst [vmem:[%s810 + $0xe8] sm:$0xff] %v6991
        %7024 = vst [vmem:[%s810 + $0xf0] sm:$0xff] %v6992
        %7025 = vst [vmem:[%s810 + $0xf8] sm:$0xff] %v6993
        %v7026 = vpack.c.bf16 %v6963, %v6962
        %v7027 = vpack.c.bf16 %v6965, %v6964
        %v7028 = vpack.c.bf16 %v6967, %v6966
        %v7029 = vpack.c.bf16 %v6969, %v6968
        %v7030 = vpack.c.bf16 %v6971, %v6970
        %v7031 = vpack.c.bf16 %v6973, %v6972
        %v7032 = vpack.c.bf16 %v6975, %v6974
        %v7033 = vpack.c.bf16 %v6977, %v6976
        %v7034 = vpack.c.bf16 %v6979, %v6978
        %v7035 = vpack.c.bf16 %v6981, %v6980
        %v7036 = vpack.c.bf16 %v6983, %v6982
        %v7037 = vpack.c.bf16 %v6985, %v6984
        %v7038 = vpack.c.bf16 %v6987, %v6986
        %v7039 = vpack.c.bf16 %v6989, %v6988
        %v7040 = vpack.c.bf16 %v6991, %v6990
        %v7041 = vpack.c.bf16 %v6993, %v6992
        %v7042 = vld [vmem:[%s890] sm:$0xf]
        %v7043 = vld [vmem:[%s890 + $0x4] sm:$0xf]
        %v7044 = vld [vmem:[%s890 + $0x8] sm:$0xf]
        %v7045 = vld [vmem:[%s890 + $0xc] sm:$0xf]
        %v7046 = vld [vmem:[%s890 + $0x10] sm:$0xf]
        %v7047 = vld [vmem:[%s890 + $0x14] sm:$0xf]
        %v7048 = vld [vmem:[%s890 + $0x18] sm:$0xf]
        %v7049 = vld [vmem:[%s890 + $0x1c] sm:$0xf]
        %v7050 = vld [vmem:[%s890 + $0x20] sm:$0xf]
        %v7051 = vld [vmem:[%s890 + $0x24] sm:$0xf]
        %v7052 = vld [vmem:[%s890 + $0x28] sm:$0xf]
        %v7053 = vld [vmem:[%s890 + $0x2c] sm:$0xf]
        %v7054 = vld [vmem:[%s890 + $0x30] sm:$0xf]
        %v7055 = vld [vmem:[%s890 + $0x34] sm:$0xf]
        %v7056 = vld [vmem:[%s890 + $0x38] sm:$0xf]
        %v7057 = vld [vmem:[%s890 + $0x3c] sm:$0xf]
        %v7058 = vld [vmem:[%s893] sm:$0x1]
        %v7060 = vlaneseq
        %v7061 = vshrl.u32 %v7060, 7
        %v7062 = vsub.s32 0, %v7061
        %v7063 = vrot.slane %v7058, %v7062
        %v7081 = vunpack.c.l.b16 %v7042
        %v7082 = vunpack.c.l.b16 %v7043
        %v7083 = vunpack.c.l.b16 %v7044
        %v7084 = vunpack.c.l.b16 %v7045
        %v7085 = vunpack.c.l.b16 %v7046
        %v7086 = vunpack.c.l.b16 %v7047
        %v7087 = vunpack.c.l.b16 %v7048
        %v7088 = vunpack.c.l.b16 %v7049
        %v7089 = vunpack.c.l.b16 %v7050
        %v7090 = vunpack.c.l.b16 %v7051
        %v7091 = vunpack.c.l.b16 %v7052
        %v7092 = vunpack.c.l.b16 %v7053
        %v7093 = vunpack.c.l.b16 %v7054
        %v7094 = vunpack.c.l.b16 %v7055
        %v7095 = vunpack.c.l.b16 %v7056
        %v7096 = vunpack.c.l.b16 %v7057
        %v7097 = vpack.c.b16 %v7082, %v7081
        %v7098 = vpack.c.b16 %v7084, %v7083
        %v7099 = vpack.c.b16 %v7086, %v7085
        %v7100 = vpack.c.b16 %v7088, %v7087
        %v7101 = vpack.c.b16 %v7090, %v7089
        %v7102 = vpack.c.b16 %v7092, %v7091
        %v7103 = vpack.c.b16 %v7094, %v7093
        %v7104 = vpack.c.b16 %v7096, %v7095
        %7113 = vmatprep.subr.bf16.mxu0 0
        %7114 = vmatpush1.bf16.msra.mxu0 %v7097
        %7115 = vmatprep.subr.bf16.mxu0 0
        %7116 = vmatpush1.bf16.msra.mxu0 %v7098
        %7117 = vmatprep.subr.bf16.mxu0 0
        %7118 = vmatpush1.bf16.msra.mxu0 %v7099
        %7119 = vmatprep.subr.bf16.mxu0 0
        %7120 = vmatpush1.bf16.msra.mxu0 %v7100
        %7121 = vmatprep.subr.bf16.mxu0 0
        %7122 = vmatpush1.bf16.msra.mxu0 %v7101
        %7123 = vmatprep.subr.bf16.mxu0 0
        %7124 = vmatpush1.bf16.msra.mxu0 %v7102
        %7125 = vmatprep.subr.bf16.mxu0 0
        %7126 = vmatpush1.bf16.msra.mxu0 %v7103
        %7127 = vmatprep.subr.bf16.mxu0 0
        %7128 = vmatpush1.bf16.msra.mxu0 %v7104
        %7129 = vmatprep.subr.bf16.mxu0 0
        %7130 = vmatpush1.bf16.msra.mxu0 0
        %7131 = vmatprep.subr.bf16.mxu0 0
        %7132 = vmatpush1.bf16.msra.mxu0 0
        %7133 = vmatprep.subr.bf16.mxu0 0
        %7134 = vmatpush1.bf16.msra.mxu0 0
        %7135 = vmatprep.subr.bf16.mxu0 0
        %7136 = vmatpush1.bf16.msra.mxu0 0
        %7137 = vmatprep.subr.bf16.mxu0 0
        %7138 = vmatpush1.bf16.msra.mxu0 0
        %7139 = vmatprep.subr.bf16.mxu0 0
        %7140 = vmatpush1.bf16.msra.mxu0 0
        %7141 = vmatprep.subr.bf16.mxu0 0
        %7142 = vmatpush1.bf16.msra.mxu0 0
        %7143 = vmatprep.subr.bf16.mxu0 0
        %7144 = vmatpush1.bf16.msra.mxu0 0
        %7145 = vmatprep.mubr.bf16.mxu0 0
        %7146 = vmatmul.mubr.bf16.gmra.mrb[0].mxu0 %v7026
        %v7147 = vpop.f32.mrb[0].mxu0
        %v7148 = vadd.f32 %v7063, %v7147
        %v7149 = vpop.f32.mrb[0].mxu0
        %v7150 = vpop.f32.mrb[0].mxu0
        %v7151 = vadd.f32 %v7063, %v7150
        %v7152 = vpop.f32.mrb[0].mxu0
        %7153 = vmatprep.mubr.bf16.mxu0 0
        %7154 = vmatmul.mubr.bf16.gmra.mrb[0].mxu0 %v7027
        %v7155 = vpop.f32.mrb[0].mxu0
        %v7156 = vadd.f32 %v7063, %v7155
        %v7157 = vpop.f32.mrb[0].mxu0
        %v7158 = vpop.f32.mrb[0].mxu0
        %v7159 = vadd.f32 %v7063, %v7158
        %v7160 = vpop.f32.mrb[0].mxu0
        %7161 = vmatprep.mubr.bf16.mxu0 0
        %7162 = vmatmul.mubr.bf16.gmra.mrb[0].mxu0 %v7028
        %v7163 = vpop.f32.mrb[0].mxu0
        %v7164 = vadd.f32 %v7063, %v7163
        %v7165 = vpop.f32.mrb[0].mxu0
        %v7166 = vpop.f32.mrb[0].mxu0
        %v7167 = vadd.f32 %v7063, %v7166
        %v7168 = vpop.f32.mrb[0].mxu0
        %7169 = vmatprep.mubr.bf16.mxu0 0
        %7170 = vmatmul.mubr.bf16.gmra.mrb[0].mxu0 %v7029
        %v7171 = vpop.f32.mrb[0].mxu0
        %v7172 = vadd.f32 %v7063, %v7171
        %v7173 = vpop.f32.mrb[0].mxu0
        %v7174 = vpop.f32.mrb[0].mxu0
        %v7175 = vadd.f32 %v7063, %v7174
        %v7176 = vpop.f32.mrb[0].mxu0
        %7177 = vmatprep.mubr.bf16.mxu0 0
        %7178 = vmatmul.mubr.bf16.gmra.mrb[0].mxu0 %v7030
        %v7179 = vpop.f32.mrb[0].mxu0
        %v7180 = vadd.f32 %v7063, %v7179
        %v7181 = vpop.f32.mrb[0].mxu0
        %v7182 = vpop.f32.mrb[0].mxu0
        %v7183 = vadd.f32 %v7063, %v7182
        %v7184 = vpop.f32.mrb[0].mxu0
        %7185 = vmatprep.mubr.bf16.mxu0 0
        %7186 = vmatmul.mubr.bf16.gmra.mrb[0].mxu0 %v7031
        %v7187 = vpop.f32.mrb[0].mxu0
        %v7188 = vadd.f32 %v7063, %v7187
        %v7189 = vpop.f32.mrb[0].mxu0
        %v7190 = vpop.f32.mrb[0].mxu0
        %v7191 = vadd.f32 %v7063, %v7190
        %v7192 = vpop.f32.mrb[0].mxu0
        %7193 = vmatprep.mubr.bf16.mxu0 0
        %7194 = vmatmul.mubr.bf16.gmra.mrb[0].mxu0 %v7032
        %v7195 = vpop.f32.mrb[0].mxu0
        %v7196 = vadd.f32 %v7063, %v7195
        %v7197 = vpop.f32.mrb[0].mxu0
        %v7198 = vpop.f32.mrb[0].mxu0
        %v7199 = vadd.f32 %v7063, %v7198
        %v7200 = vpop.f32.mrb[0].mxu0
        %7201 = vmatprep.mubr.bf16.mxu0 0
        %7202 = vmatmul.mubr.bf16.gmra.mrb[0].mxu0 %v7033
        %v7203 = vpop.f32.mrb[0].mxu0
        %v7204 = vadd.f32 %v7063, %v7203
        %v7205 = vpop.f32.mrb[0].mxu0
        %v7206 = vpop.f32.mrb[0].mxu0
        %v7207 = vadd.f32 %v7063, %v7206
        %v7208 = vpop.f32.mrb[0].mxu0
        %7209 = vmatprep.mubr.bf16.mxu0 0
        %7210 = vmatmul.mubr.bf16.gmra.mrb[0].mxu0 %v7034
        %v7211 = vpop.f32.mrb[0].mxu0
        %v7212 = vadd.f32 %v7063, %v7211
        %v7213 = vpop.f32.mrb[0].mxu0
        %v7214 = vpop.f32.mrb[0].mxu0
        %v7215 = vadd.f32 %v7063, %v7214
        %v7216 = vpop.f32.mrb[0].mxu0
        %7217 = vmatprep.mubr.bf16.mxu0 0
        %7218 = vmatmul.mubr.bf16.gmra.mrb[0].mxu0 %v7035
        %v7219 = vpop.f32.mrb[0].mxu0
        %v7220 = vadd.f32 %v7063, %v7219
        %v7221 = vpop.f32.mrb[0].mxu0
        %v7222 = vpop.f32.mrb[0].mxu0
        %v7223 = vadd.f32 %v7063, %v7222
        %v7224 = vpop.f32.mrb[0].mxu0
        %7225 = vmatprep.mubr.bf16.mxu0 0
        %7226 = vmatmul.mubr.bf16.gmra.mrb[0].mxu0 %v7036
        %v7227 = vpop.f32.mrb[0].mxu0
        %v7228 = vadd.f32 %v7063, %v7227
        %v7229 = vpop.f32.mrb[0].mxu0
        %v7230 = vpop.f32.mrb[0].mxu0
        %v7231 = vadd.f32 %v7063, %v7230
        %v7232 = vpop.f32.mrb[0].mxu0
        %7233 = vmatprep.mubr.bf16.mxu0 0
        %7234 = vmatmul.mubr.bf16.gmra.mrb[0].mxu0 %v7037
        %v7235 = vpop.f32.mrb[0].mxu0
        %v7236 = vadd.f32 %v7063, %v7235
        %v7237 = vpop.f32.mrb[0].mxu0
        %v7238 = vpop.f32.mrb[0].mxu0
        %v7239 = vadd.f32 %v7063, %v7238
        %v7240 = vpop.f32.mrb[0].mxu0
        %7241 = vmatprep.mubr.bf16.mxu0 0
        %7242 = vmatmul.mubr.bf16.gmra.mrb[0].mxu0 %v7038
        %v7243 = vpop.f32.mrb[0].mxu0
        %v7244 = vadd.f32 %v7063, %v7243
        %v7245 = vpop.f32.mrb[0].mxu0
        %v7246 = vpop.f32.mrb[0].mxu0
        %v7247 = vadd.f32 %v7063, %v7246
        %v7248 = vpop.f32.mrb[0].mxu0
        %7249 = vmatprep.mubr.bf16.mxu0 0
        %7250 = vmatmul.mubr.bf16.gmra.mrb[0].mxu0 %v7039
        %v7251 = vpop.f32.mrb[0].mxu0
        %v7252 = vadd.f32 %v7063, %v7251
        %v7253 = vpop.f32.mrb[0].mxu0
        %v7254 = vpop.f32.mrb[0].mxu0
        %v7255 = vadd.f32 %v7063, %v7254
        %v7256 = vpop.f32.mrb[0].mxu0
        %7257 = vmatprep.mubr.bf16.mxu0 0
        %7258 = vmatmul.mubr.bf16.gmra.mrb[0].mxu0 %v7040
        %v7259 = vpop.f32.mrb[0].mxu0
        %v7260 = vadd.f32 %v7063, %v7259
        %v7261 = vpop.f32.mrb[0].mxu0
        %v7262 = vpop.f32.mrb[0].mxu0
        %v7263 = vadd.f32 %v7063, %v7262
        %v7264 = vpop.f32.mrb[0].mxu0
        %7265 = vmatprep.mubr.bf16.mxu0 0
        %7266 = vmatmul.mubr.bf16.gmra.mrb[0].mxu0 %v7041
        %v7267 = vpop.f32.mrb[0].mxu0
        %v7268 = vadd.f32 %v7063, %v7267
        %v7269 = vpop.f32.mrb[0].mxu0
        %v7270 = vpop.f32.mrb[0].mxu0
        %v7271 = vadd.f32 %v7063, %v7270
        %v7272 = vpop.f32.mrb[0].mxu0
        %7273 = vdwg.mxu0
        %7274 = vst [vmem:[%s817] sm:$0xff] %v7148
        %7275 = vst [vmem:[%s817 + $0x8] sm:$0xff] %v7151
        %7276 = vst [vmem:[%s817 + $0x10] sm:$0xff] %v7156
        %7277 = vst [vmem:[%s817 + $0x18] sm:$0xff] %v7159
        %7278 = vst [vmem:[%s817 + $0x20] sm:$0xff] %v7164
        %7279 = vst [vmem:[%s817 + $0x28] sm:$0xff] %v7167
        %7280 = vst [vmem:[%s817 + $0x30] sm:$0xff] %v7172
        %7281 = vst [vmem:[%s817 + $0x38] sm:$0xff] %v7175
        %7282 = vst [vmem:[%s817 + $0x40] sm:$0xff] %v7180
        %7283 = vst [vmem:[%s817 + $0x48] sm:$0xff] %v7183
        %7284 = vst [vmem:[%s817 + $0x50] sm:$0xff] %v7188
        %7285 = vst [vmem:[%s817 + $0x58] sm:$0xff] %v7191
        %7286 = vst [vmem:[%s817 + $0x60] sm:$0xff] %v7196
        %7287 = vst [vmem:[%s817 + $0x68] sm:$0xff] %v7199
        %7288 = vst [vmem:[%s817 + $0x70] sm:$0xff] %v7204
        %7289 = vst [vmem:[%s817 + $0x78] sm:$0xff] %v7207
        %7290 = vst [vmem:[%s817 + $0x80] sm:$0xff] %v7212
        %7291 = vst [vmem:[%s817 + $0x88] sm:$0xff] %v7215
        %7292 = vst [vmem:[%s817 + $0x90] sm:$0xff] %v7220
        %7293 = vst [vmem:[%s817 + $0x98] sm:$0xff] %v7223
        %7294 = vst [vmem:[%s817 + $0xa0] sm:$0xff] %v7228
        %7295 = vst [vmem:[%s817 + $0xa8] sm:$0xff] %v7231
        %7296 = vst [vmem:[%s817 + $0xb0] sm:$0xff] %v7236
        %7297 = vst [vmem:[%s817 + $0xb8] sm:$0xff] %v7239
        %7298 = vst [vmem:[%s817 + $0xc0] sm:$0xff] %v7244
        %7299 = vst [vmem:[%s817 + $0xc8] sm:$0xff] %v7247
        %7300 = vst [vmem:[%s817 + $0xd0] sm:$0xff] %v7252
        %7301 = vst [vmem:[%s817 + $0xd8] sm:$0xff] %v7255
        %7302 = vst [vmem:[%s817 + $0xe0] sm:$0xff] %v7260
        %7303 = vst [vmem:[%s817 + $0xe8] sm:$0xff] %v7263
        %7304 = vst [vmem:[%s817 + $0xf0] sm:$0xff] %v7268
        %7305 = vst [vmem:[%s817 + $0xf8] sm:$0xff] %v7271
        %s7306 = sand.u32 %s500, 1
        %s7307 = scalar_lea.sflag [#allocation5], %s7306
        %s7308 = sand.u32 %s500, 1
        %s7309 = smul.addr %s7308, 256
        %s7310 = scalar_lea.vmem [#allocation4], %s7309
        %s7311 = sand.u32 %s528, 1
        %s7312 = scalar_lea.sflag [#allocation7], %s7311
        %s7313 = sand.u32 %s528, 1
        %s7314 = smul.addr %s7313, 256
        %s7315 = scalar_lea.vmem [#allocation6], %s7314
        // Predicated region
        $region89: #{tpu_custom_call.1} parent=87 // pred_check
          %p7316 = pneg %p510
        $region90: #{tpu_custom_call.1} parent=87 // pred_check_branch
          %7318 = sbr.rel (%p7316) target = $region92
        $region91: #{tpu_custom_call.1} parent=87 // pred_region
          %s7320 = ssub.s32 4096, 4096
          %7321 = vsyncadd %s7307, %s7320
          %s7322 = smul.addr %s41, 32
          %s7323 = smul.addr %s40, 64
          %s7324 = sadd.s32 %s7322, %s7323
          %s7325 = smul.addr %s7324, 128
          %s7326 = scalar_lea.hbm %s17, %s7325
          %s7327 = sshll.u32 %s7310, 4
          %s7328 = int_to_ptr.vmem [resolvable:$true] %s7327
          %7333 = dma.vmem_to_hbm [thread:$0]  %s7328, 4096, %s7326, %s7307, 128, 128, 8
        $region92: #{tpu_custom_call.1} parent=87 // pred_fallthru
          _
        // Predicated region
        $region93: #{tpu_custom_call.1} parent=87 // pred_check
          %p7334 = pneg %p538
        $region94: #{tpu_custom_call.1} parent=87 // pred_check_branch
          %7336 = sbr.rel (%p7334) target = $region96
        $region95: #{tpu_custom_call.1} parent=87 // pred_region
          %s7338 = ssub.s32 4096, 4096
          %7339 = vsyncadd %s7312, %s7338
          %s7340 = smul.addr %s41, 32
          %s7341 = smul.addr %s40, 64
          %s7342 = sadd.s32 %s7340, %s7341
          %s7343 = smul.addr %s7342, 128
          %s7344 = scalar_lea.hbm %s18, %s7343
          %s7345 = sshll.u32 %s7315, 4
          %s7346 = int_to_ptr.vmem [resolvable:$true] %s7345
          %7351 = dma.vmem_to_hbm [thread:$0]  %s7346, 4096, %s7344, %s7312, 128, 128, 8
        $region96: #{tpu_custom_call.1} parent=87 // pred_fallthru
          _
      $region88: #{tpu_custom_call.1} parent=5 // pred_fallthru
        _
      %p7352 = scmp.le.s32.totalorder 2, %s31
      // Predicated region
      $region97: #{tpu_custom_call.1} parent=5 // pred_check
        %p7353 = pneg %p7352
      $region98: #{tpu_custom_call.1} parent=5 // pred_check_branch
        %7355 = sbr.rel (%p7353) target = $region100
      $region99: #{tpu_custom_call.1} parent=5 // pred_region
        %s7356 = ssub.s32 %s31, 2
        // Predicated region
        $region101: #{tpu_custom_call.1} parent=99 // pred_check
          %p7357 = pneg %p516
        $region102: #{tpu_custom_call.1} parent=99 // pred_check_branch
          %7359 = sbr.rel (%p7357) target = $region104
        $region103: #{tpu_custom_call.1} parent=99 // pred_region
          %s7360 = sand.u32 %s501, 1
          %s7361 = scalar_lea.sflag [#allocation5], %s7360
          %s7362 = sand.u32 %s501, 1
          %s7363 = smul.addr %s7362, 256
          %s7364 = scalar_lea.vmem [#allocation4], %s7363
          %7365 = dma.done %s7361, 4096
        $region104: #{tpu_custom_call.1} parent=99 // pred_fallthru
          _
        // Predicated region
        $region105: #{tpu_custom_call.1} parent=99 // pred_check
          %p7366 = pneg %p544
        $region106: #{tpu_custom_call.1} parent=99 // pred_check_branch
          %7368 = sbr.rel (%p7366) target = $region108
        $region107: #{tpu_custom_call.1} parent=99 // pred_region
          %s7369 = sand.u32 %s529, 1
          %s7370 = scalar_lea.sflag [#allocation7], %s7369
          %s7371 = sand.u32 %s529, 1
          %s7372 = smul.addr %s7371, 256
          %s7373 = scalar_lea.vmem [#allocation6], %s7372
          %7374 = dma.done %s7370, 4096
        $region108: #{tpu_custom_call.1} parent=99 // pred_fallthru
          _
      $region100: #{tpu_custom_call.1} parent=5 // pred_fallthru
        _
    $region6: #{tpu_custom_call.1} parent=1 // loop_footer
      %s35 = sadd.s32 1, %s31
    $region7: #{tpu_custom_call.1} parent=1 // loop_footer_branch
      %30 = sbr.rel target = $region3
    $region8: #{tpu_custom_call.1} parent=1 // loop_exit
      _
    %7375 = vsyncpa [#allocation5], 1
    %s7376 = scalar_lea.sflag [#allocation5], 1
    %7377 = vsyncpa %s7376, 1
    %7378 = vsyncpa [#allocation7], 1
    %s7379 = scalar_lea.sflag [#allocation7], 1
    %7380 = vsyncpa %s7379, 1

</llo_original>
